<compile_context>
chip_gen: v7x
topology: tpu7x:2x2x1
jax: 0.10.0
libtpu: 0.0.40
codegen_flags: <defaults>
</compile_context>

<pallas_src>
import jax
import jax.numpy as jnp
from jax import lax
from jax.experimental import pallas as pl
from jax.experimental.pallas import tpu as pltpu


# ----------------------------------------------------------------------------
# Fused multi-layer coupling kernels
# ----------------------------------------------------------------------------
def _flow_fwd_kernel(x_ref, w1_ref, b1_ref, w2_ref, b2_ref, u_ref, ld_ref):
    """Forward pass of L stacked affine coupling layers on one batch tile."""
    L, dh, _ = w1_ref.shape
    a = x_ref[:, :dh]                      # x1  (f32)
    b = x_ref[:, dh:]                      # x2  (f32)
    ld0 = jnp.zeros((a.shape[0], 1), jnp.float32)

    def body(l, carry):
        a, b, ld = carry
        # bf16 operands on the MXU, f32 accumulation; everything else stays f32.
        h = jnp.tanh(jnp.dot(a.astype(jnp.bfloat16), w1_ref[l],
                             preferred_element_type=jnp.float32) + b1_ref[l])
        st = jnp.dot(h.astype(jnp.bfloat16), w2_ref[l],
                     preferred_element_type=jnp.float32) + b2_ref[l]
        s = jnp.tanh(st[:, :dh])           # bounded log-scale for stability
        t = st[:, dh:]
        y2 = b * jnp.exp(s) + t            # EUP exp; s/t never leave VMEM
        ld = ld + jnp.sum(s, axis=-1, keepdims=True)
        return (y2, a, ld)                 # swap halves between layers

    # Full unroll only for shallow stacks; deep stacks stay rolled to avoid
    # replicating (TB, D) temporaries per layer (spill risk with 64 vregs).
    a, b, ld = lax.fori_loop(0, L, body, (a, b, ld0), unroll=bool(L <= 8))
    u_ref[:, :dh] = a
    u_ref[:, dh:] = b
    # Lane-dense log-det block: broadcast across 128 lanes, wrapper keeps lane 0.
    ld_ref[...] = jnp.broadcast_to(ld, ld_ref.shape)


def _flow_bwd_kernel(u_ref, w1_ref, b1_ref, w2_ref, b2_ref, x_ref, ld_ref):
    """Inverse pass (layers applied in reverse) on one batch tile."""
    L, dh, _ = w1_ref.shape
    a = u_ref[:, :dh]                      # y2 of last layer
    b = u_ref[:, dh:]                      # x1 of last layer
    ld0 = jnp.zeros((a.shape[0], 1), jnp.float32)

    def body(i, carry):
        a, b, ld = carry
        l = L - 1 - i
        h = jnp.tanh(jnp.dot(b.astype(jnp.bfloat16), w1_ref[l],
                             preferred_element_type=jnp.float32) + b1_ref[l])
        st = jnp.dot(h.astype(jnp.bfloat16), w2_ref[l],
                     preferred_element_type=jnp.float32) + b2_ref[l]
        s = jnp.tanh(st[:, :dh])
        t = st[:, dh:]
        x2 = (a - t) * jnp.exp(-s)         # exact inverse of the affine combine
        ld = ld - jnp.sum(s, axis=-1, keepdims=True)
        return (b, x2, ld)

    a, b, ld = lax.fori_loop(0, L, body, (a, b, ld0), unroll=bool(L <= 8))
    x_ref[:, :dh] = a
    x_ref[:, dh:] = b
    ld_ref[...] = jnp.broadcast_to(ld, ld_ref.shape)


# ----------------------------------------------------------------------------
# Wrapper: tiling, VMEM budgeting, pallas_call
# ----------------------------------------------------------------------------
_VMEM_CAP_BYTES = 48 * 1024 * 1024     # headroom under v7x's 64 MiB physical VMEM
_BUFFERED_WEIGHTS = True               # pl.Buffered(1) on invariant weights; auto-fallback


def _round_up(v, m):
    return (v + m - 1) // m * m


def _choose_tb(B):
    """Batch tile: fill the 256-wide MXU when possible, but keep >=2 grid steps
    for medium batches so v7x's two TensorCores both get work."""
    b8 = _round_up(B, 8)
    if b8 <= 8:
        return 8
    if b8 >= 512:
        return 256
    return min(256, _round_up((b8 + 1) // 2, 8))


def _vmem_estimate(TB, D, L, Dh, HID, weight_bufs):
    w = L * (Dh * HID + HID * D) * 2                # bf16 stacked weights
    b = L * (HID + D) * 4                           # f32 biases
    tiles = 2 * (2 * TB * D * 4) + 2 * TB * 128 * 4  # double-buffered x/u tiles + ld
    return weight_bufs * (w + b) + tiles


def _make_specs(TB, D, L, Dh, HID, buffered):
    # Weights/biases have a constant index_map (resident across the batch grid);
    # single-buffering them halves their VMEM footprint.
    kw = dict(pipeline_mode=pl.Buffered(1)) if buffered else {}
    in_specs = [
        pl.BlockSpec((TB, D), lambda i: (i, 0)),               # batch tile
        pl.BlockSpec((L, Dh, HID), lambda i: (0, 0, 0), **kw),  # W1 (bf16, resident)
        pl.BlockSpec((L, 1, HID), lambda i: (0, 0, 0), **kw),   # b1 (f32)
        pl.BlockSpec((L, HID, D), lambda i: (0, 0, 0), **kw),   # W2 (bf16, resident)
        pl.BlockSpec((L, 1, D), lambda i: (0, 0, 0), **kw),     # b2 (f32)
    ]
    out_specs = (
        pl.BlockSpec((TB, D), lambda i: (i, 0)),     # u / x   (lane-dense, D multiple of 128)
        pl.BlockSpec((TB, 128), lambda i: (i, 0)),   # log-det (lane-dense block)
    )
    return in_specs, out_specs


def _flow_apply(x2d, w1, b1, w2, b2, *, inverse=False):
    """Run the fused coupling-flow kernel over a (B, D) batch of flat features."""
    global _BUFFERED_WEIGHTS
    B, D = x2d.shape
    L, Dh, HID = w1.shape
    assert 2 * Dh == D

    TB = _choose_tb(B)
    # VMEM budget check: shrink the batch tile if resident weights + tiles would
    # not fit comfortably (matters most on v7x's 64 MiB physical VMEM).
    while TB > 8 and _vmem_estimate(TB, D, L, Dh, HID, 2) > _VMEM_CAP_BYTES:
        TB = max(8, _round_up(TB // 2, 8))
    # TODO(synk): if L*HID grows until the stacked weights alone blow the budget,
    # stream weights per layer (grid axis over L marked "arbitrary") instead.

    B_pad = _round_up(B, TB)
    if B_pad != B:
        x2d = jnp.pad(x2d, ((0, B_pad - B), (0, 0)))

    vmem_limit = int(min(max(2 * _vmem_estimate(TB, D, L, Dh, HID, 2), 32 << 20),
                         64 << 20))
    compiler_params = pltpu.CompilerParams(
        dimension_semantics=("parallel",),   # batch tiles shard across TCs (v7x)
        vmem_limit_bytes=vmem_limit,         # v5e default scoped VMEM is only 16 MiB
    )

    kernel = _flow_bwd_kernel if inverse else _flow_fwd_kernel
    out_shape = (jax.ShapeDtypeStruct((B_pad, D), jnp.float32),
                 jax.ShapeDtypeStruct((B_pad, 128), jnp.float32))
    grid = (B_pad // TB,)

    last_err = None
    for buffered in ((True, False) if _BUFFERED_WEIGHTS else (False,)):
        try:
            in_specs, out_specs = _make_specs(TB, D, L, Dh, HID, buffered)
            u, ld = pl.pallas_call(
                kernel,
                out_shape=out_shape,
                grid=grid,
                in_specs=in_specs,
                out_specs=out_specs,
                compiler_params=compiler_params,
            )(x2d, w1, b1, w2, b2)
            return u[:B], ld[:B, :1]
        except Exception as e:  # pl.Buffered(1) not supported on this jax build -> fallback
            last_err = e
            _BUFFERED_WEIGHTS = False
    raise last_err


# ----------------------------------------------------------------------------
# Pure-JAX reference (same bf16-MXU / f32-accumulate math; for checks only)
# ----------------------------------------------------------------------------
def _flow_forward_ref(x2d, w1, b1, w2, b2):
    L, dh, _ = w1.shape
    a, b = x2d[:, :dh], x2d[:, dh:]
    ld = jnp.zeros((x2d.shape[0], 1), jnp.float32)
    for l in range(L):
        h = jnp.tanh(jnp.dot(a.astype(jnp.bfloat16), w1[l],
                             preferred_element_type=jnp.float32) + b1[l])
        st = jnp.dot(h.astype(jnp.bfloat16), w2[l],
                     preferred_element_type=jnp.float32) + b2[l]
        s = jnp.tanh(st[:, :dh])
        t = st[:, dh:]
        a, b = b * jnp.exp(s) + t, a
        ld = ld + jnp.sum(s, axis=-1, keepdims=True)
    return jnp.concatenate([a, b], axis=-1), ld


# ----------------------------------------------------------------------------
# Module ports
# ----------------------------------------------------------------------------
class Prior:
    """Standard-normal prior over a flat feature vector of size `input_size`."""

    def __init__(self, input_size):
        self.prior_mean = jnp.zeros((input_size,), jnp.float32)
        # NOTE: mirrors the PyTorch source, where prior_var is used as the
        # Normal's scale (std), not variance.
        self.prior_var = jnp.ones((input_size,), jnp.float32)

    def log_prob(self, x):
        z = (x - self.prior_mean) / self.prior_var
        return -0.5 * z * z - jnp.log(self.prior_var) - 0.5 * jnp.log(2.0 * jnp.pi)

    def sample(self, samples=1, key=None):
        if key is None:
            key = jax.random.PRNGKey(0)
        eps = jax.random.normal(key, (samples,) + self.prior_mean.shape,
                                dtype=jnp.float32)
        return self.prior_mean + self.prior_var * eps


class AffineCoupling:
    """Parameter container for one dense affine coupling layer."""

    def __init__(self, w1, b1, w2, b2):
        self.w1, self.b1, self.w2, self.b2 = w1, b1, w2, b2


class SequentialFlow:
    """Chain of coupling layers, executed as ONE fused Pallas kernel."""

    def __init__(self, *layers):
        self.layers = list(layers)
        # Weights stored in bf16 for MXU; biases stay f32 (added after f32 accumulate).
        self._w1 = jnp.stack([l.w1 for l in self.layers]).astype(jnp.bfloat16)   # (L, Dh, H)
        self._b1 = jnp.stack([l.b1 for l in self.layers])[:, None, :].astype(jnp.float32)  # (L, 1, H)
        self._w2 = jnp.stack([l.w2 for l in self.layers]).astype(jnp.bfloat16)   # (L, H, D)
        self._b2 = jnp.stack([l.b2 for l in self.layers])[:, None, :].astype(jnp.float32)  # (L, 1, D)

    # TODO(synk): conditioning input `y` is accepted for API parity but unused —
    # the coupling layers instantiated here are unconditional.
    def forward(self, x, y=None):
        B = x.shape[0]
        u2d, ld = _flow_apply(x.reshape(B, -1), self._w1, self._b1,
                              self._w2, self._b2, inverse=False)
        return u2d.reshape(x.shape), ld

    def backward(self, u, y=None):
        B = u.shape[0]
        x2d, ld = _flow_apply(u.reshape(B, -1), self._w1, self._b1,
                              self._w2, self._b2, inverse=True)
        return x2d.reshape(u.shape), ld

    # NOTE: the *_steps paths launch one pallas_call per layer to expose the
    # intermediates; they pay launch/pipeline-fill overhead L times.  Prefer
    # forward()/backward() (fully fused) on hot paths.
    def forward_steps(self, x, y=None):
        B = x.shape[0]
        log_det = jnp.zeros((B, 1), jnp.float32)
        xs = [[x, 'input']]
        cur = x
        for l, layer in enumerate(self.layers):
            u2d, ld = _flow_apply(cur.reshape(B, -1),
                                  self._w1[l:l + 1], self._b1[l:l + 1],
                                  self._w2[l:l + 1], self._b2[l:l + 1],
                                  inverse=False)
            cur = u2d.reshape(cur.shape)
            xs.append([cur, layer.__class__.__name__])
            log_det = log_det + ld
        return xs, log_det

    def backward_steps(self, u, y=None):
        B = u.shape[0]
        log_det = jnp.zeros((B, 1), jnp.float32)
        us = [(u, 'prior')]
        cur = u
        for l in reversed(range(len(self.layers))):
            x2d, ld = _flow_apply(cur.reshape(B, -1),
                                  self._w1[l:l + 1], self._b1[l:l + 1],
                                  self._w2[l:l + 1], self._b2[l:l + 1],
                                  inverse=True)
            cur = x2d.reshape(cur.shape)
            us.append([cur, self.layers[l].__class__.__name__])
            log_det = log_det + ld
        return us, log_det


class InvertibleNetwork:
    """JAX/Pallas port of the PyTorch InvertibleNetwork."""

    def __init__(self, layers, prior):
        self.prior = prior
        self.flows = SequentialFlow(*layers)

    def forward(self, x, y=None, return_step=False):
        if return_step:
            u, logdet = self.flows.forward_steps(x, y)
        else:
            u, logdet = self.flows.forward(x, y)
        return u, logdet.reshape(logdet.shape[0], -1)

    __call__ = forward

    def backward(self, u, y=None, return_step=False):
        if return_step:
            x, logdet = self.flows.backward_steps(u, y)
        else:
            x, logdet = self.flows.backward(u, y)
        return x, logdet.reshape(logdet.shape[0], -1)

    def sample(self, samples=1, u=None, y=None, return_step=False,
               return_logdet=False, key=None):
        if u is None:
            u = self.prior.sample(samples, key=key)
        z, det = self.backward(u, y=y, return_step=return_step)
        if return_logdet:
            return z, det
        return z

    def logprob(self, x):
        return self.prior.log_prob(x)


# ----------------------------------------------------------------------------
# Demo / self-check
# ----------------------------------------------------------------------------
if __name__ == "__main__":
    key = jax.random.PRNGKey(0)
    N, C, Hs, Ws = 2, 4, 16, 16
    D = C * Hs * Ws            # 1024 (lane-dense)
    Dh = D // 2                # 512
    HID = 128                  # coupling-subnet hidden width
    L = 4                      # number of coupling layers

    k_x, k_w, k_s = jax.random.split(key, 3)
    x = jax.random.normal(k_x, (N, C, Hs, Ws), dtype=jnp.float32)

    layers = []
    for _ in range(L):
        k_w, k1, k2 = jax.random.split(k_w, 3)
        w1 = jax.random.normal(k1, (Dh, HID), jnp.float32) / jnp.sqrt(float(Dh))
        b1 = jnp.zeros((HID,), jnp.float32)
        w2 = jax.random.normal(k2, (HID, D), jnp.float32) * (0.1 / jnp.sqrt(float(HID)))
        b2 = jnp.zeros((D,), jnp.float32)
        layers.append(AffineCoupling(w1, b1, w2, b2))

    net = InvertibleNetwork(layers, Prior(D))

    # Forward pass through the fused Pallas kernel.
    u, logdet = net.forward(x)
    u = jax.block_until_ready(u)
    logdet = jax.block_until_ready(logdet)
    assert u.shape == x.shape
    assert logdet.shape == (N, 1)

    # Check against a pure-JAX reference that uses the same bf16-MXU math.
    flows = net.flows
    u_ref, ld_ref = _flow_forward_ref(x.reshape(N, D), flows._w1, flows._b1,
                                      flows._w2, flows._b2)
    assert bool(jnp.allclose(u.reshape(N, D), u_ref, rtol=1e-2, atol=1e-2))
    assert bool(jnp.allclose(logdet, ld_ref, rtol=1e-2, atol=5e-2))

    # Invertibility: backward(forward(x)) == x and log-dets cancel.
    x_rec, logdet_b = net.backward(u)
    x_rec = jax.block_until_ready(x_rec)
    assert bool(jnp.allclose(x_rec, x, rtol=1e-2, atol=5e-3))
    assert bool(jnp.allclose(logdet + logdet_b, 0.0, atol=5e-2))

    # Prior utilities + sampling path.
    lp = net.logprob(x.reshape(N, D))
    assert lp.shape == (N, D)
    z = net.sample(samples=2, key=k_s)
    z = jax.block_until_ready(z)
    assert z.shape == (2, D) and bool(jnp.all(jnp.isfinite(z)))

    print("KERNEL_OK")
</pallas_src>

<mosaic_0001>
module attributes {stable_mosaic.version = 11 : i64} {
  func.func @_flow_fwd_kernel(%arg0: i32, %arg1: memref<8x1024xf32, #tpu.memory_space<vmem>>, %arg2: memref<4x512x128xbf16, #tpu.memory_space<vmem>>, %arg3: memref<4x1x128xf32, #tpu.memory_space<vmem>>, %arg4: memref<4x128x1024xbf16, #tpu.memory_space<vmem>>, %arg5: memref<4x1x1024xf32, #tpu.memory_space<vmem>>, %arg6: memref<8x1024xf32, #tpu.memory_space<vmem>>, %arg7: memref<8x128xf32, #tpu.memory_space<vmem>>) attributes {dimension_semantics = [#tpu.dimension_semantics<parallel>], iteration_bounds = array<i64: 1>, scalar_prefetch = 0 : i64, scratch_operands = 0 : i64, tpu.core_type = #tpu.core_type<tc>, window_params = [{transform_indices = @transform_0, window_bounds = array<i64: 8, 1024>}, {pipeline_mode = #tpu.pipeline_mode<synchronous>, transform_indices = @transform_1, window_bounds = array<i64: 4, 512, 128>}, {pipeline_mode = #tpu.pipeline_mode<synchronous>, transform_indices = @transform_2, window_bounds = array<i64: 4, 1, 128>}, {pipeline_mode = #tpu.pipeline_mode<synchronous>, transform_indices = @transform_3, window_bounds = array<i64: 4, 128, 1024>}, {pipeline_mode = #tpu.pipeline_mode<synchronous>, transform_indices = @transform_4, window_bounds = array<i64: 4, 1, 1024>}, {transform_indices = @transform_5, window_bounds = array<i64: 8, 1024>}, {transform_indices = @transform_6, window_bounds = array<i64: 8, 128>}]} {
    %c0 = arith.constant 0 : index
    %c0_0 = arith.constant 0 : index
    %0 = vector.load %arg1[%c0, %c0_0] : memref<8x1024xf32, #tpu.memory_space<vmem>>, vector<8x512xf32>
    %c0_1 = arith.constant 0 : index
    %c512 = arith.constant 512 : index
    %1 = vector.load %arg1[%c0_1, %c512] : memref<8x1024xf32, #tpu.memory_space<vmem>>, vector<8x512xf32>
    %cst = arith.constant 0.000000e+00 : f32
    %2 = vector.broadcast %cst : f32 to vector<8x1xf32>
    %c0_i32 = arith.constant 0 : i32
    %3 = arith.truncf %0 : vector<8x512xf32> to vector<8x512xbf16>
    %4 = arith.index_cast %c0_i32 : i32 to index
    %c0_2 = arith.constant 0 : index
    %c0_3 = arith.constant 0 : index
    %5 = vector.load %arg2[%4, %c0_2, %c0_3] : memref<4x512x128xbf16, #tpu.memory_space<vmem>>, vector<1x512x128xbf16>
    %6 = vector.shape_cast %5 : vector<1x512x128xbf16> to vector<512x128xbf16>
    %cst_4 = arith.constant dense<0.000000e+00> : vector<8x128xf32>
    %7 = tpu.matmul %3, %6, %cst_4 {dimension_numbers = #tpu.dot_dimension_numbers<[1], [0], [0], [1], [0, 0, 1, 1], [], []>} : vector<8x512xbf16>, vector<512x128xbf16>, vector<8x128xf32> -> vector<8x128xf32>
    %8 = arith.index_cast %c0_i32 : i32 to index
    %c0_5 = arith.constant 0 : index
    %c0_6 = arith.constant 0 : index
    %9 = vector.load %arg3[%8, %c0_5, %c0_6] : memref<4x1x128xf32, #tpu.memory_space<vmem>>, vector<1x1x128xf32>
    %10 = vector.shape_cast %9 : vector<1x1x128xf32> to vector<1x128xf32>
    %11 = vector.broadcast %10 : vector<1x128xf32> to vector<8x128xf32>
    %12 = arith.addf %7, %11 : vector<8x128xf32>
    %13 = math.tanh %12 : vector<8x128xf32>
    %14 = arith.truncf %13 : vector<8x128xf32> to vector<8x128xbf16>
    %15 = arith.index_cast %c0_i32 : i32 to index
    %c0_7 = arith.constant 0 : index
    %c0_8 = arith.constant 0 : index
    %16 = vector.load %arg4[%15, %c0_7, %c0_8] : memref<4x128x1024xbf16, #tpu.memory_space<vmem>>, vector<1x128x1024xbf16>
    %17 = vector.shape_cast %16 : vector<1x128x1024xbf16> to vector<128x1024xbf16>
    %cst_9 = arith.constant dense<0.000000e+00> : vector<8x1024xf32>
    %18 = tpu.matmul %14, %17, %cst_9 {dimension_numbers = #tpu.dot_dimension_numbers<[1], [0], [0], [1], [0, 0, 1, 1], [], []>} : vector<8x128xbf16>, vector<128x1024xbf16>, vector<8x1024xf32> -> vector<8x1024xf32>
    %19 = arith.index_cast %c0_i32 : i32 to index
    %c0_10 = arith.constant 0 : index
    %c0_11 = arith.constant 0 : index
    %20 = vector.load %arg5[%19, %c0_10, %c0_11] : memref<4x1x1024xf32, #tpu.memory_space<vmem>>, vector<1x1x1024xf32>
    %21 = vector.shape_cast %20 : vector<1x1x1024xf32> to vector<1x1024xf32>
    %22 = vector.broadcast %21 : vector<1x1024xf32> to vector<8x1024xf32>
    %23 = arith.addf %18, %22 : vector<8x1024xf32>
    %24 = vector.extract_strided_slice %23 {offsets = [0, 0], sizes = [8, 512], strides = [1, 1]} : vector<8x1024xf32> to vector<8x512xf32>
    %25 = math.tanh %24 : vector<8x512xf32>
    %26 = vector.extract_strided_slice %23 {offsets = [0, 512], sizes = [8, 512], strides = [1, 1]} : vector<8x1024xf32> to vector<8x512xf32>
    %27 = math.exp %25 : vector<8x512xf32>
    %28 = arith.mulf %1, %27 : vector<8x512xf32>
    %29 = arith.addf %28, %26 : vector<8x512xf32>
    %cst_12 = arith.constant dense<0.000000e+00> : vector<8xf32>
    %30 = vector.multi_reduction <add>, %25, %cst_12 [1] : vector<8x512xf32> to vector<8xf32>
    %31 = vector.shape_cast %30 : vector<8xf32> to vector<8x1xf32>
    %32 = arith.addf %2, %31 : vector<8x1xf32>
    %c1_i32 = arith.constant 1 : i32
    %33 = arith.truncf %29 : vector<8x512xf32> to vector<8x512xbf16>
    %34 = arith.index_cast %c1_i32 : i32 to index
    %c0_13 = arith.constant 0 : index
    %c0_14 = arith.constant 0 : index
    %35 = vector.load %arg2[%34, %c0_13, %c0_14] : memref<4x512x128xbf16, #tpu.memory_space<vmem>>, vector<1x512x128xbf16>
    %36 = vector.shape_cast %35 : vector<1x512x128xbf16> to vector<512x128xbf16>
    %cst_15 = arith.constant dense<0.000000e+00> : vector<8x128xf32>
    %37 = tpu.matmul %33, %36, %cst_15 {dimension_numbers = #tpu.dot_dimension_numbers<[1], [0], [0], [1], [0, 0, 1, 1], [], []>} : vector<8x512xbf16>, vector<512x128xbf16>, vector<8x128xf32> -> vector<8x128xf32>
    %38 = arith.index_cast %c1_i32 : i32 to index
    %c0_16 = arith.constant 0 : index
    %c0_17 = arith.constant 0 : index
    %39 = vector.load %arg3[%38, %c0_16, %c0_17] : memref<4x1x128xf32, #tpu.memory_space<vmem>>, vector<1x1x128xf32>
    %40 = vector.shape_cast %39 : vector<1x1x128xf32> to vector<1x128xf32>
    %41 = vector.broadcast %40 : vector<1x128xf32> to vector<8x128xf32>
    %42 = arith.addf %37, %41 : vector<8x128xf32>
    %43 = math.tanh %42 : vector<8x128xf32>
    %44 = arith.truncf %43 : vector<8x128xf32> to vector<8x128xbf16>
    %45 = arith.index_cast %c1_i32 : i32 to index
    %c0_18 = arith.constant 0 : index
    %c0_19 = arith.constant 0 : index
    %46 = vector.load %arg4[%45, %c0_18, %c0_19] : memref<4x128x1024xbf16, #tpu.memory_space<vmem>>, vector<1x128x1024xbf16>
    %47 = vector.shape_cast %46 : vector<1x128x1024xbf16> to vector<128x1024xbf16>
    %cst_20 = arith.constant dense<0.000000e+00> : vector<8x1024xf32>
    %48 = tpu.matmul %44, %47, %cst_20 {dimension_numbers = #tpu.dot_dimension_numbers<[1], [0], [0], [1], [0, 0, 1, 1], [], []>} : vector<8x128xbf16>, vector<128x1024xbf16>, vector<8x1024xf32> -> vector<8x1024xf32>
    %49 = arith.index_cast %c1_i32 : i32 to index
    %c0_21 = arith.constant 0 : index
    %c0_22 = arith.constant 0 : index
    %50 = vector.load %arg5[%49, %c0_21, %c0_22] : memref<4x1x1024xf32, #tpu.memory_space<vmem>>, vector<1x1x1024xf32>
    %51 = vector.shape_cast %50 : vector<1x1x1024xf32> to vector<1x1024xf32>
    %52 = vector.broadcast %51 : vector<1x1024xf32> to vector<8x1024xf32>
    %53 = arith.addf %48, %52 : vector<8x1024xf32>
    %54 = vector.extract_strided_slice %53 {offsets = [0, 0], sizes = [8, 512], strides = [1, 1]} : vector<8x1024xf32> to vector<8x512xf32>
    %55 = math.tanh %54 : vector<8x512xf32>
    %56 = vector.extract_strided_slice %53 {offsets = [0, 512], sizes = [8, 512], strides = [1, 1]} : vector<8x1024xf32> to vector<8x512xf32>
    %57 = math.exp %55 : vector<8x512xf32>
    %58 = arith.mulf %0, %57 : vector<8x512xf32>
    %59 = arith.addf %58, %56 : vector<8x512xf32>
    %cst_23 = arith.constant dense<0.000000e+00> : vector<8xf32>
    %60 = vector.multi_reduction <add>, %55, %cst_23 [1] : vector<8x512xf32> to vector<8xf32>
    %61 = vector.shape_cast %60 : vector<8xf32> to vector<8x1xf32>
    %62 = arith.addf %32, %61 : vector<8x1xf32>
    %c2_i32 = arith.constant 2 : i32
    %63 = arith.truncf %59 : vector<8x512xf32> to vector<8x512xbf16>
    %64 = arith.index_cast %c2_i32 : i32 to index
    %c0_24 = arith.constant 0 : index
    %c0_25 = arith.constant 0 : index
    %65 = vector.load %arg2[%64, %c0_24, %c0_25] : memref<4x512x128xbf16, #tpu.memory_space<vmem>>, vector<1x512x128xbf16>
    %66 = vector.shape_cast %65 : vector<1x512x128xbf16> to vector<512x128xbf16>
    %cst_26 = arith.constant dense<0.000000e+00> : vector<8x128xf32>
    %67 = tpu.matmul %63, %66, %cst_26 {dimension_numbers = #tpu.dot_dimension_numbers<[1], [0], [0], [1], [0, 0, 1, 1], [], []>} : vector<8x512xbf16>, vector<512x128xbf16>, vector<8x128xf32> -> vector<8x128xf32>
    %68 = arith.index_cast %c2_i32 : i32 to index
    %c0_27 = arith.constant 0 : index
    %c0_28 = arith.constant 0 : index
    %69 = vector.load %arg3[%68, %c0_27, %c0_28] : memref<4x1x128xf32, #tpu.memory_space<vmem>>, vector<1x1x128xf32>
    %70 = vector.shape_cast %69 : vector<1x1x128xf32> to vector<1x128xf32>
    %71 = vector.broadcast %70 : vector<1x128xf32> to vector<8x128xf32>
    %72 = arith.addf %67, %71 : vector<8x128xf32>
    %73 = math.tanh %72 : vector<8x128xf32>
    %74 = arith.truncf %73 : vector<8x128xf32> to vector<8x128xbf16>
    %75 = arith.index_cast %c2_i32 : i32 to index
    %c0_29 = arith.constant 0 : index
    %c0_30 = arith.constant 0 : index
    %76 = vector.load %arg4[%75, %c0_29, %c0_30] : memref<4x128x1024xbf16, #tpu.memory_space<vmem>>, vector<1x128x1024xbf16>
    %77 = vector.shape_cast %76 : vector<1x128x1024xbf16> to vector<128x1024xbf16>
    %cst_31 = arith.constant dense<0.000000e+00> : vector<8x1024xf32>
    %78 = tpu.matmul %74, %77, %cst_31 {dimension_numbers = #tpu.dot_dimension_numbers<[1], [0], [0], [1], [0, 0, 1, 1], [], []>} : vector<8x128xbf16>, vector<128x1024xbf16>, vector<8x1024xf32> -> vector<8x1024xf32>
    %79 = arith.index_cast %c2_i32 : i32 to index
    %c0_32 = arith.constant 0 : index
    %c0_33 = arith.constant 0 : index
    %80 = vector.load %arg5[%79, %c0_32, %c0_33] : memref<4x1x1024xf32, #tpu.memory_space<vmem>>, vector<1x1x1024xf32>
    %81 = vector.shape_cast %80 : vector<1x1x1024xf32> to vector<1x1024xf32>
    %82 = vector.broadcast %81 : vector<1x1024xf32> to vector<8x1024xf32>
    %83 = arith.addf %78, %82 : vector<8x1024xf32>
    %84 = vector.extract_strided_slice %83 {offsets = [0, 0], sizes = [8, 512], strides = [1, 1]} : vector<8x1024xf32> to vector<8x512xf32>
    %85 = math.tanh %84 : vector<8x512xf32>
    %86 = vector.extract_strided_slice %83 {offsets = [0, 512], sizes = [8, 512], strides = [1, 1]} : vector<8x1024xf32> to vector<8x512xf32>
    %87 = math.exp %85 : vector<8x512xf32>
    %88 = arith.mulf %29, %87 : vector<8x512xf32>
    %89 = arith.addf %88, %86 : vector<8x512xf32>
    %cst_34 = arith.constant dense<0.000000e+00> : vector<8xf32>
    %90 = vector.multi_reduction <add>, %85, %cst_34 [1] : vector<8x512xf32> to vector<8xf32>
    %91 = vector.shape_cast %90 : vector<8xf32> to vector<8x1xf32>
    %92 = arith.addf %62, %91 : vector<8x1xf32>
    %c3_i32 = arith.constant 3 : i32
    %93 = arith.truncf %89 : vector<8x512xf32> to vector<8x512xbf16>
    %94 = arith.index_cast %c3_i32 : i32 to index
    %c0_35 = arith.constant 0 : index
    %c0_36 = arith.constant 0 : index
    %95 = vector.load %arg2[%94, %c0_35, %c0_36] : memref<4x512x128xbf16, #tpu.memory_space<vmem>>, vector<1x512x128xbf16>
    %96 = vector.shape_cast %95 : vector<1x512x128xbf16> to vector<512x128xbf16>
    %cst_37 = arith.constant dense<0.000000e+00> : vector<8x128xf32>
    %97 = tpu.matmul %93, %96, %cst_37 {dimension_numbers = #tpu.dot_dimension_numbers<[1], [0], [0], [1], [0, 0, 1, 1], [], []>} : vector<8x512xbf16>, vector<512x128xbf16>, vector<8x128xf32> -> vector<8x128xf32>
    %98 = arith.index_cast %c3_i32 : i32 to index
    %c0_38 = arith.constant 0 : index
    %c0_39 = arith.constant 0 : index
    %99 = vector.load %arg3[%98, %c0_38, %c0_39] : memref<4x1x128xf32, #tpu.memory_space<vmem>>, vector<1x1x128xf32>
    %100 = vector.shape_cast %99 : vector<1x1x128xf32> to vector<1x128xf32>
    %101 = vector.broadcast %100 : vector<1x128xf32> to vector<8x128xf32>
    %102 = arith.addf %97, %101 : vector<8x128xf32>
    %103 = math.tanh %102 : vector<8x128xf32>
    %104 = arith.truncf %103 : vector<8x128xf32> to vector<8x128xbf16>
    %105 = arith.index_cast %c3_i32 : i32 to index
    %c0_40 = arith.constant 0 : index
    %c0_41 = arith.constant 0 : index
    %106 = vector.load %arg4[%105, %c0_40, %c0_41] : memref<4x128x1024xbf16, #tpu.memory_space<vmem>>, vector<1x128x1024xbf16>
    %107 = vector.shape_cast %106 : vector<1x128x1024xbf16> to vector<128x1024xbf16>
    %cst_42 = arith.constant dense<0.000000e+00> : vector<8x1024xf32>
    %108 = tpu.matmul %104, %107, %cst_42 {dimension_numbers = #tpu.dot_dimension_numbers<[1], [0], [0], [1], [0, 0, 1, 1], [], []>} : vector<8x128xbf16>, vector<128x1024xbf16>, vector<8x1024xf32> -> vector<8x1024xf32>
    %109 = arith.index_cast %c3_i32 : i32 to index
    %c0_43 = arith.constant 0 : index
    %c0_44 = arith.constant 0 : index
    %110 = vector.load %arg5[%109, %c0_43, %c0_44] : memref<4x1x1024xf32, #tpu.memory_space<vmem>>, vector<1x1x1024xf32>
    %111 = vector.shape_cast %110 : vector<1x1x1024xf32> to vector<1x1024xf32>
    %112 = vector.broadcast %111 : vector<1x1024xf32> to vector<8x1024xf32>
    %113 = arith.addf %108, %112 : vector<8x1024xf32>
    %114 = vector.extract_strided_slice %113 {offsets = [0, 0], sizes = [8, 512], strides = [1, 1]} : vector<8x1024xf32> to vector<8x512xf32>
    %115 = math.tanh %114 : vector<8x512xf32>
    %116 = vector.extract_strided_slice %113 {offsets = [0, 512], sizes = [8, 512], strides = [1, 1]} : vector<8x1024xf32> to vector<8x512xf32>
    %117 = math.exp %115 : vector<8x512xf32>
    %118 = arith.mulf %59, %117 : vector<8x512xf32>
    %119 = arith.addf %118, %116 : vector<8x512xf32>
    %cst_45 = arith.constant dense<0.000000e+00> : vector<8xf32>
    %120 = vector.multi_reduction <add>, %115, %cst_45 [1] : vector<8x512xf32> to vector<8xf32>
    %121 = vector.shape_cast %120 : vector<8xf32> to vector<8x1xf32>
    %122 = arith.addf %92, %121 : vector<8x1xf32>
    %c4_i32 = arith.constant 4 : i32
    %c0_46 = arith.constant 0 : index
    %c0_47 = arith.constant 0 : index
    %123 = vector.load %arg6[%c0_46, %c0_47] : memref<8x1024xf32, #tpu.memory_space<vmem>>, vector<8x512xf32>
    tpu.vector_store %arg6[%c0_46, %c0_47], %119 {strides = array<i32>} : memref<8x1024xf32, #tpu.memory_space<vmem>>, vector<8x512xf32>,
    %c0_48 = arith.constant 0 : index
    %c512_49 = arith.constant 512 : index
    %124 = vector.load %arg6[%c0_48, %c512_49] : memref<8x1024xf32, #tpu.memory_space<vmem>>, vector<8x512xf32>
    tpu.vector_store %arg6[%c0_48, %c512_49], %89 {strides = array<i32>} : memref<8x1024xf32, #tpu.memory_space<vmem>>, vector<8x512xf32>,
    %125 = vector.shape_cast %122 : vector<8x1xf32> to vector<8x1xf32>
    %126 = vector.broadcast %125 : vector<8x1xf32> to vector<8x128xf32>
    %c0_50 = arith.constant 0 : index
    %c0_51 = arith.constant 0 : index
    %127 = vector.load %arg7[%c0_50, %c0_51] : memref<8x128xf32, #tpu.memory_space<vmem>>, vector<8x128xf32>
    tpu.vector_store %arg7[%c0_50, %c0_51], %126 {strides = array<i32>} : memref<8x128xf32, #tpu.memory_space<vmem>>, vector<8x128xf32>,
    return
  }
  func.func @transform_0(%arg0: i32) -> (i32, i32) {
    %c0_i32 = arith.constant 0 : i32
    %c0_i32_0 = arith.constant 0 : i32
    return %arg0, %c0_i32 : i32, i32
  }
  func.func @transform_1(%arg0: i32) -> (i32, i32, i32) {
    %c0_i32 = arith.constant 0 : i32
    %c0_i32_0 = arith.constant 0 : i32
    %c0_i32_1 = arith.constant 0 : i32
    %c0_i32_2 = arith.constant 0 : i32
    return %c0_i32, %c0_i32_0, %c0_i32_1 : i32, i32, i32
  }
  func.func @transform_2(%arg0: i32) -> (i32, i32, i32) {
    %c0_i32 = arith.constant 0 : i32
    %c0_i32_0 = arith.constant 0 : i32
    %c0_i32_1 = arith.constant 0 : i32
    %c0_i32_2 = arith.constant 0 : i32
    return %c0_i32, %c0_i32_0, %c0_i32_1 : i32, i32, i32
  }
  func.func @transform_3(%arg0: i32) -> (i32, i32, i32) {
    %c0_i32 = arith.constant 0 : i32
    %c0_i32_0 = arith.constant 0 : i32
    %c0_i32_1 = arith.constant 0 : i32
    %c0_i32_2 = arith.constant 0 : i32
    return %c0_i32, %c0_i32_0, %c0_i32_1 : i32, i32, i32
  }
  func.func @transform_4(%arg0: i32) -> (i32, i32, i32) {
    %c0_i32 = arith.constant 0 : i32
    %c0_i32_0 = arith.constant 0 : i32
    %c0_i32_1 = arith.constant 0 : i32
    %c0_i32_2 = arith.constant 0 : i32
    return %c0_i32, %c0_i32_0, %c0_i32_1 : i32, i32, i32
  }
  func.func @transform_5(%arg0: i32) -> (i32, i32) {
    %c0_i32 = arith.constant 0 : i32
    %c0_i32_0 = arith.constant 0 : i32
    return %arg0, %c0_i32 : i32, i32
  }
  func.func @transform_6(%arg0: i32) -> (i32, i32) {
    %c0_i32 = arith.constant 0 : i32
    %c0_i32_0 = arith.constant 0 : i32
    return %arg0, %c0_i32 : i32, i32
  }
}

module attributes {stable_mosaic.version = 11 : i64} {
  func.func @_flow_fwd_kernel(%arg0: i32, %arg1: memref<8x1024xf32, #tpu.memory_space<vmem>>, %arg2: memref<4x512x128xbf16, #tpu.memory_space<vmem>>, %arg3: memref<4x1x128xf32, #tpu.memory_space<vmem>>, %arg4: memref<4x128x1024xbf16, #tpu.memory_space<vmem>>, %arg5: memref<4x1x1024xf32, #tpu.memory_space<vmem>>, %arg6: memref<8x1024xf32, #tpu.memory_space<vmem>>, %arg7: memref<8x128xf32, #tpu.memory_space<vmem>>) attributes {dimension_semantics = [#tpu.dimension_semantics<parallel>], iteration_bounds = array<i64: 1>, scalar_prefetch = 0 : i64, scratch_operands = 0 : i64, tpu.core_type = #tpu.core_type<tc>, window_params = [{transform_indices = @transform_0, window_bounds = array<i64: 8, 1024>}, {pipeline_mode = #tpu.pipeline_mode<synchronous>, transform_indices = @transform_1, window_bounds = array<i64: 4, 512, 128>}, {pipeline_mode = #tpu.pipeline_mode<synchronous>, transform_indices = @transform_2, window_bounds = array<i64: 4, 1, 128>}, {pipeline_mode = #tpu.pipeline_mode<synchronous>, transform_indices = @transform_3, window_bounds = array<i64: 4, 128, 1024>}, {pipeline_mode = #tpu.pipeline_mode<synchronous>, transform_indices = @transform_4, window_bounds = array<i64: 4, 1, 1024>}, {transform_indices = @transform_5, window_bounds = array<i64: 8, 1024>}, {transform_indices = @transform_6, window_bounds = array<i64: 8, 128>}]} {
    %c0 = arith.constant 0 : index
    %c0_0 = arith.constant 0 : index
    %0 = vector.load %arg1[%c0, %c0_0] : memref<8x1024xf32, #tpu.memory_space<vmem>>, vector<8x512xf32>
    %c0_1 = arith.constant 0 : index
    %c512 = arith.constant 512 : index
    %1 = vector.load %arg1[%c0_1, %c512] : memref<8x1024xf32, #tpu.memory_space<vmem>>, vector<8x512xf32>
    %cst = arith.constant 0.000000e+00 : f32
    %2 = vector.broadcast %cst : f32 to vector<8x1xf32>
    %c0_i32 = arith.constant 0 : i32
    %3 = arith.truncf %0 : vector<8x512xf32> to vector<8x512xbf16>
    %4 = arith.index_cast %c0_i32 : i32 to index
    %c0_2 = arith.constant 0 : index
    %c0_3 = arith.constant 0 : index
    %5 = vector.load %arg2[%4, %c0_2, %c0_3] : memref<4x512x128xbf16, #tpu.memory_space<vmem>>, vector<1x512x128xbf16>
    %6 = vector.shape_cast %5 : vector<1x512x128xbf16> to vector<512x128xbf16>
    %cst_4 = arith.constant dense<0.000000e+00> : vector<8x128xf32>
    %7 = tpu.matmul %3, %6, %cst_4 {dimension_numbers = #tpu.dot_dimension_numbers<[1], [0], [0], [1], [0, 0, 1, 1], [], []>} : vector<8x512xbf16>, vector<512x128xbf16>, vector<8x128xf32> -> vector<8x128xf32>
    %8 = arith.index_cast %c0_i32 : i32 to index
    %c0_5 = arith.constant 0 : index
    %c0_6 = arith.constant 0 : index
    %9 = vector.load %arg3[%8, %c0_5, %c0_6] : memref<4x1x128xf32, #tpu.memory_space<vmem>>, vector<1x1x128xf32>
    %10 = vector.shape_cast %9 : vector<1x1x128xf32> to vector<1x128xf32>
    %11 = vector.broadcast %10 : vector<1x128xf32> to vector<8x128xf32>
    %12 = arith.addf %7, %11 : vector<8x128xf32>
    %13 = math.tanh %12 : vector<8x128xf32>
    %14 = arith.truncf %13 : vector<8x128xf32> to vector<8x128xbf16>
    %15 = arith.index_cast %c0_i32 : i32 to index
    %c0_7 = arith.constant 0 : index
    %c0_8 = arith.constant 0 : index
    %16 = vector.load %arg4[%15, %c0_7, %c0_8] : memref<4x128x1024xbf16, #tpu.memory_space<vmem>>, vector<1x128x1024xbf16>
    %17 = vector.shape_cast %16 : vector<1x128x1024xbf16> to vector<128x1024xbf16>
    %cst_9 = arith.constant dense<0.000000e+00> : vector<8x1024xf32>
    %18 = tpu.matmul %14, %17, %cst_9 {dimension_numbers = #tpu.dot_dimension_numbers<[1], [0], [0], [1], [0, 0, 1, 1], [], []>} : vector<8x128xbf16>, vector<128x1024xbf16>, vector<8x1024xf32> -> vector<8x1024xf32>
    %19 = arith.index_cast %c0_i32 : i32 to index
    %c0_10 = arith.constant 0 : index
    %c0_11 = arith.constant 0 : index
    %20 = vector.load %arg5[%19, %c0_10, %c0_11] : memref<4x1x1024xf32, #tpu.memory_space<vmem>>, vector<1x1x1024xf32>
    %21 = vector.shape_cast %20 : vector<1x1x1024xf32> to vector<1x1024xf32>
    %22 = vector.broadcast %21 : vector<1x1024xf32> to vector<8x1024xf32>
    %23 = arith.addf %18, %22 : vector<8x1024xf32>
    %24 = vector.extract_strided_slice %23 {offsets = [0, 0], sizes = [8, 512], strides = [1, 1]} : vector<8x1024xf32> to vector<8x512xf32>
    %25 = math.tanh %24 : vector<8x512xf32>
    %26 = vector.extract_strided_slice %23 {offsets = [0, 512], sizes = [8, 512], strides = [1, 1]} : vector<8x1024xf32> to vector<8x512xf32>
    %27 = math.exp %25 : vector<8x512xf32>
    %28 = arith.mulf %1, %27 : vector<8x512xf32>
    %29 = arith.addf %28, %26 : vector<8x512xf32>
    %cst_12 = arith.constant dense<0.000000e+00> : vector<8xf32>
    %30 = vector.multi_reduction <add>, %25, %cst_12 [1] : vector<8x512xf32> to vector<8xf32>
    %31 = vector.shape_cast %30 : vector<8xf32> to vector<8x1xf32>
    %32 = arith.addf %2, %31 : vector<8x1xf32>
    %c1_i32 = arith.constant 1 : i32
    %33 = arith.truncf %29 : vector<8x512xf32> to vector<8x512xbf16>
    %34 = arith.index_cast %c1_i32 : i32 to index
    %c0_13 = arith.constant 0 : index
    %c0_14 = arith.constant 0 : index
    %35 = vector.load %arg2[%34, %c0_13, %c0_14] : memref<4x512x128xbf16, #tpu.memory_space<vmem>>, vector<1x512x128xbf16>
    %36 = vector.shape_cast %35 : vector<1x512x128xbf16> to vector<512x128xbf16>
    %cst_15 = arith.constant dense<0.000000e+00> : vector<8x128xf32>
    %37 = tpu.matmul %33, %36, %cst_15 {dimension_numbers = #tpu.dot_dimension_numbers<[1], [0], [0], [1], [0, 0, 1, 1], [], []>} : vector<8x512xbf16>, vector<512x128xbf16>, vector<8x128xf32> -> vector<8x128xf32>
    %38 = arith.index_cast %c1_i32 : i32 to index
    %c0_16 = arith.constant 0 : index
    %c0_17 = arith.constant 0 : index
    %39 = vector.load %arg3[%38, %c0_16, %c0_17] : memref<4x1x128xf32, #tpu.memory_space<vmem>>, vector<1x1x128xf32>
    %40 = vector.shape_cast %39 : vector<1x1x128xf32> to vector<1x128xf32>
    %41 = vector.broadcast %40 : vector<1x128xf32> to vector<8x128xf32>
    %42 = arith.addf %37, %41 : vector<8x128xf32>
    %43 = math.tanh %42 : vector<8x128xf32>
    %44 = arith.truncf %43 : vector<8x128xf32> to vector<8x128xbf16>
    %45 = arith.index_cast %c1_i32 : i32 to index
    %c0_18 = arith.constant 0 : index
    %c0_19 = arith.constant 0 : index
    %46 = vector.load %arg4[%45, %c0_18, %c0_19] : memref<4x128x1024xbf16, #tpu.memory_space<vmem>>, vector<1x128x1024xbf16>
    %47 = vector.shape_cast %46 : vector<1x128x1024xbf16> to vector<128x1024xbf16>
    %cst_20 = arith.constant dense<0.000000e+00> : vector<8x1024xf32>
    %48 = tpu.matmul %44, %47, %cst_20 {dimension_numbers = #tpu.dot_dimension_numbers<[1], [0], [0], [1], [0, 0, 1, 1], [], []>} : vector<8x128xbf16>, vector<128x1024xbf16>, vector<8x1024xf32> -> vector<8x1024xf32>
    %49 = arith.index_cast %c1_i32 : i32 to index
    %c0_21 = arith.constant 0 : index
    %c0_22 = arith.constant 0 : index
    %50 = vector.load %arg5[%49, %c0_21, %c0_22] : memref<4x1x1024xf32, #tpu.memory_space<vmem>>, vector<1x1x1024xf32>
    %51 = vector.shape_cast %50 : vector<1x1x1024xf32> to vector<1x1024xf32>
    %52 = vector.broadcast %51 : vector<1x1024xf32> to vector<8x1024xf32>
    %53 = arith.addf %48, %52 : vector<8x1024xf32>
    %54 = vector.extract_strided_slice %53 {offsets = [0, 0], sizes = [8, 512], strides = [1, 1]} : vector<8x1024xf32> to vector<8x512xf32>
    %55 = math.tanh %54 : vector<8x512xf32>
    %56 = vector.extract_strided_slice %53 {offsets = [0, 512], sizes = [8, 512], strides = [1, 1]} : vector<8x1024xf32> to vector<8x512xf32>
    %57 = math.exp %55 : vector<8x512xf32>
    %58 = arith.mulf %0, %57 : vector<8x512xf32>
    %59 = arith.addf %58, %56 : vector<8x512xf32>
    %cst_23 = arith.constant dense<0.000000e+00> : vector<8xf32>
    %60 = vector.multi_reduction <add>, %55, %cst_23 [1] : vector<8x512xf32> to vector<8xf32>
    %61 = vector.shape_cast %60 : vector<8xf32> to vector<8x1xf32>
    %62 = arith.addf %32, %61 : vector<8x1xf32>
    %c2_i32 = arith.constant 2 : i32
    %63 = arith.truncf %59 : vector<8x512xf32> to vector<8x512xbf16>
    %64 = arith.index_cast %c2_i32 : i32 to index
    %c0_24 = arith.constant 0 : index
    %c0_25 = arith.constant 0 : index
    %65 = vector.load %arg2[%64, %c0_24, %c0_25] : memref<4x512x128xbf16, #tpu.memory_space<vmem>>, vector<1x512x128xbf16>
    %66 = vector.shape_cast %65 : vector<1x512x128xbf16> to vector<512x128xbf16>
    %cst_26 = arith.constant dense<0.000000e+00> : vector<8x128xf32>
    %67 = tpu.matmul %63, %66, %cst_26 {dimension_numbers = #tpu.dot_dimension_numbers<[1], [0], [0], [1], [0, 0, 1, 1], [], []>} : vector<8x512xbf16>, vector<512x128xbf16>, vector<8x128xf32> -> vector<8x128xf32>
    %68 = arith.index_cast %c2_i32 : i32 to index
    %c0_27 = arith.constant 0 : index
    %c0_28 = arith.constant 0 : index
    %69 = vector.load %arg3[%68, %c0_27, %c0_28] : memref<4x1x128xf32, #tpu.memory_space<vmem>>, vector<1x1x128xf32>
    %70 = vector.shape_cast %69 : vector<1x1x128xf32> to vector<1x128xf32>
    %71 = vector.broadcast %70 : vector<1x128xf32> to vector<8x128xf32>
    %72 = arith.addf %67, %71 : vector<8x128xf32>
    %73 = math.tanh %72 : vector<8x128xf32>
    %74 = arith.truncf %73 : vector<8x128xf32> to vector<8x128xbf16>
    %75 = arith.index_cast %c2_i32 : i32 to index
    %c0_29 = arith.constant 0 : index
    %c0_30 = arith.constant 0 : index
    %76 = vector.load %arg4[%75, %c0_29, %c0_30] : memref<4x128x1024xbf16, #tpu.memory_space<vmem>>, vector<1x128x1024xbf16>
    %77 = vector.shape_cast %76 : vector<1x128x1024xbf16> to vector<128x1024xbf16>
    %cst_31 = arith.constant dense<0.000000e+00> : vector<8x1024xf32>
    %78 = tpu.matmul %74, %77, %cst_31 {dimension_numbers = #tpu.dot_dimension_numbers<[1], [0], [0], [1], [0, 0, 1, 1], [], []>} : vector<8x128xbf16>, vector<128x1024xbf16>, vector<8x1024xf32> -> vector<8x1024xf32>
    %79 = arith.index_cast %c2_i32 : i32 to index
    %c0_32 = arith.constant 0 : index
    %c0_33 = arith.constant 0 : index
    %80 = vector.load %arg5[%79, %c0_32, %c0_33] : memref<4x1x1024xf32, #tpu.memory_space<vmem>>, vector<1x1x1024xf32>
    %81 = vector.shape_cast %80 : vector<1x1x1024xf32> to vector<1x1024xf32>
    %82 = vector.broadcast %81 : vector<1x1024xf32> to vector<8x1024xf32>
    %83 = arith.addf %78, %82 : vector<8x1024xf32>
    %84 = vector.extract_strided_slice %83 {offsets = [0, 0], sizes = [8, 512], strides = [1, 1]} : vector<8x1024xf32> to vector<8x512xf32>
    %85 = math.tanh %84 : vector<8x512xf32>
    %86 = vector.extract_strided_slice %83 {offsets = [0, 512], sizes = [8, 512], strides = [1, 1]} : vector<8x1024xf32> to vector<8x512xf32>
    %87 = math.exp %85 : vector<8x512xf32>
    %88 = arith.mulf %29, %87 : vector<8x512xf32>
    %89 = arith.addf %88, %86 : vector<8x512xf32>
    %cst_34 = arith.constant dense<0.000000e+00> : vector<8xf32>
    %90 = vector.multi_reduction <add>, %85, %cst_34 [1] : vector<8x512xf32> to vector<8xf32>
    %91 = vector.shape_cast %90 : vector<8xf32> to vector<8x1xf32>
    %92 = arith.addf %62, %91 : vector<8x1xf32>
    %c3_i32 = arith.constant 3 : i32
    %93 = arith.truncf %89 : vector<8x512xf32> to vector<8x512xbf16>
    %94 = arith.index_cast %c3_i32 : i32 to index
    %c0_35 = arith.constant 0 : index
    %c0_36 = arith.constant 0 : index
    %95 = vector.load %arg2[%94, %c0_35, %c0_36] : memref<4x512x128xbf16, #tpu.memory_space<vmem>>, vector<1x512x128xbf16>
    %96 = vector.shape_cast %95 : vector<1x512x128xbf16> to vector<512x128xbf16>
    %cst_37 = arith.constant dense<0.000000e+00> : vector<8x128xf32>
    %97 = tpu.matmul %93, %96, %cst_37 {dimension_numbers = #tpu.dot_dimension_numbers<[1], [0], [0], [1], [0, 0, 1, 1], [], []>} : vector<8x512xbf16>, vector<512x128xbf16>, vector<8x128xf32> -> vector<8x128xf32>
    %98 = arith.index_cast %c3_i32 : i32 to index
    %c0_38 = arith.constant 0 : index
    %c0_39 = arith.constant 0 : index
    %99 = vector.load %arg3[%98, %c0_38, %c0_39] : memref<4x1x128xf32, #tpu.memory_space<vmem>>, vector<1x1x128xf32>
    %100 = vector.shape_cast %99 : vector<1x1x128xf32> to vector<1x128xf32>
    %101 = vector.broadcast %100 : vector<1x128xf32> to vector<8x128xf32>
    %102 = arith.addf %97, %101 : vector<8x128xf32>
    %103 = math.tanh %102 : vector<8x128xf32>
    %104 = arith.truncf %103 : vector<8x128xf32> to vector<8x128xbf16>
    %105 = arith.index_cast %c3_i32 : i32 to index
    %c0_40 = arith.constant 0 : index
    %c0_41 = arith.constant 0 : index
    %106 = vector.load %arg4[%105, %c0_40, %c0_41] : memref<4x128x1024xbf16, #tpu.memory_space<vmem>>, vector<1x128x1024xbf16>
    %107 = vector.shape_cast %106 : vector<1x128x1024xbf16> to vector<128x1024xbf16>
    %cst_42 = arith.constant dense<0.000000e+00> : vector<8x1024xf32>
    %108 = tpu.matmul %104, %107, %cst_42 {dimension_numbers = #tpu.dot_dimension_numbers<[1], [0], [0], [1], [0, 0, 1, 1], [], []>} : vector<8x128xbf16>, vector<128x1024xbf16>, vector<8x1024xf32> -> vector<8x1024xf32>
    %109 = arith.index_cast %c3_i32 : i32 to index
    %c0_43 = arith.constant 0 : index
    %c0_44 = arith.constant 0 : index
    %110 = vector.load %arg5[%109, %c0_43, %c0_44] : memref<4x1x1024xf32, #tpu.memory_space<vmem>>, vector<1x1x1024xf32>
    %111 = vector.shape_cast %110 : vector<1x1x1024xf32> to vector<1x1024xf32>
    %112 = vector.broadcast %111 : vector<1x1024xf32> to vector<8x1024xf32>
    %113 = arith.addf %108, %112 : vector<8x1024xf32>
    %114 = vector.extract_strided_slice %113 {offsets = [0, 0], sizes = [8, 512], strides = [1, 1]} : vector<8x1024xf32> to vector<8x512xf32>
    %115 = math.tanh %114 : vector<8x512xf32>
    %116 = vector.extract_strided_slice %113 {offsets = [0, 512], sizes = [8, 512], strides = [1, 1]} : vector<8x1024xf32> to vector<8x512xf32>
    %117 = math.exp %115 : vector<8x512xf32>
    %118 = arith.mulf %59, %117 : vector<8x512xf32>
    %119 = arith.addf %118, %116 : vector<8x512xf32>
    %cst_45 = arith.constant dense<0.000000e+00> : vector<8xf32>
    %120 = vector.multi_reduction <add>, %115, %cst_45 [1] : vector<8x512xf32> to vector<8xf32>
    %121 = vector.shape_cast %120 : vector<8xf32> to vector<8x1xf32>
    %122 = arith.addf %92, %121 : vector<8x1xf32>
    %c4_i32 = arith.constant 4 : i32
    %c0_46 = arith.constant 0 : index
    %c0_47 = arith.constant 0 : index
    %123 = vector.load %arg6[%c0_46, %c0_47] : memref<8x1024xf32, #tpu.memory_space<vmem>>, vector<8x512xf32>
    tpu.vector_store %arg6[%c0_46, %c0_47], %119 {strides = array<i32>} : memref<8x1024xf32, #tpu.memory_space<vmem>>, vector<8x512xf32>,
    %c0_48 = arith.constant 0 : index
    %c512_49 = arith.constant 512 : index
    %124 = vector.load %arg6[%c0_48, %c512_49] : memref<8x1024xf32, #tpu.memory_space<vmem>>, vector<8x512xf32>
    tpu.vector_store %arg6[%c0_48, %c512_49], %89 {strides = array<i32>} : memref<8x1024xf32, #tpu.memory_space<vmem>>, vector<8x512xf32>,
    %125 = vector.shape_cast %122 : vector<8x1xf32> to vector<8x1xf32>
    %126 = vector.broadcast %125 : vector<8x1xf32> to vector<8x128xf32>
    %c0_50 = arith.constant 0 : index
    %c0_51 = arith.constant 0 : index
    %127 = vector.load %arg7[%c0_50, %c0_51] : memref<8x128xf32, #tpu.memory_space<vmem>>, vector<8x128xf32>
    tpu.vector_store %arg7[%c0_50, %c0_51], %126 {strides = array<i32>} : memref<8x128xf32, #tpu.memory_space<vmem>>, vector<8x128xf32>,
    return
  }
  func.func @transform_0(%arg0: i32) -> (i32, i32) {
    %c0_i32 = arith.constant 0 : i32
    %c0_i32_0 = arith.constant 0 : i32
    return %arg0, %c0_i32 : i32, i32
  }
  func.func @transform_1(%arg0: i32) -> (i32, i32, i32) {
    %c0_i32 = arith.constant 0 : i32
    %c0_i32_0 = arith.constant 0 : i32
    %c0_i32_1 = arith.constant 0 : i32
    %c0_i32_2 = arith.constant 0 : i32
    return %c0_i32, %c0_i32_0, %c0_i32_1 : i32, i32, i32
  }
  func.func @transform_2(%arg0: i32) -> (i32, i32, i32) {
    %c0_i32 = arith.constant 0 : i32
    %c0_i32_0 = arith.constant 0 : i32
    %c0_i32_1 = arith.constant 0 : i32
    %c0_i32_2 = arith.constant 0 : i32
    return %c0_i32, %c0_i32_0, %c0_i32_1 : i32, i32, i32
  }
  func.func @transform_3(%arg0: i32) -> (i32, i32, i32) {
    %c0_i32 = arith.constant 0 : i32
    %c0_i32_0 = arith.constant 0 : i32
    %c0_i32_1 = arith.constant 0 : i32
    %c0_i32_2 = arith.constant 0 : i32
    return %c0_i32, %c0_i32_0, %c0_i32_1 : i32, i32, i32
  }
  func.func @transform_4(%arg0: i32) -> (i32, i32, i32) {
    %c0_i32 = arith.constant 0 : i32
    %c0_i32_0 = arith.constant 0 : i32
    %c0_i32_1 = arith.constant 0 : i32
    %c0_i32_2 = arith.constant 0 : i32
    return %c0_i32, %c0_i32_0, %c0_i32_1 : i32, i32, i32
  }
  func.func @transform_5(%arg0: i32) -> (i32, i32) {
    %c0_i32 = arith.constant 0 : i32
    %c0_i32_0 = arith.constant 0 : i32
    return %arg0, %c0_i32 : i32, i32
  }
  func.func @transform_6(%arg0: i32) -> (i32, i32) {
    %c0_i32 = arith.constant 0 : i32
    %c0_i32_0 = arith.constant 0 : i32
    return %arg0, %c0_i32 : i32, i32
  }
}

</mosaic_0001>

<llo_original>
// kernel: tpu_custom_call.1
$region0: #{tpu_custom_call.1}
  #allocation0 [shape = 'u32[]', space=smem, size = 0x4, offset = 0x4, fixed_abs, tag = 'smem constant byte address 0x4 - core index']
  #allocation1 [shape = 'u32[144,128]{1,0:T(1,128)}', space=vmem, size = 0x12000, scoped, tag = 'internal scratch']
  %s0 = inlined_call_operand.hbm [shape: f32[8,1024], index: 0, kind: input, shape index: {}]
  %s1 = inlined_call_operand.hbm [shape: bf16[4,512,128], index: 1, kind: input, shape index: {}]
  %s2 = inlined_call_operand.vmem [shape: f32[4,1,128], index: 2, kind: input, shape index: {}]
  %s3 = inlined_call_operand.hbm [shape: bf16[4,128,1024], index: 3, kind: input, shape index: {}]
  %s4 = inlined_call_operand.hbm [shape: f32[4,1,1024], index: 4, kind: input, shape index: {}]
  %s5 = inlined_call_operand.hbm [shape: f32[8,1024], index: 5, kind: output, shape index: {0}]
  %s6 = inlined_call_operand.hbm [shape: f32[8,128], index: 6, kind: output, shape index: {1}]
  %7 = xla_tuple %s5, %s6
  %s8 = sld [smem:[#allocation0]]
  $region54: #{tpu_custom_call.1} parent=0
    _
  %s10 = ssub.s32 1, %s8
  %s11 = scalar_select 0, %s10, %s8
  $region1: #{tpu_custom_call.1} parent=0
    #allocation2 [shape = 'u8[32768]{0}', space=vmem, size = 0x8000, scoped, tag = 'input window, operand 0, single buffered']
    #allocation3 [shape = 's32[1]{0}', space=sflag, size = 0x4, scoped, tag = 'scoped memory for tpu_custom_call.1']
    #allocation4 [shape = 's32[1]{0}', space=sflag, size = 0x4, scoped, tag = 'scoped memory for tpu_custom_call.1']
    #allocation5 [shape = 'u8[524288]{0}', space=vmem, size = 0x80000, scoped, tag = 'input window, operand 1, single buffered']
    #allocation6 [shape = 's32[1]{0}', space=sflag, size = 0x4, scoped, tag = 'scoped memory for tpu_custom_call.1']
    #allocation7 [shape = 'u8[1048576]{0}', space=vmem, size = 0x100000, scoped, tag = 'input window, operand 3, single buffered']
    #allocation8 [shape = 'u8[16384]{0}', space=vmem, size = 0x4000, scoped, tag = 'input window, operand 4, single buffered']
    #allocation9 [shape = 's32[1]{0}', space=sflag, size = 0x4, scoped, tag = 'scoped memory for tpu_custom_call.1']
    #allocation10 [shape = 'u8[32768]{0}', space=vmem, size = 0x8000, scoped, tag = 'output window, operand 0, single buffered']
    #allocation11 [shape = 'u8[4096]{0}', space=vmem, size = 0x1000, scoped, tag = 'output window, operand 1, single buffered']
    #allocation12 [shape = 's32[1]{0}', space=sflag, size = 0x4, scoped, tag = 'scoped memory for tpu_custom_call.1']
    %12 = vsyncpa [#allocation3], 0
    %13 = vsyncpa [#allocation6], 0
    %14 = vsyncpa [#allocation9], 0
    %15 = vsyncpa [#allocation4], 0
    %16 = vsyncpa [#allocation12], 0
    // Predicated region
    $region2: #{tpu_custom_call.1} parent=1 // pred_check
      _
    $region3: #{tpu_custom_call.1} parent=1 // pred_check_branch
      %18 = sbr.rel (0) target = $region5
    $region4: #{tpu_custom_call.1} parent=1 // pred_region
      %s20 = ssub.s32 1024, 1024
      %21 = vsyncadd [#allocation3], %s20
      %s23 = sshll.u32 [#allocation2], 4
      %s24 = int_to_ptr.vmem [resolvable:$true] %s23
      %26 = dma.hbm_to_vmem [thread:$0]  %s0, 1024, %s24, [#allocation3]
    $region5: #{tpu_custom_call.1} parent=1 // pred_fallthru
      _
    // Predicated region
    $region6: #{tpu_custom_call.1} parent=1 // pred_check
      _
    $region7: #{tpu_custom_call.1} parent=1 // pred_check_branch
      %28 = sbr.rel (0) target = $region9
    $region8: #{tpu_custom_call.1} parent=1 // pred_region
      %s30 = ssub.s32 16384, 16384
      %31 = vsyncadd [#allocation6], %s30
      %s32 = sshll.u32 [#allocation5], 4
      %s33 = int_to_ptr.vmem [resolvable:$true] %s32
      %38 = dma.hbm_to_vmem [thread:$0]  %s1, 16384, %s33, [#allocation6], 64, 64, 4
    $region9: #{tpu_custom_call.1} parent=1 // pred_fallthru
      _
    // Predicated region
    $region10: #{tpu_custom_call.1} parent=1 // pred_check
      _
    $region11: #{tpu_custom_call.1} parent=1 // pred_check_branch
      %40 = sbr.rel (0) target = $region13
    $region12: #{tpu_custom_call.1} parent=1 // pred_region
      _
    $region13: #{tpu_custom_call.1} parent=1 // pred_fallthru
      _
    // Predicated region
    $region14: #{tpu_custom_call.1} parent=1 // pred_check
      _
    $region15: #{tpu_custom_call.1} parent=1 // pred_check_branch
      %42 = sbr.rel (0) target = $region17
    $region16: #{tpu_custom_call.1} parent=1 // pred_region
      %s44 = ssub.s32 32768, 32768
      %45 = vsyncadd [#allocation6], %s44
      %s46 = sshll.u32 [#allocation7], 4
      %s47 = int_to_ptr.vmem [resolvable:$true] %s46
      %52 = dma.hbm_to_vmem [thread:$0]  %s3, 32768, %s47, [#allocation6], 512, 512, 32
    $region17: #{tpu_custom_call.1} parent=1 // pred_fallthru
      _
    // Predicated region
    $region18: #{tpu_custom_call.1} parent=1 // pred_check
      _
    $region19: #{tpu_custom_call.1} parent=1 // pred_check_branch
      %54 = sbr.rel (0) target = $region21
    $region20: #{tpu_custom_call.1} parent=1 // pred_region
      %s56 = ssub.s32 512, 512
      %57 = vsyncadd [#allocation9], %s56
      %s58 = sshll.u32 [#allocation8], 4
      %s59 = int_to_ptr.vmem [resolvable:$true] %s58
      %64 = dma.hbm_to_vmem [thread:$0]  %s4, 512, %s59, [#allocation9], 128, 128, 8
    $region21: #{tpu_custom_call.1} parent=1 // pred_fallthru
      _
    // Predicated region
    $region22: #{tpu_custom_call.1} parent=1 // pred_check
      _
    $region23: #{tpu_custom_call.1} parent=1 // pred_check_branch
      %66 = sbr.rel (0) target = $region25
    $region24: #{tpu_custom_call.1} parent=1 // pred_region
      %67 = dma.done [#allocation3], 1024
    $region25: #{tpu_custom_call.1} parent=1 // pred_fallthru
      _
    // Predicated region
    $region26: #{tpu_custom_call.1} parent=1 // pred_check
      _
    $region27: #{tpu_custom_call.1} parent=1 // pred_check_branch
      %69 = sbr.rel (0) target = $region29
    $region28: #{tpu_custom_call.1} parent=1 // pred_region
      %70 = dma.done [#allocation6], 16384
    $region29: #{tpu_custom_call.1} parent=1 // pred_fallthru
      _
    // Predicated region
    $region30: #{tpu_custom_call.1} parent=1 // pred_check
      _
    $region31: #{tpu_custom_call.1} parent=1 // pred_check_branch
      %72 = sbr.rel (0) target = $region33
    $region32: #{tpu_custom_call.1} parent=1 // pred_region
      %73 = dma.done [#allocation6], 32768
    $region33: #{tpu_custom_call.1} parent=1 // pred_fallthru
      _
    // Predicated region
    $region34: #{tpu_custom_call.1} parent=1 // pred_check
      _
    $region35: #{tpu_custom_call.1} parent=1 // pred_check_branch
      %75 = sbr.rel (0) target = $region37
    $region36: #{tpu_custom_call.1} parent=1 // pred_region
      %76 = dma.done [#allocation9], 512
    $region37: #{tpu_custom_call.1} parent=1 // pred_fallthru
      _
    %v78 = vld [vmem:[#allocation2] sm:$0xff]
    %v79 = vld [vmem:[#allocation2 + $0x8] sm:$0xff]
    %v80 = vld [vmem:[#allocation2 + $0x10] sm:$0xff]
    %v81 = vld [vmem:[#allocation2 + $0x18] sm:$0xff]
    %v82 = vld [vmem:[#allocation2 + $0x20] sm:$0xff]
    %v83 = vld [vmem:[#allocation2 + $0x28] sm:$0xff]
    %v84 = vld [vmem:[#allocation2 + $0x30] sm:$0xff]
    %v85 = vld [vmem:[#allocation2 + $0x38] sm:$0xff]
    %v86 = vpack.c.bf16 %v78, %v78
    %v87 = vpack.c.bf16 %v79, %v79
    %v88 = vpack.c.bf16 %v80, %v80
    %v89 = vpack.c.bf16 %v81, %v81
    %v90 = vld [vmem:[#allocation5] sm:$0xf]
    %v91 = vld [vmem:[#allocation5 + $0x4] sm:$0xf]
    %v92 = vld [vmem:[#allocation5 + $0x8] sm:$0xf]
    %v93 = vld [vmem:[#allocation5 + $0xc] sm:$0xf]
    %v94 = vld [vmem:[#allocation5 + $0x10] sm:$0xf]
    %v95 = vld [vmem:[#allocation5 + $0x14] sm:$0xf]
    %v96 = vld [vmem:[#allocation5 + $0x18] sm:$0xf]
    %v97 = vld [vmem:[#allocation5 + $0x1c] sm:$0xf]
    %v98 = vld [vmem:[#allocation5 + $0x20] sm:$0xf]
    %v99 = vld [vmem:[#allocation5 + $0x24] sm:$0xf]
    %v100 = vld [vmem:[#allocation5 + $0x28] sm:$0xf]
    %v101 = vld [vmem:[#allocation5 + $0x2c] sm:$0xf]
    %v102 = vld [vmem:[#allocation5 + $0x30] sm:$0xf]
    %v103 = vld [vmem:[#allocation5 + $0x34] sm:$0xf]
    %v104 = vld [vmem:[#allocation5 + $0x38] sm:$0xf]
    %v105 = vld [vmem:[#allocation5 + $0x3c] sm:$0xf]
    %v106 = vld [vmem:[#allocation5 + $0x40] sm:$0xf]
    %v107 = vld [vmem:[#allocation5 + $0x44] sm:$0xf]
    %v108 = vld [vmem:[#allocation5 + $0x48] sm:$0xf]
    %v109 = vld [vmem:[#allocation5 + $0x4c] sm:$0xf]
    %v110 = vld [vmem:[#allocation5 + $0x50] sm:$0xf]
    %v111 = vld [vmem:[#allocation5 + $0x54] sm:$0xf]
    %v112 = vld [vmem:[#allocation5 + $0x58] sm:$0xf]
    %v113 = vld [vmem:[#allocation5 + $0x5c] sm:$0xf]
    %v114 = vld [vmem:[#allocation5 + $0x60] sm:$0xf]
    %v115 = vld [vmem:[#allocation5 + $0x64] sm:$0xf]
    %v116 = vld [vmem:[#allocation5 + $0x68] sm:$0xf]
    %v117 = vld [vmem:[#allocation5 + $0x6c] sm:$0xf]
    %v118 = vld [vmem:[#allocation5 + $0x70] sm:$0xf]
    %v119 = vld [vmem:[#allocation5 + $0x74] sm:$0xf]
    %v120 = vld [vmem:[#allocation5 + $0x78] sm:$0xf]
    %v121 = vld [vmem:[#allocation5 + $0x7c] sm:$0xf]
    %v122 = vld [vmem:[#allocation5 + $0x80] sm:$0xf]
    %v123 = vld [vmem:[#allocation5 + $0x84] sm:$0xf]
    %v124 = vld [vmem:[#allocation5 + $0x88] sm:$0xf]
    %v125 = vld [vmem:[#allocation5 + $0x8c] sm:$0xf]
    %v126 = vld [vmem:[#allocation5 + $0x90] sm:$0xf]
    %v127 = vld [vmem:[#allocation5 + $0x94] sm:$0xf]
    %v128 = vld [vmem:[#allocation5 + $0x98] sm:$0xf]
    %v129 = vld [vmem:[#allocation5 + $0x9c] sm:$0xf]
    %v130 = vld [vmem:[#allocation5 + $0xa0] sm:$0xf]
    %v131 = vld [vmem:[#allocation5 + $0xa4] sm:$0xf]
    %v132 = vld [vmem:[#allocation5 + $0xa8] sm:$0xf]
    %v133 = vld [vmem:[#allocation5 + $0xac] sm:$0xf]
    %v134 = vld [vmem:[#allocation5 + $0xb0] sm:$0xf]
    %v135 = vld [vmem:[#allocation5 + $0xb4] sm:$0xf]
    %v136 = vld [vmem:[#allocation5 + $0xb8] sm:$0xf]
    %v137 = vld [vmem:[#allocation5 + $0xbc] sm:$0xf]
    %v138 = vld [vmem:[#allocation5 + $0xc0] sm:$0xf]
    %v139 = vld [vmem:[#allocation5 + $0xc4] sm:$0xf]
    %v140 = vld [vmem:[#allocation5 + $0xc8] sm:$0xf]
    %v141 = vld [vmem:[#allocation5 + $0xcc] sm:$0xf]
    %v142 = vld [vmem:[#allocation5 + $0xd0] sm:$0xf]
    %v143 = vld [vmem:[#allocation5 + $0xd4] sm:$0xf]
    %v144 = vld [vmem:[#allocation5 + $0xd8] sm:$0xf]
    %v145 = vld [vmem:[#allocation5 + $0xdc] sm:$0xf]
    %v146 = vld [vmem:[#allocation5 + $0xe0] sm:$0xf]
    %v147 = vld [vmem:[#allocation5 + $0xe4] sm:$0xf]
    %v148 = vld [vmem:[#allocation5 + $0xe8] sm:$0xf]
    %v149 = vld [vmem:[#allocation5 + $0xec] sm:$0xf]
    %v150 = vld [vmem:[#allocation5 + $0xf0] sm:$0xf]
    %v151 = vld [vmem:[#allocation5 + $0xf4] sm:$0xf]
    %v152 = vld [vmem:[#allocation5 + $0xf8] sm:$0xf]
    %v153 = vld [vmem:[#allocation5 + $0xfc] sm:$0xf]
    %v154 = vld [vmem:[%s2] sm:$0x1]
    %v156 = vlaneseq
    %v157 = vshrl.u32 %v156, 7
    %v158 = vsub.s32 0, %v157
    %v159 = vrot.slane %v154, %v158
    %v225 = vunpack.c.l.b16 %v90
    %v226 = vunpack.c.l.b16 %v91
    %v227 = vunpack.c.l.b16 %v92
    %v228 = vunpack.c.l.b16 %v93
    %v229 = vunpack.c.l.b16 %v94
    %v230 = vunpack.c.l.b16 %v95
    %v231 = vunpack.c.l.b16 %v96
    %v232 = vunpack.c.l.b16 %v97
    %v233 = vunpack.c.l.b16 %v98
    %v234 = vunpack.c.l.b16 %v99
    %v235 = vunpack.c.l.b16 %v100
    %v236 = vunpack.c.l.b16 %v101
    %v237 = vunpack.c.l.b16 %v102
    %v238 = vunpack.c.l.b16 %v103
    %v239 = vunpack.c.l.b16 %v104
    %v240 = vunpack.c.l.b16 %v105
    %v241 = vunpack.c.l.b16 %v106
    %v242 = vunpack.c.l.b16 %v107
    %v243 = vunpack.c.l.b16 %v108
    %v244 = vunpack.c.l.b16 %v109
    %v245 = vunpack.c.l.b16 %v110
    %v246 = vunpack.c.l.b16 %v111
    %v247 = vunpack.c.l.b16 %v112
    %v248 = vunpack.c.l.b16 %v113
    %v249 = vunpack.c.l.b16 %v114
    %v250 = vunpack.c.l.b16 %v115
    %v251 = vunpack.c.l.b16 %v116
    %v252 = vunpack.c.l.b16 %v117
    %v253 = vunpack.c.l.b16 %v118
    %v254 = vunpack.c.l.b16 %v119
    %v255 = vunpack.c.l.b16 %v120
    %v256 = vunpack.c.l.b16 %v121
    %v257 = vunpack.c.l.b16 %v122
    %v258 = vunpack.c.l.b16 %v123
    %v259 = vunpack.c.l.b16 %v124
    %v260 = vunpack.c.l.b16 %v125
    %v261 = vunpack.c.l.b16 %v126
    %v262 = vunpack.c.l.b16 %v127
    %v263 = vunpack.c.l.b16 %v128
    %v264 = vunpack.c.l.b16 %v129
    %v265 = vunpack.c.l.b16 %v130
    %v266 = vunpack.c.l.b16 %v131
    %v267 = vunpack.c.l.b16 %v132
    %v268 = vunpack.c.l.b16 %v133
    %v269 = vunpack.c.l.b16 %v134
    %v270 = vunpack.c.l.b16 %v135
    %v271 = vunpack.c.l.b16 %v136
    %v272 = vunpack.c.l.b16 %v137
    %v273 = vunpack.c.l.b16 %v138
    %v274 = vunpack.c.l.b16 %v139
    %v275 = vunpack.c.l.b16 %v140
    %v276 = vunpack.c.l.b16 %v141
    %v277 = vunpack.c.l.b16 %v142
    %v278 = vunpack.c.l.b16 %v143
    %v279 = vunpack.c.l.b16 %v144
    %v280 = vunpack.c.l.b16 %v145
    %v281 = vunpack.c.l.b16 %v146
    %v282 = vunpack.c.l.b16 %v147
    %v283 = vunpack.c.l.b16 %v148
    %v284 = vunpack.c.l.b16 %v149
    %v285 = vunpack.c.l.b16 %v150
    %v286 = vunpack.c.l.b16 %v151
    %v287 = vunpack.c.l.b16 %v152
    %v288 = vunpack.c.l.b16 %v153
    %v289 = vpack.c.b16 %v226, %v225
    %v290 = vpack.c.b16 %v228, %v227
    %v291 = vpack.c.b16 %v230, %v229
    %v292 = vpack.c.b16 %v232, %v231
    %v293 = vpack.c.b16 %v234, %v233
    %v294 = vpack.c.b16 %v236, %v235
    %v295 = vpack.c.b16 %v238, %v237
    %v296 = vpack.c.b16 %v240, %v239
    %v297 = vpack.c.b16 %v242, %v241
    %v298 = vpack.c.b16 %v244, %v243
    %v299 = vpack.c.b16 %v246, %v245
    %v300 = vpack.c.b16 %v248, %v247
    %v301 = vpack.c.b16 %v250, %v249
    %v302 = vpack.c.b16 %v252, %v251
    %v303 = vpack.c.b16 %v254, %v253
    %v304 = vpack.c.b16 %v256, %v255
    %v305 = vpack.c.b16 %v258, %v257
    %v306 = vpack.c.b16 %v260, %v259
    %v307 = vpack.c.b16 %v262, %v261
    %v308 = vpack.c.b16 %v264, %v263
    %v309 = vpack.c.b16 %v266, %v265
    %v310 = vpack.c.b16 %v268, %v267
    %v311 = vpack.c.b16 %v270, %v269
    %v312 = vpack.c.b16 %v272, %v271
    %v313 = vpack.c.b16 %v274, %v273
    %v314 = vpack.c.b16 %v276, %v275
    %v315 = vpack.c.b16 %v278, %v277
    %v316 = vpack.c.b16 %v280, %v279
    %v317 = vpack.c.b16 %v282, %v281
    %v318 = vpack.c.b16 %v284, %v283
    %v319 = vpack.c.b16 %v286, %v285
    %v320 = vpack.c.b16 %v288, %v287
    %353 = vmatprep.subr.bf16.mxu0 0
    %354 = vmatpush1.bf16.msra.mxu0 %v289
    %355 = vmatprep.subr.bf16.mxu0 0
    %356 = vmatpush1.bf16.msra.mxu0 %v290
    %357 = vmatprep.subr.bf16.mxu0 0
    %358 = vmatpush1.bf16.msra.mxu0 %v291
    %359 = vmatprep.subr.bf16.mxu0 0
    %360 = vmatpush1.bf16.msra.mxu0 %v292
    %361 = vmatprep.subr.bf16.mxu0 0
    %362 = vmatpush1.bf16.msra.mxu0 %v293
    %363 = vmatprep.subr.bf16.mxu0 0
    %364 = vmatpush1.bf16.msra.mxu0 %v294
    %365 = vmatprep.subr.bf16.mxu0 0
    %366 = vmatpush1.bf16.msra.mxu0 %v295
    %367 = vmatprep.subr.bf16.mxu0 0
    %368 = vmatpush1.bf16.msra.mxu0 %v296
    %369 = vmatprep.subr.bf16.mxu0 0
    %370 = vmatpush1.bf16.msra.mxu0 %v297
    %371 = vmatprep.subr.bf16.mxu0 0
    %372 = vmatpush1.bf16.msra.mxu0 %v298
    %373 = vmatprep.subr.bf16.mxu0 0
    %374 = vmatpush1.bf16.msra.mxu0 %v299
    %375 = vmatprep.subr.bf16.mxu0 0
    %376 = vmatpush1.bf16.msra.mxu0 %v300
    %377 = vmatprep.subr.bf16.mxu0 0
    %378 = vmatpush1.bf16.msra.mxu0 %v301
    %379 = vmatprep.subr.bf16.mxu0 0
    %380 = vmatpush1.bf16.msra.mxu0 %v302
    %381 = vmatprep.subr.bf16.mxu0 0
    %382 = vmatpush1.bf16.msra.mxu0 %v303
    %383 = vmatprep.subr.bf16.mxu0 0
    %384 = vmatpush1.bf16.msra.mxu0 %v304
    %385 = vmatprep.mubr.bf16.mxu0 %v87
    %386 = vmatmul.mubr.bf16.gmra.mrb[0].mxu0 %v86
    %v387 = vpop.f32.mrb[0].mxu0
    %v388 = vadd.f32 %v159, %v387
    %v389 = vpop.f32.mrb[0].mxu0
    %v390 = vpop.f32.mrb[0].mxu0
    %v391 = vpop.f32.mrb[0].mxu0
    %392 = vdwg.mxu0
    %393 = vmatprep.subr.bf16.mxu0 0
    %394 = vmatpush1.bf16.msra.mxu0 %v305
    %395 = vmatprep.subr.bf16.mxu0 0
    %396 = vmatpush1.bf16.msra.mxu0 %v306
    %397 = vmatprep.subr.bf16.mxu0 0
    %398 = vmatpush1.bf16.msra.mxu0 %v307
    %399 = vmatprep.subr.bf16.mxu0 0
    %400 = vmatpush1.bf16.msra.mxu0 %v308
    %401 = vmatprep.subr.bf16.mxu0 0
    %402 = vmatpush1.bf16.msra.mxu0 %v309
    %403 = vmatprep.subr.bf16.mxu0 0
    %404 = vmatpush1.bf16.msra.mxu0 %v310
    %405 = vmatprep.subr.bf16.mxu0 0
    %406 = vmatpush1.bf16.msra.mxu0 %v311
    %407 = vmatprep.subr.bf16.mxu0 0
    %408 = vmatpush1.bf16.msra.mxu0 %v312
    %409 = vmatprep.subr.bf16.mxu0 0
    %410 = vmatpush1.bf16.msra.mxu0 %v313
    %411 = vmatprep.subr.bf16.mxu0 0
    %412 = vmatpush1.bf16.msra.mxu0 %v314
    %413 = vmatprep.subr.bf16.mxu0 0
    %414 = vmatpush1.bf16.msra.mxu0 %v315
    %415 = vmatprep.subr.bf16.mxu0 0
    %416 = vmatpush1.bf16.msra.mxu0 %v316
    %417 = vmatprep.subr.bf16.mxu0 0
    %418 = vmatpush1.bf16.msra.mxu0 %v317
    %419 = vmatprep.subr.bf16.mxu0 0
    %420 = vmatpush1.bf16.msra.mxu0 %v318
    %421 = vmatprep.subr.bf16.mxu0 0
    %422 = vmatpush1.bf16.msra.mxu0 %v319
    %423 = vmatprep.subr.bf16.mxu0 0
    %424 = vmatpush1.bf16.msra.mxu0 %v320
    %425 = vmatprep.mubr.bf16.mxu0 %v89
    %426 = vmatmul.mubr.bf16.gmra.mrb[0].mxu0 %v88
    %v427 = vpop.f32.mrb[0].mxu0
    %v428 = vadd.f32 %v388, %v427
    %v429 = vpop.f32.mrb[0].mxu0
    %v430 = vpop.f32.mrb[0].mxu0
    %v431 = vpop.f32.mrb[0].mxu0
    %432 = vdwg.mxu0
    %v433 = vtanh.pop %v428
    %v434 = vpack.c.bf16 %v433, %v433
    %v435 = vld [vmem:[#allocation7] sm:$0xff]
    %v436 = vld [vmem:[#allocation7 + $0x8] sm:$0xff]
    %v437 = vld [vmem:[#allocation7 + $0x10] sm:$0xff]
    %v438 = vld [vmem:[#allocation7 + $0x18] sm:$0xff]
    %v439 = vld [vmem:[#allocation7 + $0x20] sm:$0xff]
    %v440 = vld [vmem:[#allocation7 + $0x28] sm:$0xff]
    %v441 = vld [vmem:[#allocation7 + $0x30] sm:$0xff]
    %v442 = vld [vmem:[#allocation7 + $0x38] sm:$0xff]
    %v443 = vld [vmem:[#allocation7 + $0x40] sm:$0xff]
    %v444 = vld [vmem:[#allocation7 + $0x48] sm:$0xff]
    %v445 = vld [vmem:[#allocation7 + $0x50] sm:$0xff]
    %v446 = vld [vmem:[#allocation7 + $0x58] sm:$0xff]
    %v447 = vld [vmem:[#allocation7 + $0x60] sm:$0xff]
    %v448 = vld [vmem:[#allocation7 + $0x68] sm:$0xff]
    %v449 = vld [vmem:[#allocation7 + $0x70] sm:$0xff]
    %v450 = vld [vmem:[#allocation7 + $0x78] sm:$0xff]
    %v451 = vld [vmem:[#allocation7 + $0x80] sm:$0xff]
    %v452 = vld [vmem:[#allocation7 + $0x88] sm:$0xff]
    %v453 = vld [vmem:[#allocation7 + $0x90] sm:$0xff]
    %v454 = vld [vmem:[#allocation7 + $0x98] sm:$0xff]
    %v455 = vld [vmem:[#allocation7 + $0xa0] sm:$0xff]
    %v456 = vld [vmem:[#allocation7 + $0xa8] sm:$0xff]
    %v457 = vld [vmem:[#allocation7 + $0xb0] sm:$0xff]
    %v458 = vld [vmem:[#allocation7 + $0xb8] sm:$0xff]
    %v459 = vld [vmem:[#allocation7 + $0xc0] sm:$0xff]
    %v460 = vld [vmem:[#allocation7 + $0xc8] sm:$0xff]
    %v461 = vld [vmem:[#allocation7 + $0xd0] sm:$0xff]
    %v462 = vld [vmem:[#allocation7 + $0xd8] sm:$0xff]
    %v463 = vld [vmem:[#allocation7 + $0xe0] sm:$0xff]
    %v464 = vld [vmem:[#allocation7 + $0xe8] sm:$0xff]
    %v465 = vld [vmem:[#allocation7 + $0xf0] sm:$0xff]
    %v466 = vld [vmem:[#allocation7 + $0xf8] sm:$0xff]
    %v467 = vld [vmem:[#allocation7 + $0x100] sm:$0xff]
    %v468 = vld [vmem:[#allocation7 + $0x108] sm:$0xff]
    %v469 = vld [vmem:[#allocation7 + $0x110] sm:$0xff]
    %v470 = vld [vmem:[#allocation7 + $0x118] sm:$0xff]
    %v471 = vld [vmem:[#allocation7 + $0x120] sm:$0xff]
    %v472 = vld [vmem:[#allocation7 + $0x128] sm:$0xff]
    %v473 = vld [vmem:[#allocation7 + $0x130] sm:$0xff]
    %v474 = vld [vmem:[#allocation7 + $0x138] sm:$0xff]
    %v475 = vld [vmem:[#allocation7 + $0x140] sm:$0xff]
    %v476 = vld [vmem:[#allocation7 + $0x148] sm:$0xff]
    %v477 = vld [vmem:[#allocation7 + $0x150] sm:$0xff]
    %v478 = vld [vmem:[#allocation7 + $0x158] sm:$0xff]
    %v479 = vld [vmem:[#allocation7 + $0x160] sm:$0xff]
    %v480 = vld [vmem:[#allocation7 + $0x168] sm:$0xff]
    %v481 = vld [vmem:[#allocation7 + $0x170] sm:$0xff]
    %v482 = vld [vmem:[#allocation7 + $0x178] sm:$0xff]
    %v483 = vld [vmem:[#allocation7 + $0x180] sm:$0xff]
    %v484 = vld [vmem:[#allocation7 + $0x188] sm:$0xff]
    %v485 = vld [vmem:[#allocation7 + $0x190] sm:$0xff]
    %v486 = vld [vmem:[#allocation7 + $0x198] sm:$0xff]
    %v487 = vld [vmem:[#allocation7 + $0x1a0] sm:$0xff]
    %v488 = vld [vmem:[#allocation7 + $0x1a8] sm:$0xff]
    %v489 = vld [vmem:[#allocation7 + $0x1b0] sm:$0xff]
    %v490 = vld [vmem:[#allocation7 + $0x1b8] sm:$0xff]
    %v491 = vld [vmem:[#allocation7 + $0x1c0] sm:$0xff]
    %v492 = vld [vmem:[#allocation7 + $0x1c8] sm:$0xff]
    %v493 = vld [vmem:[#allocation7 + $0x1d0] sm:$0xff]
    %v494 = vld [vmem:[#allocation7 + $0x1d8] sm:$0xff]
    %v495 = vld [vmem:[#allocation7 + $0x1e0] sm:$0xff]
    %v496 = vld [vmem:[#allocation7 + $0x1e8] sm:$0xff]
    %v497 = vld [vmem:[#allocation7 + $0x1f0] sm:$0xff]
    %v498 = vld [vmem:[#allocation7 + $0x1f8] sm:$0xff]
    %v499 = vld [vmem:[#allocation8] sm:$0xff]
    %v501 = vlaneseq
    %v502 = vshrl.u32 %v501, 7
    %v503 = vsub.s32 0, %v502
    %v504 = vrot.slane %v499, %v503
    %v505 = vlaneseq
    %v506 = vshrl.u32 %v505, 7
    %v507 = vsub.s32 1, %v506
    %v508 = vrot.slane %v499, %v507
    %v509 = vlaneseq
    %v510 = vshrl.u32 %v509, 7
    %v511 = vsub.s32 2, %v510
    %v512 = vrot.slane %v499, %v511
    %v513 = vlaneseq
    %v514 = vshrl.u32 %v513, 7
    %v515 = vsub.s32 3, %v514
    %v516 = vrot.slane %v499, %v515
    %v517 = vlaneseq
    %v518 = vshrl.u32 %v517, 7
    %v519 = vsub.s32 4, %v518
    %v520 = vrot.slane %v499, %v519
    %v521 = vlaneseq
    %v522 = vshrl.u32 %v521, 7
    %v523 = vsub.s32 5, %v522
    %v524 = vrot.slane %v499, %v523
    %v525 = vlaneseq
    %v526 = vshrl.u32 %v525, 7
    %v527 = vsub.s32 6, %v526
    %v528 = vrot.slane %v499, %v527
    %v529 = vlaneseq
    %v530 = vshrl.u32 %v529, 7
    %v531 = vsub.s32 7, %v530
    %v532 = vrot.slane %v499, %v531
    %v605 = vunpack.c.l.b16 %v435
    %v606 = vunpack.c.h.b16 %v435
    %v607 = vunpack.c.l.b16 %v436
    %v608 = vunpack.c.h.b16 %v436
    %v609 = vunpack.c.l.b16 %v437
    %v610 = vunpack.c.h.b16 %v437
    %v611 = vunpack.c.l.b16 %v438
    %v612 = vunpack.c.h.b16 %v438
    %v613 = vunpack.c.l.b16 %v439
    %v614 = vunpack.c.h.b16 %v439
    %v615 = vunpack.c.l.b16 %v440
    %v616 = vunpack.c.h.b16 %v440
    %v617 = vunpack.c.l.b16 %v441
    %v618 = vunpack.c.h.b16 %v441
    %v619 = vunpack.c.l.b16 %v442
    %v620 = vunpack.c.h.b16 %v442
    %v621 = vunpack.c.l.b16 %v443
    %v622 = vunpack.c.h.b16 %v443
    %v623 = vunpack.c.l.b16 %v444
    %v624 = vunpack.c.h.b16 %v444
    %v625 = vunpack.c.l.b16 %v445
    %v626 = vunpack.c.h.b16 %v445
    %v627 = vunpack.c.l.b16 %v446
    %v628 = vunpack.c.h.b16 %v446
    %v629 = vunpack.c.l.b16 %v447
    %v630 = vunpack.c.h.b16 %v447
    %v631 = vunpack.c.l.b16 %v448
    %v632 = vunpack.c.h.b16 %v448
    %v633 = vunpack.c.l.b16 %v449
    %v634 = vunpack.c.h.b16 %v449
    %v635 = vunpack.c.l.b16 %v450
    %v636 = vunpack.c.h.b16 %v450
    %v637 = vunpack.c.l.b16 %v451
    %v638 = vunpack.c.h.b16 %v451
    %v639 = vunpack.c.l.b16 %v452
    %v640 = vunpack.c.h.b16 %v452
    %v641 = vunpack.c.l.b16 %v453
    %v642 = vunpack.c.h.b16 %v453
    %v643 = vunpack.c.l.b16 %v454
    %v644 = vunpack.c.h.b16 %v454
    %v645 = vunpack.c.l.b16 %v455
    %v646 = vunpack.c.h.b16 %v455
    %v647 = vunpack.c.l.b16 %v456
    %v648 = vunpack.c.h.b16 %v456
    %v649 = vunpack.c.l.b16 %v457
    %v650 = vunpack.c.h.b16 %v457
    %v651 = vunpack.c.l.b16 %v458
    %v652 = vunpack.c.h.b16 %v458
    %v653 = vunpack.c.l.b16 %v459
    %v654 = vunpack.c.h.b16 %v459
    %v655 = vunpack.c.l.b16 %v460
    %v656 = vunpack.c.h.b16 %v460
    %v657 = vunpack.c.l.b16 %v461
    %v658 = vunpack.c.h.b16 %v461
    %v659 = vunpack.c.l.b16 %v462
    %v660 = vunpack.c.h.b16 %v462
    %v661 = vunpack.c.l.b16 %v463
    %v662 = vunpack.c.h.b16 %v463
    %v663 = vunpack.c.l.b16 %v464
    %v664 = vunpack.c.h.b16 %v464
    %v665 = vunpack.c.l.b16 %v465
    %v666 = vunpack.c.h.b16 %v465
    %v667 = vunpack.c.l.b16 %v466
    %v668 = vunpack.c.h.b16 %v466
    %v669 = vunpack.c.l.b16 %v467
    %v670 = vunpack.c.h.b16 %v467
    %v671 = vunpack.c.l.b16 %v468
    %v672 = vunpack.c.h.b16 %v468
    %v673 = vunpack.c.l.b16 %v469
    %v674 = vunpack.c.h.b16 %v469
    %v675 = vunpack.c.l.b16 %v470
    %v676 = vunpack.c.h.b16 %v470
    %v677 = vunpack.c.l.b16 %v471
    %v678 = vunpack.c.h.b16 %v471
    %v679 = vunpack.c.l.b16 %v472
    %v680 = vunpack.c.h.b16 %v472
    %v681 = vunpack.c.l.b16 %v473
    %v682 = vunpack.c.h.b16 %v473
    %v683 = vunpack.c.l.b16 %v474
    %v684 = vunpack.c.h.b16 %v474
    %v685 = vunpack.c.l.b16 %v475
    %v686 = vunpack.c.h.b16 %v475
    %v687 = vunpack.c.l.b16 %v476
    %v688 = vunpack.c.h.b16 %v476
    %v689 = vunpack.c.l.b16 %v477
    %v690 = vunpack.c.h.b16 %v477
    %v691 = vunpack.c.l.b16 %v478
    %v692 = vunpack.c.h.b16 %v478
    %v693 = vunpack.c.l.b16 %v479
    %v694 = vunpack.c.h.b16 %v479
    %v695 = vunpack.c.l.b16 %v480
    %v696 = vunpack.c.h.b16 %v480
    %v697 = vunpack.c.l.b16 %v481
    %v698 = vunpack.c.h.b16 %v481
    %v699 = vunpack.c.l.b16 %v482
    %v700 = vunpack.c.h.b16 %v482
    %v701 = vunpack.c.l.b16 %v483
    %v702 = vunpack.c.h.b16 %v483
    %v703 = vunpack.c.l.b16 %v484
    %v704 = vunpack.c.h.b16 %v484
    %v705 = vunpack.c.l.b16 %v485
    %v706 = vunpack.c.h.b16 %v485
    %v707 = vunpack.c.l.b16 %v486
    %v708 = vunpack.c.h.b16 %v486
    %v709 = vunpack.c.l.b16 %v487
    %v710 = vunpack.c.h.b16 %v487
    %v711 = vunpack.c.l.b16 %v488
    %v712 = vunpack.c.h.b16 %v488
    %v713 = vunpack.c.l.b16 %v489
    %v714 = vunpack.c.h.b16 %v489
    %v715 = vunpack.c.l.b16 %v490
    %v716 = vunpack.c.h.b16 %v490
    %v717 = vunpack.c.l.b16 %v491
    %v718 = vunpack.c.h.b16 %v491
    %v719 = vunpack.c.l.b16 %v492
    %v720 = vunpack.c.h.b16 %v492
    %v721 = vunpack.c.l.b16 %v493
    %v722 = vunpack.c.h.b16 %v493
    %v723 = vunpack.c.l.b16 %v494
    %v724 = vunpack.c.h.b16 %v494
    %v725 = vunpack.c.l.b16 %v495
    %v726 = vunpack.c.h.b16 %v495
    %v727 = vunpack.c.l.b16 %v496
    %v728 = vunpack.c.h.b16 %v496
    %v729 = vunpack.c.l.b16 %v497
    %v730 = vunpack.c.h.b16 %v497
    %v731 = vunpack.c.l.b16 %v498
    %v732 = vunpack.c.h.b16 %v498
    %v733 = vpack.c.b16 %v613, %v605
    %v734 = vpack.c.b16 %v614, %v606
    %v735 = vpack.c.b16 %v615, %v607
    %v736 = vpack.c.b16 %v616, %v608
    %v737 = vpack.c.b16 %v617, %v609
    %v738 = vpack.c.b16 %v618, %v610
    %v739 = vpack.c.b16 %v619, %v611
    %v740 = vpack.c.b16 %v620, %v612
    %v741 = vpack.c.b16 %v629, %v621
    %v742 = vpack.c.b16 %v630, %v622
    %v743 = vpack.c.b16 %v631, %v623
    %v744 = vpack.c.b16 %v632, %v624
    %v745 = vpack.c.b16 %v633, %v625
    %v746 = vpack.c.b16 %v634, %v626
    %v747 = vpack.c.b16 %v635, %v627
    %v748 = vpack.c.b16 %v636, %v628
    %v749 = vpack.c.b16 %v645, %v637
    %v750 = vpack.c.b16 %v646, %v638
    %v751 = vpack.c.b16 %v647, %v639
    %v752 = vpack.c.b16 %v648, %v640
    %v753 = vpack.c.b16 %v649, %v641
    %v754 = vpack.c.b16 %v650, %v642
    %v755 = vpack.c.b16 %v651, %v643
    %v756 = vpack.c.b16 %v652, %v644
    %v757 = vpack.c.b16 %v661, %v653
    %v758 = vpack.c.b16 %v662, %v654
    %v759 = vpack.c.b16 %v663, %v655
    %v760 = vpack.c.b16 %v664, %v656
    %v761 = vpack.c.b16 %v665, %v657
    %v762 = vpack.c.b16 %v666, %v658
    %v763 = vpack.c.b16 %v667, %v659
    %v764 = vpack.c.b16 %v668, %v660
    %v765 = vpack.c.b16 %v677, %v669
    %v766 = vpack.c.b16 %v678, %v670
    %v767 = vpack.c.b16 %v679, %v671
    %v768 = vpack.c.b16 %v680, %v672
    %v769 = vpack.c.b16 %v681, %v673
    %v770 = vpack.c.b16 %v682, %v674
    %v771 = vpack.c.b16 %v683, %v675
    %v772 = vpack.c.b16 %v684, %v676
    %v773 = vpack.c.b16 %v693, %v685
    %v774 = vpack.c.b16 %v694, %v686
    %v775 = vpack.c.b16 %v695, %v687
    %v776 = vpack.c.b16 %v696, %v688
    %v777 = vpack.c.b16 %v697, %v689
    %v778 = vpack.c.b16 %v698, %v690
    %v779 = vpack.c.b16 %v699, %v691
    %v780 = vpack.c.b16 %v700, %v692
    %v781 = vpack.c.b16 %v709, %v701
    %v782 = vpack.c.b16 %v710, %v702
    %v783 = vpack.c.b16 %v711, %v703
    %v784 = vpack.c.b16 %v712, %v704
    %v785 = vpack.c.b16 %v713, %v705
    %v786 = vpack.c.b16 %v714, %v706
    %v787 = vpack.c.b16 %v715, %v707
    %v788 = vpack.c.b16 %v716, %v708
    %v789 = vpack.c.b16 %v725, %v717
    %v790 = vpack.c.b16 %v726, %v718
    %v791 = vpack.c.b16 %v727, %v719
    %v792 = vpack.c.b16 %v728, %v720
    %v793 = vpack.c.b16 %v729, %v721
    %v794 = vpack.c.b16 %v730, %v722
    %v795 = vpack.c.b16 %v731, %v723
    %v796 = vpack.c.b16 %v732, %v724
    %861 = vmatprep.subr.bf16.mxu0 %v734
    %862 = vmatpush1.bf16.msra.mxu0 %v733
    %863 = vmatprep.subr.bf16.mxu0 %v742
    %864 = vmatpush1.bf16.msra.mxu0 %v741
    %865 = vmatprep.subr.bf16.mxu0 %v750
    %866 = vmatpush1.bf16.msra.mxu0 %v749
    %867 = vmatprep.subr.bf16.mxu0 %v758
    %868 = vmatpush1.bf16.msra.mxu0 %v757
    %869 = vmatprep.subr.bf16.mxu0 %v766
    %870 = vmatpush1.bf16.msra.mxu0 %v765
    %871 = vmatprep.subr.bf16.mxu0 %v774
    %872 = vmatpush1.bf16.msra.mxu0 %v773
    %873 = vmatprep.subr.bf16.mxu0 %v782
    %874 = vmatpush1.bf16.msra.mxu0 %v781
    %875 = vmatprep.subr.bf16.mxu0 %v790
    %876 = vmatpush1.bf16.msra.mxu0 %v789
    %877 = vmatprep.subr.bf16.mxu0 0
    %878 = vmatpush1.bf16.msra.mxu0 0
    %879 = vmatprep.subr.bf16.mxu0 0
    %880 = vmatpush1.bf16.msra.mxu0 0
    %881 = vmatprep.subr.bf16.mxu0 0
    %882 = vmatpush1.bf16.msra.mxu0 0
    %883 = vmatprep.subr.bf16.mxu0 0
    %884 = vmatpush1.bf16.msra.mxu0 0
    %885 = vmatprep.subr.bf16.mxu0 0
    %886 = vmatpush1.bf16.msra.mxu0 0
    %887 = vmatprep.subr.bf16.mxu0 0
    %888 = vmatpush1.bf16.msra.mxu0 0
    %889 = vmatprep.subr.bf16.mxu0 0
    %890 = vmatpush1.bf16.msra.mxu0 0
    %891 = vmatprep.subr.bf16.mxu0 0
    %892 = vmatpush1.bf16.msra.mxu0 0
    %893 = vmatprep.mubr.bf16.mxu0 0
    %894 = vmatmul.mubr.bf16.gmra.mrb[0].mxu0 %v434
    %v895 = vpop.f32.mrb[0].mxu0
    %v896 = vadd.f32 %v504, %v895
    %v897 = vpop.f32.mrb[0].mxu0
    %v898 = vadd.f32 %v508, %v897
    %v899 = vpop.f32.mrb[0].mxu0
    %v900 = vpop.f32.mrb[0].mxu0
    %901 = vdwg.mxu0
    %902 = vmatprep.subr.bf16.mxu0 %v736
    %903 = vmatpush1.bf16.msra.mxu0 %v735
    %904 = vmatprep.subr.bf16.mxu0 %v744
    %905 = vmatpush1.bf16.msra.mxu0 %v743
    %906 = vmatprep.subr.bf16.mxu0 %v752
    %907 = vmatpush1.bf16.msra.mxu0 %v751
    %908 = vmatprep.subr.bf16.mxu0 %v760
    %909 = vmatpush1.bf16.msra.mxu0 %v759
    %910 = vmatprep.subr.bf16.mxu0 %v768
    %911 = vmatpush1.bf16.msra.mxu0 %v767
    %912 = vmatprep.subr.bf16.mxu0 %v776
    %913 = vmatpush1.bf16.msra.mxu0 %v775
    %914 = vmatprep.subr.bf16.mxu0 %v784
    %915 = vmatpush1.bf16.msra.mxu0 %v783
    %916 = vmatprep.subr.bf16.mxu0 %v792
    %917 = vmatpush1.bf16.msra.mxu0 %v791
    %918 = vmatprep.subr.bf16.mxu0 0
    %919 = vmatpush1.bf16.msra.mxu0 0
    %920 = vmatprep.subr.bf16.mxu0 0
    %921 = vmatpush1.bf16.msra.mxu0 0
    %922 = vmatprep.subr.bf16.mxu0 0
    %923 = vmatpush1.bf16.msra.mxu0 0
    %924 = vmatprep.subr.bf16.mxu0 0
    %925 = vmatpush1.bf16.msra.mxu0 0
    %926 = vmatprep.subr.bf16.mxu0 0
    %927 = vmatpush1.bf16.msra.mxu0 0
    %928 = vmatprep.subr.bf16.mxu0 0
    %929 = vmatpush1.bf16.msra.mxu0 0
    %930 = vmatprep.subr.bf16.mxu0 0
    %931 = vmatpush1.bf16.msra.mxu0 0
    %932 = vmatprep.subr.bf16.mxu0 0
    %933 = vmatpush1.bf16.msra.mxu0 0
    %934 = vmatprep.mubr.bf16.mxu0 0
    %935 = vmatmul.mubr.bf16.gmra.mrb[0].mxu0 %v434
    %v936 = vpop.f32.mrb[0].mxu0
    %v937 = vadd.f32 %v512, %v936
    %v938 = vpop.f32.mrb[0].mxu0
    %v939 = vadd.f32 %v516, %v938
    %v940 = vpop.f32.mrb[0].mxu0
    %v941 = vpop.f32.mrb[0].mxu0
    %942 = vdwg.mxu0
    %943 = vmatprep.subr.bf16.mxu0 %v738
    %944 = vmatpush1.bf16.msra.mxu0 %v737
    %945 = vmatprep.subr.bf16.mxu0 %v746
    %946 = vmatpush1.bf16.msra.mxu0 %v745
    %947 = vmatprep.subr.bf16.mxu0 %v754
    %948 = vmatpush1.bf16.msra.mxu0 %v753
    %949 = vmatprep.subr.bf16.mxu0 %v762
    %950 = vmatpush1.bf16.msra.mxu0 %v761
    %951 = vmatprep.subr.bf16.mxu0 %v770
    %952 = vmatpush1.bf16.msra.mxu0 %v769
    %953 = vmatprep.subr.bf16.mxu0 %v778
    %954 = vmatpush1.bf16.msra.mxu0 %v777
    %955 = vmatprep.subr.bf16.mxu0 %v786
    %956 = vmatpush1.bf16.msra.mxu0 %v785
    %957 = vmatprep.subr.bf16.mxu0 %v794
    %958 = vmatpush1.bf16.msra.mxu0 %v793
    %959 = vmatprep.subr.bf16.mxu0 0
    %960 = vmatpush1.bf16.msra.mxu0 0
    %961 = vmatprep.subr.bf16.mxu0 0
    %962 = vmatpush1.bf16.msra.mxu0 0
    %963 = vmatprep.subr.bf16.mxu0 0
    %964 = vmatpush1.bf16.msra.mxu0 0
    %965 = vmatprep.subr.bf16.mxu0 0
    %966 = vmatpush1.bf16.msra.mxu0 0
    %967 = vmatprep.subr.bf16.mxu0 0
    %968 = vmatpush1.bf16.msra.mxu0 0
    %969 = vmatprep.subr.bf16.mxu0 0
    %970 = vmatpush1.bf16.msra.mxu0 0
    %971 = vmatprep.subr.bf16.mxu0 0
    %972 = vmatpush1.bf16.msra.mxu0 0
    %973 = vmatprep.subr.bf16.mxu0 0
    %974 = vmatpush1.bf16.msra.mxu0 0
    %975 = vmatprep.mubr.bf16.mxu0 0
    %976 = vmatmul.mubr.bf16.gmra.mrb[0].mxu0 %v434
    %v977 = vpop.f32.mrb[0].mxu0
    %v978 = vadd.f32 %v520, %v977
    %v979 = vpop.f32.mrb[0].mxu0
    %v980 = vadd.f32 %v524, %v979
    %v981 = vpop.f32.mrb[0].mxu0
    %v982 = vpop.f32.mrb[0].mxu0
    %983 = vdwg.mxu0
    %984 = vmatprep.subr.bf16.mxu0 %v740
    %985 = vmatpush1.bf16.msra.mxu0 %v739
    %986 = vmatprep.subr.bf16.mxu0 %v748
    %987 = vmatpush1.bf16.msra.mxu0 %v747
    %988 = vmatprep.subr.bf16.mxu0 %v756
    %989 = vmatpush1.bf16.msra.mxu0 %v755
    %990 = vmatprep.subr.bf16.mxu0 %v764
    %991 = vmatpush1.bf16.msra.mxu0 %v763
    %992 = vmatprep.subr.bf16.mxu0 %v772
    %993 = vmatpush1.bf16.msra.mxu0 %v771
    %994 = vmatprep.subr.bf16.mxu0 %v780
    %995 = vmatpush1.bf16.msra.mxu0 %v779
    %996 = vmatprep.subr.bf16.mxu0 %v788
    %997 = vmatpush1.bf16.msra.mxu0 %v787
    %998 = vmatprep.subr.bf16.mxu0 %v796
    %999 = vmatpush1.bf16.msra.mxu0 %v795
    %1000 = vmatprep.subr.bf16.mxu0 0
    %1001 = vmatpush1.bf16.msra.mxu0 0
    %1002 = vmatprep.subr.bf16.mxu0 0
    %1003 = vmatpush1.bf16.msra.mxu0 0
    %1004 = vmatprep.subr.bf16.mxu0 0
    %1005 = vmatpush1.bf16.msra.mxu0 0
    %1006 = vmatprep.subr.bf16.mxu0 0
    %1007 = vmatpush1.bf16.msra.mxu0 0
    %1008 = vmatprep.subr.bf16.mxu0 0
    %1009 = vmatpush1.bf16.msra.mxu0 0
    %1010 = vmatprep.subr.bf16.mxu0 0
    %1011 = vmatpush1.bf16.msra.mxu0 0
    %1012 = vmatprep.subr.bf16.mxu0 0
    %1013 = vmatpush1.bf16.msra.mxu0 0
    %1014 = vmatprep.subr.bf16.mxu0 0
    %1015 = vmatpush1.bf16.msra.mxu0 0
    %1016 = vmatprep.mubr.bf16.mxu0 0
    %1017 = vmatmul.mubr.bf16.gmra.mrb[0].mxu0 %v434
    %v1018 = vpop.f32.mrb[0].mxu0
    %v1019 = vadd.f32 %v528, %v1018
    %v1020 = vpop.f32.mrb[0].mxu0
    %v1021 = vadd.f32 %v532, %v1020
    %v1022 = vpop.f32.mrb[0].mxu0
    %v1023 = vpop.f32.mrb[0].mxu0
    %1024 = vdwg.mxu0
    %v1025 = vtanh.pop %v896
    %v1026 = vtanh.pop %v898
    %v1027 = vtanh.pop %v937
    %v1028 = vtanh.pop %v939
    %v1029 = vmul.f32 %v1025, 1.442695
    %v1030 = vpow.pop %v1029
    %v1031 = vmul.f32 %v1026, 1.442695
    %v1032 = vpow.pop %v1031
    %v1033 = vmul.f32 %v1027, 1.442695
    %v1034 = vpow.pop %v1033
    %v1035 = vmul.f32 %v1028, 1.442695
    %v1036 = vpow.pop %v1035
    %v1037 = vmul.f32 %v82, %v1030
    %v1038 = vmul.f32 %v83, %v1032
    %v1039 = vmul.f32 %v84, %v1034
    %v1040 = vmul.f32 %v85, %v1036
    %v1041 = vadd.f32 %v1037, %v978
    %v1042 = vadd.f32 %v1038, %v980
    %v1043 = vadd.f32 %v1039, %v1019
    %v1044 = vadd.f32 %v1040, %v1021
    %v1045 = vadd.f32 %v1025, %v1026
    %v1046 = vadd.f32 %v1045, %v1027
    %v1047 = vadd.f32 %v1046, %v1028
    %1048 = vadd.xlane.f32.xlu0 %v1047
    %v1049 = vpop.xlane.xlu0 %1048
    %v1050 = vadd.f32 %v1049, 0.0
    %v1051 = vpack.c.bf16 %v1041, %v1041
    %v1052 = vpack.c.bf16 %v1042, %v1042
    %v1053 = vpack.c.bf16 %v1043, %v1043
    %v1054 = vpack.c.bf16 %v1044, %v1044
    %s1055 = scalar_lea.vmem [#allocation5], 256
    %v1056 = vld [vmem:[%s1055] sm:$0xf]
    %v1057 = vld [vmem:[%s1055 + $0x4] sm:$0xf]
    %v1058 = vld [vmem:[%s1055 + $0x8] sm:$0xf]
    %v1059 = vld [vmem:[%s1055 + $0xc] sm:$0xf]
    %v1060 = vld [vmem:[%s1055 + $0x10] sm:$0xf]
    %v1061 = vld [vmem:[%s1055 + $0x14] sm:$0xf]
    %v1062 = vld [vmem:[%s1055 + $0x18] sm:$0xf]
    %v1063 = vld [vmem:[%s1055 + $0x1c] sm:$0xf]
    %v1064 = vld [vmem:[%s1055 + $0x20] sm:$0xf]
    %v1065 = vld [vmem:[%s1055 + $0x24] sm:$0xf]
    %v1066 = vld [vmem:[%s1055 + $0x28] sm:$0xf]
    %v1067 = vld [vmem:[%s1055 + $0x2c] sm:$0xf]
    %v1068 = vld [vmem:[%s1055 + $0x30] sm:$0xf]
    %v1069 = vld [vmem:[%s1055 + $0x34] sm:$0xf]
    %v1070 = vld [vmem:[%s1055 + $0x38] sm:$0xf]
    %v1071 = vld [vmem:[%s1055 + $0x3c] sm:$0xf]
    %v1072 = vld [vmem:[%s1055 + $0x40] sm:$0xf]
    %v1073 = vld [vmem:[%s1055 + $0x44] sm:$0xf]
    %v1074 = vld [vmem:[%s1055 + $0x48] sm:$0xf]
    %v1075 = vld [vmem:[%s1055 + $0x4c] sm:$0xf]
    %v1076 = vld [vmem:[%s1055 + $0x50] sm:$0xf]
    %v1077 = vld [vmem:[%s1055 + $0x54] sm:$0xf]
    %v1078 = vld [vmem:[%s1055 + $0x58] sm:$0xf]
    %v1079 = vld [vmem:[%s1055 + $0x5c] sm:$0xf]
    %v1080 = vld [vmem:[%s1055 + $0x60] sm:$0xf]
    %v1081 = vld [vmem:[%s1055 + $0x64] sm:$0xf]
    %v1082 = vld [vmem:[%s1055 + $0x68] sm:$0xf]
    %v1083 = vld [vmem:[%s1055 + $0x6c] sm:$0xf]
    %v1084 = vld [vmem:[%s1055 + $0x70] sm:$0xf]
    %v1085 = vld [vmem:[%s1055 + $0x74] sm:$0xf]
    %v1086 = vld [vmem:[%s1055 + $0x78] sm:$0xf]
    %v1087 = vld [vmem:[%s1055 + $0x7c] sm:$0xf]
    %v1088 = vld [vmem:[%s1055 + $0x80] sm:$0xf]
    %v1089 = vld [vmem:[%s1055 + $0x84] sm:$0xf]
    %v1090 = vld [vmem:[%s1055 + $0x88] sm:$0xf]
    %v1091 = vld [vmem:[%s1055 + $0x8c] sm:$0xf]
    %v1092 = vld [vmem:[%s1055 + $0x90] sm:$0xf]
    %v1093 = vld [vmem:[%s1055 + $0x94] sm:$0xf]
    %v1094 = vld [vmem:[%s1055 + $0x98] sm:$0xf]
    %v1095 = vld [vmem:[%s1055 + $0x9c] sm:$0xf]
    %v1096 = vld [vmem:[%s1055 + $0xa0] sm:$0xf]
    %v1097 = vld [vmem:[%s1055 + $0xa4] sm:$0xf]
    %v1098 = vld [vmem:[%s1055 + $0xa8] sm:$0xf]
    %v1099 = vld [vmem:[%s1055 + $0xac] sm:$0xf]
    %v1100 = vld [vmem:[%s1055 + $0xb0] sm:$0xf]
    %v1101 = vld [vmem:[%s1055 + $0xb4] sm:$0xf]
    %v1102 = vld [vmem:[%s1055 + $0xb8] sm:$0xf]
    %v1103 = vld [vmem:[%s1055 + $0xbc] sm:$0xf]
    %v1104 = vld [vmem:[%s1055 + $0xc0] sm:$0xf]
    %v1105 = vld [vmem:[%s1055 + $0xc4] sm:$0xf]
    %v1106 = vld [vmem:[%s1055 + $0xc8] sm:$0xf]
    %v1107 = vld [vmem:[%s1055 + $0xcc] sm:$0xf]
    %v1108 = vld [vmem:[%s1055 + $0xd0] sm:$0xf]
    %v1109 = vld [vmem:[%s1055 + $0xd4] sm:$0xf]
    %v1110 = vld [vmem:[%s1055 + $0xd8] sm:$0xf]
    %v1111 = vld [vmem:[%s1055 + $0xdc] sm:$0xf]
    %v1112 = vld [vmem:[%s1055 + $0xe0] sm:$0xf]
    %v1113 = vld [vmem:[%s1055 + $0xe4] sm:$0xf]
    %v1114 = vld [vmem:[%s1055 + $0xe8] sm:$0xf]
    %v1115 = vld [vmem:[%s1055 + $0xec] sm:$0xf]
    %v1116 = vld [vmem:[%s1055 + $0xf0] sm:$0xf]
    %v1117 = vld [vmem:[%s1055 + $0xf4] sm:$0xf]
    %v1118 = vld [vmem:[%s1055 + $0xf8] sm:$0xf]
    %v1119 = vld [vmem:[%s1055 + $0xfc] sm:$0xf]
    %s1120 = scalar_lea.vmem %s2, 1
    %v1121 = vld [vmem:[%s1120] sm:$0x1]
    %v1123 = vlaneseq
    %v1124 = vshrl.u32 %v1123, 7
    %v1125 = vsub.s32 0, %v1124
    %v1126 = vrot.slane %v1121, %v1125
    %v1192 = vunpack.c.l.b16 %v1056
    %v1193 = vunpack.c.l.b16 %v1057
    %v1194 = vunpack.c.l.b16 %v1058
    %v1195 = vunpack.c.l.b16 %v1059
    %v1196 = vunpack.c.l.b16 %v1060
    %v1197 = vunpack.c.l.b16 %v1061
    %v1198 = vunpack.c.l.b16 %v1062
    %v1199 = vunpack.c.l.b16 %v1063
    %v1200 = vunpack.c.l.b16 %v1064
    %v1201 = vunpack.c.l.b16 %v1065
    %v1202 = vunpack.c.l.b16 %v1066
    %v1203 = vunpack.c.l.b16 %v1067
    %v1204 = vunpack.c.l.b16 %v1068
    %v1205 = vunpack.c.l.b16 %v1069
    %v1206 = vunpack.c.l.b16 %v1070
    %v1207 = vunpack.c.l.b16 %v1071
    %v1208 = vunpack.c.l.b16 %v1072
    %v1209 = vunpack.c.l.b16 %v1073
    %v1210 = vunpack.c.l.b16 %v1074
    %v1211 = vunpack.c.l.b16 %v1075
    %v1212 = vunpack.c.l.b16 %v1076
    %v1213 = vunpack.c.l.b16 %v1077
    %v1214 = vunpack.c.l.b16 %v1078
    %v1215 = vunpack.c.l.b16 %v1079
    %v1216 = vunpack.c.l.b16 %v1080
    %v1217 = vunpack.c.l.b16 %v1081
    %v1218 = vunpack.c.l.b16 %v1082
    %v1219 = vunpack.c.l.b16 %v1083
    %v1220 = vunpack.c.l.b16 %v1084
    %v1221 = vunpack.c.l.b16 %v1085
    %v1222 = vunpack.c.l.b16 %v1086
    %v1223 = vunpack.c.l.b16 %v1087
    %v1224 = vunpack.c.l.b16 %v1088
    %v1225 = vunpack.c.l.b16 %v1089
    %v1226 = vunpack.c.l.b16 %v1090
    %v1227 = vunpack.c.l.b16 %v1091
    %v1228 = vunpack.c.l.b16 %v1092
    %v1229 = vunpack.c.l.b16 %v1093
    %v1230 = vunpack.c.l.b16 %v1094
    %v1231 = vunpack.c.l.b16 %v1095
    %v1232 = vunpack.c.l.b16 %v1096
    %v1233 = vunpack.c.l.b16 %v1097
    %v1234 = vunpack.c.l.b16 %v1098
    %v1235 = vunpack.c.l.b16 %v1099
    %v1236 = vunpack.c.l.b16 %v1100
    %v1237 = vunpack.c.l.b16 %v1101
    %v1238 = vunpack.c.l.b16 %v1102
    %v1239 = vunpack.c.l.b16 %v1103
    %v1240 = vunpack.c.l.b16 %v1104
    %v1241 = vunpack.c.l.b16 %v1105
    %v1242 = vunpack.c.l.b16 %v1106
    %v1243 = vunpack.c.l.b16 %v1107
    %v1244 = vunpack.c.l.b16 %v1108
    %v1245 = vunpack.c.l.b16 %v1109
    %v1246 = vunpack.c.l.b16 %v1110
    %v1247 = vunpack.c.l.b16 %v1111
    %v1248 = vunpack.c.l.b16 %v1112
    %v1249 = vunpack.c.l.b16 %v1113
    %v1250 = vunpack.c.l.b16 %v1114
    %v1251 = vunpack.c.l.b16 %v1115
    %v1252 = vunpack.c.l.b16 %v1116
    %v1253 = vunpack.c.l.b16 %v1117
    %v1254 = vunpack.c.l.b16 %v1118
    %v1255 = vunpack.c.l.b16 %v1119
    %v1256 = vpack.c.b16 %v1193, %v1192
    %v1257 = vpack.c.b16 %v1195, %v1194
    %v1258 = vpack.c.b16 %v1197, %v1196
    %v1259 = vpack.c.b16 %v1199, %v1198
    %v1260 = vpack.c.b16 %v1201, %v1200
    %v1261 = vpack.c.b16 %v1203, %v1202
    %v1262 = vpack.c.b16 %v1205, %v1204
    %v1263 = vpack.c.b16 %v1207, %v1206
    %v1264 = vpack.c.b16 %v1209, %v1208
    %v1265 = vpack.c.b16 %v1211, %v1210
    %v1266 = vpack.c.b16 %v1213, %v1212
    %v1267 = vpack.c.b16 %v1215, %v1214
    %v1268 = vpack.c.b16 %v1217, %v1216
    %v1269 = vpack.c.b16 %v1219, %v1218
    %v1270 = vpack.c.b16 %v1221, %v1220
    %v1271 = vpack.c.b16 %v1223, %v1222
    %v1272 = vpack.c.b16 %v1225, %v1224
    %v1273 = vpack.c.b16 %v1227, %v1226
    %v1274 = vpack.c.b16 %v1229, %v1228
    %v1275 = vpack.c.b16 %v1231, %v1230
    %v1276 = vpack.c.b16 %v1233, %v1232
    %v1277 = vpack.c.b16 %v1235, %v1234
    %v1278 = vpack.c.b16 %v1237, %v1236
    %v1279 = vpack.c.b16 %v1239, %v1238
    %v1280 = vpack.c.b16 %v1241, %v1240
    %v1281 = vpack.c.b16 %v1243, %v1242
    %v1282 = vpack.c.b16 %v1245, %v1244
    %v1283 = vpack.c.b16 %v1247, %v1246
    %v1284 = vpack.c.b16 %v1249, %v1248
    %v1285 = vpack.c.b16 %v1251, %v1250
    %v1286 = vpack.c.b16 %v1253, %v1252
    %v1287 = vpack.c.b16 %v1255, %v1254
    %1320 = vmatprep.subr.bf16.mxu0 0
    %1321 = vmatpush1.bf16.msra.mxu0 %v1256
    %1322 = vmatprep.subr.bf16.mxu0 0
    %1323 = vmatpush1.bf16.msra.mxu0 %v1257
    %1324 = vmatprep.subr.bf16.mxu0 0
    %1325 = vmatpush1.bf16.msra.mxu0 %v1258
    %1326 = vmatprep.subr.bf16.mxu0 0
    %1327 = vmatpush1.bf16.msra.mxu0 %v1259
    %1328 = vmatprep.subr.bf16.mxu0 0
    %1329 = vmatpush1.bf16.msra.mxu0 %v1260
    %1330 = vmatprep.subr.bf16.mxu0 0
    %1331 = vmatpush1.bf16.msra.mxu0 %v1261
    %1332 = vmatprep.subr.bf16.mxu0 0
    %1333 = vmatpush1.bf16.msra.mxu0 %v1262
    %1334 = vmatprep.subr.bf16.mxu0 0
    %1335 = vmatpush1.bf16.msra.mxu0 %v1263
    %1336 = vmatprep.subr.bf16.mxu0 0
    %1337 = vmatpush1.bf16.msra.mxu0 %v1264
    %1338 = vmatprep.subr.bf16.mxu0 0
    %1339 = vmatpush1.bf16.msra.mxu0 %v1265
    %1340 = vmatprep.subr.bf16.mxu0 0
    %1341 = vmatpush1.bf16.msra.mxu0 %v1266
    %1342 = vmatprep.subr.bf16.mxu0 0
    %1343 = vmatpush1.bf16.msra.mxu0 %v1267
    %1344 = vmatprep.subr.bf16.mxu0 0
    %1345 = vmatpush1.bf16.msra.mxu0 %v1268
    %1346 = vmatprep.subr.bf16.mxu0 0
    %1347 = vmatpush1.bf16.msra.mxu0 %v1269
    %1348 = vmatprep.subr.bf16.mxu0 0
    %1349 = vmatpush1.bf16.msra.mxu0 %v1270
    %1350 = vmatprep.subr.bf16.mxu0 0
    %1351 = vmatpush1.bf16.msra.mxu0 %v1271
    %1352 = vmatprep.mubr.bf16.mxu0 %v1052
    %1353 = vmatmul.mubr.bf16.gmra.mrb[0].mxu0 %v1051
    %v1354 = vpop.f32.mrb[0].mxu0
    %v1355 = vadd.f32 %v1126, %v1354
    %v1356 = vpop.f32.mrb[0].mxu0
    %v1357 = vpop.f32.mrb[0].mxu0
    %v1358 = vpop.f32.mrb[0].mxu0
    %1359 = vdwg.mxu0
    %1360 = vmatprep.subr.bf16.mxu0 0
    %1361 = vmatpush1.bf16.msra.mxu0 %v1272
    %1362 = vmatprep.subr.bf16.mxu0 0
    %1363 = vmatpush1.bf16.msra.mxu0 %v1273
    %1364 = vmatprep.subr.bf16.mxu0 0
    %1365 = vmatpush1.bf16.msra.mxu0 %v1274
    %1366 = vmatprep.subr.bf16.mxu0 0
    %1367 = vmatpush1.bf16.msra.mxu0 %v1275
    %1368 = vmatprep.subr.bf16.mxu0 0
    %1369 = vmatpush1.bf16.msra.mxu0 %v1276
    %1370 = vmatprep.subr.bf16.mxu0 0
    %1371 = vmatpush1.bf16.msra.mxu0 %v1277
    %1372 = vmatprep.subr.bf16.mxu0 0
    %1373 = vmatpush1.bf16.msra.mxu0 %v1278
    %1374 = vmatprep.subr.bf16.mxu0 0
    %1375 = vmatpush1.bf16.msra.mxu0 %v1279
    %1376 = vmatprep.subr.bf16.mxu0 0
    %1377 = vmatpush1.bf16.msra.mxu0 %v1280
    %1378 = vmatprep.subr.bf16.mxu0 0
    %1379 = vmatpush1.bf16.msra.mxu0 %v1281
    %1380 = vmatprep.subr.bf16.mxu0 0
    %1381 = vmatpush1.bf16.msra.mxu0 %v1282
    %1382 = vmatprep.subr.bf16.mxu0 0
    %1383 = vmatpush1.bf16.msra.mxu0 %v1283
    %1384 = vmatprep.subr.bf16.mxu0 0
    %1385 = vmatpush1.bf16.msra.mxu0 %v1284
    %1386 = vmatprep.subr.bf16.mxu0 0
    %1387 = vmatpush1.bf16.msra.mxu0 %v1285
    %1388 = vmatprep.subr.bf16.mxu0 0
    %1389 = vmatpush1.bf16.msra.mxu0 %v1286
    %1390 = vmatprep.subr.bf16.mxu0 0
    %1391 = vmatpush1.bf16.msra.mxu0 %v1287
    %1392 = vmatprep.mubr.bf16.mxu0 %v1054
    %1393 = vmatmul.mubr.bf16.gmra.mrb[0].mxu0 %v1053
    %v1394 = vpop.f32.mrb[0].mxu0
    %v1395 = vadd.f32 %v1355, %v1394
    %v1396 = vpop.f32.mrb[0].mxu0
    %v1397 = vpop.f32.mrb[0].mxu0
    %v1398 = vpop.f32.mrb[0].mxu0
    %1399 = vdwg.mxu0
    %v1400 = vtanh.pop %v1395
    %v1401 = vpack.c.bf16 %v1400, %v1400
    %s1402 = scalar_lea.vmem [#allocation7], 512
    %v1403 = vld [vmem:[%s1402] sm:$0xff]
    %v1404 = vld [vmem:[%s1402 + $0x8] sm:$0xff]
    %v1405 = vld [vmem:[%s1402 + $0x10] sm:$0xff]
    %v1406 = vld [vmem:[%s1402 + $0x18] sm:$0xff]
    %v1407 = vld [vmem:[%s1402 + $0x20] sm:$0xff]
    %v1408 = vld [vmem:[%s1402 + $0x28] sm:$0xff]
    %v1409 = vld [vmem:[%s1402 + $0x30] sm:$0xff]
    %v1410 = vld [vmem:[%s1402 + $0x38] sm:$0xff]
    %v1411 = vld [vmem:[%s1402 + $0x40] sm:$0xff]
    %v1412 = vld [vmem:[%s1402 + $0x48] sm:$0xff]
    %v1413 = vld [vmem:[%s1402 + $0x50] sm:$0xff]
    %v1414 = vld [vmem:[%s1402 + $0x58] sm:$0xff]
    %v1415 = vld [vmem:[%s1402 + $0x60] sm:$0xff]
    %v1416 = vld [vmem:[%s1402 + $0x68] sm:$0xff]
    %v1417 = vld [vmem:[%s1402 + $0x70] sm:$0xff]
    %v1418 = vld [vmem:[%s1402 + $0x78] sm:$0xff]
    %v1419 = vld [vmem:[%s1402 + $0x80] sm:$0xff]
    %v1420 = vld [vmem:[%s1402 + $0x88] sm:$0xff]
    %v1421 = vld [vmem:[%s1402 + $0x90] sm:$0xff]
    %v1422 = vld [vmem:[%s1402 + $0x98] sm:$0xff]
    %v1423 = vld [vmem:[%s1402 + $0xa0] sm:$0xff]
    %v1424 = vld [vmem:[%s1402 + $0xa8] sm:$0xff]
    %v1425 = vld [vmem:[%s1402 + $0xb0] sm:$0xff]
    %v1426 = vld [vmem:[%s1402 + $0xb8] sm:$0xff]
    %v1427 = vld [vmem:[%s1402 + $0xc0] sm:$0xff]
    %v1428 = vld [vmem:[%s1402 + $0xc8] sm:$0xff]
    %v1429 = vld [vmem:[%s1402 + $0xd0] sm:$0xff]
    %v1430 = vld [vmem:[%s1402 + $0xd8] sm:$0xff]
    %v1431 = vld [vmem:[%s1402 + $0xe0] sm:$0xff]
    %v1432 = vld [vmem:[%s1402 + $0xe8] sm:$0xff]
    %v1433 = vld [vmem:[%s1402 + $0xf0] sm:$0xff]
    %v1434 = vld [vmem:[%s1402 + $0xf8] sm:$0xff]
    %v1435 = vld [vmem:[%s1402 + $0x100] sm:$0xff]
    %v1436 = vld [vmem:[%s1402 + $0x108] sm:$0xff]
    %v1437 = vld [vmem:[%s1402 + $0x110] sm:$0xff]
    %v1438 = vld [vmem:[%s1402 + $0x118] sm:$0xff]
    %v1439 = vld [vmem:[%s1402 + $0x120] sm:$0xff]
    %v1440 = vld [vmem:[%s1402 + $0x128] sm:$0xff]
    %v1441 = vld [vmem:[%s1402 + $0x130] sm:$0xff]
    %v1442 = vld [vmem:[%s1402 + $0x138] sm:$0xff]
    %v1443 = vld [vmem:[%s1402 + $0x140] sm:$0xff]
    %v1444 = vld [vmem:[%s1402 + $0x148] sm:$0xff]
    %v1445 = vld [vmem:[%s1402 + $0x150] sm:$0xff]
    %v1446 = vld [vmem:[%s1402 + $0x158] sm:$0xff]
    %v1447 = vld [vmem:[%s1402 + $0x160] sm:$0xff]
    %v1448 = vld [vmem:[%s1402 + $0x168] sm:$0xff]
    %v1449 = vld [vmem:[%s1402 + $0x170] sm:$0xff]
    %v1450 = vld [vmem:[%s1402 + $0x178] sm:$0xff]
    %v1451 = vld [vmem:[%s1402 + $0x180] sm:$0xff]
    %v1452 = vld [vmem:[%s1402 + $0x188] sm:$0xff]
    %v1453 = vld [vmem:[%s1402 + $0x190] sm:$0xff]
    %v1454 = vld [vmem:[%s1402 + $0x198] sm:$0xff]
    %v1455 = vld [vmem:[%s1402 + $0x1a0] sm:$0xff]
    %v1456 = vld [vmem:[%s1402 + $0x1a8] sm:$0xff]
    %v1457 = vld [vmem:[%s1402 + $0x1b0] sm:$0xff]
    %v1458 = vld [vmem:[%s1402 + $0x1b8] sm:$0xff]
    %v1459 = vld [vmem:[%s1402 + $0x1c0] sm:$0xff]
    %v1460 = vld [vmem:[%s1402 + $0x1c8] sm:$0xff]
    %v1461 = vld [vmem:[%s1402 + $0x1d0] sm:$0xff]
    %v1462 = vld [vmem:[%s1402 + $0x1d8] sm:$0xff]
    %v1463 = vld [vmem:[%s1402 + $0x1e0] sm:$0xff]
    %v1464 = vld [vmem:[%s1402 + $0x1e8] sm:$0xff]
    %v1465 = vld [vmem:[%s1402 + $0x1f0] sm:$0xff]
    %v1466 = vld [vmem:[%s1402 + $0x1f8] sm:$0xff]
    %s1467 = scalar_lea.vmem [#allocation8], 8
    %v1468 = vld [vmem:[%s1467] sm:$0xff]
    %v1470 = vlaneseq
    %v1471 = vshrl.u32 %v1470, 7
    %v1472 = vsub.s32 0, %v1471
    %v1473 = vrot.slane %v1468, %v1472
    %v1474 = vlaneseq
    %v1475 = vshrl.u32 %v1474, 7
    %v1476 = vsub.s32 1, %v1475
    %v1477 = vrot.slane %v1468, %v1476
    %v1478 = vlaneseq
    %v1479 = vshrl.u32 %v1478, 7
    %v1480 = vsub.s32 2, %v1479
    %v1481 = vrot.slane %v1468, %v1480
    %v1482 = vlaneseq
    %v1483 = vshrl.u32 %v1482, 7
    %v1484 = vsub.s32 3, %v1483
    %v1485 = vrot.slane %v1468, %v1484
    %v1486 = vlaneseq
    %v1487 = vshrl.u32 %v1486, 7
    %v1488 = vsub.s32 4, %v1487
    %v1489 = vrot.slane %v1468, %v1488
    %v1490 = vlaneseq
    %v1491 = vshrl.u32 %v1490, 7
    %v1492 = vsub.s32 5, %v1491
    %v1493 = vrot.slane %v1468, %v1492
    %v1494 = vlaneseq
    %v1495 = vshrl.u32 %v1494, 7
    %v1496 = vsub.s32 6, %v1495
    %v1497 = vrot.slane %v1468, %v1496
    %v1498 = vlaneseq
    %v1499 = vshrl.u32 %v1498, 7
    %v1500 = vsub.s32 7, %v1499
    %v1501 = vrot.slane %v1468, %v1500
    %v1574 = vunpack.c.l.b16 %v1403
    %v1575 = vunpack.c.h.b16 %v1403
    %v1576 = vunpack.c.l.b16 %v1404
    %v1577 = vunpack.c.h.b16 %v1404
    %v1578 = vunpack.c.l.b16 %v1405
    %v1579 = vunpack.c.h.b16 %v1405
    %v1580 = vunpack.c.l.b16 %v1406
    %v1581 = vunpack.c.h.b16 %v1406
    %v1582 = vunpack.c.l.b16 %v1407
    %v1583 = vunpack.c.h.b16 %v1407
    %v1584 = vunpack.c.l.b16 %v1408
    %v1585 = vunpack.c.h.b16 %v1408
    %v1586 = vunpack.c.l.b16 %v1409
    %v1587 = vunpack.c.h.b16 %v1409
    %v1588 = vunpack.c.l.b16 %v1410
    %v1589 = vunpack.c.h.b16 %v1410
    %v1590 = vunpack.c.l.b16 %v1411
    %v1591 = vunpack.c.h.b16 %v1411
    %v1592 = vunpack.c.l.b16 %v1412
    %v1593 = vunpack.c.h.b16 %v1412
    %v1594 = vunpack.c.l.b16 %v1413
    %v1595 = vunpack.c.h.b16 %v1413
    %v1596 = vunpack.c.l.b16 %v1414
    %v1597 = vunpack.c.h.b16 %v1414
    %v1598 = vunpack.c.l.b16 %v1415
    %v1599 = vunpack.c.h.b16 %v1415
    %v1600 = vunpack.c.l.b16 %v1416
    %v1601 = vunpack.c.h.b16 %v1416
    %v1602 = vunpack.c.l.b16 %v1417
    %v1603 = vunpack.c.h.b16 %v1417
    %v1604 = vunpack.c.l.b16 %v1418
    %v1605 = vunpack.c.h.b16 %v1418
    %v1606 = vunpack.c.l.b16 %v1419
    %v1607 = vunpack.c.h.b16 %v1419
    %v1608 = vunpack.c.l.b16 %v1420
    %v1609 = vunpack.c.h.b16 %v1420
    %v1610 = vunpack.c.l.b16 %v1421
    %v1611 = vunpack.c.h.b16 %v1421
    %v1612 = vunpack.c.l.b16 %v1422
    %v1613 = vunpack.c.h.b16 %v1422
    %v1614 = vunpack.c.l.b16 %v1423
    %v1615 = vunpack.c.h.b16 %v1423
    %v1616 = vunpack.c.l.b16 %v1424
    %v1617 = vunpack.c.h.b16 %v1424
    %v1618 = vunpack.c.l.b16 %v1425
    %v1619 = vunpack.c.h.b16 %v1425
    %v1620 = vunpack.c.l.b16 %v1426
    %v1621 = vunpack.c.h.b16 %v1426
    %v1622 = vunpack.c.l.b16 %v1427
    %v1623 = vunpack.c.h.b16 %v1427
    %v1624 = vunpack.c.l.b16 %v1428
    %v1625 = vunpack.c.h.b16 %v1428
    %v1626 = vunpack.c.l.b16 %v1429
    %v1627 = vunpack.c.h.b16 %v1429
    %v1628 = vunpack.c.l.b16 %v1430
    %v1629 = vunpack.c.h.b16 %v1430
    %v1630 = vunpack.c.l.b16 %v1431
    %v1631 = vunpack.c.h.b16 %v1431
    %v1632 = vunpack.c.l.b16 %v1432
    %v1633 = vunpack.c.h.b16 %v1432
    %v1634 = vunpack.c.l.b16 %v1433
    %v1635 = vunpack.c.h.b16 %v1433
    %v1636 = vunpack.c.l.b16 %v1434
    %v1637 = vunpack.c.h.b16 %v1434
    %v1638 = vunpack.c.l.b16 %v1435
    %v1639 = vunpack.c.h.b16 %v1435
    %v1640 = vunpack.c.l.b16 %v1436
    %v1641 = vunpack.c.h.b16 %v1436
    %v1642 = vunpack.c.l.b16 %v1437
    %v1643 = vunpack.c.h.b16 %v1437
    %v1644 = vunpack.c.l.b16 %v1438
    %v1645 = vunpack.c.h.b16 %v1438
    %v1646 = vunpack.c.l.b16 %v1439
    %v1647 = vunpack.c.h.b16 %v1439
    %v1648 = vunpack.c.l.b16 %v1440
    %v1649 = vunpack.c.h.b16 %v1440
    %v1650 = vunpack.c.l.b16 %v1441
    %v1651 = vunpack.c.h.b16 %v1441
    %v1652 = vunpack.c.l.b16 %v1442
    %v1653 = vunpack.c.h.b16 %v1442
    %v1654 = vunpack.c.l.b16 %v1443
    %v1655 = vunpack.c.h.b16 %v1443
    %v1656 = vunpack.c.l.b16 %v1444
    %v1657 = vunpack.c.h.b16 %v1444
    %v1658 = vunpack.c.l.b16 %v1445
    %v1659 = vunpack.c.h.b16 %v1445
    %v1660 = vunpack.c.l.b16 %v1446
    %v1661 = vunpack.c.h.b16 %v1446
    %v1662 = vunpack.c.l.b16 %v1447
    %v1663 = vunpack.c.h.b16 %v1447
    %v1664 = vunpack.c.l.b16 %v1448
    %v1665 = vunpack.c.h.b16 %v1448
    %v1666 = vunpack.c.l.b16 %v1449
    %v1667 = vunpack.c.h.b16 %v1449
    %v1668 = vunpack.c.l.b16 %v1450
    %v1669 = vunpack.c.h.b16 %v1450
    %v1670 = vunpack.c.l.b16 %v1451
    %v1671 = vunpack.c.h.b16 %v1451
    %v1672 = vunpack.c.l.b16 %v1452
    %v1673 = vunpack.c.h.b16 %v1452
    %v1674 = vunpack.c.l.b16 %v1453
    %v1675 = vunpack.c.h.b16 %v1453
    %v1676 = vunpack.c.l.b16 %v1454
    %v1677 = vunpack.c.h.b16 %v1454
    %v1678 = vunpack.c.l.b16 %v1455
    %v1679 = vunpack.c.h.b16 %v1455
    %v1680 = vunpack.c.l.b16 %v1456
    %v1681 = vunpack.c.h.b16 %v1456
    %v1682 = vunpack.c.l.b16 %v1457
    %v1683 = vunpack.c.h.b16 %v1457
    %v1684 = vunpack.c.l.b16 %v1458
    %v1685 = vunpack.c.h.b16 %v1458
    %v1686 = vunpack.c.l.b16 %v1459
    %v1687 = vunpack.c.h.b16 %v1459
    %v1688 = vunpack.c.l.b16 %v1460
    %v1689 = vunpack.c.h.b16 %v1460
    %v1690 = vunpack.c.l.b16 %v1461
    %v1691 = vunpack.c.h.b16 %v1461
    %v1692 = vunpack.c.l.b16 %v1462
    %v1693 = vunpack.c.h.b16 %v1462
    %v1694 = vunpack.c.l.b16 %v1463
    %v1695 = vunpack.c.h.b16 %v1463
    %v1696 = vunpack.c.l.b16 %v1464
    %v1697 = vunpack.c.h.b16 %v1464
    %v1698 = vunpack.c.l.b16 %v1465
    %v1699 = vunpack.c.h.b16 %v1465
    %v1700 = vunpack.c.l.b16 %v1466
    %v1701 = vunpack.c.h.b16 %v1466
    %v1702 = vpack.c.b16 %v1582, %v1574
    %v1703 = vpack.c.b16 %v1583, %v1575
    %v1704 = vpack.c.b16 %v1584, %v1576
    %v1705 = vpack.c.b16 %v1585, %v1577
    %v1706 = vpack.c.b16 %v1586, %v1578
    %v1707 = vpack.c.b16 %v1587, %v1579
    %v1708 = vpack.c.b16 %v1588, %v1580
    %v1709 = vpack.c.b16 %v1589, %v1581
    %v1710 = vpack.c.b16 %v1598, %v1590
    %v1711 = vpack.c.b16 %v1599, %v1591
    %v1712 = vpack.c.b16 %v1600, %v1592
    %v1713 = vpack.c.b16 %v1601, %v1593
    %v1714 = vpack.c.b16 %v1602, %v1594
    %v1715 = vpack.c.b16 %v1603, %v1595
    %v1716 = vpack.c.b16 %v1604, %v1596
    %v1717 = vpack.c.b16 %v1605, %v1597
    %v1718 = vpack.c.b16 %v1614, %v1606
    %v1719 = vpack.c.b16 %v1615, %v1607
    %v1720 = vpack.c.b16 %v1616, %v1608
    %v1721 = vpack.c.b16 %v1617, %v1609
    %v1722 = vpack.c.b16 %v1618, %v1610
    %v1723 = vpack.c.b16 %v1619, %v1611
    %v1724 = vpack.c.b16 %v1620, %v1612
    %v1725 = vpack.c.b16 %v1621, %v1613
    %v1726 = vpack.c.b16 %v1630, %v1622
    %v1727 = vpack.c.b16 %v1631, %v1623
    %v1728 = vpack.c.b16 %v1632, %v1624
    %v1729 = vpack.c.b16 %v1633, %v1625
    %v1730 = vpack.c.b16 %v1634, %v1626
    %v1731 = vpack.c.b16 %v1635, %v1627
    %v1732 = vpack.c.b16 %v1636, %v1628
    %v1733 = vpack.c.b16 %v1637, %v1629
    %v1734 = vpack.c.b16 %v1646, %v1638
    %v1735 = vpack.c.b16 %v1647, %v1639
    %v1736 = vpack.c.b16 %v1648, %v1640
    %v1737 = vpack.c.b16 %v1649, %v1641
    %v1738 = vpack.c.b16 %v1650, %v1642
    %v1739 = vpack.c.b16 %v1651, %v1643
    %v1740 = vpack.c.b16 %v1652, %v1644
    %v1741 = vpack.c.b16 %v1653, %v1645
    %v1742 = vpack.c.b16 %v1662, %v1654
    %v1743 = vpack.c.b16 %v1663, %v1655
    %v1744 = vpack.c.b16 %v1664, %v1656
    %v1745 = vpack.c.b16 %v1665, %v1657
    %v1746 = vpack.c.b16 %v1666, %v1658
    %v1747 = vpack.c.b16 %v1667, %v1659
    %v1748 = vpack.c.b16 %v1668, %v1660
    %v1749 = vpack.c.b16 %v1669, %v1661
    %v1750 = vpack.c.b16 %v1678, %v1670
    %v1751 = vpack.c.b16 %v1679, %v1671
    %v1752 = vpack.c.b16 %v1680, %v1672
    %v1753 = vpack.c.b16 %v1681, %v1673
    %v1754 = vpack.c.b16 %v1682, %v1674
    %v1755 = vpack.c.b16 %v1683, %v1675
    %v1756 = vpack.c.b16 %v1684, %v1676
    %v1757 = vpack.c.b16 %v1685, %v1677
    %v1758 = vpack.c.b16 %v1694, %v1686
    %v1759 = vpack.c.b16 %v1695, %v1687
    %v1760 = vpack.c.b16 %v1696, %v1688
    %v1761 = vpack.c.b16 %v1697, %v1689
    %v1762 = vpack.c.b16 %v1698, %v1690
    %v1763 = vpack.c.b16 %v1699, %v1691
    %v1764 = vpack.c.b16 %v1700, %v1692
    %v1765 = vpack.c.b16 %v1701, %v1693
    %1830 = vmatprep.subr.bf16.mxu0 %v1703
    %1831 = vmatpush1.bf16.msra.mxu0 %v1702
    %1832 = vmatprep.subr.bf16.mxu0 %v1711
    %1833 = vmatpush1.bf16.msra.mxu0 %v1710
    %1834 = vmatprep.subr.bf16.mxu0 %v1719
    %1835 = vmatpush1.bf16.msra.mxu0 %v1718
    %1836 = vmatprep.subr.bf16.mxu0 %v1727
    %1837 = vmatpush1.bf16.msra.mxu0 %v1726
    %1838 = vmatprep.subr.bf16.mxu0 %v1735
    %1839 = vmatpush1.bf16.msra.mxu0 %v1734
    %1840 = vmatprep.subr.bf16.mxu0 %v1743
    %1841 = vmatpush1.bf16.msra.mxu0 %v1742
    %1842 = vmatprep.subr.bf16.mxu0 %v1751
    %1843 = vmatpush1.bf16.msra.mxu0 %v1750
    %1844 = vmatprep.subr.bf16.mxu0 %v1759
    %1845 = vmatpush1.bf16.msra.mxu0 %v1758
    %1846 = vmatprep.subr.bf16.mxu0 0
    %1847 = vmatpush1.bf16.msra.mxu0 0
    %1848 = vmatprep.subr.bf16.mxu0 0
    %1849 = vmatpush1.bf16.msra.mxu0 0
    %1850 = vmatprep.subr.bf16.mxu0 0
    %1851 = vmatpush1.bf16.msra.mxu0 0
    %1852 = vmatprep.subr.bf16.mxu0 0
    %1853 = vmatpush1.bf16.msra.mxu0 0
    %1854 = vmatprep.subr.bf16.mxu0 0
    %1855 = vmatpush1.bf16.msra.mxu0 0
    %1856 = vmatprep.subr.bf16.mxu0 0
    %1857 = vmatpush1.bf16.msra.mxu0 0
    %1858 = vmatprep.subr.bf16.mxu0 0
    %1859 = vmatpush1.bf16.msra.mxu0 0
    %1860 = vmatprep.subr.bf16.mxu0 0
    %1861 = vmatpush1.bf16.msra.mxu0 0
    %1862 = vmatprep.mubr.bf16.mxu0 0
    %1863 = vmatmul.mubr.bf16.gmra.mrb[0].mxu0 %v1401
    %v1864 = vpop.f32.mrb[0].mxu0
    %v1865 = vadd.f32 %v1473, %v1864
    %v1866 = vpop.f32.mrb[0].mxu0
    %v1867 = vadd.f32 %v1477, %v1866
    %v1868 = vpop.f32.mrb[0].mxu0
    %v1869 = vpop.f32.mrb[0].mxu0
    %1870 = vdwg.mxu0
    %1871 = vmatprep.subr.bf16.mxu0 %v1705
    %1872 = vmatpush1.bf16.msra.mxu0 %v1704
    %1873 = vmatprep.subr.bf16.mxu0 %v1713
    %1874 = vmatpush1.bf16.msra.mxu0 %v1712
    %1875 = vmatprep.subr.bf16.mxu0 %v1721
    %1876 = vmatpush1.bf16.msra.mxu0 %v1720
    %1877 = vmatprep.subr.bf16.mxu0 %v1729
    %1878 = vmatpush1.bf16.msra.mxu0 %v1728
    %1879 = vmatprep.subr.bf16.mxu0 %v1737
    %1880 = vmatpush1.bf16.msra.mxu0 %v1736
    %1881 = vmatprep.subr.bf16.mxu0 %v1745
    %1882 = vmatpush1.bf16.msra.mxu0 %v1744
    %1883 = vmatprep.subr.bf16.mxu0 %v1753
    %1884 = vmatpush1.bf16.msra.mxu0 %v1752
    %1885 = vmatprep.subr.bf16.mxu0 %v1761
    %1886 = vmatpush1.bf16.msra.mxu0 %v1760
    %1887 = vmatprep.subr.bf16.mxu0 0
    %1888 = vmatpush1.bf16.msra.mxu0 0
    %1889 = vmatprep.subr.bf16.mxu0 0
    %1890 = vmatpush1.bf16.msra.mxu0 0
    %1891 = vmatprep.subr.bf16.mxu0 0
    %1892 = vmatpush1.bf16.msra.mxu0 0
    %1893 = vmatprep.subr.bf16.mxu0 0
    %1894 = vmatpush1.bf16.msra.mxu0 0
    %1895 = vmatprep.subr.bf16.mxu0 0
    %1896 = vmatpush1.bf16.msra.mxu0 0
    %1897 = vmatprep.subr.bf16.mxu0 0
    %1898 = vmatpush1.bf16.msra.mxu0 0
    %1899 = vmatprep.subr.bf16.mxu0 0
    %1900 = vmatpush1.bf16.msra.mxu0 0
    %1901 = vmatprep.subr.bf16.mxu0 0
    %1902 = vmatpush1.bf16.msra.mxu0 0
    %1903 = vmatprep.mubr.bf16.mxu0 0
    %1904 = vmatmul.mubr.bf16.gmra.mrb[0].mxu0 %v1401
    %v1905 = vpop.f32.mrb[0].mxu0
    %v1906 = vadd.f32 %v1481, %v1905
    %v1907 = vpop.f32.mrb[0].mxu0
    %v1908 = vadd.f32 %v1485, %v1907
    %v1909 = vpop.f32.mrb[0].mxu0
    %v1910 = vpop.f32.mrb[0].mxu0
    %1911 = vdwg.mxu0
    %1912 = vmatprep.subr.bf16.mxu0 %v1707
    %1913 = vmatpush1.bf16.msra.mxu0 %v1706
    %1914 = vmatprep.subr.bf16.mxu0 %v1715
    %1915 = vmatpush1.bf16.msra.mxu0 %v1714
    %1916 = vmatprep.subr.bf16.mxu0 %v1723
    %1917 = vmatpush1.bf16.msra.mxu0 %v1722
    %1918 = vmatprep.subr.bf16.mxu0 %v1731
    %1919 = vmatpush1.bf16.msra.mxu0 %v1730
    %1920 = vmatprep.subr.bf16.mxu0 %v1739
    %1921 = vmatpush1.bf16.msra.mxu0 %v1738
    %1922 = vmatprep.subr.bf16.mxu0 %v1747
    %1923 = vmatpush1.bf16.msra.mxu0 %v1746
    %1924 = vmatprep.subr.bf16.mxu0 %v1755
    %1925 = vmatpush1.bf16.msra.mxu0 %v1754
    %1926 = vmatprep.subr.bf16.mxu0 %v1763
    %1927 = vmatpush1.bf16.msra.mxu0 %v1762
    %1928 = vmatprep.subr.bf16.mxu0 0
    %1929 = vmatpush1.bf16.msra.mxu0 0
    %1930 = vmatprep.subr.bf16.mxu0 0
    %1931 = vmatpush1.bf16.msra.mxu0 0
    %1932 = vmatprep.subr.bf16.mxu0 0
    %1933 = vmatpush1.bf16.msra.mxu0 0
    %1934 = vmatprep.subr.bf16.mxu0 0
    %1935 = vmatpush1.bf16.msra.mxu0 0
    %1936 = vmatprep.subr.bf16.mxu0 0
    %1937 = vmatpush1.bf16.msra.mxu0 0
    %1938 = vmatprep.subr.bf16.mxu0 0
    %1939 = vmatpush1.bf16.msra.mxu0 0
    %1940 = vmatprep.subr.bf16.mxu0 0
    %1941 = vmatpush1.bf16.msra.mxu0 0
    %1942 = vmatprep.subr.bf16.mxu0 0
    %1943 = vmatpush1.bf16.msra.mxu0 0
    %1944 = vmatprep.mubr.bf16.mxu0 0
    %1945 = vmatmul.mubr.bf16.gmra.mrb[0].mxu0 %v1401
    %v1946 = vpop.f32.mrb[0].mxu0
    %v1947 = vadd.f32 %v1489, %v1946
    %v1948 = vpop.f32.mrb[0].mxu0
    %v1949 = vadd.f32 %v1493, %v1948
    %v1950 = vpop.f32.mrb[0].mxu0
    %v1951 = vpop.f32.mrb[0].mxu0
    %1952 = vdwg.mxu0
    %1953 = vmatprep.subr.bf16.mxu0 %v1709
    %1954 = vmatpush1.bf16.msra.mxu0 %v1708
    %1955 = vmatprep.subr.bf16.mxu0 %v1717
    %1956 = vmatpush1.bf16.msra.mxu0 %v1716
    %1957 = vmatprep.subr.bf16.mxu0 %v1725
    %1958 = vmatpush1.bf16.msra.mxu0 %v1724
    %1959 = vmatprep.subr.bf16.mxu0 %v1733
    %1960 = vmatpush1.bf16.msra.mxu0 %v1732
    %1961 = vmatprep.subr.bf16.mxu0 %v1741
    %1962 = vmatpush1.bf16.msra.mxu0 %v1740
    %1963 = vmatprep.subr.bf16.mxu0 %v1749
    %1964 = vmatpush1.bf16.msra.mxu0 %v1748
    %1965 = vmatprep.subr.bf16.mxu0 %v1757
    %1966 = vmatpush1.bf16.msra.mxu0 %v1756
    %1967 = vmatprep.subr.bf16.mxu0 %v1765
    %1968 = vmatpush1.bf16.msra.mxu0 %v1764
    %1969 = vmatprep.subr.bf16.mxu0 0
    %1970 = vmatpush1.bf16.msra.mxu0 0
    %1971 = vmatprep.subr.bf16.mxu0 0
    %1972 = vmatpush1.bf16.msra.mxu0 0
    %1973 = vmatprep.subr.bf16.mxu0 0
    %1974 = vmatpush1.bf16.msra.mxu0 0
    %1975 = vmatprep.subr.bf16.mxu0 0
    %1976 = vmatpush1.bf16.msra.mxu0 0
    %1977 = vmatprep.subr.bf16.mxu0 0
    %1978 = vmatpush1.bf16.msra.mxu0 0
    %1979 = vmatprep.subr.bf16.mxu0 0
    %1980 = vmatpush1.bf16.msra.mxu0 0
    %1981 = vmatprep.subr.bf16.mxu0 0
    %1982 = vmatpush1.bf16.msra.mxu0 0
    %1983 = vmatprep.subr.bf16.mxu0 0
    %1984 = vmatpush1.bf16.msra.mxu0 0
    %1985 = vmatprep.mubr.bf16.mxu0 0
    %1986 = vmatmul.mubr.bf16.gmra.mrb[0].mxu0 %v1401
    %v1987 = vpop.f32.mrb[0].mxu0
    %v1988 = vadd.f32 %v1497, %v1987
    %v1989 = vpop.f32.mrb[0].mxu0
    %v1990 = vadd.f32 %v1501, %v1989
    %v1991 = vpop.f32.mrb[0].mxu0
    %v1992 = vpop.f32.mrb[0].mxu0
    %1993 = vdwg.mxu0
    %v1994 = vtanh.pop %v1865
    %v1995 = vtanh.pop %v1867
    %v1996 = vtanh.pop %v1906
    %v1997 = vtanh.pop %v1908
    %v1998 = vmul.f32 %v1994, 1.442695
    %v1999 = vpow.pop %v1998
    %v2000 = vmul.f32 %v1995, 1.442695
    %v2001 = vpow.pop %v2000
    %v2002 = vmul.f32 %v1996, 1.442695
    %v2003 = vpow.pop %v2002
    %v2004 = vmul.f32 %v1997, 1.442695
    %v2005 = vpow.pop %v2004
    %v2006 = vmul.f32 %v78, %v1999
    %v2007 = vmul.f32 %v79, %v2001
    %v2008 = vmul.f32 %v80, %v2003
    %v2009 = vmul.f32 %v81, %v2005
    %v2010 = vadd.f32 %v2006, %v1947
    %v2011 = vadd.f32 %v2007, %v1949
    %v2012 = vadd.f32 %v2008, %v1988
    %v2013 = vadd.f32 %v2009, %v1990
    %v2014 = vadd.f32 %v1994, %v1995
    %v2015 = vadd.f32 %v2014, %v1996
    %v2016 = vadd.f32 %v2015, %v1997
    %2017 = vadd.xlane.f32.xlu0 %v2016
    %v2018 = vpop.xlane.xlu0 %2017
    %v2019 = vadd.f32 %v1050, %v2018
    %v2020 = vpack.c.bf16 %v2010, %v2010
    %v2021 = vpack.c.bf16 %v2011, %v2011
    %v2022 = vpack.c.bf16 %v2012, %v2012
    %v2023 = vpack.c.bf16 %v2013, %v2013
    %s2024 = scalar_lea.vmem [#allocation5], 512
    %v2025 = vld [vmem:[%s2024] sm:$0xf]
    %v2026 = vld [vmem:[%s2024 + $0x4] sm:$0xf]
    %v2027 = vld [vmem:[%s2024 + $0x8] sm:$0xf]
    %v2028 = vld [vmem:[%s2024 + $0xc] sm:$0xf]
    %v2029 = vld [vmem:[%s2024 + $0x10] sm:$0xf]
    %v2030 = vld [vmem:[%s2024 + $0x14] sm:$0xf]
    %v2031 = vld [vmem:[%s2024 + $0x18] sm:$0xf]
    %v2032 = vld [vmem:[%s2024 + $0x1c] sm:$0xf]
    %v2033 = vld [vmem:[%s2024 + $0x20] sm:$0xf]
    %v2034 = vld [vmem:[%s2024 + $0x24] sm:$0xf]
    %v2035 = vld [vmem:[%s2024 + $0x28] sm:$0xf]
    %v2036 = vld [vmem:[%s2024 + $0x2c] sm:$0xf]
    %v2037 = vld [vmem:[%s2024 + $0x30] sm:$0xf]
    %v2038 = vld [vmem:[%s2024 + $0x34] sm:$0xf]
    %v2039 = vld [vmem:[%s2024 + $0x38] sm:$0xf]
    %v2040 = vld [vmem:[%s2024 + $0x3c] sm:$0xf]
    %v2041 = vld [vmem:[%s2024 + $0x40] sm:$0xf]
    %v2042 = vld [vmem:[%s2024 + $0x44] sm:$0xf]
    %v2043 = vld [vmem:[%s2024 + $0x48] sm:$0xf]
    %v2044 = vld [vmem:[%s2024 + $0x4c] sm:$0xf]
    %v2045 = vld [vmem:[%s2024 + $0x50] sm:$0xf]
    %v2046 = vld [vmem:[%s2024 + $0x54] sm:$0xf]
    %v2047 = vld [vmem:[%s2024 + $0x58] sm:$0xf]
    %v2048 = vld [vmem:[%s2024 + $0x5c] sm:$0xf]
    %v2049 = vld [vmem:[%s2024 + $0x60] sm:$0xf]
    %v2050 = vld [vmem:[%s2024 + $0x64] sm:$0xf]
    %v2051 = vld [vmem:[%s2024 + $0x68] sm:$0xf]
    %v2052 = vld [vmem:[%s2024 + $0x6c] sm:$0xf]
    %v2053 = vld [vmem:[%s2024 + $0x70] sm:$0xf]
    %v2054 = vld [vmem:[%s2024 + $0x74] sm:$0xf]
    %v2055 = vld [vmem:[%s2024 + $0x78] sm:$0xf]
    %v2056 = vld [vmem:[%s2024 + $0x7c] sm:$0xf]
    %v2057 = vld [vmem:[%s2024 + $0x80] sm:$0xf]
    %v2058 = vld [vmem:[%s2024 + $0x84] sm:$0xf]
    %v2059 = vld [vmem:[%s2024 + $0x88] sm:$0xf]
    %v2060 = vld [vmem:[%s2024 + $0x8c] sm:$0xf]
    %v2061 = vld [vmem:[%s2024 + $0x90] sm:$0xf]
    %v2062 = vld [vmem:[%s2024 + $0x94] sm:$0xf]
    %v2063 = vld [vmem:[%s2024 + $0x98] sm:$0xf]
    %v2064 = vld [vmem:[%s2024 + $0x9c] sm:$0xf]
    %v2065 = vld [vmem:[%s2024 + $0xa0] sm:$0xf]
    %v2066 = vld [vmem:[%s2024 + $0xa4] sm:$0xf]
    %v2067 = vld [vmem:[%s2024 + $0xa8] sm:$0xf]
    %v2068 = vld [vmem:[%s2024 + $0xac] sm:$0xf]
    %v2069 = vld [vmem:[%s2024 + $0xb0] sm:$0xf]
    %v2070 = vld [vmem:[%s2024 + $0xb4] sm:$0xf]
    %v2071 = vld [vmem:[%s2024 + $0xb8] sm:$0xf]
    %v2072 = vld [vmem:[%s2024 + $0xbc] sm:$0xf]
    %v2073 = vld [vmem:[%s2024 + $0xc0] sm:$0xf]
    %v2074 = vld [vmem:[%s2024 + $0xc4] sm:$0xf]
    %v2075 = vld [vmem:[%s2024 + $0xc8] sm:$0xf]
    %v2076 = vld [vmem:[%s2024 + $0xcc] sm:$0xf]
    %v2077 = vld [vmem:[%s2024 + $0xd0] sm:$0xf]
    %v2078 = vld [vmem:[%s2024 + $0xd4] sm:$0xf]
    %v2079 = vld [vmem:[%s2024 + $0xd8] sm:$0xf]
    %v2080 = vld [vmem:[%s2024 + $0xdc] sm:$0xf]
    %v2081 = vld [vmem:[%s2024 + $0xe0] sm:$0xf]
    %v2082 = vld [vmem:[%s2024 + $0xe4] sm:$0xf]
    %v2083 = vld [vmem:[%s2024 + $0xe8] sm:$0xf]
    %v2084 = vld [vmem:[%s2024 + $0xec] sm:$0xf]
    %v2085 = vld [vmem:[%s2024 + $0xf0] sm:$0xf]
    %v2086 = vld [vmem:[%s2024 + $0xf4] sm:$0xf]
    %v2087 = vld [vmem:[%s2024 + $0xf8] sm:$0xf]
    %v2088 = vld [vmem:[%s2024 + $0xfc] sm:$0xf]
    %s2089 = scalar_lea.vmem %s2, 2
    %v2090 = vld [vmem:[%s2089] sm:$0x1]
    %v2092 = vlaneseq
    %v2093 = vshrl.u32 %v2092, 7
    %v2094 = vsub.s32 0, %v2093
    %v2095 = vrot.slane %v2090, %v2094
    %v2161 = vunpack.c.l.b16 %v2025
    %v2162 = vunpack.c.l.b16 %v2026
    %v2163 = vunpack.c.l.b16 %v2027
    %v2164 = vunpack.c.l.b16 %v2028
    %v2165 = vunpack.c.l.b16 %v2029
    %v2166 = vunpack.c.l.b16 %v2030
    %v2167 = vunpack.c.l.b16 %v2031
    %v2168 = vunpack.c.l.b16 %v2032
    %v2169 = vunpack.c.l.b16 %v2033
    %v2170 = vunpack.c.l.b16 %v2034
    %v2171 = vunpack.c.l.b16 %v2035
    %v2172 = vunpack.c.l.b16 %v2036
    %v2173 = vunpack.c.l.b16 %v2037
    %v2174 = vunpack.c.l.b16 %v2038
    %v2175 = vunpack.c.l.b16 %v2039
    %v2176 = vunpack.c.l.b16 %v2040
    %v2177 = vunpack.c.l.b16 %v2041
    %v2178 = vunpack.c.l.b16 %v2042
    %v2179 = vunpack.c.l.b16 %v2043
    %v2180 = vunpack.c.l.b16 %v2044
    %v2181 = vunpack.c.l.b16 %v2045
    %v2182 = vunpack.c.l.b16 %v2046
    %v2183 = vunpack.c.l.b16 %v2047
    %v2184 = vunpack.c.l.b16 %v2048
    %v2185 = vunpack.c.l.b16 %v2049
    %v2186 = vunpack.c.l.b16 %v2050
    %v2187 = vunpack.c.l.b16 %v2051
    %v2188 = vunpack.c.l.b16 %v2052
    %v2189 = vunpack.c.l.b16 %v2053
    %v2190 = vunpack.c.l.b16 %v2054
    %v2191 = vunpack.c.l.b16 %v2055
    %v2192 = vunpack.c.l.b16 %v2056
    %v2193 = vunpack.c.l.b16 %v2057
    %v2194 = vunpack.c.l.b16 %v2058
    %v2195 = vunpack.c.l.b16 %v2059
    %v2196 = vunpack.c.l.b16 %v2060
    %v2197 = vunpack.c.l.b16 %v2061
    %v2198 = vunpack.c.l.b16 %v2062
    %v2199 = vunpack.c.l.b16 %v2063
    %v2200 = vunpack.c.l.b16 %v2064
    %v2201 = vunpack.c.l.b16 %v2065
    %v2202 = vunpack.c.l.b16 %v2066
    %v2203 = vunpack.c.l.b16 %v2067
    %v2204 = vunpack.c.l.b16 %v2068
    %v2205 = vunpack.c.l.b16 %v2069
    %v2206 = vunpack.c.l.b16 %v2070
    %v2207 = vunpack.c.l.b16 %v2071
    %v2208 = vunpack.c.l.b16 %v2072
    %v2209 = vunpack.c.l.b16 %v2073
    %v2210 = vunpack.c.l.b16 %v2074
    %v2211 = vunpack.c.l.b16 %v2075
    %v2212 = vunpack.c.l.b16 %v2076
    %v2213 = vunpack.c.l.b16 %v2077
    %v2214 = vunpack.c.l.b16 %v2078
    %v2215 = vunpack.c.l.b16 %v2079
    %v2216 = vunpack.c.l.b16 %v2080
    %v2217 = vunpack.c.l.b16 %v2081
    %v2218 = vunpack.c.l.b16 %v2082
    %v2219 = vunpack.c.l.b16 %v2083
    %v2220 = vunpack.c.l.b16 %v2084
    %v2221 = vunpack.c.l.b16 %v2085
    %v2222 = vunpack.c.l.b16 %v2086
    %v2223 = vunpack.c.l.b16 %v2087
    %v2224 = vunpack.c.l.b16 %v2088
    %v2225 = vpack.c.b16 %v2162, %v2161
    %v2226 = vpack.c.b16 %v2164, %v2163
    %v2227 = vpack.c.b16 %v2166, %v2165
    %v2228 = vpack.c.b16 %v2168, %v2167
    %v2229 = vpack.c.b16 %v2170, %v2169
    %v2230 = vpack.c.b16 %v2172, %v2171
    %v2231 = vpack.c.b16 %v2174, %v2173
    %v2232 = vpack.c.b16 %v2176, %v2175
    %v2233 = vpack.c.b16 %v2178, %v2177
    %v2234 = vpack.c.b16 %v2180, %v2179
    %v2235 = vpack.c.b16 %v2182, %v2181
    %v2236 = vpack.c.b16 %v2184, %v2183
    %v2237 = vpack.c.b16 %v2186, %v2185
    %v2238 = vpack.c.b16 %v2188, %v2187
    %v2239 = vpack.c.b16 %v2190, %v2189
    %v2240 = vpack.c.b16 %v2192, %v2191
    %v2241 = vpack.c.b16 %v2194, %v2193
    %v2242 = vpack.c.b16 %v2196, %v2195
    %v2243 = vpack.c.b16 %v2198, %v2197
    %v2244 = vpack.c.b16 %v2200, %v2199
    %v2245 = vpack.c.b16 %v2202, %v2201
    %v2246 = vpack.c.b16 %v2204, %v2203
    %v2247 = vpack.c.b16 %v2206, %v2205
    %v2248 = vpack.c.b16 %v2208, %v2207
    %v2249 = vpack.c.b16 %v2210, %v2209
    %v2250 = vpack.c.b16 %v2212, %v2211
    %v2251 = vpack.c.b16 %v2214, %v2213
    %v2252 = vpack.c.b16 %v2216, %v2215
    %v2253 = vpack.c.b16 %v2218, %v2217
    %v2254 = vpack.c.b16 %v2220, %v2219
    %v2255 = vpack.c.b16 %v2222, %v2221
    %v2256 = vpack.c.b16 %v2224, %v2223
    %2289 = vmatprep.subr.bf16.mxu0 0
    %2290 = vmatpush1.bf16.msra.mxu0 %v2225
    %2291 = vmatprep.subr.bf16.mxu0 0
    %2292 = vmatpush1.bf16.msra.mxu0 %v2226
    %2293 = vmatprep.subr.bf16.mxu0 0
    %2294 = vmatpush1.bf16.msra.mxu0 %v2227
    %2295 = vmatprep.subr.bf16.mxu0 0
    %2296 = vmatpush1.bf16.msra.mxu0 %v2228
    %2297 = vmatprep.subr.bf16.mxu0 0
    %2298 = vmatpush1.bf16.msra.mxu0 %v2229
    %2299 = vmatprep.subr.bf16.mxu0 0
    %2300 = vmatpush1.bf16.msra.mxu0 %v2230
    %2301 = vmatprep.subr.bf16.mxu0 0
    %2302 = vmatpush1.bf16.msra.mxu0 %v2231
    %2303 = vmatprep.subr.bf16.mxu0 0
    %2304 = vmatpush1.bf16.msra.mxu0 %v2232
    %2305 = vmatprep.subr.bf16.mxu0 0
    %2306 = vmatpush1.bf16.msra.mxu0 %v2233
    %2307 = vmatprep.subr.bf16.mxu0 0
    %2308 = vmatpush1.bf16.msra.mxu0 %v2234
    %2309 = vmatprep.subr.bf16.mxu0 0
    %2310 = vmatpush1.bf16.msra.mxu0 %v2235
    %2311 = vmatprep.subr.bf16.mxu0 0
    %2312 = vmatpush1.bf16.msra.mxu0 %v2236
    %2313 = vmatprep.subr.bf16.mxu0 0
    %2314 = vmatpush1.bf16.msra.mxu0 %v2237
    %2315 = vmatprep.subr.bf16.mxu0 0
    %2316 = vmatpush1.bf16.msra.mxu0 %v2238
    %2317 = vmatprep.subr.bf16.mxu0 0
    %2318 = vmatpush1.bf16.msra.mxu0 %v2239
    %2319 = vmatprep.subr.bf16.mxu0 0
    %2320 = vmatpush1.bf16.msra.mxu0 %v2240
    %2321 = vmatprep.mubr.bf16.mxu0 %v2021
    %2322 = vmatmul.mubr.bf16.gmra.mrb[0].mxu0 %v2020
    %v2323 = vpop.f32.mrb[0].mxu0
    %v2324 = vadd.f32 %v2095, %v2323
    %v2325 = vpop.f32.mrb[0].mxu0
    %v2326 = vpop.f32.mrb[0].mxu0
    %v2327 = vpop.f32.mrb[0].mxu0
    %2328 = vdwg.mxu0
    %2329 = vmatprep.subr.bf16.mxu0 0
    %2330 = vmatpush1.bf16.msra.mxu0 %v2241
    %2331 = vmatprep.subr.bf16.mxu0 0
    %2332 = vmatpush1.bf16.msra.mxu0 %v2242
    %2333 = vmatprep.subr.bf16.mxu0 0
    %2334 = vmatpush1.bf16.msra.mxu0 %v2243
    %2335 = vmatprep.subr.bf16.mxu0 0
    %2336 = vmatpush1.bf16.msra.mxu0 %v2244
    %2337 = vmatprep.subr.bf16.mxu0 0
    %2338 = vmatpush1.bf16.msra.mxu0 %v2245
    %2339 = vmatprep.subr.bf16.mxu0 0
    %2340 = vmatpush1.bf16.msra.mxu0 %v2246
    %2341 = vmatprep.subr.bf16.mxu0 0
    %2342 = vmatpush1.bf16.msra.mxu0 %v2247
    %2343 = vmatprep.subr.bf16.mxu0 0
    %2344 = vmatpush1.bf16.msra.mxu0 %v2248
    %2345 = vmatprep.subr.bf16.mxu0 0
    %2346 = vmatpush1.bf16.msra.mxu0 %v2249
    %2347 = vmatprep.subr.bf16.mxu0 0
    %2348 = vmatpush1.bf16.msra.mxu0 %v2250
    %2349 = vmatprep.subr.bf16.mxu0 0
    %2350 = vmatpush1.bf16.msra.mxu0 %v2251
    %2351 = vmatprep.subr.bf16.mxu0 0
    %2352 = vmatpush1.bf16.msra.mxu0 %v2252
    %2353 = vmatprep.subr.bf16.mxu0 0
    %2354 = vmatpush1.bf16.msra.mxu0 %v2253
    %2355 = vmatprep.subr.bf16.mxu0 0
    %2356 = vmatpush1.bf16.msra.mxu0 %v2254
    %2357 = vmatprep.subr.bf16.mxu0 0
    %2358 = vmatpush1.bf16.msra.mxu0 %v2255
    %2359 = vmatprep.subr.bf16.mxu0 0
    %2360 = vmatpush1.bf16.msra.mxu0 %v2256
    %2361 = vmatprep.mubr.bf16.mxu0 %v2023
    %2362 = vmatmul.mubr.bf16.gmra.mrb[0].mxu0 %v2022
    %v2363 = vpop.f32.mrb[0].mxu0
    %v2364 = vadd.f32 %v2324, %v2363
    %v2365 = vpop.f32.mrb[0].mxu0
    %v2366 = vpop.f32.mrb[0].mxu0
    %v2367 = vpop.f32.mrb[0].mxu0
    %2368 = vdwg.mxu0
    %v2369 = vtanh.pop %v2364
    %v2370 = vpack.c.bf16 %v2369, %v2369
    %s2371 = scalar_lea.vmem [#allocation7], 1024
    %v2372 = vld [vmem:[%s2371] sm:$0xff]
    %v2373 = vld [vmem:[%s2371 + $0x8] sm:$0xff]
    %v2374 = vld [vmem:[%s2371 + $0x10] sm:$0xff]
    %v2375 = vld [vmem:[%s2371 + $0x18] sm:$0xff]
    %v2376 = vld [vmem:[%s2371 + $0x20] sm:$0xff]
    %v2377 = vld [vmem:[%s2371 + $0x28] sm:$0xff]
    %v2378 = vld [vmem:[%s2371 + $0x30] sm:$0xff]
    %v2379 = vld [vmem:[%s2371 + $0x38] sm:$0xff]
    %v2380 = vld [vmem:[%s2371 + $0x40] sm:$0xff]
    %v2381 = vld [vmem:[%s2371 + $0x48] sm:$0xff]
    %v2382 = vld [vmem:[%s2371 + $0x50] sm:$0xff]
    %v2383 = vld [vmem:[%s2371 + $0x58] sm:$0xff]
    %v2384 = vld [vmem:[%s2371 + $0x60] sm:$0xff]
    %v2385 = vld [vmem:[%s2371 + $0x68] sm:$0xff]
    %v2386 = vld [vmem:[%s2371 + $0x70] sm:$0xff]
    %v2387 = vld [vmem:[%s2371 + $0x78] sm:$0xff]
    %v2388 = vld [vmem:[%s2371 + $0x80] sm:$0xff]
    %v2389 = vld [vmem:[%s2371 + $0x88] sm:$0xff]
    %v2390 = vld [vmem:[%s2371 + $0x90] sm:$0xff]
    %v2391 = vld [vmem:[%s2371 + $0x98] sm:$0xff]
    %v2392 = vld [vmem:[%s2371 + $0xa0] sm:$0xff]
    %v2393 = vld [vmem:[%s2371 + $0xa8] sm:$0xff]
    %v2394 = vld [vmem:[%s2371 + $0xb0] sm:$0xff]
    %v2395 = vld [vmem:[%s2371 + $0xb8] sm:$0xff]
    %v2396 = vld [vmem:[%s2371 + $0xc0] sm:$0xff]
    %v2397 = vld [vmem:[%s2371 + $0xc8] sm:$0xff]
    %v2398 = vld [vmem:[%s2371 + $0xd0] sm:$0xff]
    %v2399 = vld [vmem:[%s2371 + $0xd8] sm:$0xff]
    %v2400 = vld [vmem:[%s2371 + $0xe0] sm:$0xff]
    %v2401 = vld [vmem:[%s2371 + $0xe8] sm:$0xff]
    %v2402 = vld [vmem:[%s2371 + $0xf0] sm:$0xff]
    %v2403 = vld [vmem:[%s2371 + $0xf8] sm:$0xff]
    %v2404 = vld [vmem:[%s2371 + $0x100] sm:$0xff]
    %v2405 = vld [vmem:[%s2371 + $0x108] sm:$0xff]
    %v2406 = vld [vmem:[%s2371 + $0x110] sm:$0xff]
    %v2407 = vld [vmem:[%s2371 + $0x118] sm:$0xff]
    %v2408 = vld [vmem:[%s2371 + $0x120] sm:$0xff]
    %v2409 = vld [vmem:[%s2371 + $0x128] sm:$0xff]
    %v2410 = vld [vmem:[%s2371 + $0x130] sm:$0xff]
    %v2411 = vld [vmem:[%s2371 + $0x138] sm:$0xff]
    %v2412 = vld [vmem:[%s2371 + $0x140] sm:$0xff]
    %v2413 = vld [vmem:[%s2371 + $0x148] sm:$0xff]
    %v2414 = vld [vmem:[%s2371 + $0x150] sm:$0xff]
    %v2415 = vld [vmem:[%s2371 + $0x158] sm:$0xff]
    %v2416 = vld [vmem:[%s2371 + $0x160] sm:$0xff]
    %v2417 = vld [vmem:[%s2371 + $0x168] sm:$0xff]
    %v2418 = vld [vmem:[%s2371 + $0x170] sm:$0xff]
    %v2419 = vld [vmem:[%s2371 + $0x178] sm:$0xff]
    %v2420 = vld [vmem:[%s2371 + $0x180] sm:$0xff]
    %v2421 = vld [vmem:[%s2371 + $0x188] sm:$0xff]
    %v2422 = vld [vmem:[%s2371 + $0x190] sm:$0xff]
    %v2423 = vld [vmem:[%s2371 + $0x198] sm:$0xff]
    %v2424 = vld [vmem:[%s2371 + $0x1a0] sm:$0xff]
    %v2425 = vld [vmem:[%s2371 + $0x1a8] sm:$0xff]
    %v2426 = vld [vmem:[%s2371 + $0x1b0] sm:$0xff]
    %v2427 = vld [vmem:[%s2371 + $0x1b8] sm:$0xff]
    %v2428 = vld [vmem:[%s2371 + $0x1c0] sm:$0xff]
    %v2429 = vld [vmem:[%s2371 + $0x1c8] sm:$0xff]
    %v2430 = vld [vmem:[%s2371 + $0x1d0] sm:$0xff]
    %v2431 = vld [vmem:[%s2371 + $0x1d8] sm:$0xff]
    %v2432 = vld [vmem:[%s2371 + $0x1e0] sm:$0xff]
    %v2433 = vld [vmem:[%s2371 + $0x1e8] sm:$0xff]
    %v2434 = vld [vmem:[%s2371 + $0x1f0] sm:$0xff]
    %v2435 = vld [vmem:[%s2371 + $0x1f8] sm:$0xff]
    %s2436 = scalar_lea.vmem [#allocation8], 16
    %v2437 = vld [vmem:[%s2436] sm:$0xff]
    %v2439 = vlaneseq
    %v2440 = vshrl.u32 %v2439, 7
    %v2441 = vsub.s32 0, %v2440
    %v2442 = vrot.slane %v2437, %v2441
    %v2443 = vlaneseq
    %v2444 = vshrl.u32 %v2443, 7
    %v2445 = vsub.s32 1, %v2444
    %v2446 = vrot.slane %v2437, %v2445
    %v2447 = vlaneseq
    %v2448 = vshrl.u32 %v2447, 7
    %v2449 = vsub.s32 2, %v2448
    %v2450 = vrot.slane %v2437, %v2449
    %v2451 = vlaneseq
    %v2452 = vshrl.u32 %v2451, 7
    %v2453 = vsub.s32 3, %v2452
    %v2454 = vrot.slane %v2437, %v2453
    %v2455 = vlaneseq
    %v2456 = vshrl.u32 %v2455, 7
    %v2457 = vsub.s32 4, %v2456
    %v2458 = vrot.slane %v2437, %v2457
    %v2459 = vlaneseq
    %v2460 = vshrl.u32 %v2459, 7
    %v2461 = vsub.s32 5, %v2460
    %v2462 = vrot.slane %v2437, %v2461
    %v2463 = vlaneseq
    %v2464 = vshrl.u32 %v2463, 7
    %v2465 = vsub.s32 6, %v2464
    %v2466 = vrot.slane %v2437, %v2465
    %v2467 = vlaneseq
    %v2468 = vshrl.u32 %v2467, 7
    %v2469 = vsub.s32 7, %v2468
    %v2470 = vrot.slane %v2437, %v2469
    %v2543 = vunpack.c.l.b16 %v2372
    %v2544 = vunpack.c.h.b16 %v2372
    %v2545 = vunpack.c.l.b16 %v2373
    %v2546 = vunpack.c.h.b16 %v2373
    %v2547 = vunpack.c.l.b16 %v2374
    %v2548 = vunpack.c.h.b16 %v2374
    %v2549 = vunpack.c.l.b16 %v2375
    %v2550 = vunpack.c.h.b16 %v2375
    %v2551 = vunpack.c.l.b16 %v2376
    %v2552 = vunpack.c.h.b16 %v2376
    %v2553 = vunpack.c.l.b16 %v2377
    %v2554 = vunpack.c.h.b16 %v2377
    %v2555 = vunpack.c.l.b16 %v2378
    %v2556 = vunpack.c.h.b16 %v2378
    %v2557 = vunpack.c.l.b16 %v2379
    %v2558 = vunpack.c.h.b16 %v2379
    %v2559 = vunpack.c.l.b16 %v2380
    %v2560 = vunpack.c.h.b16 %v2380
    %v2561 = vunpack.c.l.b16 %v2381
    %v2562 = vunpack.c.h.b16 %v2381
    %v2563 = vunpack.c.l.b16 %v2382
    %v2564 = vunpack.c.h.b16 %v2382
    %v2565 = vunpack.c.l.b16 %v2383
    %v2566 = vunpack.c.h.b16 %v2383
    %v2567 = vunpack.c.l.b16 %v2384
    %v2568 = vunpack.c.h.b16 %v2384
    %v2569 = vunpack.c.l.b16 %v2385
    %v2570 = vunpack.c.h.b16 %v2385
    %v2571 = vunpack.c.l.b16 %v2386
    %v2572 = vunpack.c.h.b16 %v2386
    %v2573 = vunpack.c.l.b16 %v2387
    %v2574 = vunpack.c.h.b16 %v2387
    %v2575 = vunpack.c.l.b16 %v2388
    %v2576 = vunpack.c.h.b16 %v2388
    %v2577 = vunpack.c.l.b16 %v2389
    %v2578 = vunpack.c.h.b16 %v2389
    %v2579 = vunpack.c.l.b16 %v2390
    %v2580 = vunpack.c.h.b16 %v2390
    %v2581 = vunpack.c.l.b16 %v2391
    %v2582 = vunpack.c.h.b16 %v2391
    %v2583 = vunpack.c.l.b16 %v2392
    %v2584 = vunpack.c.h.b16 %v2392
    %v2585 = vunpack.c.l.b16 %v2393
    %v2586 = vunpack.c.h.b16 %v2393
    %v2587 = vunpack.c.l.b16 %v2394
    %v2588 = vunpack.c.h.b16 %v2394
    %v2589 = vunpack.c.l.b16 %v2395
    %v2590 = vunpack.c.h.b16 %v2395
    %v2591 = vunpack.c.l.b16 %v2396
    %v2592 = vunpack.c.h.b16 %v2396
    %v2593 = vunpack.c.l.b16 %v2397
    %v2594 = vunpack.c.h.b16 %v2397
    %v2595 = vunpack.c.l.b16 %v2398
    %v2596 = vunpack.c.h.b16 %v2398
    %v2597 = vunpack.c.l.b16 %v2399
    %v2598 = vunpack.c.h.b16 %v2399
    %v2599 = vunpack.c.l.b16 %v2400
    %v2600 = vunpack.c.h.b16 %v2400
    %v2601 = vunpack.c.l.b16 %v2401
    %v2602 = vunpack.c.h.b16 %v2401
    %v2603 = vunpack.c.l.b16 %v2402
    %v2604 = vunpack.c.h.b16 %v2402
    %v2605 = vunpack.c.l.b16 %v2403
    %v2606 = vunpack.c.h.b16 %v2403
    %v2607 = vunpack.c.l.b16 %v2404
    %v2608 = vunpack.c.h.b16 %v2404
    %v2609 = vunpack.c.l.b16 %v2405
    %v2610 = vunpack.c.h.b16 %v2405
    %v2611 = vunpack.c.l.b16 %v2406
    %v2612 = vunpack.c.h.b16 %v2406
    %v2613 = vunpack.c.l.b16 %v2407
    %v2614 = vunpack.c.h.b16 %v2407
    %v2615 = vunpack.c.l.b16 %v2408
    %v2616 = vunpack.c.h.b16 %v2408
    %v2617 = vunpack.c.l.b16 %v2409
    %v2618 = vunpack.c.h.b16 %v2409
    %v2619 = vunpack.c.l.b16 %v2410
    %v2620 = vunpack.c.h.b16 %v2410
    %v2621 = vunpack.c.l.b16 %v2411
    %v2622 = vunpack.c.h.b16 %v2411
    %v2623 = vunpack.c.l.b16 %v2412
    %v2624 = vunpack.c.h.b16 %v2412
    %v2625 = vunpack.c.l.b16 %v2413
    %v2626 = vunpack.c.h.b16 %v2413
    %v2627 = vunpack.c.l.b16 %v2414
    %v2628 = vunpack.c.h.b16 %v2414
    %v2629 = vunpack.c.l.b16 %v2415
    %v2630 = vunpack.c.h.b16 %v2415
    %v2631 = vunpack.c.l.b16 %v2416
    %v2632 = vunpack.c.h.b16 %v2416
    %v2633 = vunpack.c.l.b16 %v2417
    %v2634 = vunpack.c.h.b16 %v2417
    %v2635 = vunpack.c.l.b16 %v2418
    %v2636 = vunpack.c.h.b16 %v2418
    %v2637 = vunpack.c.l.b16 %v2419
    %v2638 = vunpack.c.h.b16 %v2419
    %v2639 = vunpack.c.l.b16 %v2420
    %v2640 = vunpack.c.h.b16 %v2420
    %v2641 = vunpack.c.l.b16 %v2421
    %v2642 = vunpack.c.h.b16 %v2421
    %v2643 = vunpack.c.l.b16 %v2422
    %v2644 = vunpack.c.h.b16 %v2422
    %v2645 = vunpack.c.l.b16 %v2423
    %v2646 = vunpack.c.h.b16 %v2423
    %v2647 = vunpack.c.l.b16 %v2424
    %v2648 = vunpack.c.h.b16 %v2424
    %v2649 = vunpack.c.l.b16 %v2425
    %v2650 = vunpack.c.h.b16 %v2425
    %v2651 = vunpack.c.l.b16 %v2426
    %v2652 = vunpack.c.h.b16 %v2426
    %v2653 = vunpack.c.l.b16 %v2427
    %v2654 = vunpack.c.h.b16 %v2427
    %v2655 = vunpack.c.l.b16 %v2428
    %v2656 = vunpack.c.h.b16 %v2428
    %v2657 = vunpack.c.l.b16 %v2429
    %v2658 = vunpack.c.h.b16 %v2429
    %v2659 = vunpack.c.l.b16 %v2430
    %v2660 = vunpack.c.h.b16 %v2430
    %v2661 = vunpack.c.l.b16 %v2431
    %v2662 = vunpack.c.h.b16 %v2431
    %v2663 = vunpack.c.l.b16 %v2432
    %v2664 = vunpack.c.h.b16 %v2432
    %v2665 = vunpack.c.l.b16 %v2433
    %v2666 = vunpack.c.h.b16 %v2433
    %v2667 = vunpack.c.l.b16 %v2434
    %v2668 = vunpack.c.h.b16 %v2434
    %v2669 = vunpack.c.l.b16 %v2435
    %v2670 = vunpack.c.h.b16 %v2435
    %v2671 = vpack.c.b16 %v2551, %v2543
    %v2672 = vpack.c.b16 %v2552, %v2544
    %v2673 = vpack.c.b16 %v2553, %v2545
    %v2674 = vpack.c.b16 %v2554, %v2546
    %v2675 = vpack.c.b16 %v2555, %v2547
    %v2676 = vpack.c.b16 %v2556, %v2548
    %v2677 = vpack.c.b16 %v2557, %v2549
    %v2678 = vpack.c.b16 %v2558, %v2550
    %v2679 = vpack.c.b16 %v2567, %v2559
    %v2680 = vpack.c.b16 %v2568, %v2560
    %v2681 = vpack.c.b16 %v2569, %v2561
    %v2682 = vpack.c.b16 %v2570, %v2562
    %v2683 = vpack.c.b16 %v2571, %v2563
    %v2684 = vpack.c.b16 %v2572, %v2564
    %v2685 = vpack.c.b16 %v2573, %v2565
    %v2686 = vpack.c.b16 %v2574, %v2566
    %v2687 = vpack.c.b16 %v2583, %v2575
    %v2688 = vpack.c.b16 %v2584, %v2576
    %v2689 = vpack.c.b16 %v2585, %v2577
    %v2690 = vpack.c.b16 %v2586, %v2578
    %v2691 = vpack.c.b16 %v2587, %v2579
    %v2692 = vpack.c.b16 %v2588, %v2580
    %v2693 = vpack.c.b16 %v2589, %v2581
    %v2694 = vpack.c.b16 %v2590, %v2582
    %v2695 = vpack.c.b16 %v2599, %v2591
    %v2696 = vpack.c.b16 %v2600, %v2592
    %v2697 = vpack.c.b16 %v2601, %v2593
    %v2698 = vpack.c.b16 %v2602, %v2594
    %v2699 = vpack.c.b16 %v2603, %v2595
    %v2700 = vpack.c.b16 %v2604, %v2596
    %v2701 = vpack.c.b16 %v2605, %v2597
    %v2702 = vpack.c.b16 %v2606, %v2598
    %v2703 = vpack.c.b16 %v2615, %v2607
    %v2704 = vpack.c.b16 %v2616, %v2608
    %v2705 = vpack.c.b16 %v2617, %v2609
    %v2706 = vpack.c.b16 %v2618, %v2610
    %v2707 = vpack.c.b16 %v2619, %v2611
    %v2708 = vpack.c.b16 %v2620, %v2612
    %v2709 = vpack.c.b16 %v2621, %v2613
    %v2710 = vpack.c.b16 %v2622, %v2614
    %v2711 = vpack.c.b16 %v2631, %v2623
    %v2712 = vpack.c.b16 %v2632, %v2624
    %v2713 = vpack.c.b16 %v2633, %v2625
    %v2714 = vpack.c.b16 %v2634, %v2626
    %v2715 = vpack.c.b16 %v2635, %v2627
    %v2716 = vpack.c.b16 %v2636, %v2628
    %v2717 = vpack.c.b16 %v2637, %v2629
    %v2718 = vpack.c.b16 %v2638, %v2630
    %v2719 = vpack.c.b16 %v2647, %v2639
    %v2720 = vpack.c.b16 %v2648, %v2640
    %v2721 = vpack.c.b16 %v2649, %v2641
    %v2722 = vpack.c.b16 %v2650, %v2642
    %v2723 = vpack.c.b16 %v2651, %v2643
    %v2724 = vpack.c.b16 %v2652, %v2644
    %v2725 = vpack.c.b16 %v2653, %v2645
    %v2726 = vpack.c.b16 %v2654, %v2646
    %v2727 = vpack.c.b16 %v2663, %v2655
    %v2728 = vpack.c.b16 %v2664, %v2656
    %v2729 = vpack.c.b16 %v2665, %v2657
    %v2730 = vpack.c.b16 %v2666, %v2658
    %v2731 = vpack.c.b16 %v2667, %v2659
    %v2732 = vpack.c.b16 %v2668, %v2660
    %v2733 = vpack.c.b16 %v2669, %v2661
    %v2734 = vpack.c.b16 %v2670, %v2662
    %2799 = vmatprep.subr.bf16.mxu0 %v2672
    %2800 = vmatpush1.bf16.msra.mxu0 %v2671
    %2801 = vmatprep.subr.bf16.mxu0 %v2680
    %2802 = vmatpush1.bf16.msra.mxu0 %v2679
    %2803 = vmatprep.subr.bf16.mxu0 %v2688
    %2804 = vmatpush1.bf16.msra.mxu0 %v2687
    %2805 = vmatprep.subr.bf16.mxu0 %v2696
    %2806 = vmatpush1.bf16.msra.mxu0 %v2695
    %2807 = vmatprep.subr.bf16.mxu0 %v2704
    %2808 = vmatpush1.bf16.msra.mxu0 %v2703
    %2809 = vmatprep.subr.bf16.mxu0 %v2712
    %2810 = vmatpush1.bf16.msra.mxu0 %v2711
    %2811 = vmatprep.subr.bf16.mxu0 %v2720
    %2812 = vmatpush1.bf16.msra.mxu0 %v2719
    %2813 = vmatprep.subr.bf16.mxu0 %v2728
    %2814 = vmatpush1.bf16.msra.mxu0 %v2727
    %2815 = vmatprep.subr.bf16.mxu0 0
    %2816 = vmatpush1.bf16.msra.mxu0 0
    %2817 = vmatprep.subr.bf16.mxu0 0
    %2818 = vmatpush1.bf16.msra.mxu0 0
    %2819 = vmatprep.subr.bf16.mxu0 0
    %2820 = vmatpush1.bf16.msra.mxu0 0
    %2821 = vmatprep.subr.bf16.mxu0 0
    %2822 = vmatpush1.bf16.msra.mxu0 0
    %2823 = vmatprep.subr.bf16.mxu0 0
    %2824 = vmatpush1.bf16.msra.mxu0 0
    %2825 = vmatprep.subr.bf16.mxu0 0
    %2826 = vmatpush1.bf16.msra.mxu0 0
    %2827 = vmatprep.subr.bf16.mxu0 0
    %2828 = vmatpush1.bf16.msra.mxu0 0
    %2829 = vmatprep.subr.bf16.mxu0 0
    %2830 = vmatpush1.bf16.msra.mxu0 0
    %2831 = vmatprep.mubr.bf16.mxu0 0
    %2832 = vmatmul.mubr.bf16.gmra.mrb[0].mxu0 %v2370
    %v2833 = vpop.f32.mrb[0].mxu0
    %v2834 = vadd.f32 %v2442, %v2833
    %v2835 = vpop.f32.mrb[0].mxu0
    %v2836 = vadd.f32 %v2446, %v2835
    %v2837 = vpop.f32.mrb[0].mxu0
    %v2838 = vpop.f32.mrb[0].mxu0
    %2839 = vdwg.mxu0
    %2840 = vmatprep.subr.bf16.mxu0 %v2674
    %2841 = vmatpush1.bf16.msra.mxu0 %v2673
    %2842 = vmatprep.subr.bf16.mxu0 %v2682
    %2843 = vmatpush1.bf16.msra.mxu0 %v2681
    %2844 = vmatprep.subr.bf16.mxu0 %v2690
    %2845 = vmatpush1.bf16.msra.mxu0 %v2689
    %2846 = vmatprep.subr.bf16.mxu0 %v2698
    %2847 = vmatpush1.bf16.msra.mxu0 %v2697
    %2848 = vmatprep.subr.bf16.mxu0 %v2706
    %2849 = vmatpush1.bf16.msra.mxu0 %v2705
    %2850 = vmatprep.subr.bf16.mxu0 %v2714
    %2851 = vmatpush1.bf16.msra.mxu0 %v2713
    %2852 = vmatprep.subr.bf16.mxu0 %v2722
    %2853 = vmatpush1.bf16.msra.mxu0 %v2721
    %2854 = vmatprep.subr.bf16.mxu0 %v2730
    %2855 = vmatpush1.bf16.msra.mxu0 %v2729
    %2856 = vmatprep.subr.bf16.mxu0 0
    %2857 = vmatpush1.bf16.msra.mxu0 0
    %2858 = vmatprep.subr.bf16.mxu0 0
    %2859 = vmatpush1.bf16.msra.mxu0 0
    %2860 = vmatprep.subr.bf16.mxu0 0
    %2861 = vmatpush1.bf16.msra.mxu0 0
    %2862 = vmatprep.subr.bf16.mxu0 0
    %2863 = vmatpush1.bf16.msra.mxu0 0
    %2864 = vmatprep.subr.bf16.mxu0 0
    %2865 = vmatpush1.bf16.msra.mxu0 0
    %2866 = vmatprep.subr.bf16.mxu0 0
    %2867 = vmatpush1.bf16.msra.mxu0 0
    %2868 = vmatprep.subr.bf16.mxu0 0
    %2869 = vmatpush1.bf16.msra.mxu0 0
    %2870 = vmatprep.subr.bf16.mxu0 0
    %2871 = vmatpush1.bf16.msra.mxu0 0
    %2872 = vmatprep.mubr.bf16.mxu0 0
    %2873 = vmatmul.mubr.bf16.gmra.mrb[0].mxu0 %v2370
    %v2874 = vpop.f32.mrb[0].mxu0
    %v2875 = vadd.f32 %v2450, %v2874
    %v2876 = vpop.f32.mrb[0].mxu0
    %v2877 = vadd.f32 %v2454, %v2876
    %v2878 = vpop.f32.mrb[0].mxu0
    %v2879 = vpop.f32.mrb[0].mxu0
    %2880 = vdwg.mxu0
    %2881 = vmatprep.subr.bf16.mxu0 %v2676
    %2882 = vmatpush1.bf16.msra.mxu0 %v2675
    %2883 = vmatprep.subr.bf16.mxu0 %v2684
    %2884 = vmatpush1.bf16.msra.mxu0 %v2683
    %2885 = vmatprep.subr.bf16.mxu0 %v2692
    %2886 = vmatpush1.bf16.msra.mxu0 %v2691
    %2887 = vmatprep.subr.bf16.mxu0 %v2700
    %2888 = vmatpush1.bf16.msra.mxu0 %v2699
    %2889 = vmatprep.subr.bf16.mxu0 %v2708
    %2890 = vmatpush1.bf16.msra.mxu0 %v2707
    %2891 = vmatprep.subr.bf16.mxu0 %v2716
    %2892 = vmatpush1.bf16.msra.mxu0 %v2715
    %2893 = vmatprep.subr.bf16.mxu0 %v2724
    %2894 = vmatpush1.bf16.msra.mxu0 %v2723
    %2895 = vmatprep.subr.bf16.mxu0 %v2732
    %2896 = vmatpush1.bf16.msra.mxu0 %v2731
    %2897 = vmatprep.subr.bf16.mxu0 0
    %2898 = vmatpush1.bf16.msra.mxu0 0
    %2899 = vmatprep.subr.bf16.mxu0 0
    %2900 = vmatpush1.bf16.msra.mxu0 0
    %2901 = vmatprep.subr.bf16.mxu0 0
    %2902 = vmatpush1.bf16.msra.mxu0 0
    %2903 = vmatprep.subr.bf16.mxu0 0
    %2904 = vmatpush1.bf16.msra.mxu0 0
    %2905 = vmatprep.subr.bf16.mxu0 0
    %2906 = vmatpush1.bf16.msra.mxu0 0
    %2907 = vmatprep.subr.bf16.mxu0 0
    %2908 = vmatpush1.bf16.msra.mxu0 0
    %2909 = vmatprep.subr.bf16.mxu0 0
    %2910 = vmatpush1.bf16.msra.mxu0 0
    %2911 = vmatprep.subr.bf16.mxu0 0
    %2912 = vmatpush1.bf16.msra.mxu0 0
    %2913 = vmatprep.mubr.bf16.mxu0 0
    %2914 = vmatmul.mubr.bf16.gmra.mrb[0].mxu0 %v2370
    %v2915 = vpop.f32.mrb[0].mxu0
    %v2916 = vadd.f32 %v2458, %v2915
    %v2917 = vpop.f32.mrb[0].mxu0
    %v2918 = vadd.f32 %v2462, %v2917
    %v2919 = vpop.f32.mrb[0].mxu0
    %v2920 = vpop.f32.mrb[0].mxu0
    %2921 = vdwg.mxu0
    %2922 = vmatprep.subr.bf16.mxu0 %v2678
    %2923 = vmatpush1.bf16.msra.mxu0 %v2677
    %2924 = vmatprep.subr.bf16.mxu0 %v2686
    %2925 = vmatpush1.bf16.msra.mxu0 %v2685
    %2926 = vmatprep.subr.bf16.mxu0 %v2694
    %2927 = vmatpush1.bf16.msra.mxu0 %v2693
    %2928 = vmatprep.subr.bf16.mxu0 %v2702
    %2929 = vmatpush1.bf16.msra.mxu0 %v2701
    %2930 = vmatprep.subr.bf16.mxu0 %v2710
    %2931 = vmatpush1.bf16.msra.mxu0 %v2709
    %2932 = vmatprep.subr.bf16.mxu0 %v2718
    %2933 = vmatpush1.bf16.msra.mxu0 %v2717
    %2934 = vmatprep.subr.bf16.mxu0 %v2726
    %2935 = vmatpush1.bf16.msra.mxu0 %v2725
    %2936 = vmatprep.subr.bf16.mxu0 %v2734
    %2937 = vmatpush1.bf16.msra.mxu0 %v2733
    %2938 = vmatprep.subr.bf16.mxu0 0
    %2939 = vmatpush1.bf16.msra.mxu0 0
    %2940 = vmatprep.subr.bf16.mxu0 0
    %2941 = vmatpush1.bf16.msra.mxu0 0
    %2942 = vmatprep.subr.bf16.mxu0 0
    %2943 = vmatpush1.bf16.msra.mxu0 0
    %2944 = vmatprep.subr.bf16.mxu0 0
    %2945 = vmatpush1.bf16.msra.mxu0 0
    %2946 = vmatprep.subr.bf16.mxu0 0
    %2947 = vmatpush1.bf16.msra.mxu0 0
    %2948 = vmatprep.subr.bf16.mxu0 0
    %2949 = vmatpush1.bf16.msra.mxu0 0
    %2950 = vmatprep.subr.bf16.mxu0 0
    %2951 = vmatpush1.bf16.msra.mxu0 0
    %2952 = vmatprep.subr.bf16.mxu0 0
    %2953 = vmatpush1.bf16.msra.mxu0 0
    %2954 = vmatprep.mubr.bf16.mxu0 0
    %2955 = vmatmul.mubr.bf16.gmra.mrb[0].mxu0 %v2370
    %v2956 = vpop.f32.mrb[0].mxu0
    %v2957 = vadd.f32 %v2466, %v2956
    %v2958 = vpop.f32.mrb[0].mxu0
    %v2959 = vadd.f32 %v2470, %v2958
    %v2960 = vpop.f32.mrb[0].mxu0
    %v2961 = vpop.f32.mrb[0].mxu0
    %2962 = vdwg.mxu0
    %v2963 = vtanh.pop %v2834
    %v2964 = vtanh.pop %v2836
    %v2965 = vtanh.pop %v2875
    %v2966 = vtanh.pop %v2877
    %v2967 = vmul.f32 %v2963, 1.442695
    %v2968 = vpow.pop %v2967
    %v2969 = vmul.f32 %v2964, 1.442695
    %v2970 = vpow.pop %v2969
    %v2971 = vmul.f32 %v2965, 1.442695
    %v2972 = vpow.pop %v2971
    %v2973 = vmul.f32 %v2966, 1.442695
    %v2974 = vpow.pop %v2973
    %v2975 = vmul.f32 %v1041, %v2968
    %v2976 = vmul.f32 %v1042, %v2970
    %v2977 = vmul.f32 %v1043, %v2972
    %v2978 = vmul.f32 %v1044, %v2974
    %v2979 = vadd.f32 %v2975, %v2916
    %v2980 = vadd.f32 %v2976, %v2918
    %v2981 = vadd.f32 %v2977, %v2957
    %v2982 = vadd.f32 %v2978, %v2959
    %v2983 = vadd.f32 %v2963, %v2964
    %v2984 = vadd.f32 %v2983, %v2965
    %v2985 = vadd.f32 %v2984, %v2966
    %2986 = vadd.xlane.f32.xlu0 %v2985
    %v2987 = vpop.xlane.xlu0 %2986
    %v2988 = vadd.f32 %v2019, %v2987
    %v2989 = vpack.c.bf16 %v2979, %v2979
    %v2990 = vpack.c.bf16 %v2980, %v2980
    %v2991 = vpack.c.bf16 %v2981, %v2981
    %v2992 = vpack.c.bf16 %v2982, %v2982
    %s2993 = scalar_lea.vmem [#allocation5], 768
    %v2994 = vld [vmem:[%s2993] sm:$0xf]
    %v2995 = vld [vmem:[%s2993 + $0x4] sm:$0xf]
    %v2996 = vld [vmem:[%s2993 + $0x8] sm:$0xf]
    %v2997 = vld [vmem:[%s2993 + $0xc] sm:$0xf]
    %v2998 = vld [vmem:[%s2993 + $0x10] sm:$0xf]
    %v2999 = vld [vmem:[%s2993 + $0x14] sm:$0xf]
    %v3000 = vld [vmem:[%s2993 + $0x18] sm:$0xf]
    %v3001 = vld [vmem:[%s2993 + $0x1c] sm:$0xf]
    %v3002 = vld [vmem:[%s2993 + $0x20] sm:$0xf]
    %v3003 = vld [vmem:[%s2993 + $0x24] sm:$0xf]
    %v3004 = vld [vmem:[%s2993 + $0x28] sm:$0xf]
    %v3005 = vld [vmem:[%s2993 + $0x2c] sm:$0xf]
    %v3006 = vld [vmem:[%s2993 + $0x30] sm:$0xf]
    %v3007 = vld [vmem:[%s2993 + $0x34] sm:$0xf]
    %v3008 = vld [vmem:[%s2993 + $0x38] sm:$0xf]
    %v3009 = vld [vmem:[%s2993 + $0x3c] sm:$0xf]
    %v3010 = vld [vmem:[%s2993 + $0x40] sm:$0xf]
    %v3011 = vld [vmem:[%s2993 + $0x44] sm:$0xf]
    %v3012 = vld [vmem:[%s2993 + $0x48] sm:$0xf]
    %v3013 = vld [vmem:[%s2993 + $0x4c] sm:$0xf]
    %v3014 = vld [vmem:[%s2993 + $0x50] sm:$0xf]
    %v3015 = vld [vmem:[%s2993 + $0x54] sm:$0xf]
    %v3016 = vld [vmem:[%s2993 + $0x58] sm:$0xf]
    %v3017 = vld [vmem:[%s2993 + $0x5c] sm:$0xf]
    %v3018 = vld [vmem:[%s2993 + $0x60] sm:$0xf]
    %v3019 = vld [vmem:[%s2993 + $0x64] sm:$0xf]
    %v3020 = vld [vmem:[%s2993 + $0x68] sm:$0xf]
    %v3021 = vld [vmem:[%s2993 + $0x6c] sm:$0xf]
    %v3022 = vld [vmem:[%s2993 + $0x70] sm:$0xf]
    %v3023 = vld [vmem:[%s2993 + $0x74] sm:$0xf]
    %v3024 = vld [vmem:[%s2993 + $0x78] sm:$0xf]
    %v3025 = vld [vmem:[%s2993 + $0x7c] sm:$0xf]
    %v3026 = vld [vmem:[%s2993 + $0x80] sm:$0xf]
    %v3027 = vld [vmem:[%s2993 + $0x84] sm:$0xf]
    %v3028 = vld [vmem:[%s2993 + $0x88] sm:$0xf]
    %v3029 = vld [vmem:[%s2993 + $0x8c] sm:$0xf]
    %v3030 = vld [vmem:[%s2993 + $0x90] sm:$0xf]
    %v3031 = vld [vmem:[%s2993 + $0x94] sm:$0xf]
    %v3032 = vld [vmem:[%s2993 + $0x98] sm:$0xf]
    %v3033 = vld [vmem:[%s2993 + $0x9c] sm:$0xf]
    %v3034 = vld [vmem:[%s2993 + $0xa0] sm:$0xf]
    %v3035 = vld [vmem:[%s2993 + $0xa4] sm:$0xf]
    %v3036 = vld [vmem:[%s2993 + $0xa8] sm:$0xf]
    %v3037 = vld [vmem:[%s2993 + $0xac] sm:$0xf]
    %v3038 = vld [vmem:[%s2993 + $0xb0] sm:$0xf]
    %v3039 = vld [vmem:[%s2993 + $0xb4] sm:$0xf]
    %v3040 = vld [vmem:[%s2993 + $0xb8] sm:$0xf]
    %v3041 = vld [vmem:[%s2993 + $0xbc] sm:$0xf]
    %v3042 = vld [vmem:[%s2993 + $0xc0] sm:$0xf]
    %v3043 = vld [vmem:[%s2993 + $0xc4] sm:$0xf]
    %v3044 = vld [vmem:[%s2993 + $0xc8] sm:$0xf]
    %v3045 = vld [vmem:[%s2993 + $0xcc] sm:$0xf]
    %v3046 = vld [vmem:[%s2993 + $0xd0] sm:$0xf]
    %v3047 = vld [vmem:[%s2993 + $0xd4] sm:$0xf]
    %v3048 = vld [vmem:[%s2993 + $0xd8] sm:$0xf]
    %v3049 = vld [vmem:[%s2993 + $0xdc] sm:$0xf]
    %v3050 = vld [vmem:[%s2993 + $0xe0] sm:$0xf]
    %v3051 = vld [vmem:[%s2993 + $0xe4] sm:$0xf]
    %v3052 = vld [vmem:[%s2993 + $0xe8] sm:$0xf]
    %v3053 = vld [vmem:[%s2993 + $0xec] sm:$0xf]
    %v3054 = vld [vmem:[%s2993 + $0xf0] sm:$0xf]
    %v3055 = vld [vmem:[%s2993 + $0xf4] sm:$0xf]
    %v3056 = vld [vmem:[%s2993 + $0xf8] sm:$0xf]
    %v3057 = vld [vmem:[%s2993 + $0xfc] sm:$0xf]
    %s3058 = scalar_lea.vmem %s2, 3
    %v3059 = vld [vmem:[%s3058] sm:$0x1]
    %v3061 = vlaneseq
    %v3062 = vshrl.u32 %v3061, 7
    %v3063 = vsub.s32 0, %v3062
    %v3064 = vrot.slane %v3059, %v3063
    %v3130 = vunpack.c.l.b16 %v2994
    %v3131 = vunpack.c.l.b16 %v2995
    %v3132 = vunpack.c.l.b16 %v2996
    %v3133 = vunpack.c.l.b16 %v2997
    %v3134 = vunpack.c.l.b16 %v2998
    %v3135 = vunpack.c.l.b16 %v2999
    %v3136 = vunpack.c.l.b16 %v3000
    %v3137 = vunpack.c.l.b16 %v3001
    %v3138 = vunpack.c.l.b16 %v3002
    %v3139 = vunpack.c.l.b16 %v3003
    %v3140 = vunpack.c.l.b16 %v3004
    %v3141 = vunpack.c.l.b16 %v3005
    %v3142 = vunpack.c.l.b16 %v3006
    %v3143 = vunpack.c.l.b16 %v3007
    %v3144 = vunpack.c.l.b16 %v3008
    %v3145 = vunpack.c.l.b16 %v3009
    %v3146 = vunpack.c.l.b16 %v3010
    %v3147 = vunpack.c.l.b16 %v3011
    %v3148 = vunpack.c.l.b16 %v3012
    %v3149 = vunpack.c.l.b16 %v3013
    %v3150 = vunpack.c.l.b16 %v3014
    %v3151 = vunpack.c.l.b16 %v3015
    %v3152 = vunpack.c.l.b16 %v3016
    %v3153 = vunpack.c.l.b16 %v3017
    %v3154 = vunpack.c.l.b16 %v3018
    %v3155 = vunpack.c.l.b16 %v3019
    %v3156 = vunpack.c.l.b16 %v3020
    %v3157 = vunpack.c.l.b16 %v3021
    %v3158 = vunpack.c.l.b16 %v3022
    %v3159 = vunpack.c.l.b16 %v3023
    %v3160 = vunpack.c.l.b16 %v3024
    %v3161 = vunpack.c.l.b16 %v3025
    %v3162 = vunpack.c.l.b16 %v3026
    %v3163 = vunpack.c.l.b16 %v3027
    %v3164 = vunpack.c.l.b16 %v3028
    %v3165 = vunpack.c.l.b16 %v3029
    %v3166 = vunpack.c.l.b16 %v3030
    %v3167 = vunpack.c.l.b16 %v3031
    %v3168 = vunpack.c.l.b16 %v3032
    %v3169 = vunpack.c.l.b16 %v3033
    %v3170 = vunpack.c.l.b16 %v3034
    %v3171 = vunpack.c.l.b16 %v3035
    %v3172 = vunpack.c.l.b16 %v3036
    %v3173 = vunpack.c.l.b16 %v3037
    %v3174 = vunpack.c.l.b16 %v3038
    %v3175 = vunpack.c.l.b16 %v3039
    %v3176 = vunpack.c.l.b16 %v3040
    %v3177 = vunpack.c.l.b16 %v3041
    %v3178 = vunpack.c.l.b16 %v3042
    %v3179 = vunpack.c.l.b16 %v3043
    %v3180 = vunpack.c.l.b16 %v3044
    %v3181 = vunpack.c.l.b16 %v3045
    %v3182 = vunpack.c.l.b16 %v3046
    %v3183 = vunpack.c.l.b16 %v3047
    %v3184 = vunpack.c.l.b16 %v3048
    %v3185 = vunpack.c.l.b16 %v3049
    %v3186 = vunpack.c.l.b16 %v3050
    %v3187 = vunpack.c.l.b16 %v3051
    %v3188 = vunpack.c.l.b16 %v3052
    %v3189 = vunpack.c.l.b16 %v3053
    %v3190 = vunpack.c.l.b16 %v3054
    %v3191 = vunpack.c.l.b16 %v3055
    %v3192 = vunpack.c.l.b16 %v3056
    %v3193 = vunpack.c.l.b16 %v3057
    %v3194 = vpack.c.b16 %v3131, %v3130
    %v3195 = vpack.c.b16 %v3133, %v3132
    %v3196 = vpack.c.b16 %v3135, %v3134
    %v3197 = vpack.c.b16 %v3137, %v3136
    %v3198 = vpack.c.b16 %v3139, %v3138
    %v3199 = vpack.c.b16 %v3141, %v3140
    %v3200 = vpack.c.b16 %v3143, %v3142
    %v3201 = vpack.c.b16 %v3145, %v3144
    %v3202 = vpack.c.b16 %v3147, %v3146
    %v3203 = vpack.c.b16 %v3149, %v3148
    %v3204 = vpack.c.b16 %v3151, %v3150
    %v3205 = vpack.c.b16 %v3153, %v3152
    %v3206 = vpack.c.b16 %v3155, %v3154
    %v3207 = vpack.c.b16 %v3157, %v3156
    %v3208 = vpack.c.b16 %v3159, %v3158
    %v3209 = vpack.c.b16 %v3161, %v3160
    %v3210 = vpack.c.b16 %v3163, %v3162
    %v3211 = vpack.c.b16 %v3165, %v3164
    %v3212 = vpack.c.b16 %v3167, %v3166
    %v3213 = vpack.c.b16 %v3169, %v3168
    %v3214 = vpack.c.b16 %v3171, %v3170
    %v3215 = vpack.c.b16 %v3173, %v3172
    %v3216 = vpack.c.b16 %v3175, %v3174
    %v3217 = vpack.c.b16 %v3177, %v3176
    %v3218 = vpack.c.b16 %v3179, %v3178
    %v3219 = vpack.c.b16 %v3181, %v3180
    %v3220 = vpack.c.b16 %v3183, %v3182
    %v3221 = vpack.c.b16 %v3185, %v3184
    %v3222 = vpack.c.b16 %v3187, %v3186
    %v3223 = vpack.c.b16 %v3189, %v3188
    %v3224 = vpack.c.b16 %v3191, %v3190
    %v3225 = vpack.c.b16 %v3193, %v3192
    %3258 = vmatprep.subr.bf16.mxu0 0
    %3259 = vmatpush1.bf16.msra.mxu0 %v3194
    %3260 = vmatprep.subr.bf16.mxu0 0
    %3261 = vmatpush1.bf16.msra.mxu0 %v3195
    %3262 = vmatprep.subr.bf16.mxu0 0
    %3263 = vmatpush1.bf16.msra.mxu0 %v3196
    %3264 = vmatprep.subr.bf16.mxu0 0
    %3265 = vmatpush1.bf16.msra.mxu0 %v3197
    %3266 = vmatprep.subr.bf16.mxu0 0
    %3267 = vmatpush1.bf16.msra.mxu0 %v3198
    %3268 = vmatprep.subr.bf16.mxu0 0
    %3269 = vmatpush1.bf16.msra.mxu0 %v3199
    %3270 = vmatprep.subr.bf16.mxu0 0
    %3271 = vmatpush1.bf16.msra.mxu0 %v3200
    %3272 = vmatprep.subr.bf16.mxu0 0
    %3273 = vmatpush1.bf16.msra.mxu0 %v3201
    %3274 = vmatprep.subr.bf16.mxu0 0
    %3275 = vmatpush1.bf16.msra.mxu0 %v3202
    %3276 = vmatprep.subr.bf16.mxu0 0
    %3277 = vmatpush1.bf16.msra.mxu0 %v3203
    %3278 = vmatprep.subr.bf16.mxu0 0
    %3279 = vmatpush1.bf16.msra.mxu0 %v3204
    %3280 = vmatprep.subr.bf16.mxu0 0
    %3281 = vmatpush1.bf16.msra.mxu0 %v3205
    %3282 = vmatprep.subr.bf16.mxu0 0
    %3283 = vmatpush1.bf16.msra.mxu0 %v3206
    %3284 = vmatprep.subr.bf16.mxu0 0
    %3285 = vmatpush1.bf16.msra.mxu0 %v3207
    %3286 = vmatprep.subr.bf16.mxu0 0
    %3287 = vmatpush1.bf16.msra.mxu0 %v3208
    %3288 = vmatprep.subr.bf16.mxu0 0
    %3289 = vmatpush1.bf16.msra.mxu0 %v3209
    %3290 = vmatprep.mubr.bf16.mxu0 %v2990
    %3291 = vmatmul.mubr.bf16.gmra.mrb[0].mxu0 %v2989
    %v3292 = vpop.f32.mrb[0].mxu0
    %v3293 = vadd.f32 %v3064, %v3292
    %v3294 = vpop.f32.mrb[0].mxu0
    %v3295 = vpop.f32.mrb[0].mxu0
    %v3296 = vpop.f32.mrb[0].mxu0
    %3297 = vdwg.mxu0
    %3298 = vmatprep.subr.bf16.mxu0 0
    %3299 = vmatpush1.bf16.msra.mxu0 %v3210
    %3300 = vmatprep.subr.bf16.mxu0 0
    %3301 = vmatpush1.bf16.msra.mxu0 %v3211
    %3302 = vmatprep.subr.bf16.mxu0 0
    %3303 = vmatpush1.bf16.msra.mxu0 %v3212
    %3304 = vmatprep.subr.bf16.mxu0 0
    %3305 = vmatpush1.bf16.msra.mxu0 %v3213
    %3306 = vmatprep.subr.bf16.mxu0 0
    %3307 = vmatpush1.bf16.msra.mxu0 %v3214
    %3308 = vmatprep.subr.bf16.mxu0 0
    %3309 = vmatpush1.bf16.msra.mxu0 %v3215
    %3310 = vmatprep.subr.bf16.mxu0 0
    %3311 = vmatpush1.bf16.msra.mxu0 %v3216
    %3312 = vmatprep.subr.bf16.mxu0 0
    %3313 = vmatpush1.bf16.msra.mxu0 %v3217
    %3314 = vmatprep.subr.bf16.mxu0 0
    %3315 = vmatpush1.bf16.msra.mxu0 %v3218
    %3316 = vmatprep.subr.bf16.mxu0 0
    %3317 = vmatpush1.bf16.msra.mxu0 %v3219
    %3318 = vmatprep.subr.bf16.mxu0 0
    %3319 = vmatpush1.bf16.msra.mxu0 %v3220
    %3320 = vmatprep.subr.bf16.mxu0 0
    %3321 = vmatpush1.bf16.msra.mxu0 %v3221
    %3322 = vmatprep.subr.bf16.mxu0 0
    %3323 = vmatpush1.bf16.msra.mxu0 %v3222
    %3324 = vmatprep.subr.bf16.mxu0 0
    %3325 = vmatpush1.bf16.msra.mxu0 %v3223
    %3326 = vmatprep.subr.bf16.mxu0 0
    %3327 = vmatpush1.bf16.msra.mxu0 %v3224
    %3328 = vmatprep.subr.bf16.mxu0 0
    %3329 = vmatpush1.bf16.msra.mxu0 %v3225
    %3330 = vmatprep.mubr.bf16.mxu0 %v2992
    %3331 = vmatmul.mubr.bf16.gmra.mrb[0].mxu0 %v2991
    %v3332 = vpop.f32.mrb[0].mxu0
    %v3333 = vadd.f32 %v3293, %v3332
    %v3334 = vpop.f32.mrb[0].mxu0
    %v3335 = vpop.f32.mrb[0].mxu0
    %v3336 = vpop.f32.mrb[0].mxu0
    %3337 = vdwg.mxu0
    %v3338 = vtanh.pop %v3333
    %v3339 = vpack.c.bf16 %v3338, %v3338
    %s3340 = scalar_lea.vmem [#allocation7], 1536
    %v3341 = vld [vmem:[%s3340] sm:$0xff]
    %v3342 = vld [vmem:[%s3340 + $0x8] sm:$0xff]
    %v3343 = vld [vmem:[%s3340 + $0x10] sm:$0xff]
    %v3344 = vld [vmem:[%s3340 + $0x18] sm:$0xff]
    %v3345 = vld [vmem:[%s3340 + $0x20] sm:$0xff]
    %v3346 = vld [vmem:[%s3340 + $0x28] sm:$0xff]
    %v3347 = vld [vmem:[%s3340 + $0x30] sm:$0xff]
    %v3348 = vld [vmem:[%s3340 + $0x38] sm:$0xff]
    %v3349 = vld [vmem:[%s3340 + $0x40] sm:$0xff]
    %v3350 = vld [vmem:[%s3340 + $0x48] sm:$0xff]
    %v3351 = vld [vmem:[%s3340 + $0x50] sm:$0xff]
    %v3352 = vld [vmem:[%s3340 + $0x58] sm:$0xff]
    %v3353 = vld [vmem:[%s3340 + $0x60] sm:$0xff]
    %v3354 = vld [vmem:[%s3340 + $0x68] sm:$0xff]
    %v3355 = vld [vmem:[%s3340 + $0x70] sm:$0xff]
    %v3356 = vld [vmem:[%s3340 + $0x78] sm:$0xff]
    %v3357 = vld [vmem:[%s3340 + $0x80] sm:$0xff]
    %v3358 = vld [vmem:[%s3340 + $0x88] sm:$0xff]
    %v3359 = vld [vmem:[%s3340 + $0x90] sm:$0xff]
    %v3360 = vld [vmem:[%s3340 + $0x98] sm:$0xff]
    %v3361 = vld [vmem:[%s3340 + $0xa0] sm:$0xff]
    %v3362 = vld [vmem:[%s3340 + $0xa8] sm:$0xff]
    %v3363 = vld [vmem:[%s3340 + $0xb0] sm:$0xff]
    %v3364 = vld [vmem:[%s3340 + $0xb8] sm:$0xff]
    %v3365 = vld [vmem:[%s3340 + $0xc0] sm:$0xff]
    %v3366 = vld [vmem:[%s3340 + $0xc8] sm:$0xff]
    %v3367 = vld [vmem:[%s3340 + $0xd0] sm:$0xff]
    %v3368 = vld [vmem:[%s3340 + $0xd8] sm:$0xff]
    %v3369 = vld [vmem:[%s3340 + $0xe0] sm:$0xff]
    %v3370 = vld [vmem:[%s3340 + $0xe8] sm:$0xff]
    %v3371 = vld [vmem:[%s3340 + $0xf0] sm:$0xff]
    %v3372 = vld [vmem:[%s3340 + $0xf8] sm:$0xff]
    %v3373 = vld [vmem:[%s3340 + $0x100] sm:$0xff]
    %v3374 = vld [vmem:[%s3340 + $0x108] sm:$0xff]
    %v3375 = vld [vmem:[%s3340 + $0x110] sm:$0xff]
    %v3376 = vld [vmem:[%s3340 + $0x118] sm:$0xff]
    %v3377 = vld [vmem:[%s3340 + $0x120] sm:$0xff]
    %v3378 = vld [vmem:[%s3340 + $0x128] sm:$0xff]
    %v3379 = vld [vmem:[%s3340 + $0x130] sm:$0xff]
    %v3380 = vld [vmem:[%s3340 + $0x138] sm:$0xff]
    %v3381 = vld [vmem:[%s3340 + $0x140] sm:$0xff]
    %v3382 = vld [vmem:[%s3340 + $0x148] sm:$0xff]
    %v3383 = vld [vmem:[%s3340 + $0x150] sm:$0xff]
    %v3384 = vld [vmem:[%s3340 + $0x158] sm:$0xff]
    %v3385 = vld [vmem:[%s3340 + $0x160] sm:$0xff]
    %v3386 = vld [vmem:[%s3340 + $0x168] sm:$0xff]
    %v3387 = vld [vmem:[%s3340 + $0x170] sm:$0xff]
    %v3388 = vld [vmem:[%s3340 + $0x178] sm:$0xff]
    %v3389 = vld [vmem:[%s3340 + $0x180] sm:$0xff]
    %v3390 = vld [vmem:[%s3340 + $0x188] sm:$0xff]
    %v3391 = vld [vmem:[%s3340 + $0x190] sm:$0xff]
    %v3392 = vld [vmem:[%s3340 + $0x198] sm:$0xff]
    %v3393 = vld [vmem:[%s3340 + $0x1a0] sm:$0xff]
    %v3394 = vld [vmem:[%s3340 + $0x1a8] sm:$0xff]
    %v3395 = vld [vmem:[%s3340 + $0x1b0] sm:$0xff]
    %v3396 = vld [vmem:[%s3340 + $0x1b8] sm:$0xff]
    %v3397 = vld [vmem:[%s3340 + $0x1c0] sm:$0xff]
    %v3398 = vld [vmem:[%s3340 + $0x1c8] sm:$0xff]
    %v3399 = vld [vmem:[%s3340 + $0x1d0] sm:$0xff]
    %v3400 = vld [vmem:[%s3340 + $0x1d8] sm:$0xff]
    %v3401 = vld [vmem:[%s3340 + $0x1e0] sm:$0xff]
    %v3402 = vld [vmem:[%s3340 + $0x1e8] sm:$0xff]
    %v3403 = vld [vmem:[%s3340 + $0x1f0] sm:$0xff]
    %v3404 = vld [vmem:[%s3340 + $0x1f8] sm:$0xff]
    %s3405 = scalar_lea.vmem [#allocation8], 24
    %v3406 = vld [vmem:[%s3405] sm:$0xff]
    %v3408 = vlaneseq
    %v3409 = vshrl.u32 %v3408, 7
    %v3410 = vsub.s32 0, %v3409
    %v3411 = vrot.slane %v3406, %v3410
    %v3412 = vlaneseq
    %v3413 = vshrl.u32 %v3412, 7
    %v3414 = vsub.s32 1, %v3413
    %v3415 = vrot.slane %v3406, %v3414
    %v3416 = vlaneseq
    %v3417 = vshrl.u32 %v3416, 7
    %v3418 = vsub.s32 2, %v3417
    %v3419 = vrot.slane %v3406, %v3418
    %v3420 = vlaneseq
    %v3421 = vshrl.u32 %v3420, 7
    %v3422 = vsub.s32 3, %v3421
    %v3423 = vrot.slane %v3406, %v3422
    %v3424 = vlaneseq
    %v3425 = vshrl.u32 %v3424, 7
    %v3426 = vsub.s32 4, %v3425
    %v3427 = vrot.slane %v3406, %v3426
    %v3428 = vlaneseq
    %v3429 = vshrl.u32 %v3428, 7
    %v3430 = vsub.s32 5, %v3429
    %v3431 = vrot.slane %v3406, %v3430
    %v3432 = vlaneseq
    %v3433 = vshrl.u32 %v3432, 7
    %v3434 = vsub.s32 6, %v3433
    %v3435 = vrot.slane %v3406, %v3434
    %v3436 = vlaneseq
    %v3437 = vshrl.u32 %v3436, 7
    %v3438 = vsub.s32 7, %v3437
    %v3439 = vrot.slane %v3406, %v3438
    %v3512 = vunpack.c.l.b16 %v3341
    %v3513 = vunpack.c.h.b16 %v3341
    %v3514 = vunpack.c.l.b16 %v3342
    %v3515 = vunpack.c.h.b16 %v3342
    %v3516 = vunpack.c.l.b16 %v3343
    %v3517 = vunpack.c.h.b16 %v3343
    %v3518 = vunpack.c.l.b16 %v3344
    %v3519 = vunpack.c.h.b16 %v3344
    %v3520 = vunpack.c.l.b16 %v3345
    %v3521 = vunpack.c.h.b16 %v3345
    %v3522 = vunpack.c.l.b16 %v3346
    %v3523 = vunpack.c.h.b16 %v3346
    %v3524 = vunpack.c.l.b16 %v3347
    %v3525 = vunpack.c.h.b16 %v3347
    %v3526 = vunpack.c.l.b16 %v3348
    %v3527 = vunpack.c.h.b16 %v3348
    %v3528 = vunpack.c.l.b16 %v3349
    %v3529 = vunpack.c.h.b16 %v3349
    %v3530 = vunpack.c.l.b16 %v3350
    %v3531 = vunpack.c.h.b16 %v3350
    %v3532 = vunpack.c.l.b16 %v3351
    %v3533 = vunpack.c.h.b16 %v3351
    %v3534 = vunpack.c.l.b16 %v3352
    %v3535 = vunpack.c.h.b16 %v3352
    %v3536 = vunpack.c.l.b16 %v3353
    %v3537 = vunpack.c.h.b16 %v3353
    %v3538 = vunpack.c.l.b16 %v3354
    %v3539 = vunpack.c.h.b16 %v3354
    %v3540 = vunpack.c.l.b16 %v3355
    %v3541 = vunpack.c.h.b16 %v3355
    %v3542 = vunpack.c.l.b16 %v3356
    %v3543 = vunpack.c.h.b16 %v3356
    %v3544 = vunpack.c.l.b16 %v3357
    %v3545 = vunpack.c.h.b16 %v3357
    %v3546 = vunpack.c.l.b16 %v3358
    %v3547 = vunpack.c.h.b16 %v3358
    %v3548 = vunpack.c.l.b16 %v3359
    %v3549 = vunpack.c.h.b16 %v3359
    %v3550 = vunpack.c.l.b16 %v3360
    %v3551 = vunpack.c.h.b16 %v3360
    %v3552 = vunpack.c.l.b16 %v3361
    %v3553 = vunpack.c.h.b16 %v3361
    %v3554 = vunpack.c.l.b16 %v3362
    %v3555 = vunpack.c.h.b16 %v3362
    %v3556 = vunpack.c.l.b16 %v3363
    %v3557 = vunpack.c.h.b16 %v3363
    %v3558 = vunpack.c.l.b16 %v3364
    %v3559 = vunpack.c.h.b16 %v3364
    %v3560 = vunpack.c.l.b16 %v3365
    %v3561 = vunpack.c.h.b16 %v3365
    %v3562 = vunpack.c.l.b16 %v3366
    %v3563 = vunpack.c.h.b16 %v3366
    %v3564 = vunpack.c.l.b16 %v3367
    %v3565 = vunpack.c.h.b16 %v3367
    %v3566 = vunpack.c.l.b16 %v3368
    %v3567 = vunpack.c.h.b16 %v3368
    %v3568 = vunpack.c.l.b16 %v3369
    %v3569 = vunpack.c.h.b16 %v3369
    %v3570 = vunpack.c.l.b16 %v3370
    %v3571 = vunpack.c.h.b16 %v3370
    %v3572 = vunpack.c.l.b16 %v3371
    %v3573 = vunpack.c.h.b16 %v3371
    %v3574 = vunpack.c.l.b16 %v3372
    %v3575 = vunpack.c.h.b16 %v3372
    %v3576 = vunpack.c.l.b16 %v3373
    %v3577 = vunpack.c.h.b16 %v3373
    %v3578 = vunpack.c.l.b16 %v3374
    %v3579 = vunpack.c.h.b16 %v3374
    %v3580 = vunpack.c.l.b16 %v3375
    %v3581 = vunpack.c.h.b16 %v3375
    %v3582 = vunpack.c.l.b16 %v3376
    %v3583 = vunpack.c.h.b16 %v3376
    %v3584 = vunpack.c.l.b16 %v3377
    %v3585 = vunpack.c.h.b16 %v3377
    %v3586 = vunpack.c.l.b16 %v3378
    %v3587 = vunpack.c.h.b16 %v3378
    %v3588 = vunpack.c.l.b16 %v3379
    %v3589 = vunpack.c.h.b16 %v3379
    %v3590 = vunpack.c.l.b16 %v3380
    %v3591 = vunpack.c.h.b16 %v3380
    %v3592 = vunpack.c.l.b16 %v3381
    %v3593 = vunpack.c.h.b16 %v3381
    %v3594 = vunpack.c.l.b16 %v3382
    %v3595 = vunpack.c.h.b16 %v3382
    %v3596 = vunpack.c.l.b16 %v3383
    %v3597 = vunpack.c.h.b16 %v3383
    %v3598 = vunpack.c.l.b16 %v3384
    %v3599 = vunpack.c.h.b16 %v3384
    %v3600 = vunpack.c.l.b16 %v3385
    %v3601 = vunpack.c.h.b16 %v3385
    %v3602 = vunpack.c.l.b16 %v3386
    %v3603 = vunpack.c.h.b16 %v3386
    %v3604 = vunpack.c.l.b16 %v3387
    %v3605 = vunpack.c.h.b16 %v3387
    %v3606 = vunpack.c.l.b16 %v3388
    %v3607 = vunpack.c.h.b16 %v3388
    %v3608 = vunpack.c.l.b16 %v3389
    %v3609 = vunpack.c.h.b16 %v3389
    %v3610 = vunpack.c.l.b16 %v3390
    %v3611 = vunpack.c.h.b16 %v3390
    %v3612 = vunpack.c.l.b16 %v3391
    %v3613 = vunpack.c.h.b16 %v3391
    %v3614 = vunpack.c.l.b16 %v3392
    %v3615 = vunpack.c.h.b16 %v3392
    %v3616 = vunpack.c.l.b16 %v3393
    %v3617 = vunpack.c.h.b16 %v3393
    %v3618 = vunpack.c.l.b16 %v3394
    %v3619 = vunpack.c.h.b16 %v3394
    %v3620 = vunpack.c.l.b16 %v3395
    %v3621 = vunpack.c.h.b16 %v3395
    %v3622 = vunpack.c.l.b16 %v3396
    %v3623 = vunpack.c.h.b16 %v3396
    %v3624 = vunpack.c.l.b16 %v3397
    %v3625 = vunpack.c.h.b16 %v3397
    %v3626 = vunpack.c.l.b16 %v3398
    %v3627 = vunpack.c.h.b16 %v3398
    %v3628 = vunpack.c.l.b16 %v3399
    %v3629 = vunpack.c.h.b16 %v3399
    %v3630 = vunpack.c.l.b16 %v3400
    %v3631 = vunpack.c.h.b16 %v3400
    %v3632 = vunpack.c.l.b16 %v3401
    %v3633 = vunpack.c.h.b16 %v3401
    %v3634 = vunpack.c.l.b16 %v3402
    %v3635 = vunpack.c.h.b16 %v3402
    %v3636 = vunpack.c.l.b16 %v3403
    %v3637 = vunpack.c.h.b16 %v3403
    %v3638 = vunpack.c.l.b16 %v3404
    %v3639 = vunpack.c.h.b16 %v3404
    %v3640 = vpack.c.b16 %v3520, %v3512
    %v3641 = vpack.c.b16 %v3521, %v3513
    %v3642 = vpack.c.b16 %v3522, %v3514
    %v3643 = vpack.c.b16 %v3523, %v3515
    %v3644 = vpack.c.b16 %v3524, %v3516
    %v3645 = vpack.c.b16 %v3525, %v3517
    %v3646 = vpack.c.b16 %v3526, %v3518
    %v3647 = vpack.c.b16 %v3527, %v3519
    %v3648 = vpack.c.b16 %v3536, %v3528
    %v3649 = vpack.c.b16 %v3537, %v3529
    %v3650 = vpack.c.b16 %v3538, %v3530
    %v3651 = vpack.c.b16 %v3539, %v3531
    %v3652 = vpack.c.b16 %v3540, %v3532
    %v3653 = vpack.c.b16 %v3541, %v3533
    %v3654 = vpack.c.b16 %v3542, %v3534
    %v3655 = vpack.c.b16 %v3543, %v3535
    %v3656 = vpack.c.b16 %v3552, %v3544
    %v3657 = vpack.c.b16 %v3553, %v3545
    %v3658 = vpack.c.b16 %v3554, %v3546
    %v3659 = vpack.c.b16 %v3555, %v3547
    %v3660 = vpack.c.b16 %v3556, %v3548
    %v3661 = vpack.c.b16 %v3557, %v3549
    %v3662 = vpack.c.b16 %v3558, %v3550
    %v3663 = vpack.c.b16 %v3559, %v3551
    %v3664 = vpack.c.b16 %v3568, %v3560
    %v3665 = vpack.c.b16 %v3569, %v3561
    %v3666 = vpack.c.b16 %v3570, %v3562
    %v3667 = vpack.c.b16 %v3571, %v3563
    %v3668 = vpack.c.b16 %v3572, %v3564
    %v3669 = vpack.c.b16 %v3573, %v3565
    %v3670 = vpack.c.b16 %v3574, %v3566
    %v3671 = vpack.c.b16 %v3575, %v3567
    %v3672 = vpack.c.b16 %v3584, %v3576
    %v3673 = vpack.c.b16 %v3585, %v3577
    %v3674 = vpack.c.b16 %v3586, %v3578
    %v3675 = vpack.c.b16 %v3587, %v3579
    %v3676 = vpack.c.b16 %v3588, %v3580
    %v3677 = vpack.c.b16 %v3589, %v3581
    %v3678 = vpack.c.b16 %v3590, %v3582
    %v3679 = vpack.c.b16 %v3591, %v3583
    %v3680 = vpack.c.b16 %v3600, %v3592
    %v3681 = vpack.c.b16 %v3601, %v3593
    %v3682 = vpack.c.b16 %v3602, %v3594
    %v3683 = vpack.c.b16 %v3603, %v3595
    %v3684 = vpack.c.b16 %v3604, %v3596
    %v3685 = vpack.c.b16 %v3605, %v3597
    %v3686 = vpack.c.b16 %v3606, %v3598
    %v3687 = vpack.c.b16 %v3607, %v3599
    %v3688 = vpack.c.b16 %v3616, %v3608
    %v3689 = vpack.c.b16 %v3617, %v3609
    %v3690 = vpack.c.b16 %v3618, %v3610
    %v3691 = vpack.c.b16 %v3619, %v3611
    %v3692 = vpack.c.b16 %v3620, %v3612
    %v3693 = vpack.c.b16 %v3621, %v3613
    %v3694 = vpack.c.b16 %v3622, %v3614
    %v3695 = vpack.c.b16 %v3623, %v3615
    %v3696 = vpack.c.b16 %v3632, %v3624
    %v3697 = vpack.c.b16 %v3633, %v3625
    %v3698 = vpack.c.b16 %v3634, %v3626
    %v3699 = vpack.c.b16 %v3635, %v3627
    %v3700 = vpack.c.b16 %v3636, %v3628
    %v3701 = vpack.c.b16 %v3637, %v3629
    %v3702 = vpack.c.b16 %v3638, %v3630
    %v3703 = vpack.c.b16 %v3639, %v3631
    %3768 = vmatprep.subr.bf16.mxu0 %v3641
    %3769 = vmatpush1.bf16.msra.mxu0 %v3640
    %3770 = vmatprep.subr.bf16.mxu0 %v3649
    %3771 = vmatpush1.bf16.msra.mxu0 %v3648
    %3772 = vmatprep.subr.bf16.mxu0 %v3657
    %3773 = vmatpush1.bf16.msra.mxu0 %v3656
    %3774 = vmatprep.subr.bf16.mxu0 %v3665
    %3775 = vmatpush1.bf16.msra.mxu0 %v3664
    %3776 = vmatprep.subr.bf16.mxu0 %v3673
    %3777 = vmatpush1.bf16.msra.mxu0 %v3672
    %3778 = vmatprep.subr.bf16.mxu0 %v3681
    %3779 = vmatpush1.bf16.msra.mxu0 %v3680
    %3780 = vmatprep.subr.bf16.mxu0 %v3689
    %3781 = vmatpush1.bf16.msra.mxu0 %v3688
    %3782 = vmatprep.subr.bf16.mxu0 %v3697
    %3783 = vmatpush1.bf16.msra.mxu0 %v3696
    %3784 = vmatprep.subr.bf16.mxu0 0
    %3785 = vmatpush1.bf16.msra.mxu0 0
    %3786 = vmatprep.subr.bf16.mxu0 0
    %3787 = vmatpush1.bf16.msra.mxu0 0
    %3788 = vmatprep.subr.bf16.mxu0 0
    %3789 = vmatpush1.bf16.msra.mxu0 0
    %3790 = vmatprep.subr.bf16.mxu0 0
    %3791 = vmatpush1.bf16.msra.mxu0 0
    %3792 = vmatprep.subr.bf16.mxu0 0
    %3793 = vmatpush1.bf16.msra.mxu0 0
    %3794 = vmatprep.subr.bf16.mxu0 0
    %3795 = vmatpush1.bf16.msra.mxu0 0
    %3796 = vmatprep.subr.bf16.mxu0 0
    %3797 = vmatpush1.bf16.msra.mxu0 0
    %3798 = vmatprep.subr.bf16.mxu0 0
    %3799 = vmatpush1.bf16.msra.mxu0 0
    %3800 = vmatprep.mubr.bf16.mxu0 0
    %3801 = vmatmul.mubr.bf16.gmra.mrb[0].mxu0 %v3339
    %v3802 = vpop.f32.mrb[0].mxu0
    %v3803 = vadd.f32 %v3411, %v3802
    %v3804 = vpop.f32.mrb[0].mxu0
    %v3805 = vadd.f32 %v3415, %v3804
    %v3806 = vpop.f32.mrb[0].mxu0
    %v3807 = vpop.f32.mrb[0].mxu0
    %3808 = vdwg.mxu0
    %3809 = vmatprep.subr.bf16.mxu0 %v3643
    %3810 = vmatpush1.bf16.msra.mxu0 %v3642
    %3811 = vmatprep.subr.bf16.mxu0 %v3651
    %3812 = vmatpush1.bf16.msra.mxu0 %v3650
    %3813 = vmatprep.subr.bf16.mxu0 %v3659
    %3814 = vmatpush1.bf16.msra.mxu0 %v3658
    %3815 = vmatprep.subr.bf16.mxu0 %v3667
    %3816 = vmatpush1.bf16.msra.mxu0 %v3666
    %3817 = vmatprep.subr.bf16.mxu0 %v3675
    %3818 = vmatpush1.bf16.msra.mxu0 %v3674
    %3819 = vmatprep.subr.bf16.mxu0 %v3683
    %3820 = vmatpush1.bf16.msra.mxu0 %v3682
    %3821 = vmatprep.subr.bf16.mxu0 %v3691
    %3822 = vmatpush1.bf16.msra.mxu0 %v3690
    %3823 = vmatprep.subr.bf16.mxu0 %v3699
    %3824 = vmatpush1.bf16.msra.mxu0 %v3698
    %3825 = vmatprep.subr.bf16.mxu0 0
    %3826 = vmatpush1.bf16.msra.mxu0 0
    %3827 = vmatprep.subr.bf16.mxu0 0
    %3828 = vmatpush1.bf16.msra.mxu0 0
    %3829 = vmatprep.subr.bf16.mxu0 0
    %3830 = vmatpush1.bf16.msra.mxu0 0
    %3831 = vmatprep.subr.bf16.mxu0 0
    %3832 = vmatpush1.bf16.msra.mxu0 0
    %3833 = vmatprep.subr.bf16.mxu0 0
    %3834 = vmatpush1.bf16.msra.mxu0 0
    %3835 = vmatprep.subr.bf16.mxu0 0
    %3836 = vmatpush1.bf16.msra.mxu0 0
    %3837 = vmatprep.subr.bf16.mxu0 0
    %3838 = vmatpush1.bf16.msra.mxu0 0
    %3839 = vmatprep.subr.bf16.mxu0 0
    %3840 = vmatpush1.bf16.msra.mxu0 0
    %3841 = vmatprep.mubr.bf16.mxu0 0
    %3842 = vmatmul.mubr.bf16.gmra.mrb[0].mxu0 %v3339
    %v3843 = vpop.f32.mrb[0].mxu0
    %v3844 = vadd.f32 %v3419, %v3843
    %v3845 = vpop.f32.mrb[0].mxu0
    %v3846 = vadd.f32 %v3423, %v3845
    %v3847 = vpop.f32.mrb[0].mxu0
    %v3848 = vpop.f32.mrb[0].mxu0
    %3849 = vdwg.mxu0
    %3850 = vmatprep.subr.bf16.mxu0 %v3645
    %3851 = vmatpush1.bf16.msra.mxu0 %v3644
    %3852 = vmatprep.subr.bf16.mxu0 %v3653
    %3853 = vmatpush1.bf16.msra.mxu0 %v3652
    %3854 = vmatprep.subr.bf16.mxu0 %v3661
    %3855 = vmatpush1.bf16.msra.mxu0 %v3660
    %3856 = vmatprep.subr.bf16.mxu0 %v3669
    %3857 = vmatpush1.bf16.msra.mxu0 %v3668
    %3858 = vmatprep.subr.bf16.mxu0 %v3677
    %3859 = vmatpush1.bf16.msra.mxu0 %v3676
    %3860 = vmatprep.subr.bf16.mxu0 %v3685
    %3861 = vmatpush1.bf16.msra.mxu0 %v3684
    %3862 = vmatprep.subr.bf16.mxu0 %v3693
    %3863 = vmatpush1.bf16.msra.mxu0 %v3692
    %3864 = vmatprep.subr.bf16.mxu0 %v3701
    %3865 = vmatpush1.bf16.msra.mxu0 %v3700
    %3866 = vmatprep.subr.bf16.mxu0 0
    %3867 = vmatpush1.bf16.msra.mxu0 0
    %3868 = vmatprep.subr.bf16.mxu0 0
    %3869 = vmatpush1.bf16.msra.mxu0 0
    %3870 = vmatprep.subr.bf16.mxu0 0
    %3871 = vmatpush1.bf16.msra.mxu0 0
    %3872 = vmatprep.subr.bf16.mxu0 0
    %3873 = vmatpush1.bf16.msra.mxu0 0
    %3874 = vmatprep.subr.bf16.mxu0 0
    %3875 = vmatpush1.bf16.msra.mxu0 0
    %3876 = vmatprep.subr.bf16.mxu0 0
    %3877 = vmatpush1.bf16.msra.mxu0 0
    %3878 = vmatprep.subr.bf16.mxu0 0
    %3879 = vmatpush1.bf16.msra.mxu0 0
    %3880 = vmatprep.subr.bf16.mxu0 0
    %3881 = vmatpush1.bf16.msra.mxu0 0
    %3882 = vmatprep.mubr.bf16.mxu0 0
    %3883 = vmatmul.mubr.bf16.gmra.mrb[0].mxu0 %v3339
    %v3884 = vpop.f32.mrb[0].mxu0
    %v3885 = vadd.f32 %v3427, %v3884
    %v3886 = vpop.f32.mrb[0].mxu0
    %v3887 = vadd.f32 %v3431, %v3886
    %v3888 = vpop.f32.mrb[0].mxu0
    %v3889 = vpop.f32.mrb[0].mxu0
    %3890 = vdwg.mxu0
    %3891 = vmatprep.subr.bf16.mxu0 %v3647
    %3892 = vmatpush1.bf16.msra.mxu0 %v3646
    %3893 = vmatprep.subr.bf16.mxu0 %v3655
    %3894 = vmatpush1.bf16.msra.mxu0 %v3654
    %3895 = vmatprep.subr.bf16.mxu0 %v3663
    %3896 = vmatpush1.bf16.msra.mxu0 %v3662
    %3897 = vmatprep.subr.bf16.mxu0 %v3671
    %3898 = vmatpush1.bf16.msra.mxu0 %v3670
    %3899 = vmatprep.subr.bf16.mxu0 %v3679
    %3900 = vmatpush1.bf16.msra.mxu0 %v3678
    %3901 = vmatprep.subr.bf16.mxu0 %v3687
    %3902 = vmatpush1.bf16.msra.mxu0 %v3686
    %3903 = vmatprep.subr.bf16.mxu0 %v3695
    %3904 = vmatpush1.bf16.msra.mxu0 %v3694
    %3905 = vmatprep.subr.bf16.mxu0 %v3703
    %3906 = vmatpush1.bf16.msra.mxu0 %v3702
    %3907 = vmatprep.subr.bf16.mxu0 0
    %3908 = vmatpush1.bf16.msra.mxu0 0
    %3909 = vmatprep.subr.bf16.mxu0 0
    %3910 = vmatpush1.bf16.msra.mxu0 0
    %3911 = vmatprep.subr.bf16.mxu0 0
    %3912 = vmatpush1.bf16.msra.mxu0 0
    %3913 = vmatprep.subr.bf16.mxu0 0
    %3914 = vmatpush1.bf16.msra.mxu0 0
    %3915 = vmatprep.subr.bf16.mxu0 0
    %3916 = vmatpush1.bf16.msra.mxu0 0
    %3917 = vmatprep.subr.bf16.mxu0 0
    %3918 = vmatpush1.bf16.msra.mxu0 0
    %3919 = vmatprep.subr.bf16.mxu0 0
    %3920 = vmatpush1.bf16.msra.mxu0 0
    %3921 = vmatprep.subr.bf16.mxu0 0
    %3922 = vmatpush1.bf16.msra.mxu0 0
    %3923 = vmatprep.mubr.bf16.mxu0 0
    %3924 = vmatmul.mubr.bf16.gmra.mrb[0].mxu0 %v3339
    %v3925 = vpop.f32.mrb[0].mxu0
    %v3926 = vadd.f32 %v3435, %v3925
    %v3927 = vpop.f32.mrb[0].mxu0
    %v3928 = vadd.f32 %v3439, %v3927
    %v3929 = vpop.f32.mrb[0].mxu0
    %v3930 = vpop.f32.mrb[0].mxu0
    %3931 = vdwg.mxu0
    %v3932 = vtanh.pop %v3803
    %v3933 = vtanh.pop %v3805
    %v3934 = vtanh.pop %v3844
    %v3935 = vtanh.pop %v3846
    %v3936 = vmul.f32 %v3932, 1.442695
    %v3937 = vpow.pop %v3936
    %v3938 = vmul.f32 %v3933, 1.442695
    %v3939 = vpow.pop %v3938
    %v3940 = vmul.f32 %v3934, 1.442695
    %v3941 = vpow.pop %v3940
    %v3942 = vmul.f32 %v3935, 1.442695
    %v3943 = vpow.pop %v3942
    %v3944 = vmul.f32 %v2010, %v3937
    %v3945 = vmul.f32 %v2011, %v3939
    %v3946 = vmul.f32 %v2012, %v3941
    %v3947 = vmul.f32 %v2013, %v3943
    %v3948 = vadd.f32 %v3944, %v3885
    %v3949 = vadd.f32 %v3945, %v3887
    %v3950 = vadd.f32 %v3946, %v3926
    %v3951 = vadd.f32 %v3947, %v3928
    %v3952 = vadd.f32 %v3932, %v3933
    %v3953 = vadd.f32 %v3952, %v3934
    %v3954 = vadd.f32 %v3953, %v3935
    %3955 = vadd.xlane.f32.xlu0 %v3954
    %v3956 = vpop.xlane.xlu0 %3955
    %v3957 = vadd.f32 %v2988, %v3956
    %3958 = vst [vmem:[#allocation10] sm:$0xff] %v3948
    %3959 = vst [vmem:[#allocation10 + $0x8] sm:$0xff] %v3949
    %3960 = vst [vmem:[#allocation10 + $0x10] sm:$0xff] %v3950
    %3961 = vst [vmem:[#allocation10 + $0x18] sm:$0xff] %v3951
    %3962 = vst [vmem:[#allocation10 + $0x20] sm:$0xff] %v2979
    %3963 = vst [vmem:[#allocation10 + $0x28] sm:$0xff] %v2980
    %3964 = vst [vmem:[#allocation10 + $0x30] sm:$0xff] %v2981
    %3965 = vst [vmem:[#allocation10 + $0x38] sm:$0xff] %v2982
    %3966 = vst [vmem:[#allocation11] sm:$0xff] %v3957
    // Predicated region
    $region38: #{tpu_custom_call.1} parent=1 // pred_check
      _
    $region39: #{tpu_custom_call.1} parent=1 // pred_check_branch
      %3968 = sbr.rel (0) target = $region41
    $region40: #{tpu_custom_call.1} parent=1 // pred_region
      %s3970 = ssub.s32 1024, 1024
      %3971 = vsyncadd [#allocation4], %s3970
      %s3973 = sshll.u32 [#allocation10], 4
      %s3974 = int_to_ptr.vmem [resolvable:$true] %s3973
      %3976 = dma.vmem_to_hbm [thread:$0]  %s3974, 1024, %s5, [#allocation4]
    $region41: #{tpu_custom_call.1} parent=1 // pred_fallthru
      _
    // Predicated region
    $region42: #{tpu_custom_call.1} parent=1 // pred_check
      _
    $region43: #{tpu_custom_call.1} parent=1 // pred_check_branch
      %3978 = sbr.rel (0) target = $region45
    $region44: #{tpu_custom_call.1} parent=1 // pred_region
      %s3980 = ssub.s32 128, 128
      %3981 = vsyncadd [#allocation12], %s3980
      %s3983 = sshll.u32 [#allocation11], 4
      %s3984 = int_to_ptr.vmem [resolvable:$true] %s3983
      %3986 = dma.vmem_to_hbm [thread:$0]  %s3984, 128, %s6, [#allocation12]
    $region45: #{tpu_custom_call.1} parent=1 // pred_fallthru
      _
    // Predicated region
    $region46: #{tpu_custom_call.1} parent=1 // pred_check
      _
    $region47: #{tpu_custom_call.1} parent=1 // pred_check_branch
      %3988 = sbr.rel (0) target = $region49
    $region48: #{tpu_custom_call.1} parent=1 // pred_region
      %3989 = dma.done [#allocation4], 1024
    $region49: #{tpu_custom_call.1} parent=1 // pred_fallthru
      _
    // Predicated region
    $region50: #{tpu_custom_call.1} parent=1 // pred_check
      _
    $region51: #{tpu_custom_call.1} parent=1 // pred_check_branch
      %3991 = sbr.rel (0) target = $region53
    $region52: #{tpu_custom_call.1} parent=1 // pred_region
      %3992 = dma.done [#allocation12], 128
    $region53: #{tpu_custom_call.1} parent=1 // pred_fallthru
      _
    %3993 = vsyncpa [#allocation3], 1
    %3994 = vsyncpa [#allocation6], 1
    %3995 = vsyncpa [#allocation9], 1
    %3996 = vsyncpa [#allocation4], 1
    %3997 = vsyncpa [#allocation12], 1

// kernel: tpu_custom_call.1
$region0: #{tpu_custom_call.1}
  #allocation0 [shape = 'u32[]', space=smem, size = 0x4, offset = 0x4, fixed_abs, tag = 'smem constant byte address 0x4 - core index']
  #allocation1 [shape = 'u32[144,128]{1,0:T(1,128)}', space=vmem, size = 0x12000, scoped, tag = 'internal scratch']
  %s0 = inlined_call_operand.hbm [shape: f32[8,1024], index: 0, kind: input, shape index: {}]
  %s1 = inlined_call_operand.hbm [shape: bf16[4,512,128], index: 1, kind: input, shape index: {}]
  %s2 = inlined_call_operand.vmem [shape: f32[4,1,128], index: 2, kind: input, shape index: {}]
  %s3 = inlined_call_operand.hbm [shape: bf16[4,128,1024], index: 3, kind: input, shape index: {}]
  %s4 = inlined_call_operand.hbm [shape: f32[4,1,1024], index: 4, kind: input, shape index: {}]
  %s5 = inlined_call_operand.hbm [shape: f32[8,1024], index: 5, kind: output, shape index: {0}]
  %s6 = inlined_call_operand.hbm [shape: f32[8,128], index: 6, kind: output, shape index: {1}]
  %7 = xla_tuple %s5, %s6
  %s8 = sld [smem:[#allocation0]]
  $region54: #{tpu_custom_call.1} parent=0
    _
  %s10 = ssub.s32 1, %s8
  %s11 = scalar_select 0, %s10, %s8
  $region1: #{tpu_custom_call.1} parent=0
    #allocation2 [shape = 'u8[32768]{0}', space=vmem, size = 0x8000, scoped, tag = 'input window, operand 0, single buffered']
    #allocation3 [shape = 's32[1]{0}', space=sflag, size = 0x4, scoped, tag = 'scoped memory for tpu_custom_call.1']
    #allocation4 [shape = 's32[1]{0}', space=sflag, size = 0x4, scoped, tag = 'scoped memory for tpu_custom_call.1']
    #allocation5 [shape = 'u8[524288]{0}', space=vmem, size = 0x80000, scoped, tag = 'input window, operand 1, single buffered']
    #allocation6 [shape = 's32[1]{0}', space=sflag, size = 0x4, scoped, tag = 'scoped memory for tpu_custom_call.1']
    #allocation7 [shape = 'u8[1048576]{0}', space=vmem, size = 0x100000, scoped, tag = 'input window, operand 3, single buffered']
    #allocation8 [shape = 'u8[16384]{0}', space=vmem, size = 0x4000, scoped, tag = 'input window, operand 4, single buffered']
    #allocation9 [shape = 's32[1]{0}', space=sflag, size = 0x4, scoped, tag = 'scoped memory for tpu_custom_call.1']
    #allocation10 [shape = 'u8[32768]{0}', space=vmem, size = 0x8000, scoped, tag = 'output window, operand 0, single buffered']
    #allocation11 [shape = 'u8[4096]{0}', space=vmem, size = 0x1000, scoped, tag = 'output window, operand 1, single buffered']
    #allocation12 [shape = 's32[1]{0}', space=sflag, size = 0x4, scoped, tag = 'scoped memory for tpu_custom_call.1']
    %12 = vsyncpa [#allocation3], 0
    %13 = vsyncpa [#allocation6], 0
    %14 = vsyncpa [#allocation9], 0
    %15 = vsyncpa [#allocation4], 0
    %16 = vsyncpa [#allocation12], 0
    // Predicated region
    $region2: #{tpu_custom_call.1} parent=1 // pred_check
      _
    $region3: #{tpu_custom_call.1} parent=1 // pred_check_branch
      %18 = sbr.rel (0) target = $region5
    $region4: #{tpu_custom_call.1} parent=1 // pred_region
      %s20 = ssub.s32 1024, 1024
      %21 = vsyncadd [#allocation3], %s20
      %s23 = sshll.u32 [#allocation2], 4
      %s24 = int_to_ptr.vmem [resolvable:$true] %s23
      %26 = dma.hbm_to_vmem [thread:$0]  %s0, 1024, %s24, [#allocation3]
    $region5: #{tpu_custom_call.1} parent=1 // pred_fallthru
      _
    // Predicated region
    $region6: #{tpu_custom_call.1} parent=1 // pred_check
      _
    $region7: #{tpu_custom_call.1} parent=1 // pred_check_branch
      %28 = sbr.rel (0) target = $region9
    $region8: #{tpu_custom_call.1} parent=1 // pred_region
      %s30 = ssub.s32 16384, 16384
      %31 = vsyncadd [#allocation6], %s30
      %s32 = sshll.u32 [#allocation5], 4
      %s33 = int_to_ptr.vmem [resolvable:$true] %s32
      %38 = dma.hbm_to_vmem [thread:$0]  %s1, 16384, %s33, [#allocation6], 64, 64, 4
    $region9: #{tpu_custom_call.1} parent=1 // pred_fallthru
      _
    // Predicated region
    $region10: #{tpu_custom_call.1} parent=1 // pred_check
      _
    $region11: #{tpu_custom_call.1} parent=1 // pred_check_branch
      %40 = sbr.rel (0) target = $region13
    $region12: #{tpu_custom_call.1} parent=1 // pred_region
      _
    $region13: #{tpu_custom_call.1} parent=1 // pred_fallthru
      _
    // Predicated region
    $region14: #{tpu_custom_call.1} parent=1 // pred_check
      _
    $region15: #{tpu_custom_call.1} parent=1 // pred_check_branch
      %42 = sbr.rel (0) target = $region17
    $region16: #{tpu_custom_call.1} parent=1 // pred_region
      %s44 = ssub.s32 32768, 32768
      %45 = vsyncadd [#allocation6], %s44
      %s46 = sshll.u32 [#allocation7], 4
      %s47 = int_to_ptr.vmem [resolvable:$true] %s46
      %52 = dma.hbm_to_vmem [thread:$0]  %s3, 32768, %s47, [#allocation6], 512, 512, 32
    $region17: #{tpu_custom_call.1} parent=1 // pred_fallthru
      _
    // Predicated region
    $region18: #{tpu_custom_call.1} parent=1 // pred_check
      _
    $region19: #{tpu_custom_call.1} parent=1 // pred_check_branch
      %54 = sbr.rel (0) target = $region21
    $region20: #{tpu_custom_call.1} parent=1 // pred_region
      %s56 = ssub.s32 512, 512
      %57 = vsyncadd [#allocation9], %s56
      %s58 = sshll.u32 [#allocation8], 4
      %s59 = int_to_ptr.vmem [resolvable:$true] %s58
      %64 = dma.hbm_to_vmem [thread:$0]  %s4, 512, %s59, [#allocation9], 128, 128, 8
    $region21: #{tpu_custom_call.1} parent=1 // pred_fallthru
      _
    // Predicated region
    $region22: #{tpu_custom_call.1} parent=1 // pred_check
      _
    $region23: #{tpu_custom_call.1} parent=1 // pred_check_branch
      %66 = sbr.rel (0) target = $region25
    $region24: #{tpu_custom_call.1} parent=1 // pred_region
      %67 = dma.done [#allocation3], 1024
    $region25: #{tpu_custom_call.1} parent=1 // pred_fallthru
      _
    // Predicated region
    $region26: #{tpu_custom_call.1} parent=1 // pred_check
      _
    $region27: #{tpu_custom_call.1} parent=1 // pred_check_branch
      %69 = sbr.rel (0) target = $region29
    $region28: #{tpu_custom_call.1} parent=1 // pred_region
      %70 = dma.done [#allocation6], 16384
    $region29: #{tpu_custom_call.1} parent=1 // pred_fallthru
      _
    // Predicated region
    $region30: #{tpu_custom_call.1} parent=1 // pred_check
      _
    $region31: #{tpu_custom_call.1} parent=1 // pred_check_branch
      %72 = sbr.rel (0) target = $region33
    $region32: #{tpu_custom_call.1} parent=1 // pred_region
      %73 = dma.done [#allocation6], 32768
    $region33: #{tpu_custom_call.1} parent=1 // pred_fallthru
      _
    // Predicated region
    $region34: #{tpu_custom_call.1} parent=1 // pred_check
      _
    $region35: #{tpu_custom_call.1} parent=1 // pred_check_branch
      %75 = sbr.rel (0) target = $region37
    $region36: #{tpu_custom_call.1} parent=1 // pred_region
      %76 = dma.done [#allocation9], 512
    $region37: #{tpu_custom_call.1} parent=1 // pred_fallthru
      _
    %v78 = vld [vmem:[#allocation2] sm:$0xff]
    %v79 = vld [vmem:[#allocation2 + $0x8] sm:$0xff]
    %v80 = vld [vmem:[#allocation2 + $0x10] sm:$0xff]
    %v81 = vld [vmem:[#allocation2 + $0x18] sm:$0xff]
    %v82 = vld [vmem:[#allocation2 + $0x20] sm:$0xff]
    %v83 = vld [vmem:[#allocation2 + $0x28] sm:$0xff]
    %v84 = vld [vmem:[#allocation2 + $0x30] sm:$0xff]
    %v85 = vld [vmem:[#allocation2 + $0x38] sm:$0xff]
    %v86 = vpack.c.bf16 %v78, %v78
    %v87 = vpack.c.bf16 %v79, %v79
    %v88 = vpack.c.bf16 %v80, %v80
    %v89 = vpack.c.bf16 %v81, %v81
    %v90 = vld [vmem:[#allocation5] sm:$0xf]
    %v91 = vld [vmem:[#allocation5 + $0x4] sm:$0xf]
    %v92 = vld [vmem:[#allocation5 + $0x8] sm:$0xf]
    %v93 = vld [vmem:[#allocation5 + $0xc] sm:$0xf]
    %v94 = vld [vmem:[#allocation5 + $0x10] sm:$0xf]
    %v95 = vld [vmem:[#allocation5 + $0x14] sm:$0xf]
    %v96 = vld [vmem:[#allocation5 + $0x18] sm:$0xf]
    %v97 = vld [vmem:[#allocation5 + $0x1c] sm:$0xf]
    %v98 = vld [vmem:[#allocation5 + $0x20] sm:$0xf]
    %v99 = vld [vmem:[#allocation5 + $0x24] sm:$0xf]
    %v100 = vld [vmem:[#allocation5 + $0x28] sm:$0xf]
    %v101 = vld [vmem:[#allocation5 + $0x2c] sm:$0xf]
    %v102 = vld [vmem:[#allocation5 + $0x30] sm:$0xf]
    %v103 = vld [vmem:[#allocation5 + $0x34] sm:$0xf]
    %v104 = vld [vmem:[#allocation5 + $0x38] sm:$0xf]
    %v105 = vld [vmem:[#allocation5 + $0x3c] sm:$0xf]
    %v106 = vld [vmem:[#allocation5 + $0x40] sm:$0xf]
    %v107 = vld [vmem:[#allocation5 + $0x44] sm:$0xf]
    %v108 = vld [vmem:[#allocation5 + $0x48] sm:$0xf]
    %v109 = vld [vmem:[#allocation5 + $0x4c] sm:$0xf]
    %v110 = vld [vmem:[#allocation5 + $0x50] sm:$0xf]
    %v111 = vld [vmem:[#allocation5 + $0x54] sm:$0xf]
    %v112 = vld [vmem:[#allocation5 + $0x58] sm:$0xf]
    %v113 = vld [vmem:[#allocation5 + $0x5c] sm:$0xf]
    %v114 = vld [vmem:[#allocation5 + $0x60] sm:$0xf]
    %v115 = vld [vmem:[#allocation5 + $0x64] sm:$0xf]
    %v116 = vld [vmem:[#allocation5 + $0x68] sm:$0xf]
    %v117 = vld [vmem:[#allocation5 + $0x6c] sm:$0xf]
    %v118 = vld [vmem:[#allocation5 + $0x70] sm:$0xf]
    %v119 = vld [vmem:[#allocation5 + $0x74] sm:$0xf]
    %v120 = vld [vmem:[#allocation5 + $0x78] sm:$0xf]
    %v121 = vld [vmem:[#allocation5 + $0x7c] sm:$0xf]
    %v122 = vld [vmem:[#allocation5 + $0x80] sm:$0xf]
    %v123 = vld [vmem:[#allocation5 + $0x84] sm:$0xf]
    %v124 = vld [vmem:[#allocation5 + $0x88] sm:$0xf]
    %v125 = vld [vmem:[#allocation5 + $0x8c] sm:$0xf]
    %v126 = vld [vmem:[#allocation5 + $0x90] sm:$0xf]
    %v127 = vld [vmem:[#allocation5 + $0x94] sm:$0xf]
    %v128 = vld [vmem:[#allocation5 + $0x98] sm:$0xf]
    %v129 = vld [vmem:[#allocation5 + $0x9c] sm:$0xf]
    %v130 = vld [vmem:[#allocation5 + $0xa0] sm:$0xf]
    %v131 = vld [vmem:[#allocation5 + $0xa4] sm:$0xf]
    %v132 = vld [vmem:[#allocation5 + $0xa8] sm:$0xf]
    %v133 = vld [vmem:[#allocation5 + $0xac] sm:$0xf]
    %v134 = vld [vmem:[#allocation5 + $0xb0] sm:$0xf]
    %v135 = vld [vmem:[#allocation5 + $0xb4] sm:$0xf]
    %v136 = vld [vmem:[#allocation5 + $0xb8] sm:$0xf]
    %v137 = vld [vmem:[#allocation5 + $0xbc] sm:$0xf]
    %v138 = vld [vmem:[#allocation5 + $0xc0] sm:$0xf]
    %v139 = vld [vmem:[#allocation5 + $0xc4] sm:$0xf]
    %v140 = vld [vmem:[#allocation5 + $0xc8] sm:$0xf]
    %v141 = vld [vmem:[#allocation5 + $0xcc] sm:$0xf]
    %v142 = vld [vmem:[#allocation5 + $0xd0] sm:$0xf]
    %v143 = vld [vmem:[#allocation5 + $0xd4] sm:$0xf]
    %v144 = vld [vmem:[#allocation5 + $0xd8] sm:$0xf]
    %v145 = vld [vmem:[#allocation5 + $0xdc] sm:$0xf]
    %v146 = vld [vmem:[#allocation5 + $0xe0] sm:$0xf]
    %v147 = vld [vmem:[#allocation5 + $0xe4] sm:$0xf]
    %v148 = vld [vmem:[#allocation5 + $0xe8] sm:$0xf]
    %v149 = vld [vmem:[#allocation5 + $0xec] sm:$0xf]
    %v150 = vld [vmem:[#allocation5 + $0xf0] sm:$0xf]
    %v151 = vld [vmem:[#allocation5 + $0xf4] sm:$0xf]
    %v152 = vld [vmem:[#allocation5 + $0xf8] sm:$0xf]
    %v153 = vld [vmem:[#allocation5 + $0xfc] sm:$0xf]
    %v154 = vld [vmem:[%s2] sm:$0x1]
    %v156 = vlaneseq
    %v157 = vshrl.u32 %v156, 7
    %v158 = vsub.s32 0, %v157
    %v159 = vrot.slane %v154, %v158
    %v225 = vunpack.c.l.b16 %v90
    %v226 = vunpack.c.l.b16 %v91
    %v227 = vunpack.c.l.b16 %v92
    %v228 = vunpack.c.l.b16 %v93
    %v229 = vunpack.c.l.b16 %v94
    %v230 = vunpack.c.l.b16 %v95
    %v231 = vunpack.c.l.b16 %v96
    %v232 = vunpack.c.l.b16 %v97
    %v233 = vunpack.c.l.b16 %v98
    %v234 = vunpack.c.l.b16 %v99
    %v235 = vunpack.c.l.b16 %v100
    %v236 = vunpack.c.l.b16 %v101
    %v237 = vunpack.c.l.b16 %v102
    %v238 = vunpack.c.l.b16 %v103
    %v239 = vunpack.c.l.b16 %v104
    %v240 = vunpack.c.l.b16 %v105
    %v241 = vunpack.c.l.b16 %v106
    %v242 = vunpack.c.l.b16 %v107
    %v243 = vunpack.c.l.b16 %v108
    %v244 = vunpack.c.l.b16 %v109
    %v245 = vunpack.c.l.b16 %v110
    %v246 = vunpack.c.l.b16 %v111
    %v247 = vunpack.c.l.b16 %v112
    %v248 = vunpack.c.l.b16 %v113
    %v249 = vunpack.c.l.b16 %v114
    %v250 = vunpack.c.l.b16 %v115
    %v251 = vunpack.c.l.b16 %v116
    %v252 = vunpack.c.l.b16 %v117
    %v253 = vunpack.c.l.b16 %v118
    %v254 = vunpack.c.l.b16 %v119
    %v255 = vunpack.c.l.b16 %v120
    %v256 = vunpack.c.l.b16 %v121
    %v257 = vunpack.c.l.b16 %v122
    %v258 = vunpack.c.l.b16 %v123
    %v259 = vunpack.c.l.b16 %v124
    %v260 = vunpack.c.l.b16 %v125
    %v261 = vunpack.c.l.b16 %v126
    %v262 = vunpack.c.l.b16 %v127
    %v263 = vunpack.c.l.b16 %v128
    %v264 = vunpack.c.l.b16 %v129
    %v265 = vunpack.c.l.b16 %v130
    %v266 = vunpack.c.l.b16 %v131
    %v267 = vunpack.c.l.b16 %v132
    %v268 = vunpack.c.l.b16 %v133
    %v269 = vunpack.c.l.b16 %v134
    %v270 = vunpack.c.l.b16 %v135
    %v271 = vunpack.c.l.b16 %v136
    %v272 = vunpack.c.l.b16 %v137
    %v273 = vunpack.c.l.b16 %v138
    %v274 = vunpack.c.l.b16 %v139
    %v275 = vunpack.c.l.b16 %v140
    %v276 = vunpack.c.l.b16 %v141
    %v277 = vunpack.c.l.b16 %v142
    %v278 = vunpack.c.l.b16 %v143
    %v279 = vunpack.c.l.b16 %v144
    %v280 = vunpack.c.l.b16 %v145
    %v281 = vunpack.c.l.b16 %v146
    %v282 = vunpack.c.l.b16 %v147
    %v283 = vunpack.c.l.b16 %v148
    %v284 = vunpack.c.l.b16 %v149
    %v285 = vunpack.c.l.b16 %v150
    %v286 = vunpack.c.l.b16 %v151
    %v287 = vunpack.c.l.b16 %v152
    %v288 = vunpack.c.l.b16 %v153
    %v289 = vpack.c.b16 %v226, %v225
    %v290 = vpack.c.b16 %v228, %v227
    %v291 = vpack.c.b16 %v230, %v229
    %v292 = vpack.c.b16 %v232, %v231
    %v293 = vpack.c.b16 %v234, %v233
    %v294 = vpack.c.b16 %v236, %v235
    %v295 = vpack.c.b16 %v238, %v237
    %v296 = vpack.c.b16 %v240, %v239
    %v297 = vpack.c.b16 %v242, %v241
    %v298 = vpack.c.b16 %v244, %v243
    %v299 = vpack.c.b16 %v246, %v245
    %v300 = vpack.c.b16 %v248, %v247
    %v301 = vpack.c.b16 %v250, %v249
    %v302 = vpack.c.b16 %v252, %v251
    %v303 = vpack.c.b16 %v254, %v253
    %v304 = vpack.c.b16 %v256, %v255
    %v305 = vpack.c.b16 %v258, %v257
    %v306 = vpack.c.b16 %v260, %v259
    %v307 = vpack.c.b16 %v262, %v261
    %v308 = vpack.c.b16 %v264, %v263
    %v309 = vpack.c.b16 %v266, %v265
    %v310 = vpack.c.b16 %v268, %v267
    %v311 = vpack.c.b16 %v270, %v269
    %v312 = vpack.c.b16 %v272, %v271
    %v313 = vpack.c.b16 %v274, %v273
    %v314 = vpack.c.b16 %v276, %v275
    %v315 = vpack.c.b16 %v278, %v277
    %v316 = vpack.c.b16 %v280, %v279
    %v317 = vpack.c.b16 %v282, %v281
    %v318 = vpack.c.b16 %v284, %v283
    %v319 = vpack.c.b16 %v286, %v285
    %v320 = vpack.c.b16 %v288, %v287
    %353 = vmatprep.subr.bf16.mxu0 0
    %354 = vmatpush1.bf16.msra.mxu0 %v289
    %355 = vmatprep.subr.bf16.mxu0 0
    %356 = vmatpush1.bf16.msra.mxu0 %v290
    %357 = vmatprep.subr.bf16.mxu0 0
    %358 = vmatpush1.bf16.msra.mxu0 %v291
    %359 = vmatprep.subr.bf16.mxu0 0
    %360 = vmatpush1.bf16.msra.mxu0 %v292
    %361 = vmatprep.subr.bf16.mxu0 0
    %362 = vmatpush1.bf16.msra.mxu0 %v293
    %363 = vmatprep.subr.bf16.mxu0 0
    %364 = vmatpush1.bf16.msra.mxu0 %v294
    %365 = vmatprep.subr.bf16.mxu0 0
    %366 = vmatpush1.bf16.msra.mxu0 %v295
    %367 = vmatprep.subr.bf16.mxu0 0
    %368 = vmatpush1.bf16.msra.mxu0 %v296
    %369 = vmatprep.subr.bf16.mxu0 0
    %370 = vmatpush1.bf16.msra.mxu0 %v297
    %371 = vmatprep.subr.bf16.mxu0 0
    %372 = vmatpush1.bf16.msra.mxu0 %v298
    %373 = vmatprep.subr.bf16.mxu0 0
    %374 = vmatpush1.bf16.msra.mxu0 %v299
    %375 = vmatprep.subr.bf16.mxu0 0
    %376 = vmatpush1.bf16.msra.mxu0 %v300
    %377 = vmatprep.subr.bf16.mxu0 0
    %378 = vmatpush1.bf16.msra.mxu0 %v301
    %379 = vmatprep.subr.bf16.mxu0 0
    %380 = vmatpush1.bf16.msra.mxu0 %v302
    %381 = vmatprep.subr.bf16.mxu0 0
    %382 = vmatpush1.bf16.msra.mxu0 %v303
    %383 = vmatprep.subr.bf16.mxu0 0
    %384 = vmatpush1.bf16.msra.mxu0 %v304
    %385 = vmatprep.mubr.bf16.mxu0 %v87
    %386 = vmatmul.mubr.bf16.gmra.mrb[0].mxu0 %v86
    %v387 = vpop.f32.mrb[0].mxu0
    %v388 = vadd.f32 %v159, %v387
    %v389 = vpop.f32.mrb[0].mxu0
    %v390 = vpop.f32.mrb[0].mxu0
    %v391 = vpop.f32.mrb[0].mxu0
    %392 = vdwg.mxu0
    %393 = vmatprep.subr.bf16.mxu0 0
    %394 = vmatpush1.bf16.msra.mxu0 %v305
    %395 = vmatprep.subr.bf16.mxu0 0
    %396 = vmatpush1.bf16.msra.mxu0 %v306
    %397 = vmatprep.subr.bf16.mxu0 0
    %398 = vmatpush1.bf16.msra.mxu0 %v307
    %399 = vmatprep.subr.bf16.mxu0 0
    %400 = vmatpush1.bf16.msra.mxu0 %v308
    %401 = vmatprep.subr.bf16.mxu0 0
    %402 = vmatpush1.bf16.msra.mxu0 %v309
    %403 = vmatprep.subr.bf16.mxu0 0
    %404 = vmatpush1.bf16.msra.mxu0 %v310
    %405 = vmatprep.subr.bf16.mxu0 0
    %406 = vmatpush1.bf16.msra.mxu0 %v311
    %407 = vmatprep.subr.bf16.mxu0 0
    %408 = vmatpush1.bf16.msra.mxu0 %v312
    %409 = vmatprep.subr.bf16.mxu0 0
    %410 = vmatpush1.bf16.msra.mxu0 %v313
    %411 = vmatprep.subr.bf16.mxu0 0
    %412 = vmatpush1.bf16.msra.mxu0 %v314
    %413 = vmatprep.subr.bf16.mxu0 0
    %414 = vmatpush1.bf16.msra.mxu0 %v315
    %415 = vmatprep.subr.bf16.mxu0 0
    %416 = vmatpush1.bf16.msra.mxu0 %v316
    %417 = vmatprep.subr.bf16.mxu0 0
    %418 = vmatpush1.bf16.msra.mxu0 %v317
    %419 = vmatprep.subr.bf16.mxu0 0
    %420 = vmatpush1.bf16.msra.mxu0 %v318
    %421 = vmatprep.subr.bf16.mxu0 0
    %422 = vmatpush1.bf16.msra.mxu0 %v319
    %423 = vmatprep.subr.bf16.mxu0 0
    %424 = vmatpush1.bf16.msra.mxu0 %v320
    %425 = vmatprep.mubr.bf16.mxu0 %v89
    %426 = vmatmul.mubr.bf16.gmra.mrb[0].mxu0 %v88
    %v427 = vpop.f32.mrb[0].mxu0
    %v428 = vadd.f32 %v388, %v427
    %v429 = vpop.f32.mrb[0].mxu0
    %v430 = vpop.f32.mrb[0].mxu0
    %v431 = vpop.f32.mrb[0].mxu0
    %432 = vdwg.mxu0
    %v433 = vtanh.pop %v428
    %v434 = vpack.c.bf16 %v433, %v433
    %v435 = vld [vmem:[#allocation7] sm:$0xff]
    %v436 = vld [vmem:[#allocation7 + $0x8] sm:$0xff]
    %v437 = vld [vmem:[#allocation7 + $0x10] sm:$0xff]
    %v438 = vld [vmem:[#allocation7 + $0x18] sm:$0xff]
    %v439 = vld [vmem:[#allocation7 + $0x20] sm:$0xff]
    %v440 = vld [vmem:[#allocation7 + $0x28] sm:$0xff]
    %v441 = vld [vmem:[#allocation7 + $0x30] sm:$0xff]
    %v442 = vld [vmem:[#allocation7 + $0x38] sm:$0xff]
    %v443 = vld [vmem:[#allocation7 + $0x40] sm:$0xff]
    %v444 = vld [vmem:[#allocation7 + $0x48] sm:$0xff]
    %v445 = vld [vmem:[#allocation7 + $0x50] sm:$0xff]
    %v446 = vld [vmem:[#allocation7 + $0x58] sm:$0xff]
    %v447 = vld [vmem:[#allocation7 + $0x60] sm:$0xff]
    %v448 = vld [vmem:[#allocation7 + $0x68] sm:$0xff]
    %v449 = vld [vmem:[#allocation7 + $0x70] sm:$0xff]
    %v450 = vld [vmem:[#allocation7 + $0x78] sm:$0xff]
    %v451 = vld [vmem:[#allocation7 + $0x80] sm:$0xff]
    %v452 = vld [vmem:[#allocation7 + $0x88] sm:$0xff]
    %v453 = vld [vmem:[#allocation7 + $0x90] sm:$0xff]
    %v454 = vld [vmem:[#allocation7 + $0x98] sm:$0xff]
    %v455 = vld [vmem:[#allocation7 + $0xa0] sm:$0xff]
    %v456 = vld [vmem:[#allocation7 + $0xa8] sm:$0xff]
    %v457 = vld [vmem:[#allocation7 + $0xb0] sm:$0xff]
    %v458 = vld [vmem:[#allocation7 + $0xb8] sm:$0xff]
    %v459 = vld [vmem:[#allocation7 + $0xc0] sm:$0xff]
    %v460 = vld [vmem:[#allocation7 + $0xc8] sm:$0xff]
    %v461 = vld [vmem:[#allocation7 + $0xd0] sm:$0xff]
    %v462 = vld [vmem:[#allocation7 + $0xd8] sm:$0xff]
    %v463 = vld [vmem:[#allocation7 + $0xe0] sm:$0xff]
    %v464 = vld [vmem:[#allocation7 + $0xe8] sm:$0xff]
    %v465 = vld [vmem:[#allocation7 + $0xf0] sm:$0xff]
    %v466 = vld [vmem:[#allocation7 + $0xf8] sm:$0xff]
    %v467 = vld [vmem:[#allocation7 + $0x100] sm:$0xff]
    %v468 = vld [vmem:[#allocation7 + $0x108] sm:$0xff]
    %v469 = vld [vmem:[#allocation7 + $0x110] sm:$0xff]
    %v470 = vld [vmem:[#allocation7 + $0x118] sm:$0xff]
    %v471 = vld [vmem:[#allocation7 + $0x120] sm:$0xff]
    %v472 = vld [vmem:[#allocation7 + $0x128] sm:$0xff]
    %v473 = vld [vmem:[#allocation7 + $0x130] sm:$0xff]
    %v474 = vld [vmem:[#allocation7 + $0x138] sm:$0xff]
    %v475 = vld [vmem:[#allocation7 + $0x140] sm:$0xff]
    %v476 = vld [vmem:[#allocation7 + $0x148] sm:$0xff]
    %v477 = vld [vmem:[#allocation7 + $0x150] sm:$0xff]
    %v478 = vld [vmem:[#allocation7 + $0x158] sm:$0xff]
    %v479 = vld [vmem:[#allocation7 + $0x160] sm:$0xff]
    %v480 = vld [vmem:[#allocation7 + $0x168] sm:$0xff]
    %v481 = vld [vmem:[#allocation7 + $0x170] sm:$0xff]
    %v482 = vld [vmem:[#allocation7 + $0x178] sm:$0xff]
    %v483 = vld [vmem:[#allocation7 + $0x180] sm:$0xff]
    %v484 = vld [vmem:[#allocation7 + $0x188] sm:$0xff]
    %v485 = vld [vmem:[#allocation7 + $0x190] sm:$0xff]
    %v486 = vld [vmem:[#allocation7 + $0x198] sm:$0xff]
    %v487 = vld [vmem:[#allocation7 + $0x1a0] sm:$0xff]
    %v488 = vld [vmem:[#allocation7 + $0x1a8] sm:$0xff]
    %v489 = vld [vmem:[#allocation7 + $0x1b0] sm:$0xff]
    %v490 = vld [vmem:[#allocation7 + $0x1b8] sm:$0xff]
    %v491 = vld [vmem:[#allocation7 + $0x1c0] sm:$0xff]
    %v492 = vld [vmem:[#allocation7 + $0x1c8] sm:$0xff]
    %v493 = vld [vmem:[#allocation7 + $0x1d0] sm:$0xff]
    %v494 = vld [vmem:[#allocation7 + $0x1d8] sm:$0xff]
    %v495 = vld [vmem:[#allocation7 + $0x1e0] sm:$0xff]
    %v496 = vld [vmem:[#allocation7 + $0x1e8] sm:$0xff]
    %v497 = vld [vmem:[#allocation7 + $0x1f0] sm:$0xff]
    %v498 = vld [vmem:[#allocation7 + $0x1f8] sm:$0xff]
    %v499 = vld [vmem:[#allocation8] sm:$0xff]
    %v501 = vlaneseq
    %v502 = vshrl.u32 %v501, 7
    %v503 = vsub.s32 0, %v502
    %v504 = vrot.slane %v499, %v503
    %v505 = vlaneseq
    %v506 = vshrl.u32 %v505, 7
    %v507 = vsub.s32 1, %v506
    %v508 = vrot.slane %v499, %v507
    %v509 = vlaneseq
    %v510 = vshrl.u32 %v509, 7
    %v511 = vsub.s32 2, %v510
    %v512 = vrot.slane %v499, %v511
    %v513 = vlaneseq
    %v514 = vshrl.u32 %v513, 7
    %v515 = vsub.s32 3, %v514
    %v516 = vrot.slane %v499, %v515
    %v517 = vlaneseq
    %v518 = vshrl.u32 %v517, 7
    %v519 = vsub.s32 4, %v518
    %v520 = vrot.slane %v499, %v519
    %v521 = vlaneseq
    %v522 = vshrl.u32 %v521, 7
    %v523 = vsub.s32 5, %v522
    %v524 = vrot.slane %v499, %v523
    %v525 = vlaneseq
    %v526 = vshrl.u32 %v525, 7
    %v527 = vsub.s32 6, %v526
    %v528 = vrot.slane %v499, %v527
    %v529 = vlaneseq
    %v530 = vshrl.u32 %v529, 7
    %v531 = vsub.s32 7, %v530
    %v532 = vrot.slane %v499, %v531
    %v605 = vunpack.c.l.b16 %v435
    %v606 = vunpack.c.h.b16 %v435
    %v607 = vunpack.c.l.b16 %v436
    %v608 = vunpack.c.h.b16 %v436
    %v609 = vunpack.c.l.b16 %v437
    %v610 = vunpack.c.h.b16 %v437
    %v611 = vunpack.c.l.b16 %v438
    %v612 = vunpack.c.h.b16 %v438
    %v613 = vunpack.c.l.b16 %v439
    %v614 = vunpack.c.h.b16 %v439
    %v615 = vunpack.c.l.b16 %v440
    %v616 = vunpack.c.h.b16 %v440
    %v617 = vunpack.c.l.b16 %v441
    %v618 = vunpack.c.h.b16 %v441
    %v619 = vunpack.c.l.b16 %v442
    %v620 = vunpack.c.h.b16 %v442
    %v621 = vunpack.c.l.b16 %v443
    %v622 = vunpack.c.h.b16 %v443
    %v623 = vunpack.c.l.b16 %v444
    %v624 = vunpack.c.h.b16 %v444
    %v625 = vunpack.c.l.b16 %v445
    %v626 = vunpack.c.h.b16 %v445
    %v627 = vunpack.c.l.b16 %v446
    %v628 = vunpack.c.h.b16 %v446
    %v629 = vunpack.c.l.b16 %v447
    %v630 = vunpack.c.h.b16 %v447
    %v631 = vunpack.c.l.b16 %v448
    %v632 = vunpack.c.h.b16 %v448
    %v633 = vunpack.c.l.b16 %v449
    %v634 = vunpack.c.h.b16 %v449
    %v635 = vunpack.c.l.b16 %v450
    %v636 = vunpack.c.h.b16 %v450
    %v637 = vunpack.c.l.b16 %v451
    %v638 = vunpack.c.h.b16 %v451
    %v639 = vunpack.c.l.b16 %v452
    %v640 = vunpack.c.h.b16 %v452
    %v641 = vunpack.c.l.b16 %v453
    %v642 = vunpack.c.h.b16 %v453
    %v643 = vunpack.c.l.b16 %v454
    %v644 = vunpack.c.h.b16 %v454
    %v645 = vunpack.c.l.b16 %v455
    %v646 = vunpack.c.h.b16 %v455
    %v647 = vunpack.c.l.b16 %v456
    %v648 = vunpack.c.h.b16 %v456
    %v649 = vunpack.c.l.b16 %v457
    %v650 = vunpack.c.h.b16 %v457
    %v651 = vunpack.c.l.b16 %v458
    %v652 = vunpack.c.h.b16 %v458
    %v653 = vunpack.c.l.b16 %v459
    %v654 = vunpack.c.h.b16 %v459
    %v655 = vunpack.c.l.b16 %v460
    %v656 = vunpack.c.h.b16 %v460
    %v657 = vunpack.c.l.b16 %v461
    %v658 = vunpack.c.h.b16 %v461
    %v659 = vunpack.c.l.b16 %v462
    %v660 = vunpack.c.h.b16 %v462
    %v661 = vunpack.c.l.b16 %v463
    %v662 = vunpack.c.h.b16 %v463
    %v663 = vunpack.c.l.b16 %v464
    %v664 = vunpack.c.h.b16 %v464
    %v665 = vunpack.c.l.b16 %v465
    %v666 = vunpack.c.h.b16 %v465
    %v667 = vunpack.c.l.b16 %v466
    %v668 = vunpack.c.h.b16 %v466
    %v669 = vunpack.c.l.b16 %v467
    %v670 = vunpack.c.h.b16 %v467
    %v671 = vunpack.c.l.b16 %v468
    %v672 = vunpack.c.h.b16 %v468
    %v673 = vunpack.c.l.b16 %v469
    %v674 = vunpack.c.h.b16 %v469
    %v675 = vunpack.c.l.b16 %v470
    %v676 = vunpack.c.h.b16 %v470
    %v677 = vunpack.c.l.b16 %v471
    %v678 = vunpack.c.h.b16 %v471
    %v679 = vunpack.c.l.b16 %v472
    %v680 = vunpack.c.h.b16 %v472
    %v681 = vunpack.c.l.b16 %v473
    %v682 = vunpack.c.h.b16 %v473
    %v683 = vunpack.c.l.b16 %v474
    %v684 = vunpack.c.h.b16 %v474
    %v685 = vunpack.c.l.b16 %v475
    %v686 = vunpack.c.h.b16 %v475
    %v687 = vunpack.c.l.b16 %v476
    %v688 = vunpack.c.h.b16 %v476
    %v689 = vunpack.c.l.b16 %v477
    %v690 = vunpack.c.h.b16 %v477
    %v691 = vunpack.c.l.b16 %v478
    %v692 = vunpack.c.h.b16 %v478
    %v693 = vunpack.c.l.b16 %v479
    %v694 = vunpack.c.h.b16 %v479
    %v695 = vunpack.c.l.b16 %v480
    %v696 = vunpack.c.h.b16 %v480
    %v697 = vunpack.c.l.b16 %v481
    %v698 = vunpack.c.h.b16 %v481
    %v699 = vunpack.c.l.b16 %v482
    %v700 = vunpack.c.h.b16 %v482
    %v701 = vunpack.c.l.b16 %v483
    %v702 = vunpack.c.h.b16 %v483
    %v703 = vunpack.c.l.b16 %v484
    %v704 = vunpack.c.h.b16 %v484
    %v705 = vunpack.c.l.b16 %v485
    %v706 = vunpack.c.h.b16 %v485
    %v707 = vunpack.c.l.b16 %v486
    %v708 = vunpack.c.h.b16 %v486
    %v709 = vunpack.c.l.b16 %v487
    %v710 = vunpack.c.h.b16 %v487
    %v711 = vunpack.c.l.b16 %v488
    %v712 = vunpack.c.h.b16 %v488
    %v713 = vunpack.c.l.b16 %v489
    %v714 = vunpack.c.h.b16 %v489
    %v715 = vunpack.c.l.b16 %v490
    %v716 = vunpack.c.h.b16 %v490
    %v717 = vunpack.c.l.b16 %v491
    %v718 = vunpack.c.h.b16 %v491
    %v719 = vunpack.c.l.b16 %v492
    %v720 = vunpack.c.h.b16 %v492
    %v721 = vunpack.c.l.b16 %v493
    %v722 = vunpack.c.h.b16 %v493
    %v723 = vunpack.c.l.b16 %v494
    %v724 = vunpack.c.h.b16 %v494
    %v725 = vunpack.c.l.b16 %v495
    %v726 = vunpack.c.h.b16 %v495
    %v727 = vunpack.c.l.b16 %v496
    %v728 = vunpack.c.h.b16 %v496
    %v729 = vunpack.c.l.b16 %v497
    %v730 = vunpack.c.h.b16 %v497
    %v731 = vunpack.c.l.b16 %v498
    %v732 = vunpack.c.h.b16 %v498
    %v733 = vpack.c.b16 %v613, %v605
    %v734 = vpack.c.b16 %v614, %v606
    %v735 = vpack.c.b16 %v615, %v607
    %v736 = vpack.c.b16 %v616, %v608
    %v737 = vpack.c.b16 %v617, %v609
    %v738 = vpack.c.b16 %v618, %v610
    %v739 = vpack.c.b16 %v619, %v611
    %v740 = vpack.c.b16 %v620, %v612
    %v741 = vpack.c.b16 %v629, %v621
    %v742 = vpack.c.b16 %v630, %v622
    %v743 = vpack.c.b16 %v631, %v623
    %v744 = vpack.c.b16 %v632, %v624
    %v745 = vpack.c.b16 %v633, %v625
    %v746 = vpack.c.b16 %v634, %v626
    %v747 = vpack.c.b16 %v635, %v627
    %v748 = vpack.c.b16 %v636, %v628
    %v749 = vpack.c.b16 %v645, %v637
    %v750 = vpack.c.b16 %v646, %v638
    %v751 = vpack.c.b16 %v647, %v639
    %v752 = vpack.c.b16 %v648, %v640
    %v753 = vpack.c.b16 %v649, %v641
    %v754 = vpack.c.b16 %v650, %v642
    %v755 = vpack.c.b16 %v651, %v643
    %v756 = vpack.c.b16 %v652, %v644
    %v757 = vpack.c.b16 %v661, %v653
    %v758 = vpack.c.b16 %v662, %v654
    %v759 = vpack.c.b16 %v663, %v655
    %v760 = vpack.c.b16 %v664, %v656
    %v761 = vpack.c.b16 %v665, %v657
    %v762 = vpack.c.b16 %v666, %v658
    %v763 = vpack.c.b16 %v667, %v659
    %v764 = vpack.c.b16 %v668, %v660
    %v765 = vpack.c.b16 %v677, %v669
    %v766 = vpack.c.b16 %v678, %v670
    %v767 = vpack.c.b16 %v679, %v671
    %v768 = vpack.c.b16 %v680, %v672
    %v769 = vpack.c.b16 %v681, %v673
    %v770 = vpack.c.b16 %v682, %v674
    %v771 = vpack.c.b16 %v683, %v675
    %v772 = vpack.c.b16 %v684, %v676
    %v773 = vpack.c.b16 %v693, %v685
    %v774 = vpack.c.b16 %v694, %v686
    %v775 = vpack.c.b16 %v695, %v687
    %v776 = vpack.c.b16 %v696, %v688
    %v777 = vpack.c.b16 %v697, %v689
    %v778 = vpack.c.b16 %v698, %v690
    %v779 = vpack.c.b16 %v699, %v691
    %v780 = vpack.c.b16 %v700, %v692
    %v781 = vpack.c.b16 %v709, %v701
    %v782 = vpack.c.b16 %v710, %v702
    %v783 = vpack.c.b16 %v711, %v703
    %v784 = vpack.c.b16 %v712, %v704
    %v785 = vpack.c.b16 %v713, %v705
    %v786 = vpack.c.b16 %v714, %v706
    %v787 = vpack.c.b16 %v715, %v707
    %v788 = vpack.c.b16 %v716, %v708
    %v789 = vpack.c.b16 %v725, %v717
    %v790 = vpack.c.b16 %v726, %v718
    %v791 = vpack.c.b16 %v727, %v719
    %v792 = vpack.c.b16 %v728, %v720
    %v793 = vpack.c.b16 %v729, %v721
    %v794 = vpack.c.b16 %v730, %v722
    %v795 = vpack.c.b16 %v731, %v723
    %v796 = vpack.c.b16 %v732, %v724
    %861 = vmatprep.subr.bf16.mxu0 %v734
    %862 = vmatpush1.bf16.msra.mxu0 %v733
    %863 = vmatprep.subr.bf16.mxu0 %v742
    %864 = vmatpush1.bf16.msra.mxu0 %v741
    %865 = vmatprep.subr.bf16.mxu0 %v750
    %866 = vmatpush1.bf16.msra.mxu0 %v749
    %867 = vmatprep.subr.bf16.mxu0 %v758
    %868 = vmatpush1.bf16.msra.mxu0 %v757
    %869 = vmatprep.subr.bf16.mxu0 %v766
    %870 = vmatpush1.bf16.msra.mxu0 %v765
    %871 = vmatprep.subr.bf16.mxu0 %v774
    %872 = vmatpush1.bf16.msra.mxu0 %v773
    %873 = vmatprep.subr.bf16.mxu0 %v782
    %874 = vmatpush1.bf16.msra.mxu0 %v781
    %875 = vmatprep.subr.bf16.mxu0 %v790
    %876 = vmatpush1.bf16.msra.mxu0 %v789
    %877 = vmatprep.subr.bf16.mxu0 0
    %878 = vmatpush1.bf16.msra.mxu0 0
    %879 = vmatprep.subr.bf16.mxu0 0
    %880 = vmatpush1.bf16.msra.mxu0 0
    %881 = vmatprep.subr.bf16.mxu0 0
    %882 = vmatpush1.bf16.msra.mxu0 0
    %883 = vmatprep.subr.bf16.mxu0 0
    %884 = vmatpush1.bf16.msra.mxu0 0
    %885 = vmatprep.subr.bf16.mxu0 0
    %886 = vmatpush1.bf16.msra.mxu0 0
    %887 = vmatprep.subr.bf16.mxu0 0
    %888 = vmatpush1.bf16.msra.mxu0 0
    %889 = vmatprep.subr.bf16.mxu0 0
    %890 = vmatpush1.bf16.msra.mxu0 0
    %891 = vmatprep.subr.bf16.mxu0 0
    %892 = vmatpush1.bf16.msra.mxu0 0
    %893 = vmatprep.mubr.bf16.mxu0 0
    %894 = vmatmul.mubr.bf16.gmra.mrb[0].mxu0 %v434
    %v895 = vpop.f32.mrb[0].mxu0
    %v896 = vadd.f32 %v504, %v895
    %v897 = vpop.f32.mrb[0].mxu0
    %v898 = vadd.f32 %v508, %v897
    %v899 = vpop.f32.mrb[0].mxu0
    %v900 = vpop.f32.mrb[0].mxu0
    %901 = vdwg.mxu0
    %902 = vmatprep.subr.bf16.mxu0 %v736
    %903 = vmatpush1.bf16.msra.mxu0 %v735
    %904 = vmatprep.subr.bf16.mxu0 %v744
    %905 = vmatpush1.bf16.msra.mxu0 %v743
    %906 = vmatprep.subr.bf16.mxu0 %v752
    %907 = vmatpush1.bf16.msra.mxu0 %v751
    %908 = vmatprep.subr.bf16.mxu0 %v760
    %909 = vmatpush1.bf16.msra.mxu0 %v759
    %910 = vmatprep.subr.bf16.mxu0 %v768
    %911 = vmatpush1.bf16.msra.mxu0 %v767
    %912 = vmatprep.subr.bf16.mxu0 %v776
    %913 = vmatpush1.bf16.msra.mxu0 %v775
    %914 = vmatprep.subr.bf16.mxu0 %v784
    %915 = vmatpush1.bf16.msra.mxu0 %v783
    %916 = vmatprep.subr.bf16.mxu0 %v792
    %917 = vmatpush1.bf16.msra.mxu0 %v791
    %918 = vmatprep.subr.bf16.mxu0 0
    %919 = vmatpush1.bf16.msra.mxu0 0
    %920 = vmatprep.subr.bf16.mxu0 0
    %921 = vmatpush1.bf16.msra.mxu0 0
    %922 = vmatprep.subr.bf16.mxu0 0
    %923 = vmatpush1.bf16.msra.mxu0 0
    %924 = vmatprep.subr.bf16.mxu0 0
    %925 = vmatpush1.bf16.msra.mxu0 0
    %926 = vmatprep.subr.bf16.mxu0 0
    %927 = vmatpush1.bf16.msra.mxu0 0
    %928 = vmatprep.subr.bf16.mxu0 0
    %929 = vmatpush1.bf16.msra.mxu0 0
    %930 = vmatprep.subr.bf16.mxu0 0
    %931 = vmatpush1.bf16.msra.mxu0 0
    %932 = vmatprep.subr.bf16.mxu0 0
    %933 = vmatpush1.bf16.msra.mxu0 0
    %934 = vmatprep.mubr.bf16.mxu0 0
    %935 = vmatmul.mubr.bf16.gmra.mrb[0].mxu0 %v434
    %v936 = vpop.f32.mrb[0].mxu0
    %v937 = vadd.f32 %v512, %v936
    %v938 = vpop.f32.mrb[0].mxu0
    %v939 = vadd.f32 %v516, %v938
    %v940 = vpop.f32.mrb[0].mxu0
    %v941 = vpop.f32.mrb[0].mxu0
    %942 = vdwg.mxu0
    %943 = vmatprep.subr.bf16.mxu0 %v738
    %944 = vmatpush1.bf16.msra.mxu0 %v737
    %945 = vmatprep.subr.bf16.mxu0 %v746
    %946 = vmatpush1.bf16.msra.mxu0 %v745
    %947 = vmatprep.subr.bf16.mxu0 %v754
    %948 = vmatpush1.bf16.msra.mxu0 %v753
    %949 = vmatprep.subr.bf16.mxu0 %v762
    %950 = vmatpush1.bf16.msra.mxu0 %v761
    %951 = vmatprep.subr.bf16.mxu0 %v770
    %952 = vmatpush1.bf16.msra.mxu0 %v769
    %953 = vmatprep.subr.bf16.mxu0 %v778
    %954 = vmatpush1.bf16.msra.mxu0 %v777
    %955 = vmatprep.subr.bf16.mxu0 %v786
    %956 = vmatpush1.bf16.msra.mxu0 %v785
    %957 = vmatprep.subr.bf16.mxu0 %v794
    %958 = vmatpush1.bf16.msra.mxu0 %v793
    %959 = vmatprep.subr.bf16.mxu0 0
    %960 = vmatpush1.bf16.msra.mxu0 0
    %961 = vmatprep.subr.bf16.mxu0 0
    %962 = vmatpush1.bf16.msra.mxu0 0
    %963 = vmatprep.subr.bf16.mxu0 0
    %964 = vmatpush1.bf16.msra.mxu0 0
    %965 = vmatprep.subr.bf16.mxu0 0
    %966 = vmatpush1.bf16.msra.mxu0 0
    %967 = vmatprep.subr.bf16.mxu0 0
    %968 = vmatpush1.bf16.msra.mxu0 0
    %969 = vmatprep.subr.bf16.mxu0 0
    %970 = vmatpush1.bf16.msra.mxu0 0
    %971 = vmatprep.subr.bf16.mxu0 0
    %972 = vmatpush1.bf16.msra.mxu0 0
    %973 = vmatprep.subr.bf16.mxu0 0
    %974 = vmatpush1.bf16.msra.mxu0 0
    %975 = vmatprep.mubr.bf16.mxu0 0
    %976 = vmatmul.mubr.bf16.gmra.mrb[0].mxu0 %v434
    %v977 = vpop.f32.mrb[0].mxu0
    %v978 = vadd.f32 %v520, %v977
    %v979 = vpop.f32.mrb[0].mxu0
    %v980 = vadd.f32 %v524, %v979
    %v981 = vpop.f32.mrb[0].mxu0
    %v982 = vpop.f32.mrb[0].mxu0
    %983 = vdwg.mxu0
    %984 = vmatprep.subr.bf16.mxu0 %v740
    %985 = vmatpush1.bf16.msra.mxu0 %v739
    %986 = vmatprep.subr.bf16.mxu0 %v748
    %987 = vmatpush1.bf16.msra.mxu0 %v747
    %988 = vmatprep.subr.bf16.mxu0 %v756
    %989 = vmatpush1.bf16.msra.mxu0 %v755
    %990 = vmatprep.subr.bf16.mxu0 %v764
    %991 = vmatpush1.bf16.msra.mxu0 %v763
    %992 = vmatprep.subr.bf16.mxu0 %v772
    %993 = vmatpush1.bf16.msra.mxu0 %v771
    %994 = vmatprep.subr.bf16.mxu0 %v780
    %995 = vmatpush1.bf16.msra.mxu0 %v779
    %996 = vmatprep.subr.bf16.mxu0 %v788
    %997 = vmatpush1.bf16.msra.mxu0 %v787
    %998 = vmatprep.subr.bf16.mxu0 %v796
    %999 = vmatpush1.bf16.msra.mxu0 %v795
    %1000 = vmatprep.subr.bf16.mxu0 0
    %1001 = vmatpush1.bf16.msra.mxu0 0
    %1002 = vmatprep.subr.bf16.mxu0 0
    %1003 = vmatpush1.bf16.msra.mxu0 0
    %1004 = vmatprep.subr.bf16.mxu0 0
    %1005 = vmatpush1.bf16.msra.mxu0 0
    %1006 = vmatprep.subr.bf16.mxu0 0
    %1007 = vmatpush1.bf16.msra.mxu0 0
    %1008 = vmatprep.subr.bf16.mxu0 0
    %1009 = vmatpush1.bf16.msra.mxu0 0
    %1010 = vmatprep.subr.bf16.mxu0 0
    %1011 = vmatpush1.bf16.msra.mxu0 0
    %1012 = vmatprep.subr.bf16.mxu0 0
    %1013 = vmatpush1.bf16.msra.mxu0 0
    %1014 = vmatprep.subr.bf16.mxu0 0
    %1015 = vmatpush1.bf16.msra.mxu0 0
    %1016 = vmatprep.mubr.bf16.mxu0 0
    %1017 = vmatmul.mubr.bf16.gmra.mrb[0].mxu0 %v434
    %v1018 = vpop.f32.mrb[0].mxu0
    %v1019 = vadd.f32 %v528, %v1018
    %v1020 = vpop.f32.mrb[0].mxu0
    %v1021 = vadd.f32 %v532, %v1020
    %v1022 = vpop.f32.mrb[0].mxu0
    %v1023 = vpop.f32.mrb[0].mxu0
    %1024 = vdwg.mxu0
    %v1025 = vtanh.pop %v896
    %v1026 = vtanh.pop %v898
    %v1027 = vtanh.pop %v937
    %v1028 = vtanh.pop %v939
    %v1029 = vmul.f32 %v1025, 1.442695
    %v1030 = vpow.pop %v1029
    %v1031 = vmul.f32 %v1026, 1.442695
    %v1032 = vpow.pop %v1031
    %v1033 = vmul.f32 %v1027, 1.442695
    %v1034 = vpow.pop %v1033
    %v1035 = vmul.f32 %v1028, 1.442695
    %v1036 = vpow.pop %v1035
    %v1037 = vmul.f32 %v82, %v1030
    %v1038 = vmul.f32 %v83, %v1032
    %v1039 = vmul.f32 %v84, %v1034
    %v1040 = vmul.f32 %v85, %v1036
    %v1041 = vadd.f32 %v1037, %v978
    %v1042 = vadd.f32 %v1038, %v980
    %v1043 = vadd.f32 %v1039, %v1019
    %v1044 = vadd.f32 %v1040, %v1021
    %v1045 = vadd.f32 %v1025, %v1026
    %v1046 = vadd.f32 %v1045, %v1027
    %v1047 = vadd.f32 %v1046, %v1028
    %1048 = vadd.xlane.f32.xlu0 %v1047
    %v1049 = vpop.xlane.xlu0 %1048
    %v1050 = vadd.f32 %v1049, 0.0
    %v1051 = vpack.c.bf16 %v1041, %v1041
    %v1052 = vpack.c.bf16 %v1042, %v1042
    %v1053 = vpack.c.bf16 %v1043, %v1043
    %v1054 = vpack.c.bf16 %v1044, %v1044
    %s1055 = scalar_lea.vmem [#allocation5], 256
    %v1056 = vld [vmem:[%s1055] sm:$0xf]
    %v1057 = vld [vmem:[%s1055 + $0x4] sm:$0xf]
    %v1058 = vld [vmem:[%s1055 + $0x8] sm:$0xf]
    %v1059 = vld [vmem:[%s1055 + $0xc] sm:$0xf]
    %v1060 = vld [vmem:[%s1055 + $0x10] sm:$0xf]
    %v1061 = vld [vmem:[%s1055 + $0x14] sm:$0xf]
    %v1062 = vld [vmem:[%s1055 + $0x18] sm:$0xf]
    %v1063 = vld [vmem:[%s1055 + $0x1c] sm:$0xf]
    %v1064 = vld [vmem:[%s1055 + $0x20] sm:$0xf]
    %v1065 = vld [vmem:[%s1055 + $0x24] sm:$0xf]
    %v1066 = vld [vmem:[%s1055 + $0x28] sm:$0xf]
    %v1067 = vld [vmem:[%s1055 + $0x2c] sm:$0xf]
    %v1068 = vld [vmem:[%s1055 + $0x30] sm:$0xf]
    %v1069 = vld [vmem:[%s1055 + $0x34] sm:$0xf]
    %v1070 = vld [vmem:[%s1055 + $0x38] sm:$0xf]
    %v1071 = vld [vmem:[%s1055 + $0x3c] sm:$0xf]
    %v1072 = vld [vmem:[%s1055 + $0x40] sm:$0xf]
    %v1073 = vld [vmem:[%s1055 + $0x44] sm:$0xf]
    %v1074 = vld [vmem:[%s1055 + $0x48] sm:$0xf]
    %v1075 = vld [vmem:[%s1055 + $0x4c] sm:$0xf]
    %v1076 = vld [vmem:[%s1055 + $0x50] sm:$0xf]
    %v1077 = vld [vmem:[%s1055 + $0x54] sm:$0xf]
    %v1078 = vld [vmem:[%s1055 + $0x58] sm:$0xf]
    %v1079 = vld [vmem:[%s1055 + $0x5c] sm:$0xf]
    %v1080 = vld [vmem:[%s1055 + $0x60] sm:$0xf]
    %v1081 = vld [vmem:[%s1055 + $0x64] sm:$0xf]
    %v1082 = vld [vmem:[%s1055 + $0x68] sm:$0xf]
    %v1083 = vld [vmem:[%s1055 + $0x6c] sm:$0xf]
    %v1084 = vld [vmem:[%s1055 + $0x70] sm:$0xf]
    %v1085 = vld [vmem:[%s1055 + $0x74] sm:$0xf]
    %v1086 = vld [vmem:[%s1055 + $0x78] sm:$0xf]
    %v1087 = vld [vmem:[%s1055 + $0x7c] sm:$0xf]
    %v1088 = vld [vmem:[%s1055 + $0x80] sm:$0xf]
    %v1089 = vld [vmem:[%s1055 + $0x84] sm:$0xf]
    %v1090 = vld [vmem:[%s1055 + $0x88] sm:$0xf]
    %v1091 = vld [vmem:[%s1055 + $0x8c] sm:$0xf]
    %v1092 = vld [vmem:[%s1055 + $0x90] sm:$0xf]
    %v1093 = vld [vmem:[%s1055 + $0x94] sm:$0xf]
    %v1094 = vld [vmem:[%s1055 + $0x98] sm:$0xf]
    %v1095 = vld [vmem:[%s1055 + $0x9c] sm:$0xf]
    %v1096 = vld [vmem:[%s1055 + $0xa0] sm:$0xf]
    %v1097 = vld [vmem:[%s1055 + $0xa4] sm:$0xf]
    %v1098 = vld [vmem:[%s1055 + $0xa8] sm:$0xf]
    %v1099 = vld [vmem:[%s1055 + $0xac] sm:$0xf]
    %v1100 = vld [vmem:[%s1055 + $0xb0] sm:$0xf]
    %v1101 = vld [vmem:[%s1055 + $0xb4] sm:$0xf]
    %v1102 = vld [vmem:[%s1055 + $0xb8] sm:$0xf]
    %v1103 = vld [vmem:[%s1055 + $0xbc] sm:$0xf]
    %v1104 = vld [vmem:[%s1055 + $0xc0] sm:$0xf]
    %v1105 = vld [vmem:[%s1055 + $0xc4] sm:$0xf]
    %v1106 = vld [vmem:[%s1055 + $0xc8] sm:$0xf]
    %v1107 = vld [vmem:[%s1055 + $0xcc] sm:$0xf]
    %v1108 = vld [vmem:[%s1055 + $0xd0] sm:$0xf]
    %v1109 = vld [vmem:[%s1055 + $0xd4] sm:$0xf]
    %v1110 = vld [vmem:[%s1055 + $0xd8] sm:$0xf]
    %v1111 = vld [vmem:[%s1055 + $0xdc] sm:$0xf]
    %v1112 = vld [vmem:[%s1055 + $0xe0] sm:$0xf]
    %v1113 = vld [vmem:[%s1055 + $0xe4] sm:$0xf]
    %v1114 = vld [vmem:[%s1055 + $0xe8] sm:$0xf]
    %v1115 = vld [vmem:[%s1055 + $0xec] sm:$0xf]
    %v1116 = vld [vmem:[%s1055 + $0xf0] sm:$0xf]
    %v1117 = vld [vmem:[%s1055 + $0xf4] sm:$0xf]
    %v1118 = vld [vmem:[%s1055 + $0xf8] sm:$0xf]
    %v1119 = vld [vmem:[%s1055 + $0xfc] sm:$0xf]
    %s1120 = scalar_lea.vmem %s2, 1
    %v1121 = vld [vmem:[%s1120] sm:$0x1]
    %v1123 = vlaneseq
    %v1124 = vshrl.u32 %v1123, 7
    %v1125 = vsub.s32 0, %v1124
    %v1126 = vrot.slane %v1121, %v1125
    %v1192 = vunpack.c.l.b16 %v1056
    %v1193 = vunpack.c.l.b16 %v1057
    %v1194 = vunpack.c.l.b16 %v1058
    %v1195 = vunpack.c.l.b16 %v1059
    %v1196 = vunpack.c.l.b16 %v1060
    %v1197 = vunpack.c.l.b16 %v1061
    %v1198 = vunpack.c.l.b16 %v1062
    %v1199 = vunpack.c.l.b16 %v1063
    %v1200 = vunpack.c.l.b16 %v1064
    %v1201 = vunpack.c.l.b16 %v1065
    %v1202 = vunpack.c.l.b16 %v1066
    %v1203 = vunpack.c.l.b16 %v1067
    %v1204 = vunpack.c.l.b16 %v1068
    %v1205 = vunpack.c.l.b16 %v1069
    %v1206 = vunpack.c.l.b16 %v1070
    %v1207 = vunpack.c.l.b16 %v1071
    %v1208 = vunpack.c.l.b16 %v1072
    %v1209 = vunpack.c.l.b16 %v1073
    %v1210 = vunpack.c.l.b16 %v1074
    %v1211 = vunpack.c.l.b16 %v1075
    %v1212 = vunpack.c.l.b16 %v1076
    %v1213 = vunpack.c.l.b16 %v1077
    %v1214 = vunpack.c.l.b16 %v1078
    %v1215 = vunpack.c.l.b16 %v1079
    %v1216 = vunpack.c.l.b16 %v1080
    %v1217 = vunpack.c.l.b16 %v1081
    %v1218 = vunpack.c.l.b16 %v1082
    %v1219 = vunpack.c.l.b16 %v1083
    %v1220 = vunpack.c.l.b16 %v1084
    %v1221 = vunpack.c.l.b16 %v1085
    %v1222 = vunpack.c.l.b16 %v1086
    %v1223 = vunpack.c.l.b16 %v1087
    %v1224 = vunpack.c.l.b16 %v1088
    %v1225 = vunpack.c.l.b16 %v1089
    %v1226 = vunpack.c.l.b16 %v1090
    %v1227 = vunpack.c.l.b16 %v1091
    %v1228 = vunpack.c.l.b16 %v1092
    %v1229 = vunpack.c.l.b16 %v1093
    %v1230 = vunpack.c.l.b16 %v1094
    %v1231 = vunpack.c.l.b16 %v1095
    %v1232 = vunpack.c.l.b16 %v1096
    %v1233 = vunpack.c.l.b16 %v1097
    %v1234 = vunpack.c.l.b16 %v1098
    %v1235 = vunpack.c.l.b16 %v1099
    %v1236 = vunpack.c.l.b16 %v1100
    %v1237 = vunpack.c.l.b16 %v1101
    %v1238 = vunpack.c.l.b16 %v1102
    %v1239 = vunpack.c.l.b16 %v1103
    %v1240 = vunpack.c.l.b16 %v1104
    %v1241 = vunpack.c.l.b16 %v1105
    %v1242 = vunpack.c.l.b16 %v1106
    %v1243 = vunpack.c.l.b16 %v1107
    %v1244 = vunpack.c.l.b16 %v1108
    %v1245 = vunpack.c.l.b16 %v1109
    %v1246 = vunpack.c.l.b16 %v1110
    %v1247 = vunpack.c.l.b16 %v1111
    %v1248 = vunpack.c.l.b16 %v1112
    %v1249 = vunpack.c.l.b16 %v1113
    %v1250 = vunpack.c.l.b16 %v1114
    %v1251 = vunpack.c.l.b16 %v1115
    %v1252 = vunpack.c.l.b16 %v1116
    %v1253 = vunpack.c.l.b16 %v1117
    %v1254 = vunpack.c.l.b16 %v1118
    %v1255 = vunpack.c.l.b16 %v1119
    %v1256 = vpack.c.b16 %v1193, %v1192
    %v1257 = vpack.c.b16 %v1195, %v1194
    %v1258 = vpack.c.b16 %v1197, %v1196
    %v1259 = vpack.c.b16 %v1199, %v1198
    %v1260 = vpack.c.b16 %v1201, %v1200
    %v1261 = vpack.c.b16 %v1203, %v1202
    %v1262 = vpack.c.b16 %v1205, %v1204
    %v1263 = vpack.c.b16 %v1207, %v1206
    %v1264 = vpack.c.b16 %v1209, %v1208
    %v1265 = vpack.c.b16 %v1211, %v1210
    %v1266 = vpack.c.b16 %v1213, %v1212
    %v1267 = vpack.c.b16 %v1215, %v1214
    %v1268 = vpack.c.b16 %v1217, %v1216
    %v1269 = vpack.c.b16 %v1219, %v1218
    %v1270 = vpack.c.b16 %v1221, %v1220
    %v1271 = vpack.c.b16 %v1223, %v1222
    %v1272 = vpack.c.b16 %v1225, %v1224
    %v1273 = vpack.c.b16 %v1227, %v1226
    %v1274 = vpack.c.b16 %v1229, %v1228
    %v1275 = vpack.c.b16 %v1231, %v1230
    %v1276 = vpack.c.b16 %v1233, %v1232
    %v1277 = vpack.c.b16 %v1235, %v1234
    %v1278 = vpack.c.b16 %v1237, %v1236
    %v1279 = vpack.c.b16 %v1239, %v1238
    %v1280 = vpack.c.b16 %v1241, %v1240
    %v1281 = vpack.c.b16 %v1243, %v1242
    %v1282 = vpack.c.b16 %v1245, %v1244
    %v1283 = vpack.c.b16 %v1247, %v1246
    %v1284 = vpack.c.b16 %v1249, %v1248
    %v1285 = vpack.c.b16 %v1251, %v1250
    %v1286 = vpack.c.b16 %v1253, %v1252
    %v1287 = vpack.c.b16 %v1255, %v1254
    %1320 = vmatprep.subr.bf16.mxu0 0
    %1321 = vmatpush1.bf16.msra.mxu0 %v1256
    %1322 = vmatprep.subr.bf16.mxu0 0
    %1323 = vmatpush1.bf16.msra.mxu0 %v1257
    %1324 = vmatprep.subr.bf16.mxu0 0
    %1325 = vmatpush1.bf16.msra.mxu0 %v1258
    %1326 = vmatprep.subr.bf16.mxu0 0
    %1327 = vmatpush1.bf16.msra.mxu0 %v1259
    %1328 = vmatprep.subr.bf16.mxu0 0
    %1329 = vmatpush1.bf16.msra.mxu0 %v1260
    %1330 = vmatprep.subr.bf16.mxu0 0
    %1331 = vmatpush1.bf16.msra.mxu0 %v1261
    %1332 = vmatprep.subr.bf16.mxu0 0
    %1333 = vmatpush1.bf16.msra.mxu0 %v1262
    %1334 = vmatprep.subr.bf16.mxu0 0
    %1335 = vmatpush1.bf16.msra.mxu0 %v1263
    %1336 = vmatprep.subr.bf16.mxu0 0
    %1337 = vmatpush1.bf16.msra.mxu0 %v1264
    %1338 = vmatprep.subr.bf16.mxu0 0
    %1339 = vmatpush1.bf16.msra.mxu0 %v1265
    %1340 = vmatprep.subr.bf16.mxu0 0
    %1341 = vmatpush1.bf16.msra.mxu0 %v1266
    %1342 = vmatprep.subr.bf16.mxu0 0
    %1343 = vmatpush1.bf16.msra.mxu0 %v1267
    %1344 = vmatprep.subr.bf16.mxu0 0
    %1345 = vmatpush1.bf16.msra.mxu0 %v1268
    %1346 = vmatprep.subr.bf16.mxu0 0
    %1347 = vmatpush1.bf16.msra.mxu0 %v1269
    %1348 = vmatprep.subr.bf16.mxu0 0
    %1349 = vmatpush1.bf16.msra.mxu0 %v1270
    %1350 = vmatprep.subr.bf16.mxu0 0
    %1351 = vmatpush1.bf16.msra.mxu0 %v1271
    %1352 = vmatprep.mubr.bf16.mxu0 %v1052
    %1353 = vmatmul.mubr.bf16.gmra.mrb[0].mxu0 %v1051
    %v1354 = vpop.f32.mrb[0].mxu0
    %v1355 = vadd.f32 %v1126, %v1354
    %v1356 = vpop.f32.mrb[0].mxu0
    %v1357 = vpop.f32.mrb[0].mxu0
    %v1358 = vpop.f32.mrb[0].mxu0
    %1359 = vdwg.mxu0
    %1360 = vmatprep.subr.bf16.mxu0 0
    %1361 = vmatpush1.bf16.msra.mxu0 %v1272
    %1362 = vmatprep.subr.bf16.mxu0 0
    %1363 = vmatpush1.bf16.msra.mxu0 %v1273
    %1364 = vmatprep.subr.bf16.mxu0 0
    %1365 = vmatpush1.bf16.msra.mxu0 %v1274
    %1366 = vmatprep.subr.bf16.mxu0 0
    %1367 = vmatpush1.bf16.msra.mxu0 %v1275
    %1368 = vmatprep.subr.bf16.mxu0 0
    %1369 = vmatpush1.bf16.msra.mxu0 %v1276
    %1370 = vmatprep.subr.bf16.mxu0 0
    %1371 = vmatpush1.bf16.msra.mxu0 %v1277
    %1372 = vmatprep.subr.bf16.mxu0 0
    %1373 = vmatpush1.bf16.msra.mxu0 %v1278
    %1374 = vmatprep.subr.bf16.mxu0 0
    %1375 = vmatpush1.bf16.msra.mxu0 %v1279
    %1376 = vmatprep.subr.bf16.mxu0 0
    %1377 = vmatpush1.bf16.msra.mxu0 %v1280
    %1378 = vmatprep.subr.bf16.mxu0 0
    %1379 = vmatpush1.bf16.msra.mxu0 %v1281
    %1380 = vmatprep.subr.bf16.mxu0 0
    %1381 = vmatpush1.bf16.msra.mxu0 %v1282
    %1382 = vmatprep.subr.bf16.mxu0 0
    %1383 = vmatpush1.bf16.msra.mxu0 %v1283
    %1384 = vmatprep.subr.bf16.mxu0 0
    %1385 = vmatpush1.bf16.msra.mxu0 %v1284
    %1386 = vmatprep.subr.bf16.mxu0 0
    %1387 = vmatpush1.bf16.msra.mxu0 %v1285
    %1388 = vmatprep.subr.bf16.mxu0 0
    %1389 = vmatpush1.bf16.msra.mxu0 %v1286
    %1390 = vmatprep.subr.bf16.mxu0 0
    %1391 = vmatpush1.bf16.msra.mxu0 %v1287
    %1392 = vmatprep.mubr.bf16.mxu0 %v1054
    %1393 = vmatmul.mubr.bf16.gmra.mrb[0].mxu0 %v1053
    %v1394 = vpop.f32.mrb[0].mxu0
    %v1395 = vadd.f32 %v1355, %v1394
    %v1396 = vpop.f32.mrb[0].mxu0
    %v1397 = vpop.f32.mrb[0].mxu0
    %v1398 = vpop.f32.mrb[0].mxu0
    %1399 = vdwg.mxu0
    %v1400 = vtanh.pop %v1395
    %v1401 = vpack.c.bf16 %v1400, %v1400
    %s1402 = scalar_lea.vmem [#allocation7], 512
    %v1403 = vld [vmem:[%s1402] sm:$0xff]
    %v1404 = vld [vmem:[%s1402 + $0x8] sm:$0xff]
    %v1405 = vld [vmem:[%s1402 + $0x10] sm:$0xff]
    %v1406 = vld [vmem:[%s1402 + $0x18] sm:$0xff]
    %v1407 = vld [vmem:[%s1402 + $0x20] sm:$0xff]
    %v1408 = vld [vmem:[%s1402 + $0x28] sm:$0xff]
    %v1409 = vld [vmem:[%s1402 + $0x30] sm:$0xff]
    %v1410 = vld [vmem:[%s1402 + $0x38] sm:$0xff]
    %v1411 = vld [vmem:[%s1402 + $0x40] sm:$0xff]
    %v1412 = vld [vmem:[%s1402 + $0x48] sm:$0xff]
    %v1413 = vld [vmem:[%s1402 + $0x50] sm:$0xff]
    %v1414 = vld [vmem:[%s1402 + $0x58] sm:$0xff]
    %v1415 = vld [vmem:[%s1402 + $0x60] sm:$0xff]
    %v1416 = vld [vmem:[%s1402 + $0x68] sm:$0xff]
    %v1417 = vld [vmem:[%s1402 + $0x70] sm:$0xff]
    %v1418 = vld [vmem:[%s1402 + $0x78] sm:$0xff]
    %v1419 = vld [vmem:[%s1402 + $0x80] sm:$0xff]
    %v1420 = vld [vmem:[%s1402 + $0x88] sm:$0xff]
    %v1421 = vld [vmem:[%s1402 + $0x90] sm:$0xff]
    %v1422 = vld [vmem:[%s1402 + $0x98] sm:$0xff]
    %v1423 = vld [vmem:[%s1402 + $0xa0] sm:$0xff]
    %v1424 = vld [vmem:[%s1402 + $0xa8] sm:$0xff]
    %v1425 = vld [vmem:[%s1402 + $0xb0] sm:$0xff]
    %v1426 = vld [vmem:[%s1402 + $0xb8] sm:$0xff]
    %v1427 = vld [vmem:[%s1402 + $0xc0] sm:$0xff]
    %v1428 = vld [vmem:[%s1402 + $0xc8] sm:$0xff]
    %v1429 = vld [vmem:[%s1402 + $0xd0] sm:$0xff]
    %v1430 = vld [vmem:[%s1402 + $0xd8] sm:$0xff]
    %v1431 = vld [vmem:[%s1402 + $0xe0] sm:$0xff]
    %v1432 = vld [vmem:[%s1402 + $0xe8] sm:$0xff]
    %v1433 = vld [vmem:[%s1402 + $0xf0] sm:$0xff]
    %v1434 = vld [vmem:[%s1402 + $0xf8] sm:$0xff]
    %v1435 = vld [vmem:[%s1402 + $0x100] sm:$0xff]
    %v1436 = vld [vmem:[%s1402 + $0x108] sm:$0xff]
    %v1437 = vld [vmem:[%s1402 + $0x110] sm:$0xff]
    %v1438 = vld [vmem:[%s1402 + $0x118] sm:$0xff]
    %v1439 = vld [vmem:[%s1402 + $0x120] sm:$0xff]
    %v1440 = vld [vmem:[%s1402 + $0x128] sm:$0xff]
    %v1441 = vld [vmem:[%s1402 + $0x130] sm:$0xff]
    %v1442 = vld [vmem:[%s1402 + $0x138] sm:$0xff]
    %v1443 = vld [vmem:[%s1402 + $0x140] sm:$0xff]
    %v1444 = vld [vmem:[%s1402 + $0x148] sm:$0xff]
    %v1445 = vld [vmem:[%s1402 + $0x150] sm:$0xff]
    %v1446 = vld [vmem:[%s1402 + $0x158] sm:$0xff]
    %v1447 = vld [vmem:[%s1402 + $0x160] sm:$0xff]
    %v1448 = vld [vmem:[%s1402 + $0x168] sm:$0xff]
    %v1449 = vld [vmem:[%s1402 + $0x170] sm:$0xff]
    %v1450 = vld [vmem:[%s1402 + $0x178] sm:$0xff]
    %v1451 = vld [vmem:[%s1402 + $0x180] sm:$0xff]
    %v1452 = vld [vmem:[%s1402 + $0x188] sm:$0xff]
    %v1453 = vld [vmem:[%s1402 + $0x190] sm:$0xff]
    %v1454 = vld [vmem:[%s1402 + $0x198] sm:$0xff]
    %v1455 = vld [vmem:[%s1402 + $0x1a0] sm:$0xff]
    %v1456 = vld [vmem:[%s1402 + $0x1a8] sm:$0xff]
    %v1457 = vld [vmem:[%s1402 + $0x1b0] sm:$0xff]
    %v1458 = vld [vmem:[%s1402 + $0x1b8] sm:$0xff]
    %v1459 = vld [vmem:[%s1402 + $0x1c0] sm:$0xff]
    %v1460 = vld [vmem:[%s1402 + $0x1c8] sm:$0xff]
    %v1461 = vld [vmem:[%s1402 + $0x1d0] sm:$0xff]
    %v1462 = vld [vmem:[%s1402 + $0x1d8] sm:$0xff]
    %v1463 = vld [vmem:[%s1402 + $0x1e0] sm:$0xff]
    %v1464 = vld [vmem:[%s1402 + $0x1e8] sm:$0xff]
    %v1465 = vld [vmem:[%s1402 + $0x1f0] sm:$0xff]
    %v1466 = vld [vmem:[%s1402 + $0x1f8] sm:$0xff]
    %s1467 = scalar_lea.vmem [#allocation8], 8
    %v1468 = vld [vmem:[%s1467] sm:$0xff]
    %v1470 = vlaneseq
    %v1471 = vshrl.u32 %v1470, 7
    %v1472 = vsub.s32 0, %v1471
    %v1473 = vrot.slane %v1468, %v1472
    %v1474 = vlaneseq
    %v1475 = vshrl.u32 %v1474, 7
    %v1476 = vsub.s32 1, %v1475
    %v1477 = vrot.slane %v1468, %v1476
    %v1478 = vlaneseq
    %v1479 = vshrl.u32 %v1478, 7
    %v1480 = vsub.s32 2, %v1479
    %v1481 = vrot.slane %v1468, %v1480
    %v1482 = vlaneseq
    %v1483 = vshrl.u32 %v1482, 7
    %v1484 = vsub.s32 3, %v1483
    %v1485 = vrot.slane %v1468, %v1484
    %v1486 = vlaneseq
    %v1487 = vshrl.u32 %v1486, 7
    %v1488 = vsub.s32 4, %v1487
    %v1489 = vrot.slane %v1468, %v1488
    %v1490 = vlaneseq
    %v1491 = vshrl.u32 %v1490, 7
    %v1492 = vsub.s32 5, %v1491
    %v1493 = vrot.slane %v1468, %v1492
    %v1494 = vlaneseq
    %v1495 = vshrl.u32 %v1494, 7
    %v1496 = vsub.s32 6, %v1495
    %v1497 = vrot.slane %v1468, %v1496
    %v1498 = vlaneseq
    %v1499 = vshrl.u32 %v1498, 7
    %v1500 = vsub.s32 7, %v1499
    %v1501 = vrot.slane %v1468, %v1500
    %v1574 = vunpack.c.l.b16 %v1403
    %v1575 = vunpack.c.h.b16 %v1403
    %v1576 = vunpack.c.l.b16 %v1404
    %v1577 = vunpack.c.h.b16 %v1404
    %v1578 = vunpack.c.l.b16 %v1405
    %v1579 = vunpack.c.h.b16 %v1405
    %v1580 = vunpack.c.l.b16 %v1406
    %v1581 = vunpack.c.h.b16 %v1406
    %v1582 = vunpack.c.l.b16 %v1407
    %v1583 = vunpack.c.h.b16 %v1407
    %v1584 = vunpack.c.l.b16 %v1408
    %v1585 = vunpack.c.h.b16 %v1408
    %v1586 = vunpack.c.l.b16 %v1409
    %v1587 = vunpack.c.h.b16 %v1409
    %v1588 = vunpack.c.l.b16 %v1410
    %v1589 = vunpack.c.h.b16 %v1410
    %v1590 = vunpack.c.l.b16 %v1411
    %v1591 = vunpack.c.h.b16 %v1411
    %v1592 = vunpack.c.l.b16 %v1412
    %v1593 = vunpack.c.h.b16 %v1412
    %v1594 = vunpack.c.l.b16 %v1413
    %v1595 = vunpack.c.h.b16 %v1413
    %v1596 = vunpack.c.l.b16 %v1414
    %v1597 = vunpack.c.h.b16 %v1414
    %v1598 = vunpack.c.l.b16 %v1415
    %v1599 = vunpack.c.h.b16 %v1415
    %v1600 = vunpack.c.l.b16 %v1416
    %v1601 = vunpack.c.h.b16 %v1416
    %v1602 = vunpack.c.l.b16 %v1417
    %v1603 = vunpack.c.h.b16 %v1417
    %v1604 = vunpack.c.l.b16 %v1418
    %v1605 = vunpack.c.h.b16 %v1418
    %v1606 = vunpack.c.l.b16 %v1419
    %v1607 = vunpack.c.h.b16 %v1419
    %v1608 = vunpack.c.l.b16 %v1420
    %v1609 = vunpack.c.h.b16 %v1420
    %v1610 = vunpack.c.l.b16 %v1421
    %v1611 = vunpack.c.h.b16 %v1421
    %v1612 = vunpack.c.l.b16 %v1422
    %v1613 = vunpack.c.h.b16 %v1422
    %v1614 = vunpack.c.l.b16 %v1423
    %v1615 = vunpack.c.h.b16 %v1423
    %v1616 = vunpack.c.l.b16 %v1424
    %v1617 = vunpack.c.h.b16 %v1424
    %v1618 = vunpack.c.l.b16 %v1425
    %v1619 = vunpack.c.h.b16 %v1425
    %v1620 = vunpack.c.l.b16 %v1426
    %v1621 = vunpack.c.h.b16 %v1426
    %v1622 = vunpack.c.l.b16 %v1427
    %v1623 = vunpack.c.h.b16 %v1427
    %v1624 = vunpack.c.l.b16 %v1428
    %v1625 = vunpack.c.h.b16 %v1428
    %v1626 = vunpack.c.l.b16 %v1429
    %v1627 = vunpack.c.h.b16 %v1429
    %v1628 = vunpack.c.l.b16 %v1430
    %v1629 = vunpack.c.h.b16 %v1430
    %v1630 = vunpack.c.l.b16 %v1431
    %v1631 = vunpack.c.h.b16 %v1431
    %v1632 = vunpack.c.l.b16 %v1432
    %v1633 = vunpack.c.h.b16 %v1432
    %v1634 = vunpack.c.l.b16 %v1433
    %v1635 = vunpack.c.h.b16 %v1433
    %v1636 = vunpack.c.l.b16 %v1434
    %v1637 = vunpack.c.h.b16 %v1434
    %v1638 = vunpack.c.l.b16 %v1435
    %v1639 = vunpack.c.h.b16 %v1435
    %v1640 = vunpack.c.l.b16 %v1436
    %v1641 = vunpack.c.h.b16 %v1436
    %v1642 = vunpack.c.l.b16 %v1437
    %v1643 = vunpack.c.h.b16 %v1437
    %v1644 = vunpack.c.l.b16 %v1438
    %v1645 = vunpack.c.h.b16 %v1438
    %v1646 = vunpack.c.l.b16 %v1439
    %v1647 = vunpack.c.h.b16 %v1439
    %v1648 = vunpack.c.l.b16 %v1440
    %v1649 = vunpack.c.h.b16 %v1440
    %v1650 = vunpack.c.l.b16 %v1441
    %v1651 = vunpack.c.h.b16 %v1441
    %v1652 = vunpack.c.l.b16 %v1442
    %v1653 = vunpack.c.h.b16 %v1442
    %v1654 = vunpack.c.l.b16 %v1443
    %v1655 = vunpack.c.h.b16 %v1443
    %v1656 = vunpack.c.l.b16 %v1444
    %v1657 = vunpack.c.h.b16 %v1444
    %v1658 = vunpack.c.l.b16 %v1445
    %v1659 = vunpack.c.h.b16 %v1445
    %v1660 = vunpack.c.l.b16 %v1446
    %v1661 = vunpack.c.h.b16 %v1446
    %v1662 = vunpack.c.l.b16 %v1447
    %v1663 = vunpack.c.h.b16 %v1447
    %v1664 = vunpack.c.l.b16 %v1448
    %v1665 = vunpack.c.h.b16 %v1448
    %v1666 = vunpack.c.l.b16 %v1449
    %v1667 = vunpack.c.h.b16 %v1449
    %v1668 = vunpack.c.l.b16 %v1450
    %v1669 = vunpack.c.h.b16 %v1450
    %v1670 = vunpack.c.l.b16 %v1451
    %v1671 = vunpack.c.h.b16 %v1451
    %v1672 = vunpack.c.l.b16 %v1452
    %v1673 = vunpack.c.h.b16 %v1452
    %v1674 = vunpack.c.l.b16 %v1453
    %v1675 = vunpack.c.h.b16 %v1453
    %v1676 = vunpack.c.l.b16 %v1454
    %v1677 = vunpack.c.h.b16 %v1454
    %v1678 = vunpack.c.l.b16 %v1455
    %v1679 = vunpack.c.h.b16 %v1455
    %v1680 = vunpack.c.l.b16 %v1456
    %v1681 = vunpack.c.h.b16 %v1456
    %v1682 = vunpack.c.l.b16 %v1457
    %v1683 = vunpack.c.h.b16 %v1457
    %v1684 = vunpack.c.l.b16 %v1458
    %v1685 = vunpack.c.h.b16 %v1458
    %v1686 = vunpack.c.l.b16 %v1459
    %v1687 = vunpack.c.h.b16 %v1459
    %v1688 = vunpack.c.l.b16 %v1460
    %v1689 = vunpack.c.h.b16 %v1460
    %v1690 = vunpack.c.l.b16 %v1461
    %v1691 = vunpack.c.h.b16 %v1461
    %v1692 = vunpack.c.l.b16 %v1462
    %v1693 = vunpack.c.h.b16 %v1462
    %v1694 = vunpack.c.l.b16 %v1463
    %v1695 = vunpack.c.h.b16 %v1463
    %v1696 = vunpack.c.l.b16 %v1464
    %v1697 = vunpack.c.h.b16 %v1464
    %v1698 = vunpack.c.l.b16 %v1465
    %v1699 = vunpack.c.h.b16 %v1465
    %v1700 = vunpack.c.l.b16 %v1466
    %v1701 = vunpack.c.h.b16 %v1466
    %v1702 = vpack.c.b16 %v1582, %v1574
    %v1703 = vpack.c.b16 %v1583, %v1575
    %v1704 = vpack.c.b16 %v1584, %v1576
    %v1705 = vpack.c.b16 %v1585, %v1577
    %v1706 = vpack.c.b16 %v1586, %v1578
    %v1707 = vpack.c.b16 %v1587, %v1579
    %v1708 = vpack.c.b16 %v1588, %v1580
    %v1709 = vpack.c.b16 %v1589, %v1581
    %v1710 = vpack.c.b16 %v1598, %v1590
    %v1711 = vpack.c.b16 %v1599, %v1591
    %v1712 = vpack.c.b16 %v1600, %v1592
    %v1713 = vpack.c.b16 %v1601, %v1593
    %v1714 = vpack.c.b16 %v1602, %v1594
    %v1715 = vpack.c.b16 %v1603, %v1595
    %v1716 = vpack.c.b16 %v1604, %v1596
    %v1717 = vpack.c.b16 %v1605, %v1597
    %v1718 = vpack.c.b16 %v1614, %v1606
    %v1719 = vpack.c.b16 %v1615, %v1607
    %v1720 = vpack.c.b16 %v1616, %v1608
    %v1721 = vpack.c.b16 %v1617, %v1609
    %v1722 = vpack.c.b16 %v1618, %v1610
    %v1723 = vpack.c.b16 %v1619, %v1611
    %v1724 = vpack.c.b16 %v1620, %v1612
    %v1725 = vpack.c.b16 %v1621, %v1613
    %v1726 = vpack.c.b16 %v1630, %v1622
    %v1727 = vpack.c.b16 %v1631, %v1623
    %v1728 = vpack.c.b16 %v1632, %v1624
    %v1729 = vpack.c.b16 %v1633, %v1625
    %v1730 = vpack.c.b16 %v1634, %v1626
    %v1731 = vpack.c.b16 %v1635, %v1627
    %v1732 = vpack.c.b16 %v1636, %v1628
    %v1733 = vpack.c.b16 %v1637, %v1629
    %v1734 = vpack.c.b16 %v1646, %v1638
    %v1735 = vpack.c.b16 %v1647, %v1639
    %v1736 = vpack.c.b16 %v1648, %v1640
    %v1737 = vpack.c.b16 %v1649, %v1641
    %v1738 = vpack.c.b16 %v1650, %v1642
    %v1739 = vpack.c.b16 %v1651, %v1643
    %v1740 = vpack.c.b16 %v1652, %v1644
    %v1741 = vpack.c.b16 %v1653, %v1645
    %v1742 = vpack.c.b16 %v1662, %v1654
    %v1743 = vpack.c.b16 %v1663, %v1655
    %v1744 = vpack.c.b16 %v1664, %v1656
    %v1745 = vpack.c.b16 %v1665, %v1657
    %v1746 = vpack.c.b16 %v1666, %v1658
    %v1747 = vpack.c.b16 %v1667, %v1659
    %v1748 = vpack.c.b16 %v1668, %v1660
    %v1749 = vpack.c.b16 %v1669, %v1661
    %v1750 = vpack.c.b16 %v1678, %v1670
    %v1751 = vpack.c.b16 %v1679, %v1671
    %v1752 = vpack.c.b16 %v1680, %v1672
    %v1753 = vpack.c.b16 %v1681, %v1673
    %v1754 = vpack.c.b16 %v1682, %v1674
    %v1755 = vpack.c.b16 %v1683, %v1675
    %v1756 = vpack.c.b16 %v1684, %v1676
    %v1757 = vpack.c.b16 %v1685, %v1677
    %v1758 = vpack.c.b16 %v1694, %v1686
    %v1759 = vpack.c.b16 %v1695, %v1687
    %v1760 = vpack.c.b16 %v1696, %v1688
    %v1761 = vpack.c.b16 %v1697, %v1689
    %v1762 = vpack.c.b16 %v1698, %v1690
    %v1763 = vpack.c.b16 %v1699, %v1691
    %v1764 = vpack.c.b16 %v1700, %v1692
    %v1765 = vpack.c.b16 %v1701, %v1693
    %1830 = vmatprep.subr.bf16.mxu0 %v1703
    %1831 = vmatpush1.bf16.msra.mxu0 %v1702
    %1832 = vmatprep.subr.bf16.mxu0 %v1711
    %1833 = vmatpush1.bf16.msra.mxu0 %v1710
    %1834 = vmatprep.subr.bf16.mxu0 %v1719
    %1835 = vmatpush1.bf16.msra.mxu0 %v1718
    %1836 = vmatprep.subr.bf16.mxu0 %v1727
    %1837 = vmatpush1.bf16.msra.mxu0 %v1726
    %1838 = vmatprep.subr.bf16.mxu0 %v1735
    %1839 = vmatpush1.bf16.msra.mxu0 %v1734
    %1840 = vmatprep.subr.bf16.mxu0 %v1743
    %1841 = vmatpush1.bf16.msra.mxu0 %v1742
    %1842 = vmatprep.subr.bf16.mxu0 %v1751
    %1843 = vmatpush1.bf16.msra.mxu0 %v1750
    %1844 = vmatprep.subr.bf16.mxu0 %v1759
    %1845 = vmatpush1.bf16.msra.mxu0 %v1758
    %1846 = vmatprep.subr.bf16.mxu0 0
    %1847 = vmatpush1.bf16.msra.mxu0 0
    %1848 = vmatprep.subr.bf16.mxu0 0
    %1849 = vmatpush1.bf16.msra.mxu0 0
    %1850 = vmatprep.subr.bf16.mxu0 0
    %1851 = vmatpush1.bf16.msra.mxu0 0
    %1852 = vmatprep.subr.bf16.mxu0 0
    %1853 = vmatpush1.bf16.msra.mxu0 0
    %1854 = vmatprep.subr.bf16.mxu0 0
    %1855 = vmatpush1.bf16.msra.mxu0 0
    %1856 = vmatprep.subr.bf16.mxu0 0
    %1857 = vmatpush1.bf16.msra.mxu0 0
    %1858 = vmatprep.subr.bf16.mxu0 0
    %1859 = vmatpush1.bf16.msra.mxu0 0
    %1860 = vmatprep.subr.bf16.mxu0 0
    %1861 = vmatpush1.bf16.msra.mxu0 0
    %1862 = vmatprep.mubr.bf16.mxu0 0
    %1863 = vmatmul.mubr.bf16.gmra.mrb[0].mxu0 %v1401
    %v1864 = vpop.f32.mrb[0].mxu0
    %v1865 = vadd.f32 %v1473, %v1864
    %v1866 = vpop.f32.mrb[0].mxu0
    %v1867 = vadd.f32 %v1477, %v1866
    %v1868 = vpop.f32.mrb[0].mxu0
    %v1869 = vpop.f32.mrb[0].mxu0
    %1870 = vdwg.mxu0
    %1871 = vmatprep.subr.bf16.mxu0 %v1705
    %1872 = vmatpush1.bf16.msra.mxu0 %v1704
    %1873 = vmatprep.subr.bf16.mxu0 %v1713
    %1874 = vmatpush1.bf16.msra.mxu0 %v1712
    %1875 = vmatprep.subr.bf16.mxu0 %v1721
    %1876 = vmatpush1.bf16.msra.mxu0 %v1720
    %1877 = vmatprep.subr.bf16.mxu0 %v1729
    %1878 = vmatpush1.bf16.msra.mxu0 %v1728
    %1879 = vmatprep.subr.bf16.mxu0 %v1737
    %1880 = vmatpush1.bf16.msra.mxu0 %v1736
    %1881 = vmatprep.subr.bf16.mxu0 %v1745
    %1882 = vmatpush1.bf16.msra.mxu0 %v1744
    %1883 = vmatprep.subr.bf16.mxu0 %v1753
    %1884 = vmatpush1.bf16.msra.mxu0 %v1752
    %1885 = vmatprep.subr.bf16.mxu0 %v1761
    %1886 = vmatpush1.bf16.msra.mxu0 %v1760
    %1887 = vmatprep.subr.bf16.mxu0 0
    %1888 = vmatpush1.bf16.msra.mxu0 0
    %1889 = vmatprep.subr.bf16.mxu0 0
    %1890 = vmatpush1.bf16.msra.mxu0 0
    %1891 = vmatprep.subr.bf16.mxu0 0
    %1892 = vmatpush1.bf16.msra.mxu0 0
    %1893 = vmatprep.subr.bf16.mxu0 0
    %1894 = vmatpush1.bf16.msra.mxu0 0
    %1895 = vmatprep.subr.bf16.mxu0 0
    %1896 = vmatpush1.bf16.msra.mxu0 0
    %1897 = vmatprep.subr.bf16.mxu0 0
    %1898 = vmatpush1.bf16.msra.mxu0 0
    %1899 = vmatprep.subr.bf16.mxu0 0
    %1900 = vmatpush1.bf16.msra.mxu0 0
    %1901 = vmatprep.subr.bf16.mxu0 0
    %1902 = vmatpush1.bf16.msra.mxu0 0
    %1903 = vmatprep.mubr.bf16.mxu0 0
    %1904 = vmatmul.mubr.bf16.gmra.mrb[0].mxu0 %v1401
    %v1905 = vpop.f32.mrb[0].mxu0
    %v1906 = vadd.f32 %v1481, %v1905
    %v1907 = vpop.f32.mrb[0].mxu0
    %v1908 = vadd.f32 %v1485, %v1907
    %v1909 = vpop.f32.mrb[0].mxu0
    %v1910 = vpop.f32.mrb[0].mxu0
    %1911 = vdwg.mxu0
    %1912 = vmatprep.subr.bf16.mxu0 %v1707
    %1913 = vmatpush1.bf16.msra.mxu0 %v1706
    %1914 = vmatprep.subr.bf16.mxu0 %v1715
    %1915 = vmatpush1.bf16.msra.mxu0 %v1714
    %1916 = vmatprep.subr.bf16.mxu0 %v1723
    %1917 = vmatpush1.bf16.msra.mxu0 %v1722
    %1918 = vmatprep.subr.bf16.mxu0 %v1731
    %1919 = vmatpush1.bf16.msra.mxu0 %v1730
    %1920 = vmatprep.subr.bf16.mxu0 %v1739
    %1921 = vmatpush1.bf16.msra.mxu0 %v1738
    %1922 = vmatprep.subr.bf16.mxu0 %v1747
    %1923 = vmatpush1.bf16.msra.mxu0 %v1746
    %1924 = vmatprep.subr.bf16.mxu0 %v1755
    %1925 = vmatpush1.bf16.msra.mxu0 %v1754
    %1926 = vmatprep.subr.bf16.mxu0 %v1763
    %1927 = vmatpush1.bf16.msra.mxu0 %v1762
    %1928 = vmatprep.subr.bf16.mxu0 0
    %1929 = vmatpush1.bf16.msra.mxu0 0
    %1930 = vmatprep.subr.bf16.mxu0 0
    %1931 = vmatpush1.bf16.msra.mxu0 0
    %1932 = vmatprep.subr.bf16.mxu0 0
    %1933 = vmatpush1.bf16.msra.mxu0 0
    %1934 = vmatprep.subr.bf16.mxu0 0
    %1935 = vmatpush1.bf16.msra.mxu0 0
    %1936 = vmatprep.subr.bf16.mxu0 0
    %1937 = vmatpush1.bf16.msra.mxu0 0
    %1938 = vmatprep.subr.bf16.mxu0 0
    %1939 = vmatpush1.bf16.msra.mxu0 0
    %1940 = vmatprep.subr.bf16.mxu0 0
    %1941 = vmatpush1.bf16.msra.mxu0 0
    %1942 = vmatprep.subr.bf16.mxu0 0
    %1943 = vmatpush1.bf16.msra.mxu0 0
    %1944 = vmatprep.mubr.bf16.mxu0 0
    %1945 = vmatmul.mubr.bf16.gmra.mrb[0].mxu0 %v1401
    %v1946 = vpop.f32.mrb[0].mxu0
    %v1947 = vadd.f32 %v1489, %v1946
    %v1948 = vpop.f32.mrb[0].mxu0
    %v1949 = vadd.f32 %v1493, %v1948
    %v1950 = vpop.f32.mrb[0].mxu0
    %v1951 = vpop.f32.mrb[0].mxu0
    %1952 = vdwg.mxu0
    %1953 = vmatprep.subr.bf16.mxu0 %v1709
    %1954 = vmatpush1.bf16.msra.mxu0 %v1708
    %1955 = vmatprep.subr.bf16.mxu0 %v1717
    %1956 = vmatpush1.bf16.msra.mxu0 %v1716
    %1957 = vmatprep.subr.bf16.mxu0 %v1725
    %1958 = vmatpush1.bf16.msra.mxu0 %v1724
    %1959 = vmatprep.subr.bf16.mxu0 %v1733
    %1960 = vmatpush1.bf16.msra.mxu0 %v1732
    %1961 = vmatprep.subr.bf16.mxu0 %v1741
    %1962 = vmatpush1.bf16.msra.mxu0 %v1740
    %1963 = vmatprep.subr.bf16.mxu0 %v1749
    %1964 = vmatpush1.bf16.msra.mxu0 %v1748
    %1965 = vmatprep.subr.bf16.mxu0 %v1757
    %1966 = vmatpush1.bf16.msra.mxu0 %v1756
    %1967 = vmatprep.subr.bf16.mxu0 %v1765
    %1968 = vmatpush1.bf16.msra.mxu0 %v1764
    %1969 = vmatprep.subr.bf16.mxu0 0
    %1970 = vmatpush1.bf16.msra.mxu0 0
    %1971 = vmatprep.subr.bf16.mxu0 0
    %1972 = vmatpush1.bf16.msra.mxu0 0
    %1973 = vmatprep.subr.bf16.mxu0 0
    %1974 = vmatpush1.bf16.msra.mxu0 0
    %1975 = vmatprep.subr.bf16.mxu0 0
    %1976 = vmatpush1.bf16.msra.mxu0 0
    %1977 = vmatprep.subr.bf16.mxu0 0
    %1978 = vmatpush1.bf16.msra.mxu0 0
    %1979 = vmatprep.subr.bf16.mxu0 0
    %1980 = vmatpush1.bf16.msra.mxu0 0
    %1981 = vmatprep.subr.bf16.mxu0 0
    %1982 = vmatpush1.bf16.msra.mxu0 0
    %1983 = vmatprep.subr.bf16.mxu0 0
    %1984 = vmatpush1.bf16.msra.mxu0 0
    %1985 = vmatprep.mubr.bf16.mxu0 0
    %1986 = vmatmul.mubr.bf16.gmra.mrb[0].mxu0 %v1401
    %v1987 = vpop.f32.mrb[0].mxu0
    %v1988 = vadd.f32 %v1497, %v1987
    %v1989 = vpop.f32.mrb[0].mxu0
    %v1990 = vadd.f32 %v1501, %v1989
    %v1991 = vpop.f32.mrb[0].mxu0
    %v1992 = vpop.f32.mrb[0].mxu0
    %1993 = vdwg.mxu0
    %v1994 = vtanh.pop %v1865
    %v1995 = vtanh.pop %v1867
    %v1996 = vtanh.pop %v1906
    %v1997 = vtanh.pop %v1908
    %v1998 = vmul.f32 %v1994, 1.442695
    %v1999 = vpow.pop %v1998
    %v2000 = vmul.f32 %v1995, 1.442695
    %v2001 = vpow.pop %v2000
    %v2002 = vmul.f32 %v1996, 1.442695
    %v2003 = vpow.pop %v2002
    %v2004 = vmul.f32 %v1997, 1.442695
    %v2005 = vpow.pop %v2004
    %v2006 = vmul.f32 %v78, %v1999
    %v2007 = vmul.f32 %v79, %v2001
    %v2008 = vmul.f32 %v80, %v2003
    %v2009 = vmul.f32 %v81, %v2005
    %v2010 = vadd.f32 %v2006, %v1947
    %v2011 = vadd.f32 %v2007, %v1949
    %v2012 = vadd.f32 %v2008, %v1988
    %v2013 = vadd.f32 %v2009, %v1990
    %v2014 = vadd.f32 %v1994, %v1995
    %v2015 = vadd.f32 %v2014, %v1996
    %v2016 = vadd.f32 %v2015, %v1997
    %2017 = vadd.xlane.f32.xlu0 %v2016
    %v2018 = vpop.xlane.xlu0 %2017
    %v2019 = vadd.f32 %v1050, %v2018
    %v2020 = vpack.c.bf16 %v2010, %v2010
    %v2021 = vpack.c.bf16 %v2011, %v2011
    %v2022 = vpack.c.bf16 %v2012, %v2012
    %v2023 = vpack.c.bf16 %v2013, %v2013
    %s2024 = scalar_lea.vmem [#allocation5], 512
    %v2025 = vld [vmem:[%s2024] sm:$0xf]
    %v2026 = vld [vmem:[%s2024 + $0x4] sm:$0xf]
    %v2027 = vld [vmem:[%s2024 + $0x8] sm:$0xf]
    %v2028 = vld [vmem:[%s2024 + $0xc] sm:$0xf]
    %v2029 = vld [vmem:[%s2024 + $0x10] sm:$0xf]
    %v2030 = vld [vmem:[%s2024 + $0x14] sm:$0xf]
    %v2031 = vld [vmem:[%s2024 + $0x18] sm:$0xf]
    %v2032 = vld [vmem:[%s2024 + $0x1c] sm:$0xf]
    %v2033 = vld [vmem:[%s2024 + $0x20] sm:$0xf]
    %v2034 = vld [vmem:[%s2024 + $0x24] sm:$0xf]
    %v2035 = vld [vmem:[%s2024 + $0x28] sm:$0xf]
    %v2036 = vld [vmem:[%s2024 + $0x2c] sm:$0xf]
    %v2037 = vld [vmem:[%s2024 + $0x30] sm:$0xf]
    %v2038 = vld [vmem:[%s2024 + $0x34] sm:$0xf]
    %v2039 = vld [vmem:[%s2024 + $0x38] sm:$0xf]
    %v2040 = vld [vmem:[%s2024 + $0x3c] sm:$0xf]
    %v2041 = vld [vmem:[%s2024 + $0x40] sm:$0xf]
    %v2042 = vld [vmem:[%s2024 + $0x44] sm:$0xf]
    %v2043 = vld [vmem:[%s2024 + $0x48] sm:$0xf]
    %v2044 = vld [vmem:[%s2024 + $0x4c] sm:$0xf]
    %v2045 = vld [vmem:[%s2024 + $0x50] sm:$0xf]
    %v2046 = vld [vmem:[%s2024 + $0x54] sm:$0xf]
    %v2047 = vld [vmem:[%s2024 + $0x58] sm:$0xf]
    %v2048 = vld [vmem:[%s2024 + $0x5c] sm:$0xf]
    %v2049 = vld [vmem:[%s2024 + $0x60] sm:$0xf]
    %v2050 = vld [vmem:[%s2024 + $0x64] sm:$0xf]
    %v2051 = vld [vmem:[%s2024 + $0x68] sm:$0xf]
    %v2052 = vld [vmem:[%s2024 + $0x6c] sm:$0xf]
    %v2053 = vld [vmem:[%s2024 + $0x70] sm:$0xf]
    %v2054 = vld [vmem:[%s2024 + $0x74] sm:$0xf]
    %v2055 = vld [vmem:[%s2024 + $0x78] sm:$0xf]
    %v2056 = vld [vmem:[%s2024 + $0x7c] sm:$0xf]
    %v2057 = vld [vmem:[%s2024 + $0x80] sm:$0xf]
    %v2058 = vld [vmem:[%s2024 + $0x84] sm:$0xf]
    %v2059 = vld [vmem:[%s2024 + $0x88] sm:$0xf]
    %v2060 = vld [vmem:[%s2024 + $0x8c] sm:$0xf]
    %v2061 = vld [vmem:[%s2024 + $0x90] sm:$0xf]
    %v2062 = vld [vmem:[%s2024 + $0x94] sm:$0xf]
    %v2063 = vld [vmem:[%s2024 + $0x98] sm:$0xf]
    %v2064 = vld [vmem:[%s2024 + $0x9c] sm:$0xf]
    %v2065 = vld [vmem:[%s2024 + $0xa0] sm:$0xf]
    %v2066 = vld [vmem:[%s2024 + $0xa4] sm:$0xf]
    %v2067 = vld [vmem:[%s2024 + $0xa8] sm:$0xf]
    %v2068 = vld [vmem:[%s2024 + $0xac] sm:$0xf]
    %v2069 = vld [vmem:[%s2024 + $0xb0] sm:$0xf]
    %v2070 = vld [vmem:[%s2024 + $0xb4] sm:$0xf]
    %v2071 = vld [vmem:[%s2024 + $0xb8] sm:$0xf]
    %v2072 = vld [vmem:[%s2024 + $0xbc] sm:$0xf]
    %v2073 = vld [vmem:[%s2024 + $0xc0] sm:$0xf]
    %v2074 = vld [vmem:[%s2024 + $0xc4] sm:$0xf]
    %v2075 = vld [vmem:[%s2024 + $0xc8] sm:$0xf]
    %v2076 = vld [vmem:[%s2024 + $0xcc] sm:$0xf]
    %v2077 = vld [vmem:[%s2024 + $0xd0] sm:$0xf]
    %v2078 = vld [vmem:[%s2024 + $0xd4] sm:$0xf]
    %v2079 = vld [vmem:[%s2024 + $0xd8] sm:$0xf]
    %v2080 = vld [vmem:[%s2024 + $0xdc] sm:$0xf]
    %v2081 = vld [vmem:[%s2024 + $0xe0] sm:$0xf]
    %v2082 = vld [vmem:[%s2024 + $0xe4] sm:$0xf]
    %v2083 = vld [vmem:[%s2024 + $0xe8] sm:$0xf]
    %v2084 = vld [vmem:[%s2024 + $0xec] sm:$0xf]
    %v2085 = vld [vmem:[%s2024 + $0xf0] sm:$0xf]
    %v2086 = vld [vmem:[%s2024 + $0xf4] sm:$0xf]
    %v2087 = vld [vmem:[%s2024 + $0xf8] sm:$0xf]
    %v2088 = vld [vmem:[%s2024 + $0xfc] sm:$0xf]
    %s2089 = scalar_lea.vmem %s2, 2
    %v2090 = vld [vmem:[%s2089] sm:$0x1]
    %v2092 = vlaneseq
    %v2093 = vshrl.u32 %v2092, 7
    %v2094 = vsub.s32 0, %v2093
    %v2095 = vrot.slane %v2090, %v2094
    %v2161 = vunpack.c.l.b16 %v2025
    %v2162 = vunpack.c.l.b16 %v2026
    %v2163 = vunpack.c.l.b16 %v2027
    %v2164 = vunpack.c.l.b16 %v2028
    %v2165 = vunpack.c.l.b16 %v2029
    %v2166 = vunpack.c.l.b16 %v2030
    %v2167 = vunpack.c.l.b16 %v2031
    %v2168 = vunpack.c.l.b16 %v2032
    %v2169 = vunpack.c.l.b16 %v2033
    %v2170 = vunpack.c.l.b16 %v2034
    %v2171 = vunpack.c.l.b16 %v2035
    %v2172 = vunpack.c.l.b16 %v2036
    %v2173 = vunpack.c.l.b16 %v2037
    %v2174 = vunpack.c.l.b16 %v2038
    %v2175 = vunpack.c.l.b16 %v2039
    %v2176 = vunpack.c.l.b16 %v2040
    %v2177 = vunpack.c.l.b16 %v2041
    %v2178 = vunpack.c.l.b16 %v2042
    %v2179 = vunpack.c.l.b16 %v2043
    %v2180 = vunpack.c.l.b16 %v2044
    %v2181 = vunpack.c.l.b16 %v2045
    %v2182 = vunpack.c.l.b16 %v2046
    %v2183 = vunpack.c.l.b16 %v2047
    %v2184 = vunpack.c.l.b16 %v2048
    %v2185 = vunpack.c.l.b16 %v2049
    %v2186 = vunpack.c.l.b16 %v2050
    %v2187 = vunpack.c.l.b16 %v2051
    %v2188 = vunpack.c.l.b16 %v2052
    %v2189 = vunpack.c.l.b16 %v2053
    %v2190 = vunpack.c.l.b16 %v2054
    %v2191 = vunpack.c.l.b16 %v2055
    %v2192 = vunpack.c.l.b16 %v2056
    %v2193 = vunpack.c.l.b16 %v2057
    %v2194 = vunpack.c.l.b16 %v2058
    %v2195 = vunpack.c.l.b16 %v2059
    %v2196 = vunpack.c.l.b16 %v2060
    %v2197 = vunpack.c.l.b16 %v2061
    %v2198 = vunpack.c.l.b16 %v2062
    %v2199 = vunpack.c.l.b16 %v2063
    %v2200 = vunpack.c.l.b16 %v2064
    %v2201 = vunpack.c.l.b16 %v2065
    %v2202 = vunpack.c.l.b16 %v2066
    %v2203 = vunpack.c.l.b16 %v2067
    %v2204 = vunpack.c.l.b16 %v2068
    %v2205 = vunpack.c.l.b16 %v2069
    %v2206 = vunpack.c.l.b16 %v2070
    %v2207 = vunpack.c.l.b16 %v2071
    %v2208 = vunpack.c.l.b16 %v2072
    %v2209 = vunpack.c.l.b16 %v2073
    %v2210 = vunpack.c.l.b16 %v2074
    %v2211 = vunpack.c.l.b16 %v2075
    %v2212 = vunpack.c.l.b16 %v2076
    %v2213 = vunpack.c.l.b16 %v2077
    %v2214 = vunpack.c.l.b16 %v2078
    %v2215 = vunpack.c.l.b16 %v2079
    %v2216 = vunpack.c.l.b16 %v2080
    %v2217 = vunpack.c.l.b16 %v2081
    %v2218 = vunpack.c.l.b16 %v2082
    %v2219 = vunpack.c.l.b16 %v2083
    %v2220 = vunpack.c.l.b16 %v2084
    %v2221 = vunpack.c.l.b16 %v2085
    %v2222 = vunpack.c.l.b16 %v2086
    %v2223 = vunpack.c.l.b16 %v2087
    %v2224 = vunpack.c.l.b16 %v2088
    %v2225 = vpack.c.b16 %v2162, %v2161
    %v2226 = vpack.c.b16 %v2164, %v2163
    %v2227 = vpack.c.b16 %v2166, %v2165
    %v2228 = vpack.c.b16 %v2168, %v2167
    %v2229 = vpack.c.b16 %v2170, %v2169
    %v2230 = vpack.c.b16 %v2172, %v2171
    %v2231 = vpack.c.b16 %v2174, %v2173
    %v2232 = vpack.c.b16 %v2176, %v2175
    %v2233 = vpack.c.b16 %v2178, %v2177
    %v2234 = vpack.c.b16 %v2180, %v2179
    %v2235 = vpack.c.b16 %v2182, %v2181
    %v2236 = vpack.c.b16 %v2184, %v2183
    %v2237 = vpack.c.b16 %v2186, %v2185
    %v2238 = vpack.c.b16 %v2188, %v2187
    %v2239 = vpack.c.b16 %v2190, %v2189
    %v2240 = vpack.c.b16 %v2192, %v2191
    %v2241 = vpack.c.b16 %v2194, %v2193
    %v2242 = vpack.c.b16 %v2196, %v2195
    %v2243 = vpack.c.b16 %v2198, %v2197
    %v2244 = vpack.c.b16 %v2200, %v2199
    %v2245 = vpack.c.b16 %v2202, %v2201
    %v2246 = vpack.c.b16 %v2204, %v2203
    %v2247 = vpack.c.b16 %v2206, %v2205
    %v2248 = vpack.c.b16 %v2208, %v2207
    %v2249 = vpack.c.b16 %v2210, %v2209
    %v2250 = vpack.c.b16 %v2212, %v2211
    %v2251 = vpack.c.b16 %v2214, %v2213
    %v2252 = vpack.c.b16 %v2216, %v2215
    %v2253 = vpack.c.b16 %v2218, %v2217
    %v2254 = vpack.c.b16 %v2220, %v2219
    %v2255 = vpack.c.b16 %v2222, %v2221
    %v2256 = vpack.c.b16 %v2224, %v2223
    %2289 = vmatprep.subr.bf16.mxu0 0
    %2290 = vmatpush1.bf16.msra.mxu0 %v2225
    %2291 = vmatprep.subr.bf16.mxu0 0
    %2292 = vmatpush1.bf16.msra.mxu0 %v2226
    %2293 = vmatprep.subr.bf16.mxu0 0
    %2294 = vmatpush1.bf16.msra.mxu0 %v2227
    %2295 = vmatprep.subr.bf16.mxu0 0
    %2296 = vmatpush1.bf16.msra.mxu0 %v2228
    %2297 = vmatprep.subr.bf16.mxu0 0
    %2298 = vmatpush1.bf16.msra.mxu0 %v2229
    %2299 = vmatprep.subr.bf16.mxu0 0
    %2300 = vmatpush1.bf16.msra.mxu0 %v2230
    %2301 = vmatprep.subr.bf16.mxu0 0
    %2302 = vmatpush1.bf16.msra.mxu0 %v2231
    %2303 = vmatprep.subr.bf16.mxu0 0
    %2304 = vmatpush1.bf16.msra.mxu0 %v2232
    %2305 = vmatprep.subr.bf16.mxu0 0
    %2306 = vmatpush1.bf16.msra.mxu0 %v2233
    %2307 = vmatprep.subr.bf16.mxu0 0
    %2308 = vmatpush1.bf16.msra.mxu0 %v2234
    %2309 = vmatprep.subr.bf16.mxu0 0
    %2310 = vmatpush1.bf16.msra.mxu0 %v2235
    %2311 = vmatprep.subr.bf16.mxu0 0
    %2312 = vmatpush1.bf16.msra.mxu0 %v2236
    %2313 = vmatprep.subr.bf16.mxu0 0
    %2314 = vmatpush1.bf16.msra.mxu0 %v2237
    %2315 = vmatprep.subr.bf16.mxu0 0
    %2316 = vmatpush1.bf16.msra.mxu0 %v2238
    %2317 = vmatprep.subr.bf16.mxu0 0
    %2318 = vmatpush1.bf16.msra.mxu0 %v2239
    %2319 = vmatprep.subr.bf16.mxu0 0
    %2320 = vmatpush1.bf16.msra.mxu0 %v2240
    %2321 = vmatprep.mubr.bf16.mxu0 %v2021
    %2322 = vmatmul.mubr.bf16.gmra.mrb[0].mxu0 %v2020
    %v2323 = vpop.f32.mrb[0].mxu0
    %v2324 = vadd.f32 %v2095, %v2323
    %v2325 = vpop.f32.mrb[0].mxu0
    %v2326 = vpop.f32.mrb[0].mxu0
    %v2327 = vpop.f32.mrb[0].mxu0
    %2328 = vdwg.mxu0
    %2329 = vmatprep.subr.bf16.mxu0 0
    %2330 = vmatpush1.bf16.msra.mxu0 %v2241
    %2331 = vmatprep.subr.bf16.mxu0 0
    %2332 = vmatpush1.bf16.msra.mxu0 %v2242
    %2333 = vmatprep.subr.bf16.mxu0 0
    %2334 = vmatpush1.bf16.msra.mxu0 %v2243
    %2335 = vmatprep.subr.bf16.mxu0 0
    %2336 = vmatpush1.bf16.msra.mxu0 %v2244
    %2337 = vmatprep.subr.bf16.mxu0 0
    %2338 = vmatpush1.bf16.msra.mxu0 %v2245
    %2339 = vmatprep.subr.bf16.mxu0 0
    %2340 = vmatpush1.bf16.msra.mxu0 %v2246
    %2341 = vmatprep.subr.bf16.mxu0 0
    %2342 = vmatpush1.bf16.msra.mxu0 %v2247
    %2343 = vmatprep.subr.bf16.mxu0 0
    %2344 = vmatpush1.bf16.msra.mxu0 %v2248
    %2345 = vmatprep.subr.bf16.mxu0 0
    %2346 = vmatpush1.bf16.msra.mxu0 %v2249
    %2347 = vmatprep.subr.bf16.mxu0 0
    %2348 = vmatpush1.bf16.msra.mxu0 %v2250
    %2349 = vmatprep.subr.bf16.mxu0 0
    %2350 = vmatpush1.bf16.msra.mxu0 %v2251
    %2351 = vmatprep.subr.bf16.mxu0 0
    %2352 = vmatpush1.bf16.msra.mxu0 %v2252
    %2353 = vmatprep.subr.bf16.mxu0 0
    %2354 = vmatpush1.bf16.msra.mxu0 %v2253
    %2355 = vmatprep.subr.bf16.mxu0 0
    %2356 = vmatpush1.bf16.msra.mxu0 %v2254
    %2357 = vmatprep.subr.bf16.mxu0 0
    %2358 = vmatpush1.bf16.msra.mxu0 %v2255
    %2359 = vmatprep.subr.bf16.mxu0 0
    %2360 = vmatpush1.bf16.msra.mxu0 %v2256
    %2361 = vmatprep.mubr.bf16.mxu0 %v2023
    %2362 = vmatmul.mubr.bf16.gmra.mrb[0].mxu0 %v2022
    %v2363 = vpop.f32.mrb[0].mxu0
    %v2364 = vadd.f32 %v2324, %v2363
    %v2365 = vpop.f32.mrb[0].mxu0
    %v2366 = vpop.f32.mrb[0].mxu0
    %v2367 = vpop.f32.mrb[0].mxu0
    %2368 = vdwg.mxu0
    %v2369 = vtanh.pop %v2364
    %v2370 = vpack.c.bf16 %v2369, %v2369
    %s2371 = scalar_lea.vmem [#allocation7], 1024
    %v2372 = vld [vmem:[%s2371] sm:$0xff]
    %v2373 = vld [vmem:[%s2371 + $0x8] sm:$0xff]
    %v2374 = vld [vmem:[%s2371 + $0x10] sm:$0xff]
    %v2375 = vld [vmem:[%s2371 + $0x18] sm:$0xff]
    %v2376 = vld [vmem:[%s2371 + $0x20] sm:$0xff]
    %v2377 = vld [vmem:[%s2371 + $0x28] sm:$0xff]
    %v2378 = vld [vmem:[%s2371 + $0x30] sm:$0xff]
    %v2379 = vld [vmem:[%s2371 + $0x38] sm:$0xff]
    %v2380 = vld [vmem:[%s2371 + $0x40] sm:$0xff]
    %v2381 = vld [vmem:[%s2371 + $0x48] sm:$0xff]
    %v2382 = vld [vmem:[%s2371 + $0x50] sm:$0xff]
    %v2383 = vld [vmem:[%s2371 + $0x58] sm:$0xff]
    %v2384 = vld [vmem:[%s2371 + $0x60] sm:$0xff]
    %v2385 = vld [vmem:[%s2371 + $0x68] sm:$0xff]
    %v2386 = vld [vmem:[%s2371 + $0x70] sm:$0xff]
    %v2387 = vld [vmem:[%s2371 + $0x78] sm:$0xff]
    %v2388 = vld [vmem:[%s2371 + $0x80] sm:$0xff]
    %v2389 = vld [vmem:[%s2371 + $0x88] sm:$0xff]
    %v2390 = vld [vmem:[%s2371 + $0x90] sm:$0xff]
    %v2391 = vld [vmem:[%s2371 + $0x98] sm:$0xff]
    %v2392 = vld [vmem:[%s2371 + $0xa0] sm:$0xff]
    %v2393 = vld [vmem:[%s2371 + $0xa8] sm:$0xff]
    %v2394 = vld [vmem:[%s2371 + $0xb0] sm:$0xff]
    %v2395 = vld [vmem:[%s2371 + $0xb8] sm:$0xff]
    %v2396 = vld [vmem:[%s2371 + $0xc0] sm:$0xff]
    %v2397 = vld [vmem:[%s2371 + $0xc8] sm:$0xff]
    %v2398 = vld [vmem:[%s2371 + $0xd0] sm:$0xff]
    %v2399 = vld [vmem:[%s2371 + $0xd8] sm:$0xff]
    %v2400 = vld [vmem:[%s2371 + $0xe0] sm:$0xff]
    %v2401 = vld [vmem:[%s2371 + $0xe8] sm:$0xff]
    %v2402 = vld [vmem:[%s2371 + $0xf0] sm:$0xff]
    %v2403 = vld [vmem:[%s2371 + $0xf8] sm:$0xff]
    %v2404 = vld [vmem:[%s2371 + $0x100] sm:$0xff]
    %v2405 = vld [vmem:[%s2371 + $0x108] sm:$0xff]
    %v2406 = vld [vmem:[%s2371 + $0x110] sm:$0xff]
    %v2407 = vld [vmem:[%s2371 + $0x118] sm:$0xff]
    %v2408 = vld [vmem:[%s2371 + $0x120] sm:$0xff]
    %v2409 = vld [vmem:[%s2371 + $0x128] sm:$0xff]
    %v2410 = vld [vmem:[%s2371 + $0x130] sm:$0xff]
    %v2411 = vld [vmem:[%s2371 + $0x138] sm:$0xff]
    %v2412 = vld [vmem:[%s2371 + $0x140] sm:$0xff]
    %v2413 = vld [vmem:[%s2371 + $0x148] sm:$0xff]
    %v2414 = vld [vmem:[%s2371 + $0x150] sm:$0xff]
    %v2415 = vld [vmem:[%s2371 + $0x158] sm:$0xff]
    %v2416 = vld [vmem:[%s2371 + $0x160] sm:$0xff]
    %v2417 = vld [vmem:[%s2371 + $0x168] sm:$0xff]
    %v2418 = vld [vmem:[%s2371 + $0x170] sm:$0xff]
    %v2419 = vld [vmem:[%s2371 + $0x178] sm:$0xff]
    %v2420 = vld [vmem:[%s2371 + $0x180] sm:$0xff]
    %v2421 = vld [vmem:[%s2371 + $0x188] sm:$0xff]
    %v2422 = vld [vmem:[%s2371 + $0x190] sm:$0xff]
    %v2423 = vld [vmem:[%s2371 + $0x198] sm:$0xff]
    %v2424 = vld [vmem:[%s2371 + $0x1a0] sm:$0xff]
    %v2425 = vld [vmem:[%s2371 + $0x1a8] sm:$0xff]
    %v2426 = vld [vmem:[%s2371 + $0x1b0] sm:$0xff]
    %v2427 = vld [vmem:[%s2371 + $0x1b8] sm:$0xff]
    %v2428 = vld [vmem:[%s2371 + $0x1c0] sm:$0xff]
    %v2429 = vld [vmem:[%s2371 + $0x1c8] sm:$0xff]
    %v2430 = vld [vmem:[%s2371 + $0x1d0] sm:$0xff]
    %v2431 = vld [vmem:[%s2371 + $0x1d8] sm:$0xff]
    %v2432 = vld [vmem:[%s2371 + $0x1e0] sm:$0xff]
    %v2433 = vld [vmem:[%s2371 + $0x1e8] sm:$0xff]
    %v2434 = vld [vmem:[%s2371 + $0x1f0] sm:$0xff]
    %v2435 = vld [vmem:[%s2371 + $0x1f8] sm:$0xff]
    %s2436 = scalar_lea.vmem [#allocation8], 16
    %v2437 = vld [vmem:[%s2436] sm:$0xff]
    %v2439 = vlaneseq
    %v2440 = vshrl.u32 %v2439, 7
    %v2441 = vsub.s32 0, %v2440
    %v2442 = vrot.slane %v2437, %v2441
    %v2443 = vlaneseq
    %v2444 = vshrl.u32 %v2443, 7
    %v2445 = vsub.s32 1, %v2444
    %v2446 = vrot.slane %v2437, %v2445
    %v2447 = vlaneseq
    %v2448 = vshrl.u32 %v2447, 7
    %v2449 = vsub.s32 2, %v2448
    %v2450 = vrot.slane %v2437, %v2449
    %v2451 = vlaneseq
    %v2452 = vshrl.u32 %v2451, 7
    %v2453 = vsub.s32 3, %v2452
    %v2454 = vrot.slane %v2437, %v2453
    %v2455 = vlaneseq
    %v2456 = vshrl.u32 %v2455, 7
    %v2457 = vsub.s32 4, %v2456
    %v2458 = vrot.slane %v2437, %v2457
    %v2459 = vlaneseq
    %v2460 = vshrl.u32 %v2459, 7
    %v2461 = vsub.s32 5, %v2460
    %v2462 = vrot.slane %v2437, %v2461
    %v2463 = vlaneseq
    %v2464 = vshrl.u32 %v2463, 7
    %v2465 = vsub.s32 6, %v2464
    %v2466 = vrot.slane %v2437, %v2465
    %v2467 = vlaneseq
    %v2468 = vshrl.u32 %v2467, 7
    %v2469 = vsub.s32 7, %v2468
    %v2470 = vrot.slane %v2437, %v2469
    %v2543 = vunpack.c.l.b16 %v2372
    %v2544 = vunpack.c.h.b16 %v2372
    %v2545 = vunpack.c.l.b16 %v2373
    %v2546 = vunpack.c.h.b16 %v2373
    %v2547 = vunpack.c.l.b16 %v2374
    %v2548 = vunpack.c.h.b16 %v2374
    %v2549 = vunpack.c.l.b16 %v2375
    %v2550 = vunpack.c.h.b16 %v2375
    %v2551 = vunpack.c.l.b16 %v2376
    %v2552 = vunpack.c.h.b16 %v2376
    %v2553 = vunpack.c.l.b16 %v2377
    %v2554 = vunpack.c.h.b16 %v2377
    %v2555 = vunpack.c.l.b16 %v2378
    %v2556 = vunpack.c.h.b16 %v2378
    %v2557 = vunpack.c.l.b16 %v2379
    %v2558 = vunpack.c.h.b16 %v2379
    %v2559 = vunpack.c.l.b16 %v2380
    %v2560 = vunpack.c.h.b16 %v2380
    %v2561 = vunpack.c.l.b16 %v2381
    %v2562 = vunpack.c.h.b16 %v2381
    %v2563 = vunpack.c.l.b16 %v2382
    %v2564 = vunpack.c.h.b16 %v2382
    %v2565 = vunpack.c.l.b16 %v2383
    %v2566 = vunpack.c.h.b16 %v2383
    %v2567 = vunpack.c.l.b16 %v2384
    %v2568 = vunpack.c.h.b16 %v2384
    %v2569 = vunpack.c.l.b16 %v2385
    %v2570 = vunpack.c.h.b16 %v2385
    %v2571 = vunpack.c.l.b16 %v2386
    %v2572 = vunpack.c.h.b16 %v2386
    %v2573 = vunpack.c.l.b16 %v2387
    %v2574 = vunpack.c.h.b16 %v2387
    %v2575 = vunpack.c.l.b16 %v2388
    %v2576 = vunpack.c.h.b16 %v2388
    %v2577 = vunpack.c.l.b16 %v2389
    %v2578 = vunpack.c.h.b16 %v2389
    %v2579 = vunpack.c.l.b16 %v2390
    %v2580 = vunpack.c.h.b16 %v2390
    %v2581 = vunpack.c.l.b16 %v2391
    %v2582 = vunpack.c.h.b16 %v2391
    %v2583 = vunpack.c.l.b16 %v2392
    %v2584 = vunpack.c.h.b16 %v2392
    %v2585 = vunpack.c.l.b16 %v2393
    %v2586 = vunpack.c.h.b16 %v2393
    %v2587 = vunpack.c.l.b16 %v2394
    %v2588 = vunpack.c.h.b16 %v2394
    %v2589 = vunpack.c.l.b16 %v2395
    %v2590 = vunpack.c.h.b16 %v2395
    %v2591 = vunpack.c.l.b16 %v2396
    %v2592 = vunpack.c.h.b16 %v2396
    %v2593 = vunpack.c.l.b16 %v2397
    %v2594 = vunpack.c.h.b16 %v2397
    %v2595 = vunpack.c.l.b16 %v2398
    %v2596 = vunpack.c.h.b16 %v2398
    %v2597 = vunpack.c.l.b16 %v2399
    %v2598 = vunpack.c.h.b16 %v2399
    %v2599 = vunpack.c.l.b16 %v2400
    %v2600 = vunpack.c.h.b16 %v2400
    %v2601 = vunpack.c.l.b16 %v2401
    %v2602 = vunpack.c.h.b16 %v2401
    %v2603 = vunpack.c.l.b16 %v2402
    %v2604 = vunpack.c.h.b16 %v2402
    %v2605 = vunpack.c.l.b16 %v2403
    %v2606 = vunpack.c.h.b16 %v2403
    %v2607 = vunpack.c.l.b16 %v2404
    %v2608 = vunpack.c.h.b16 %v2404
    %v2609 = vunpack.c.l.b16 %v2405
    %v2610 = vunpack.c.h.b16 %v2405
    %v2611 = vunpack.c.l.b16 %v2406
    %v2612 = vunpack.c.h.b16 %v2406
    %v2613 = vunpack.c.l.b16 %v2407
    %v2614 = vunpack.c.h.b16 %v2407
    %v2615 = vunpack.c.l.b16 %v2408
    %v2616 = vunpack.c.h.b16 %v2408
    %v2617 = vunpack.c.l.b16 %v2409
    %v2618 = vunpack.c.h.b16 %v2409
    %v2619 = vunpack.c.l.b16 %v2410
    %v2620 = vunpack.c.h.b16 %v2410
    %v2621 = vunpack.c.l.b16 %v2411
    %v2622 = vunpack.c.h.b16 %v2411
    %v2623 = vunpack.c.l.b16 %v2412
    %v2624 = vunpack.c.h.b16 %v2412
    %v2625 = vunpack.c.l.b16 %v2413
    %v2626 = vunpack.c.h.b16 %v2413
    %v2627 = vunpack.c.l.b16 %v2414
    %v2628 = vunpack.c.h.b16 %v2414
    %v2629 = vunpack.c.l.b16 %v2415
    %v2630 = vunpack.c.h.b16 %v2415
    %v2631 = vunpack.c.l.b16 %v2416
    %v2632 = vunpack.c.h.b16 %v2416
    %v2633 = vunpack.c.l.b16 %v2417
    %v2634 = vunpack.c.h.b16 %v2417
    %v2635 = vunpack.c.l.b16 %v2418
    %v2636 = vunpack.c.h.b16 %v2418
    %v2637 = vunpack.c.l.b16 %v2419
    %v2638 = vunpack.c.h.b16 %v2419
    %v2639 = vunpack.c.l.b16 %v2420
    %v2640 = vunpack.c.h.b16 %v2420
    %v2641 = vunpack.c.l.b16 %v2421
    %v2642 = vunpack.c.h.b16 %v2421
    %v2643 = vunpack.c.l.b16 %v2422
    %v2644 = vunpack.c.h.b16 %v2422
    %v2645 = vunpack.c.l.b16 %v2423
    %v2646 = vunpack.c.h.b16 %v2423
    %v2647 = vunpack.c.l.b16 %v2424
    %v2648 = vunpack.c.h.b16 %v2424
    %v2649 = vunpack.c.l.b16 %v2425
    %v2650 = vunpack.c.h.b16 %v2425
    %v2651 = vunpack.c.l.b16 %v2426
    %v2652 = vunpack.c.h.b16 %v2426
    %v2653 = vunpack.c.l.b16 %v2427
    %v2654 = vunpack.c.h.b16 %v2427
    %v2655 = vunpack.c.l.b16 %v2428
    %v2656 = vunpack.c.h.b16 %v2428
    %v2657 = vunpack.c.l.b16 %v2429
    %v2658 = vunpack.c.h.b16 %v2429
    %v2659 = vunpack.c.l.b16 %v2430
    %v2660 = vunpack.c.h.b16 %v2430
    %v2661 = vunpack.c.l.b16 %v2431
    %v2662 = vunpack.c.h.b16 %v2431
    %v2663 = vunpack.c.l.b16 %v2432
    %v2664 = vunpack.c.h.b16 %v2432
    %v2665 = vunpack.c.l.b16 %v2433
    %v2666 = vunpack.c.h.b16 %v2433
    %v2667 = vunpack.c.l.b16 %v2434
    %v2668 = vunpack.c.h.b16 %v2434
    %v2669 = vunpack.c.l.b16 %v2435
    %v2670 = vunpack.c.h.b16 %v2435
    %v2671 = vpack.c.b16 %v2551, %v2543
    %v2672 = vpack.c.b16 %v2552, %v2544
    %v2673 = vpack.c.b16 %v2553, %v2545
    %v2674 = vpack.c.b16 %v2554, %v2546
    %v2675 = vpack.c.b16 %v2555, %v2547
    %v2676 = vpack.c.b16 %v2556, %v2548
    %v2677 = vpack.c.b16 %v2557, %v2549
    %v2678 = vpack.c.b16 %v2558, %v2550
    %v2679 = vpack.c.b16 %v2567, %v2559
    %v2680 = vpack.c.b16 %v2568, %v2560
    %v2681 = vpack.c.b16 %v2569, %v2561
    %v2682 = vpack.c.b16 %v2570, %v2562
    %v2683 = vpack.c.b16 %v2571, %v2563
    %v2684 = vpack.c.b16 %v2572, %v2564
    %v2685 = vpack.c.b16 %v2573, %v2565
    %v2686 = vpack.c.b16 %v2574, %v2566
    %v2687 = vpack.c.b16 %v2583, %v2575
    %v2688 = vpack.c.b16 %v2584, %v2576
    %v2689 = vpack.c.b16 %v2585, %v2577
    %v2690 = vpack.c.b16 %v2586, %v2578
    %v2691 = vpack.c.b16 %v2587, %v2579
    %v2692 = vpack.c.b16 %v2588, %v2580
    %v2693 = vpack.c.b16 %v2589, %v2581
    %v2694 = vpack.c.b16 %v2590, %v2582
    %v2695 = vpack.c.b16 %v2599, %v2591
    %v2696 = vpack.c.b16 %v2600, %v2592
    %v2697 = vpack.c.b16 %v2601, %v2593
    %v2698 = vpack.c.b16 %v2602, %v2594
    %v2699 = vpack.c.b16 %v2603, %v2595
    %v2700 = vpack.c.b16 %v2604, %v2596
    %v2701 = vpack.c.b16 %v2605, %v2597
    %v2702 = vpack.c.b16 %v2606, %v2598
    %v2703 = vpack.c.b16 %v2615, %v2607
    %v2704 = vpack.c.b16 %v2616, %v2608
    %v2705 = vpack.c.b16 %v2617, %v2609
    %v2706 = vpack.c.b16 %v2618, %v2610
    %v2707 = vpack.c.b16 %v2619, %v2611
    %v2708 = vpack.c.b16 %v2620, %v2612
    %v2709 = vpack.c.b16 %v2621, %v2613
    %v2710 = vpack.c.b16 %v2622, %v2614
    %v2711 = vpack.c.b16 %v2631, %v2623
    %v2712 = vpack.c.b16 %v2632, %v2624
    %v2713 = vpack.c.b16 %v2633, %v2625
    %v2714 = vpack.c.b16 %v2634, %v2626
    %v2715 = vpack.c.b16 %v2635, %v2627
    %v2716 = vpack.c.b16 %v2636, %v2628
    %v2717 = vpack.c.b16 %v2637, %v2629
    %v2718 = vpack.c.b16 %v2638, %v2630
    %v2719 = vpack.c.b16 %v2647, %v2639
    %v2720 = vpack.c.b16 %v2648, %v2640
    %v2721 = vpack.c.b16 %v2649, %v2641
    %v2722 = vpack.c.b16 %v2650, %v2642
    %v2723 = vpack.c.b16 %v2651, %v2643
    %v2724 = vpack.c.b16 %v2652, %v2644
    %v2725 = vpack.c.b16 %v2653, %v2645
    %v2726 = vpack.c.b16 %v2654, %v2646
    %v2727 = vpack.c.b16 %v2663, %v2655
    %v2728 = vpack.c.b16 %v2664, %v2656
    %v2729 = vpack.c.b16 %v2665, %v2657
    %v2730 = vpack.c.b16 %v2666, %v2658
    %v2731 = vpack.c.b16 %v2667, %v2659
    %v2732 = vpack.c.b16 %v2668, %v2660
    %v2733 = vpack.c.b16 %v2669, %v2661
    %v2734 = vpack.c.b16 %v2670, %v2662
    %2799 = vmatprep.subr.bf16.mxu0 %v2672
    %2800 = vmatpush1.bf16.msra.mxu0 %v2671
    %2801 = vmatprep.subr.bf16.mxu0 %v2680
    %2802 = vmatpush1.bf16.msra.mxu0 %v2679
    %2803 = vmatprep.subr.bf16.mxu0 %v2688
    %2804 = vmatpush1.bf16.msra.mxu0 %v2687
    %2805 = vmatprep.subr.bf16.mxu0 %v2696
    %2806 = vmatpush1.bf16.msra.mxu0 %v2695
    %2807 = vmatprep.subr.bf16.mxu0 %v2704
    %2808 = vmatpush1.bf16.msra.mxu0 %v2703
    %2809 = vmatprep.subr.bf16.mxu0 %v2712
    %2810 = vmatpush1.bf16.msra.mxu0 %v2711
    %2811 = vmatprep.subr.bf16.mxu0 %v2720
    %2812 = vmatpush1.bf16.msra.mxu0 %v2719
    %2813 = vmatprep.subr.bf16.mxu0 %v2728
    %2814 = vmatpush1.bf16.msra.mxu0 %v2727
    %2815 = vmatprep.subr.bf16.mxu0 0
    %2816 = vmatpush1.bf16.msra.mxu0 0
    %2817 = vmatprep.subr.bf16.mxu0 0
    %2818 = vmatpush1.bf16.msra.mxu0 0
    %2819 = vmatprep.subr.bf16.mxu0 0
    %2820 = vmatpush1.bf16.msra.mxu0 0
    %2821 = vmatprep.subr.bf16.mxu0 0
    %2822 = vmatpush1.bf16.msra.mxu0 0
    %2823 = vmatprep.subr.bf16.mxu0 0
    %2824 = vmatpush1.bf16.msra.mxu0 0
    %2825 = vmatprep.subr.bf16.mxu0 0
    %2826 = vmatpush1.bf16.msra.mxu0 0
    %2827 = vmatprep.subr.bf16.mxu0 0
    %2828 = vmatpush1.bf16.msra.mxu0 0
    %2829 = vmatprep.subr.bf16.mxu0 0
    %2830 = vmatpush1.bf16.msra.mxu0 0
    %2831 = vmatprep.mubr.bf16.mxu0 0
    %2832 = vmatmul.mubr.bf16.gmra.mrb[0].mxu0 %v2370
    %v2833 = vpop.f32.mrb[0].mxu0
    %v2834 = vadd.f32 %v2442, %v2833
    %v2835 = vpop.f32.mrb[0].mxu0
    %v2836 = vadd.f32 %v2446, %v2835
    %v2837 = vpop.f32.mrb[0].mxu0
    %v2838 = vpop.f32.mrb[0].mxu0
    %2839 = vdwg.mxu0
    %2840 = vmatprep.subr.bf16.mxu0 %v2674
    %2841 = vmatpush1.bf16.msra.mxu0 %v2673
    %2842 = vmatprep.subr.bf16.mxu0 %v2682
    %2843 = vmatpush1.bf16.msra.mxu0 %v2681
    %2844 = vmatprep.subr.bf16.mxu0 %v2690
    %2845 = vmatpush1.bf16.msra.mxu0 %v2689
    %2846 = vmatprep.subr.bf16.mxu0 %v2698
    %2847 = vmatpush1.bf16.msra.mxu0 %v2697
    %2848 = vmatprep.subr.bf16.mxu0 %v2706
    %2849 = vmatpush1.bf16.msra.mxu0 %v2705
    %2850 = vmatprep.subr.bf16.mxu0 %v2714
    %2851 = vmatpush1.bf16.msra.mxu0 %v2713
    %2852 = vmatprep.subr.bf16.mxu0 %v2722
    %2853 = vmatpush1.bf16.msra.mxu0 %v2721
    %2854 = vmatprep.subr.bf16.mxu0 %v2730
    %2855 = vmatpush1.bf16.msra.mxu0 %v2729
    %2856 = vmatprep.subr.bf16.mxu0 0
    %2857 = vmatpush1.bf16.msra.mxu0 0
    %2858 = vmatprep.subr.bf16.mxu0 0
    %2859 = vmatpush1.bf16.msra.mxu0 0
    %2860 = vmatprep.subr.bf16.mxu0 0
    %2861 = vmatpush1.bf16.msra.mxu0 0
    %2862 = vmatprep.subr.bf16.mxu0 0
    %2863 = vmatpush1.bf16.msra.mxu0 0
    %2864 = vmatprep.subr.bf16.mxu0 0
    %2865 = vmatpush1.bf16.msra.mxu0 0
    %2866 = vmatprep.subr.bf16.mxu0 0
    %2867 = vmatpush1.bf16.msra.mxu0 0
    %2868 = vmatprep.subr.bf16.mxu0 0
    %2869 = vmatpush1.bf16.msra.mxu0 0
    %2870 = vmatprep.subr.bf16.mxu0 0
    %2871 = vmatpush1.bf16.msra.mxu0 0
    %2872 = vmatprep.mubr.bf16.mxu0 0
    %2873 = vmatmul.mubr.bf16.gmra.mrb[0].mxu0 %v2370
    %v2874 = vpop.f32.mrb[0].mxu0
    %v2875 = vadd.f32 %v2450, %v2874
    %v2876 = vpop.f32.mrb[0].mxu0
    %v2877 = vadd.f32 %v2454, %v2876
    %v2878 = vpop.f32.mrb[0].mxu0
    %v2879 = vpop.f32.mrb[0].mxu0
    %2880 = vdwg.mxu0
    %2881 = vmatprep.subr.bf16.mxu0 %v2676
    %2882 = vmatpush1.bf16.msra.mxu0 %v2675
    %2883 = vmatprep.subr.bf16.mxu0 %v2684
    %2884 = vmatpush1.bf16.msra.mxu0 %v2683
    %2885 = vmatprep.subr.bf16.mxu0 %v2692
    %2886 = vmatpush1.bf16.msra.mxu0 %v2691
    %2887 = vmatprep.subr.bf16.mxu0 %v2700
    %2888 = vmatpush1.bf16.msra.mxu0 %v2699
    %2889 = vmatprep.subr.bf16.mxu0 %v2708
    %2890 = vmatpush1.bf16.msra.mxu0 %v2707
    %2891 = vmatprep.subr.bf16.mxu0 %v2716
    %2892 = vmatpush1.bf16.msra.mxu0 %v2715
    %2893 = vmatprep.subr.bf16.mxu0 %v2724
    %2894 = vmatpush1.bf16.msra.mxu0 %v2723
    %2895 = vmatprep.subr.bf16.mxu0 %v2732
    %2896 = vmatpush1.bf16.msra.mxu0 %v2731
    %2897 = vmatprep.subr.bf16.mxu0 0
    %2898 = vmatpush1.bf16.msra.mxu0 0
    %2899 = vmatprep.subr.bf16.mxu0 0
    %2900 = vmatpush1.bf16.msra.mxu0 0
    %2901 = vmatprep.subr.bf16.mxu0 0
    %2902 = vmatpush1.bf16.msra.mxu0 0
    %2903 = vmatprep.subr.bf16.mxu0 0
    %2904 = vmatpush1.bf16.msra.mxu0 0
    %2905 = vmatprep.subr.bf16.mxu0 0
    %2906 = vmatpush1.bf16.msra.mxu0 0
    %2907 = vmatprep.subr.bf16.mxu0 0
    %2908 = vmatpush1.bf16.msra.mxu0 0
    %2909 = vmatprep.subr.bf16.mxu0 0
    %2910 = vmatpush1.bf16.msra.mxu0 0
    %2911 = vmatprep.subr.bf16.mxu0 0
    %2912 = vmatpush1.bf16.msra.mxu0 0
    %2913 = vmatprep.mubr.bf16.mxu0 0
    %2914 = vmatmul.mubr.bf16.gmra.mrb[0].mxu0 %v2370
    %v2915 = vpop.f32.mrb[0].mxu0
    %v2916 = vadd.f32 %v2458, %v2915
    %v2917 = vpop.f32.mrb[0].mxu0
    %v2918 = vadd.f32 %v2462, %v2917
    %v2919 = vpop.f32.mrb[0].mxu0
    %v2920 = vpop.f32.mrb[0].mxu0
    %2921 = vdwg.mxu0
    %2922 = vmatprep.subr.bf16.mxu0 %v2678
    %2923 = vmatpush1.bf16.msra.mxu0 %v2677
    %2924 = vmatprep.subr.bf16.mxu0 %v2686
    %2925 = vmatpush1.bf16.msra.mxu0 %v2685
    %2926 = vmatprep.subr.bf16.mxu0 %v2694
    %2927 = vmatpush1.bf16.msra.mxu0 %v2693
    %2928 = vmatprep.subr.bf16.mxu0 %v2702
    %2929 = vmatpush1.bf16.msra.mxu0 %v2701
    %2930 = vmatprep.subr.bf16.mxu0 %v2710
    %2931 = vmatpush1.bf16.msra.mxu0 %v2709
    %2932 = vmatprep.subr.bf16.mxu0 %v2718
    %2933 = vmatpush1.bf16.msra.mxu0 %v2717
    %2934 = vmatprep.subr.bf16.mxu0 %v2726
    %2935 = vmatpush1.bf16.msra.mxu0 %v2725
    %2936 = vmatprep.subr.bf16.mxu0 %v2734
    %2937 = vmatpush1.bf16.msra.mxu0 %v2733
    %2938 = vmatprep.subr.bf16.mxu0 0
    %2939 = vmatpush1.bf16.msra.mxu0 0
    %2940 = vmatprep.subr.bf16.mxu0 0
    %2941 = vmatpush1.bf16.msra.mxu0 0
    %2942 = vmatprep.subr.bf16.mxu0 0
    %2943 = vmatpush1.bf16.msra.mxu0 0
    %2944 = vmatprep.subr.bf16.mxu0 0
    %2945 = vmatpush1.bf16.msra.mxu0 0
    %2946 = vmatprep.subr.bf16.mxu0 0
    %2947 = vmatpush1.bf16.msra.mxu0 0
    %2948 = vmatprep.subr.bf16.mxu0 0
    %2949 = vmatpush1.bf16.msra.mxu0 0
    %2950 = vmatprep.subr.bf16.mxu0 0
    %2951 = vmatpush1.bf16.msra.mxu0 0
    %2952 = vmatprep.subr.bf16.mxu0 0
    %2953 = vmatpush1.bf16.msra.mxu0 0
    %2954 = vmatprep.mubr.bf16.mxu0 0
    %2955 = vmatmul.mubr.bf16.gmra.mrb[0].mxu0 %v2370
    %v2956 = vpop.f32.mrb[0].mxu0
    %v2957 = vadd.f32 %v2466, %v2956
    %v2958 = vpop.f32.mrb[0].mxu0
    %v2959 = vadd.f32 %v2470, %v2958
    %v2960 = vpop.f32.mrb[0].mxu0
    %v2961 = vpop.f32.mrb[0].mxu0
    %2962 = vdwg.mxu0
    %v2963 = vtanh.pop %v2834
    %v2964 = vtanh.pop %v2836
    %v2965 = vtanh.pop %v2875
    %v2966 = vtanh.pop %v2877
    %v2967 = vmul.f32 %v2963, 1.442695
    %v2968 = vpow.pop %v2967
    %v2969 = vmul.f32 %v2964, 1.442695
    %v2970 = vpow.pop %v2969
    %v2971 = vmul.f32 %v2965, 1.442695
    %v2972 = vpow.pop %v2971
    %v2973 = vmul.f32 %v2966, 1.442695
    %v2974 = vpow.pop %v2973
    %v2975 = vmul.f32 %v1041, %v2968
    %v2976 = vmul.f32 %v1042, %v2970
    %v2977 = vmul.f32 %v1043, %v2972
    %v2978 = vmul.f32 %v1044, %v2974
    %v2979 = vadd.f32 %v2975, %v2916
    %v2980 = vadd.f32 %v2976, %v2918
    %v2981 = vadd.f32 %v2977, %v2957
    %v2982 = vadd.f32 %v2978, %v2959
    %v2983 = vadd.f32 %v2963, %v2964
    %v2984 = vadd.f32 %v2983, %v2965
    %v2985 = vadd.f32 %v2984, %v2966
    %2986 = vadd.xlane.f32.xlu0 %v2985
    %v2987 = vpop.xlane.xlu0 %2986
    %v2988 = vadd.f32 %v2019, %v2987
    %v2989 = vpack.c.bf16 %v2979, %v2979
    %v2990 = vpack.c.bf16 %v2980, %v2980
    %v2991 = vpack.c.bf16 %v2981, %v2981
    %v2992 = vpack.c.bf16 %v2982, %v2982
    %s2993 = scalar_lea.vmem [#allocation5], 768
    %v2994 = vld [vmem:[%s2993] sm:$0xf]
    %v2995 = vld [vmem:[%s2993 + $0x4] sm:$0xf]
    %v2996 = vld [vmem:[%s2993 + $0x8] sm:$0xf]
    %v2997 = vld [vmem:[%s2993 + $0xc] sm:$0xf]
    %v2998 = vld [vmem:[%s2993 + $0x10] sm:$0xf]
    %v2999 = vld [vmem:[%s2993 + $0x14] sm:$0xf]
    %v3000 = vld [vmem:[%s2993 + $0x18] sm:$0xf]
    %v3001 = vld [vmem:[%s2993 + $0x1c] sm:$0xf]
    %v3002 = vld [vmem:[%s2993 + $0x20] sm:$0xf]
    %v3003 = vld [vmem:[%s2993 + $0x24] sm:$0xf]
    %v3004 = vld [vmem:[%s2993 + $0x28] sm:$0xf]
    %v3005 = vld [vmem:[%s2993 + $0x2c] sm:$0xf]
    %v3006 = vld [vmem:[%s2993 + $0x30] sm:$0xf]
    %v3007 = vld [vmem:[%s2993 + $0x34] sm:$0xf]
    %v3008 = vld [vmem:[%s2993 + $0x38] sm:$0xf]
    %v3009 = vld [vmem:[%s2993 + $0x3c] sm:$0xf]
    %v3010 = vld [vmem:[%s2993 + $0x40] sm:$0xf]
    %v3011 = vld [vmem:[%s2993 + $0x44] sm:$0xf]
    %v3012 = vld [vmem:[%s2993 + $0x48] sm:$0xf]
    %v3013 = vld [vmem:[%s2993 + $0x4c] sm:$0xf]
    %v3014 = vld [vmem:[%s2993 + $0x50] sm:$0xf]
    %v3015 = vld [vmem:[%s2993 + $0x54] sm:$0xf]
    %v3016 = vld [vmem:[%s2993 + $0x58] sm:$0xf]
    %v3017 = vld [vmem:[%s2993 + $0x5c] sm:$0xf]
    %v3018 = vld [vmem:[%s2993 + $0x60] sm:$0xf]
    %v3019 = vld [vmem:[%s2993 + $0x64] sm:$0xf]
    %v3020 = vld [vmem:[%s2993 + $0x68] sm:$0xf]
    %v3021 = vld [vmem:[%s2993 + $0x6c] sm:$0xf]
    %v3022 = vld [vmem:[%s2993 + $0x70] sm:$0xf]
    %v3023 = vld [vmem:[%s2993 + $0x74] sm:$0xf]
    %v3024 = vld [vmem:[%s2993 + $0x78] sm:$0xf]
    %v3025 = vld [vmem:[%s2993 + $0x7c] sm:$0xf]
    %v3026 = vld [vmem:[%s2993 + $0x80] sm:$0xf]
    %v3027 = vld [vmem:[%s2993 + $0x84] sm:$0xf]
    %v3028 = vld [vmem:[%s2993 + $0x88] sm:$0xf]
    %v3029 = vld [vmem:[%s2993 + $0x8c] sm:$0xf]
    %v3030 = vld [vmem:[%s2993 + $0x90] sm:$0xf]
    %v3031 = vld [vmem:[%s2993 + $0x94] sm:$0xf]
    %v3032 = vld [vmem:[%s2993 + $0x98] sm:$0xf]
    %v3033 = vld [vmem:[%s2993 + $0x9c] sm:$0xf]
    %v3034 = vld [vmem:[%s2993 + $0xa0] sm:$0xf]
    %v3035 = vld [vmem:[%s2993 + $0xa4] sm:$0xf]
    %v3036 = vld [vmem:[%s2993 + $0xa8] sm:$0xf]
    %v3037 = vld [vmem:[%s2993 + $0xac] sm:$0xf]
    %v3038 = vld [vmem:[%s2993 + $0xb0] sm:$0xf]
    %v3039 = vld [vmem:[%s2993 + $0xb4] sm:$0xf]
    %v3040 = vld [vmem:[%s2993 + $0xb8] sm:$0xf]
    %v3041 = vld [vmem:[%s2993 + $0xbc] sm:$0xf]
    %v3042 = vld [vmem:[%s2993 + $0xc0] sm:$0xf]
    %v3043 = vld [vmem:[%s2993 + $0xc4] sm:$0xf]
    %v3044 = vld [vmem:[%s2993 + $0xc8] sm:$0xf]
    %v3045 = vld [vmem:[%s2993 + $0xcc] sm:$0xf]
    %v3046 = vld [vmem:[%s2993 + $0xd0] sm:$0xf]
    %v3047 = vld [vmem:[%s2993 + $0xd4] sm:$0xf]
    %v3048 = vld [vmem:[%s2993 + $0xd8] sm:$0xf]
    %v3049 = vld [vmem:[%s2993 + $0xdc] sm:$0xf]
    %v3050 = vld [vmem:[%s2993 + $0xe0] sm:$0xf]
    %v3051 = vld [vmem:[%s2993 + $0xe4] sm:$0xf]
    %v3052 = vld [vmem:[%s2993 + $0xe8] sm:$0xf]
    %v3053 = vld [vmem:[%s2993 + $0xec] sm:$0xf]
    %v3054 = vld [vmem:[%s2993 + $0xf0] sm:$0xf]
    %v3055 = vld [vmem:[%s2993 + $0xf4] sm:$0xf]
    %v3056 = vld [vmem:[%s2993 + $0xf8] sm:$0xf]
    %v3057 = vld [vmem:[%s2993 + $0xfc] sm:$0xf]
    %s3058 = scalar_lea.vmem %s2, 3
    %v3059 = vld [vmem:[%s3058] sm:$0x1]
    %v3061 = vlaneseq
    %v3062 = vshrl.u32 %v3061, 7
    %v3063 = vsub.s32 0, %v3062
    %v3064 = vrot.slane %v3059, %v3063
    %v3130 = vunpack.c.l.b16 %v2994
    %v3131 = vunpack.c.l.b16 %v2995
    %v3132 = vunpack.c.l.b16 %v2996
    %v3133 = vunpack.c.l.b16 %v2997
    %v3134 = vunpack.c.l.b16 %v2998
    %v3135 = vunpack.c.l.b16 %v2999
    %v3136 = vunpack.c.l.b16 %v3000
    %v3137 = vunpack.c.l.b16 %v3001
    %v3138 = vunpack.c.l.b16 %v3002
    %v3139 = vunpack.c.l.b16 %v3003
    %v3140 = vunpack.c.l.b16 %v3004
    %v3141 = vunpack.c.l.b16 %v3005
    %v3142 = vunpack.c.l.b16 %v3006
    %v3143 = vunpack.c.l.b16 %v3007
    %v3144 = vunpack.c.l.b16 %v3008
    %v3145 = vunpack.c.l.b16 %v3009
    %v3146 = vunpack.c.l.b16 %v3010
    %v3147 = vunpack.c.l.b16 %v3011
    %v3148 = vunpack.c.l.b16 %v3012
    %v3149 = vunpack.c.l.b16 %v3013
    %v3150 = vunpack.c.l.b16 %v3014
    %v3151 = vunpack.c.l.b16 %v3015
    %v3152 = vunpack.c.l.b16 %v3016
    %v3153 = vunpack.c.l.b16 %v3017
    %v3154 = vunpack.c.l.b16 %v3018
    %v3155 = vunpack.c.l.b16 %v3019
    %v3156 = vunpack.c.l.b16 %v3020
    %v3157 = vunpack.c.l.b16 %v3021
    %v3158 = vunpack.c.l.b16 %v3022
    %v3159 = vunpack.c.l.b16 %v3023
    %v3160 = vunpack.c.l.b16 %v3024
    %v3161 = vunpack.c.l.b16 %v3025
    %v3162 = vunpack.c.l.b16 %v3026
    %v3163 = vunpack.c.l.b16 %v3027
    %v3164 = vunpack.c.l.b16 %v3028
    %v3165 = vunpack.c.l.b16 %v3029
    %v3166 = vunpack.c.l.b16 %v3030
    %v3167 = vunpack.c.l.b16 %v3031
    %v3168 = vunpack.c.l.b16 %v3032
    %v3169 = vunpack.c.l.b16 %v3033
    %v3170 = vunpack.c.l.b16 %v3034
    %v3171 = vunpack.c.l.b16 %v3035
    %v3172 = vunpack.c.l.b16 %v3036
    %v3173 = vunpack.c.l.b16 %v3037
    %v3174 = vunpack.c.l.b16 %v3038
    %v3175 = vunpack.c.l.b16 %v3039
    %v3176 = vunpack.c.l.b16 %v3040
    %v3177 = vunpack.c.l.b16 %v3041
    %v3178 = vunpack.c.l.b16 %v3042
    %v3179 = vunpack.c.l.b16 %v3043
    %v3180 = vunpack.c.l.b16 %v3044
    %v3181 = vunpack.c.l.b16 %v3045
    %v3182 = vunpack.c.l.b16 %v3046
    %v3183 = vunpack.c.l.b16 %v3047
    %v3184 = vunpack.c.l.b16 %v3048
    %v3185 = vunpack.c.l.b16 %v3049
    %v3186 = vunpack.c.l.b16 %v3050
    %v3187 = vunpack.c.l.b16 %v3051
    %v3188 = vunpack.c.l.b16 %v3052
    %v3189 = vunpack.c.l.b16 %v3053
    %v3190 = vunpack.c.l.b16 %v3054
    %v3191 = vunpack.c.l.b16 %v3055
    %v3192 = vunpack.c.l.b16 %v3056
    %v3193 = vunpack.c.l.b16 %v3057
    %v3194 = vpack.c.b16 %v3131, %v3130
    %v3195 = vpack.c.b16 %v3133, %v3132
    %v3196 = vpack.c.b16 %v3135, %v3134
    %v3197 = vpack.c.b16 %v3137, %v3136
    %v3198 = vpack.c.b16 %v3139, %v3138
    %v3199 = vpack.c.b16 %v3141, %v3140
    %v3200 = vpack.c.b16 %v3143, %v3142
    %v3201 = vpack.c.b16 %v3145, %v3144
    %v3202 = vpack.c.b16 %v3147, %v3146
    %v3203 = vpack.c.b16 %v3149, %v3148
    %v3204 = vpack.c.b16 %v3151, %v3150
    %v3205 = vpack.c.b16 %v3153, %v3152
    %v3206 = vpack.c.b16 %v3155, %v3154
    %v3207 = vpack.c.b16 %v3157, %v3156
    %v3208 = vpack.c.b16 %v3159, %v3158
    %v3209 = vpack.c.b16 %v3161, %v3160
    %v3210 = vpack.c.b16 %v3163, %v3162
    %v3211 = vpack.c.b16 %v3165, %v3164
    %v3212 = vpack.c.b16 %v3167, %v3166
    %v3213 = vpack.c.b16 %v3169, %v3168
    %v3214 = vpack.c.b16 %v3171, %v3170
    %v3215 = vpack.c.b16 %v3173, %v3172
    %v3216 = vpack.c.b16 %v3175, %v3174
    %v3217 = vpack.c.b16 %v3177, %v3176
    %v3218 = vpack.c.b16 %v3179, %v3178
    %v3219 = vpack.c.b16 %v3181, %v3180
    %v3220 = vpack.c.b16 %v3183, %v3182
    %v3221 = vpack.c.b16 %v3185, %v3184
    %v3222 = vpack.c.b16 %v3187, %v3186
    %v3223 = vpack.c.b16 %v3189, %v3188
    %v3224 = vpack.c.b16 %v3191, %v3190
    %v3225 = vpack.c.b16 %v3193, %v3192
    %3258 = vmatprep.subr.bf16.mxu0 0
    %3259 = vmatpush1.bf16.msra.mxu0 %v3194
    %3260 = vmatprep.subr.bf16.mxu0 0
    %3261 = vmatpush1.bf16.msra.mxu0 %v3195
    %3262 = vmatprep.subr.bf16.mxu0 0
    %3263 = vmatpush1.bf16.msra.mxu0 %v3196
    %3264 = vmatprep.subr.bf16.mxu0 0
    %3265 = vmatpush1.bf16.msra.mxu0 %v3197
    %3266 = vmatprep.subr.bf16.mxu0 0
    %3267 = vmatpush1.bf16.msra.mxu0 %v3198
    %3268 = vmatprep.subr.bf16.mxu0 0
    %3269 = vmatpush1.bf16.msra.mxu0 %v3199
    %3270 = vmatprep.subr.bf16.mxu0 0
    %3271 = vmatpush1.bf16.msra.mxu0 %v3200
    %3272 = vmatprep.subr.bf16.mxu0 0
    %3273 = vmatpush1.bf16.msra.mxu0 %v3201
    %3274 = vmatprep.subr.bf16.mxu0 0
    %3275 = vmatpush1.bf16.msra.mxu0 %v3202
    %3276 = vmatprep.subr.bf16.mxu0 0
    %3277 = vmatpush1.bf16.msra.mxu0 %v3203
    %3278 = vmatprep.subr.bf16.mxu0 0
    %3279 = vmatpush1.bf16.msra.mxu0 %v3204
    %3280 = vmatprep.subr.bf16.mxu0 0
    %3281 = vmatpush1.bf16.msra.mxu0 %v3205
    %3282 = vmatprep.subr.bf16.mxu0 0
    %3283 = vmatpush1.bf16.msra.mxu0 %v3206
    %3284 = vmatprep.subr.bf16.mxu0 0
    %3285 = vmatpush1.bf16.msra.mxu0 %v3207
    %3286 = vmatprep.subr.bf16.mxu0 0
    %3287 = vmatpush1.bf16.msra.mxu0 %v3208
    %3288 = vmatprep.subr.bf16.mxu0 0
    %3289 = vmatpush1.bf16.msra.mxu0 %v3209
    %3290 = vmatprep.mubr.bf16.mxu0 %v2990
    %3291 = vmatmul.mubr.bf16.gmra.mrb[0].mxu0 %v2989
    %v3292 = vpop.f32.mrb[0].mxu0
    %v3293 = vadd.f32 %v3064, %v3292
    %v3294 = vpop.f32.mrb[0].mxu0
    %v3295 = vpop.f32.mrb[0].mxu0
    %v3296 = vpop.f32.mrb[0].mxu0
    %3297 = vdwg.mxu0
    %3298 = vmatprep.subr.bf16.mxu0 0
    %3299 = vmatpush1.bf16.msra.mxu0 %v3210
    %3300 = vmatprep.subr.bf16.mxu0 0
    %3301 = vmatpush1.bf16.msra.mxu0 %v3211
    %3302 = vmatprep.subr.bf16.mxu0 0
    %3303 = vmatpush1.bf16.msra.mxu0 %v3212
    %3304 = vmatprep.subr.bf16.mxu0 0
    %3305 = vmatpush1.bf16.msra.mxu0 %v3213
    %3306 = vmatprep.subr.bf16.mxu0 0
    %3307 = vmatpush1.bf16.msra.mxu0 %v3214
    %3308 = vmatprep.subr.bf16.mxu0 0
    %3309 = vmatpush1.bf16.msra.mxu0 %v3215
    %3310 = vmatprep.subr.bf16.mxu0 0
    %3311 = vmatpush1.bf16.msra.mxu0 %v3216
    %3312 = vmatprep.subr.bf16.mxu0 0
    %3313 = vmatpush1.bf16.msra.mxu0 %v3217
    %3314 = vmatprep.subr.bf16.mxu0 0
    %3315 = vmatpush1.bf16.msra.mxu0 %v3218
    %3316 = vmatprep.subr.bf16.mxu0 0
    %3317 = vmatpush1.bf16.msra.mxu0 %v3219
    %3318 = vmatprep.subr.bf16.mxu0 0
    %3319 = vmatpush1.bf16.msra.mxu0 %v3220
    %3320 = vmatprep.subr.bf16.mxu0 0
    %3321 = vmatpush1.bf16.msra.mxu0 %v3221
    %3322 = vmatprep.subr.bf16.mxu0 0
    %3323 = vmatpush1.bf16.msra.mxu0 %v3222
    %3324 = vmatprep.subr.bf16.mxu0 0
    %3325 = vmatpush1.bf16.msra.mxu0 %v3223
    %3326 = vmatprep.subr.bf16.mxu0 0
    %3327 = vmatpush1.bf16.msra.mxu0 %v3224
    %3328 = vmatprep.subr.bf16.mxu0 0
    %3329 = vmatpush1.bf16.msra.mxu0 %v3225
    %3330 = vmatprep.mubr.bf16.mxu0 %v2992
    %3331 = vmatmul.mubr.bf16.gmra.mrb[0].mxu0 %v2991
    %v3332 = vpop.f32.mrb[0].mxu0
    %v3333 = vadd.f32 %v3293, %v3332
    %v3334 = vpop.f32.mrb[0].mxu0
    %v3335 = vpop.f32.mrb[0].mxu0
    %v3336 = vpop.f32.mrb[0].mxu0
    %3337 = vdwg.mxu0
    %v3338 = vtanh.pop %v3333
    %v3339 = vpack.c.bf16 %v3338, %v3338
    %s3340 = scalar_lea.vmem [#allocation7], 1536
    %v3341 = vld [vmem:[%s3340] sm:$0xff]
    %v3342 = vld [vmem:[%s3340 + $0x8] sm:$0xff]
    %v3343 = vld [vmem:[%s3340 + $0x10] sm:$0xff]
    %v3344 = vld [vmem:[%s3340 + $0x18] sm:$0xff]
    %v3345 = vld [vmem:[%s3340 + $0x20] sm:$0xff]
    %v3346 = vld [vmem:[%s3340 + $0x28] sm:$0xff]
    %v3347 = vld [vmem:[%s3340 + $0x30] sm:$0xff]
    %v3348 = vld [vmem:[%s3340 + $0x38] sm:$0xff]
    %v3349 = vld [vmem:[%s3340 + $0x40] sm:$0xff]
    %v3350 = vld [vmem:[%s3340 + $0x48] sm:$0xff]
    %v3351 = vld [vmem:[%s3340 + $0x50] sm:$0xff]
    %v3352 = vld [vmem:[%s3340 + $0x58] sm:$0xff]
    %v3353 = vld [vmem:[%s3340 + $0x60] sm:$0xff]
    %v3354 = vld [vmem:[%s3340 + $0x68] sm:$0xff]
    %v3355 = vld [vmem:[%s3340 + $0x70] sm:$0xff]
    %v3356 = vld [vmem:[%s3340 + $0x78] sm:$0xff]
    %v3357 = vld [vmem:[%s3340 + $0x80] sm:$0xff]
    %v3358 = vld [vmem:[%s3340 + $0x88] sm:$0xff]
    %v3359 = vld [vmem:[%s3340 + $0x90] sm:$0xff]
    %v3360 = vld [vmem:[%s3340 + $0x98] sm:$0xff]
    %v3361 = vld [vmem:[%s3340 + $0xa0] sm:$0xff]
    %v3362 = vld [vmem:[%s3340 + $0xa8] sm:$0xff]
    %v3363 = vld [vmem:[%s3340 + $0xb0] sm:$0xff]
    %v3364 = vld [vmem:[%s3340 + $0xb8] sm:$0xff]
    %v3365 = vld [vmem:[%s3340 + $0xc0] sm:$0xff]
    %v3366 = vld [vmem:[%s3340 + $0xc8] sm:$0xff]
    %v3367 = vld [vmem:[%s3340 + $0xd0] sm:$0xff]
    %v3368 = vld [vmem:[%s3340 + $0xd8] sm:$0xff]
    %v3369 = vld [vmem:[%s3340 + $0xe0] sm:$0xff]
    %v3370 = vld [vmem:[%s3340 + $0xe8] sm:$0xff]
    %v3371 = vld [vmem:[%s3340 + $0xf0] sm:$0xff]
    %v3372 = vld [vmem:[%s3340 + $0xf8] sm:$0xff]
    %v3373 = vld [vmem:[%s3340 + $0x100] sm:$0xff]
    %v3374 = vld [vmem:[%s3340 + $0x108] sm:$0xff]
    %v3375 = vld [vmem:[%s3340 + $0x110] sm:$0xff]
    %v3376 = vld [vmem:[%s3340 + $0x118] sm:$0xff]
    %v3377 = vld [vmem:[%s3340 + $0x120] sm:$0xff]
    %v3378 = vld [vmem:[%s3340 + $0x128] sm:$0xff]
    %v3379 = vld [vmem:[%s3340 + $0x130] sm:$0xff]
    %v3380 = vld [vmem:[%s3340 + $0x138] sm:$0xff]
    %v3381 = vld [vmem:[%s3340 + $0x140] sm:$0xff]
    %v3382 = vld [vmem:[%s3340 + $0x148] sm:$0xff]
    %v3383 = vld [vmem:[%s3340 + $0x150] sm:$0xff]
    %v3384 = vld [vmem:[%s3340 + $0x158] sm:$0xff]
    %v3385 = vld [vmem:[%s3340 + $0x160] sm:$0xff]
    %v3386 = vld [vmem:[%s3340 + $0x168] sm:$0xff]
    %v3387 = vld [vmem:[%s3340 + $0x170] sm:$0xff]
    %v3388 = vld [vmem:[%s3340 + $0x178] sm:$0xff]
    %v3389 = vld [vmem:[%s3340 + $0x180] sm:$0xff]
    %v3390 = vld [vmem:[%s3340 + $0x188] sm:$0xff]
    %v3391 = vld [vmem:[%s3340 + $0x190] sm:$0xff]
    %v3392 = vld [vmem:[%s3340 + $0x198] sm:$0xff]
    %v3393 = vld [vmem:[%s3340 + $0x1a0] sm:$0xff]
    %v3394 = vld [vmem:[%s3340 + $0x1a8] sm:$0xff]
    %v3395 = vld [vmem:[%s3340 + $0x1b0] sm:$0xff]
    %v3396 = vld [vmem:[%s3340 + $0x1b8] sm:$0xff]
    %v3397 = vld [vmem:[%s3340 + $0x1c0] sm:$0xff]
    %v3398 = vld [vmem:[%s3340 + $0x1c8] sm:$0xff]
    %v3399 = vld [vmem:[%s3340 + $0x1d0] sm:$0xff]
    %v3400 = vld [vmem:[%s3340 + $0x1d8] sm:$0xff]
    %v3401 = vld [vmem:[%s3340 + $0x1e0] sm:$0xff]
    %v3402 = vld [vmem:[%s3340 + $0x1e8] sm:$0xff]
    %v3403 = vld [vmem:[%s3340 + $0x1f0] sm:$0xff]
    %v3404 = vld [vmem:[%s3340 + $0x1f8] sm:$0xff]
    %s3405 = scalar_lea.vmem [#allocation8], 24
    %v3406 = vld [vmem:[%s3405] sm:$0xff]
    %v3408 = vlaneseq
    %v3409 = vshrl.u32 %v3408, 7
    %v3410 = vsub.s32 0, %v3409
    %v3411 = vrot.slane %v3406, %v3410
    %v3412 = vlaneseq
    %v3413 = vshrl.u32 %v3412, 7
    %v3414 = vsub.s32 1, %v3413
    %v3415 = vrot.slane %v3406, %v3414
    %v3416 = vlaneseq
    %v3417 = vshrl.u32 %v3416, 7
    %v3418 = vsub.s32 2, %v3417
    %v3419 = vrot.slane %v3406, %v3418
    %v3420 = vlaneseq
    %v3421 = vshrl.u32 %v3420, 7
    %v3422 = vsub.s32 3, %v3421
    %v3423 = vrot.slane %v3406, %v3422
    %v3424 = vlaneseq
    %v3425 = vshrl.u32 %v3424, 7
    %v3426 = vsub.s32 4, %v3425
    %v3427 = vrot.slane %v3406, %v3426
    %v3428 = vlaneseq
    %v3429 = vshrl.u32 %v3428, 7
    %v3430 = vsub.s32 5, %v3429
    %v3431 = vrot.slane %v3406, %v3430
    %v3432 = vlaneseq
    %v3433 = vshrl.u32 %v3432, 7
    %v3434 = vsub.s32 6, %v3433
    %v3435 = vrot.slane %v3406, %v3434
    %v3436 = vlaneseq
    %v3437 = vshrl.u32 %v3436, 7
    %v3438 = vsub.s32 7, %v3437
    %v3439 = vrot.slane %v3406, %v3438
    %v3512 = vunpack.c.l.b16 %v3341
    %v3513 = vunpack.c.h.b16 %v3341
    %v3514 = vunpack.c.l.b16 %v3342
    %v3515 = vunpack.c.h.b16 %v3342
    %v3516 = vunpack.c.l.b16 %v3343
    %v3517 = vunpack.c.h.b16 %v3343
    %v3518 = vunpack.c.l.b16 %v3344
    %v3519 = vunpack.c.h.b16 %v3344
    %v3520 = vunpack.c.l.b16 %v3345
    %v3521 = vunpack.c.h.b16 %v3345
    %v3522 = vunpack.c.l.b16 %v3346
    %v3523 = vunpack.c.h.b16 %v3346
    %v3524 = vunpack.c.l.b16 %v3347
    %v3525 = vunpack.c.h.b16 %v3347
    %v3526 = vunpack.c.l.b16 %v3348
    %v3527 = vunpack.c.h.b16 %v3348
    %v3528 = vunpack.c.l.b16 %v3349
    %v3529 = vunpack.c.h.b16 %v3349
    %v3530 = vunpack.c.l.b16 %v3350
    %v3531 = vunpack.c.h.b16 %v3350
    %v3532 = vunpack.c.l.b16 %v3351
    %v3533 = vunpack.c.h.b16 %v3351
    %v3534 = vunpack.c.l.b16 %v3352
    %v3535 = vunpack.c.h.b16 %v3352
    %v3536 = vunpack.c.l.b16 %v3353
    %v3537 = vunpack.c.h.b16 %v3353
    %v3538 = vunpack.c.l.b16 %v3354
    %v3539 = vunpack.c.h.b16 %v3354
    %v3540 = vunpack.c.l.b16 %v3355
    %v3541 = vunpack.c.h.b16 %v3355
    %v3542 = vunpack.c.l.b16 %v3356
    %v3543 = vunpack.c.h.b16 %v3356
    %v3544 = vunpack.c.l.b16 %v3357
    %v3545 = vunpack.c.h.b16 %v3357
    %v3546 = vunpack.c.l.b16 %v3358
    %v3547 = vunpack.c.h.b16 %v3358
    %v3548 = vunpack.c.l.b16 %v3359
    %v3549 = vunpack.c.h.b16 %v3359
    %v3550 = vunpack.c.l.b16 %v3360
    %v3551 = vunpack.c.h.b16 %v3360
    %v3552 = vunpack.c.l.b16 %v3361
    %v3553 = vunpack.c.h.b16 %v3361
    %v3554 = vunpack.c.l.b16 %v3362
    %v3555 = vunpack.c.h.b16 %v3362
    %v3556 = vunpack.c.l.b16 %v3363
    %v3557 = vunpack.c.h.b16 %v3363
    %v3558 = vunpack.c.l.b16 %v3364
    %v3559 = vunpack.c.h.b16 %v3364
    %v3560 = vunpack.c.l.b16 %v3365
    %v3561 = vunpack.c.h.b16 %v3365
    %v3562 = vunpack.c.l.b16 %v3366
    %v3563 = vunpack.c.h.b16 %v3366
    %v3564 = vunpack.c.l.b16 %v3367
    %v3565 = vunpack.c.h.b16 %v3367
    %v3566 = vunpack.c.l.b16 %v3368
    %v3567 = vunpack.c.h.b16 %v3368
    %v3568 = vunpack.c.l.b16 %v3369
    %v3569 = vunpack.c.h.b16 %v3369
    %v3570 = vunpack.c.l.b16 %v3370
    %v3571 = vunpack.c.h.b16 %v3370
    %v3572 = vunpack.c.l.b16 %v3371
    %v3573 = vunpack.c.h.b16 %v3371
    %v3574 = vunpack.c.l.b16 %v3372
    %v3575 = vunpack.c.h.b16 %v3372
    %v3576 = vunpack.c.l.b16 %v3373
    %v3577 = vunpack.c.h.b16 %v3373
    %v3578 = vunpack.c.l.b16 %v3374
    %v3579 = vunpack.c.h.b16 %v3374
    %v3580 = vunpack.c.l.b16 %v3375
    %v3581 = vunpack.c.h.b16 %v3375
    %v3582 = vunpack.c.l.b16 %v3376
    %v3583 = vunpack.c.h.b16 %v3376
    %v3584 = vunpack.c.l.b16 %v3377
    %v3585 = vunpack.c.h.b16 %v3377
    %v3586 = vunpack.c.l.b16 %v3378
    %v3587 = vunpack.c.h.b16 %v3378
    %v3588 = vunpack.c.l.b16 %v3379
    %v3589 = vunpack.c.h.b16 %v3379
    %v3590 = vunpack.c.l.b16 %v3380
    %v3591 = vunpack.c.h.b16 %v3380
    %v3592 = vunpack.c.l.b16 %v3381
    %v3593 = vunpack.c.h.b16 %v3381
    %v3594 = vunpack.c.l.b16 %v3382
    %v3595 = vunpack.c.h.b16 %v3382
    %v3596 = vunpack.c.l.b16 %v3383
    %v3597 = vunpack.c.h.b16 %v3383
    %v3598 = vunpack.c.l.b16 %v3384
    %v3599 = vunpack.c.h.b16 %v3384
    %v3600 = vunpack.c.l.b16 %v3385
    %v3601 = vunpack.c.h.b16 %v3385
    %v3602 = vunpack.c.l.b16 %v3386
    %v3603 = vunpack.c.h.b16 %v3386
    %v3604 = vunpack.c.l.b16 %v3387
    %v3605 = vunpack.c.h.b16 %v3387
    %v3606 = vunpack.c.l.b16 %v3388
    %v3607 = vunpack.c.h.b16 %v3388
    %v3608 = vunpack.c.l.b16 %v3389
    %v3609 = vunpack.c.h.b16 %v3389
    %v3610 = vunpack.c.l.b16 %v3390
    %v3611 = vunpack.c.h.b16 %v3390
    %v3612 = vunpack.c.l.b16 %v3391
    %v3613 = vunpack.c.h.b16 %v3391
    %v3614 = vunpack.c.l.b16 %v3392
    %v3615 = vunpack.c.h.b16 %v3392
    %v3616 = vunpack.c.l.b16 %v3393
    %v3617 = vunpack.c.h.b16 %v3393
    %v3618 = vunpack.c.l.b16 %v3394
    %v3619 = vunpack.c.h.b16 %v3394
    %v3620 = vunpack.c.l.b16 %v3395
    %v3621 = vunpack.c.h.b16 %v3395
    %v3622 = vunpack.c.l.b16 %v3396
    %v3623 = vunpack.c.h.b16 %v3396
    %v3624 = vunpack.c.l.b16 %v3397
    %v3625 = vunpack.c.h.b16 %v3397
    %v3626 = vunpack.c.l.b16 %v3398
    %v3627 = vunpack.c.h.b16 %v3398
    %v3628 = vunpack.c.l.b16 %v3399
    %v3629 = vunpack.c.h.b16 %v3399
    %v3630 = vunpack.c.l.b16 %v3400
    %v3631 = vunpack.c.h.b16 %v3400
    %v3632 = vunpack.c.l.b16 %v3401
    %v3633 = vunpack.c.h.b16 %v3401
    %v3634 = vunpack.c.l.b16 %v3402
    %v3635 = vunpack.c.h.b16 %v3402
    %v3636 = vunpack.c.l.b16 %v3403
    %v3637 = vunpack.c.h.b16 %v3403
    %v3638 = vunpack.c.l.b16 %v3404
    %v3639 = vunpack.c.h.b16 %v3404
    %v3640 = vpack.c.b16 %v3520, %v3512
    %v3641 = vpack.c.b16 %v3521, %v3513
    %v3642 = vpack.c.b16 %v3522, %v3514
    %v3643 = vpack.c.b16 %v3523, %v3515
    %v3644 = vpack.c.b16 %v3524, %v3516
    %v3645 = vpack.c.b16 %v3525, %v3517
    %v3646 = vpack.c.b16 %v3526, %v3518
    %v3647 = vpack.c.b16 %v3527, %v3519
    %v3648 = vpack.c.b16 %v3536, %v3528
    %v3649 = vpack.c.b16 %v3537, %v3529
    %v3650 = vpack.c.b16 %v3538, %v3530
    %v3651 = vpack.c.b16 %v3539, %v3531
    %v3652 = vpack.c.b16 %v3540, %v3532
    %v3653 = vpack.c.b16 %v3541, %v3533
    %v3654 = vpack.c.b16 %v3542, %v3534
    %v3655 = vpack.c.b16 %v3543, %v3535
    %v3656 = vpack.c.b16 %v3552, %v3544
    %v3657 = vpack.c.b16 %v3553, %v3545
    %v3658 = vpack.c.b16 %v3554, %v3546
    %v3659 = vpack.c.b16 %v3555, %v3547
    %v3660 = vpack.c.b16 %v3556, %v3548
    %v3661 = vpack.c.b16 %v3557, %v3549
    %v3662 = vpack.c.b16 %v3558, %v3550
    %v3663 = vpack.c.b16 %v3559, %v3551
    %v3664 = vpack.c.b16 %v3568, %v3560
    %v3665 = vpack.c.b16 %v3569, %v3561
    %v3666 = vpack.c.b16 %v3570, %v3562
    %v3667 = vpack.c.b16 %v3571, %v3563
    %v3668 = vpack.c.b16 %v3572, %v3564
    %v3669 = vpack.c.b16 %v3573, %v3565
    %v3670 = vpack.c.b16 %v3574, %v3566
    %v3671 = vpack.c.b16 %v3575, %v3567
    %v3672 = vpack.c.b16 %v3584, %v3576
    %v3673 = vpack.c.b16 %v3585, %v3577
    %v3674 = vpack.c.b16 %v3586, %v3578
    %v3675 = vpack.c.b16 %v3587, %v3579
    %v3676 = vpack.c.b16 %v3588, %v3580
    %v3677 = vpack.c.b16 %v3589, %v3581
    %v3678 = vpack.c.b16 %v3590, %v3582
    %v3679 = vpack.c.b16 %v3591, %v3583
    %v3680 = vpack.c.b16 %v3600, %v3592
    %v3681 = vpack.c.b16 %v3601, %v3593
    %v3682 = vpack.c.b16 %v3602, %v3594
    %v3683 = vpack.c.b16 %v3603, %v3595
    %v3684 = vpack.c.b16 %v3604, %v3596
    %v3685 = vpack.c.b16 %v3605, %v3597
    %v3686 = vpack.c.b16 %v3606, %v3598
    %v3687 = vpack.c.b16 %v3607, %v3599
    %v3688 = vpack.c.b16 %v3616, %v3608
    %v3689 = vpack.c.b16 %v3617, %v3609
    %v3690 = vpack.c.b16 %v3618, %v3610
    %v3691 = vpack.c.b16 %v3619, %v3611
    %v3692 = vpack.c.b16 %v3620, %v3612
    %v3693 = vpack.c.b16 %v3621, %v3613
    %v3694 = vpack.c.b16 %v3622, %v3614
    %v3695 = vpack.c.b16 %v3623, %v3615
    %v3696 = vpack.c.b16 %v3632, %v3624
    %v3697 = vpack.c.b16 %v3633, %v3625
    %v3698 = vpack.c.b16 %v3634, %v3626
    %v3699 = vpack.c.b16 %v3635, %v3627
    %v3700 = vpack.c.b16 %v3636, %v3628
    %v3701 = vpack.c.b16 %v3637, %v3629
    %v3702 = vpack.c.b16 %v3638, %v3630
    %v3703 = vpack.c.b16 %v3639, %v3631
    %3768 = vmatprep.subr.bf16.mxu0 %v3641
    %3769 = vmatpush1.bf16.msra.mxu0 %v3640
    %3770 = vmatprep.subr.bf16.mxu0 %v3649
    %3771 = vmatpush1.bf16.msra.mxu0 %v3648
    %3772 = vmatprep.subr.bf16.mxu0 %v3657
    %3773 = vmatpush1.bf16.msra.mxu0 %v3656
    %3774 = vmatprep.subr.bf16.mxu0 %v3665
    %3775 = vmatpush1.bf16.msra.mxu0 %v3664
    %3776 = vmatprep.subr.bf16.mxu0 %v3673
    %3777 = vmatpush1.bf16.msra.mxu0 %v3672
    %3778 = vmatprep.subr.bf16.mxu0 %v3681
    %3779 = vmatpush1.bf16.msra.mxu0 %v3680
    %3780 = vmatprep.subr.bf16.mxu0 %v3689
    %3781 = vmatpush1.bf16.msra.mxu0 %v3688
    %3782 = vmatprep.subr.bf16.mxu0 %v3697
    %3783 = vmatpush1.bf16.msra.mxu0 %v3696
    %3784 = vmatprep.subr.bf16.mxu0 0
    %3785 = vmatpush1.bf16.msra.mxu0 0
    %3786 = vmatprep.subr.bf16.mxu0 0
    %3787 = vmatpush1.bf16.msra.mxu0 0
    %3788 = vmatprep.subr.bf16.mxu0 0
    %3789 = vmatpush1.bf16.msra.mxu0 0
    %3790 = vmatprep.subr.bf16.mxu0 0
    %3791 = vmatpush1.bf16.msra.mxu0 0
    %3792 = vmatprep.subr.bf16.mxu0 0
    %3793 = vmatpush1.bf16.msra.mxu0 0
    %3794 = vmatprep.subr.bf16.mxu0 0
    %3795 = vmatpush1.bf16.msra.mxu0 0
    %3796 = vmatprep.subr.bf16.mxu0 0
    %3797 = vmatpush1.bf16.msra.mxu0 0
    %3798 = vmatprep.subr.bf16.mxu0 0
    %3799 = vmatpush1.bf16.msra.mxu0 0
    %3800 = vmatprep.mubr.bf16.mxu0 0
    %3801 = vmatmul.mubr.bf16.gmra.mrb[0].mxu0 %v3339
    %v3802 = vpop.f32.mrb[0].mxu0
    %v3803 = vadd.f32 %v3411, %v3802
    %v3804 = vpop.f32.mrb[0].mxu0
    %v3805 = vadd.f32 %v3415, %v3804
    %v3806 = vpop.f32.mrb[0].mxu0
    %v3807 = vpop.f32.mrb[0].mxu0
    %3808 = vdwg.mxu0
    %3809 = vmatprep.subr.bf16.mxu0 %v3643
    %3810 = vmatpush1.bf16.msra.mxu0 %v3642
    %3811 = vmatprep.subr.bf16.mxu0 %v3651
    %3812 = vmatpush1.bf16.msra.mxu0 %v3650
    %3813 = vmatprep.subr.bf16.mxu0 %v3659
    %3814 = vmatpush1.bf16.msra.mxu0 %v3658
    %3815 = vmatprep.subr.bf16.mxu0 %v3667
    %3816 = vmatpush1.bf16.msra.mxu0 %v3666
    %3817 = vmatprep.subr.bf16.mxu0 %v3675
    %3818 = vmatpush1.bf16.msra.mxu0 %v3674
    %3819 = vmatprep.subr.bf16.mxu0 %v3683
    %3820 = vmatpush1.bf16.msra.mxu0 %v3682
    %3821 = vmatprep.subr.bf16.mxu0 %v3691
    %3822 = vmatpush1.bf16.msra.mxu0 %v3690
    %3823 = vmatprep.subr.bf16.mxu0 %v3699
    %3824 = vmatpush1.bf16.msra.mxu0 %v3698
    %3825 = vmatprep.subr.bf16.mxu0 0
    %3826 = vmatpush1.bf16.msra.mxu0 0
    %3827 = vmatprep.subr.bf16.mxu0 0
    %3828 = vmatpush1.bf16.msra.mxu0 0
    %3829 = vmatprep.subr.bf16.mxu0 0
    %3830 = vmatpush1.bf16.msra.mxu0 0
    %3831 = vmatprep.subr.bf16.mxu0 0
    %3832 = vmatpush1.bf16.msra.mxu0 0
    %3833 = vmatprep.subr.bf16.mxu0 0
    %3834 = vmatpush1.bf16.msra.mxu0 0
    %3835 = vmatprep.subr.bf16.mxu0 0
    %3836 = vmatpush1.bf16.msra.mxu0 0
    %3837 = vmatprep.subr.bf16.mxu0 0
    %3838 = vmatpush1.bf16.msra.mxu0 0
    %3839 = vmatprep.subr.bf16.mxu0 0
    %3840 = vmatpush1.bf16.msra.mxu0 0
    %3841 = vmatprep.mubr.bf16.mxu0 0
    %3842 = vmatmul.mubr.bf16.gmra.mrb[0].mxu0 %v3339
    %v3843 = vpop.f32.mrb[0].mxu0
    %v3844 = vadd.f32 %v3419, %v3843
    %v3845 = vpop.f32.mrb[0].mxu0
    %v3846 = vadd.f32 %v3423, %v3845
    %v3847 = vpop.f32.mrb[0].mxu0
    %v3848 = vpop.f32.mrb[0].mxu0
    %3849 = vdwg.mxu0
    %3850 = vmatprep.subr.bf16.mxu0 %v3645
    %3851 = vmatpush1.bf16.msra.mxu0 %v3644
    %3852 = vmatprep.subr.bf16.mxu0 %v3653
    %3853 = vmatpush1.bf16.msra.mxu0 %v3652
    %3854 = vmatprep.subr.bf16.mxu0 %v3661
    %3855 = vmatpush1.bf16.msra.mxu0 %v3660
    %3856 = vmatprep.subr.bf16.mxu0 %v3669
    %3857 = vmatpush1.bf16.msra.mxu0 %v3668
    %3858 = vmatprep.subr.bf16.mxu0 %v3677
    %3859 = vmatpush1.bf16.msra.mxu0 %v3676
    %3860 = vmatprep.subr.bf16.mxu0 %v3685
    %3861 = vmatpush1.bf16.msra.mxu0 %v3684
    %3862 = vmatprep.subr.bf16.mxu0 %v3693
    %3863 = vmatpush1.bf16.msra.mxu0 %v3692
    %3864 = vmatprep.subr.bf16.mxu0 %v3701
    %3865 = vmatpush1.bf16.msra.mxu0 %v3700
    %3866 = vmatprep.subr.bf16.mxu0 0
    %3867 = vmatpush1.bf16.msra.mxu0 0
    %3868 = vmatprep.subr.bf16.mxu0 0
    %3869 = vmatpush1.bf16.msra.mxu0 0
    %3870 = vmatprep.subr.bf16.mxu0 0
    %3871 = vmatpush1.bf16.msra.mxu0 0
    %3872 = vmatprep.subr.bf16.mxu0 0
    %3873 = vmatpush1.bf16.msra.mxu0 0
    %3874 = vmatprep.subr.bf16.mxu0 0
    %3875 = vmatpush1.bf16.msra.mxu0 0
    %3876 = vmatprep.subr.bf16.mxu0 0
    %3877 = vmatpush1.bf16.msra.mxu0 0
    %3878 = vmatprep.subr.bf16.mxu0 0
    %3879 = vmatpush1.bf16.msra.mxu0 0
    %3880 = vmatprep.subr.bf16.mxu0 0
    %3881 = vmatpush1.bf16.msra.mxu0 0
    %3882 = vmatprep.mubr.bf16.mxu0 0
    %3883 = vmatmul.mubr.bf16.gmra.mrb[0].mxu0 %v3339
    %v3884 = vpop.f32.mrb[0].mxu0
    %v3885 = vadd.f32 %v3427, %v3884
    %v3886 = vpop.f32.mrb[0].mxu0
    %v3887 = vadd.f32 %v3431, %v3886
    %v3888 = vpop.f32.mrb[0].mxu0
    %v3889 = vpop.f32.mrb[0].mxu0
    %3890 = vdwg.mxu0
    %3891 = vmatprep.subr.bf16.mxu0 %v3647
    %3892 = vmatpush1.bf16.msra.mxu0 %v3646
    %3893 = vmatprep.subr.bf16.mxu0 %v3655
    %3894 = vmatpush1.bf16.msra.mxu0 %v3654
    %3895 = vmatprep.subr.bf16.mxu0 %v3663
    %3896 = vmatpush1.bf16.msra.mxu0 %v3662
    %3897 = vmatprep.subr.bf16.mxu0 %v3671
    %3898 = vmatpush1.bf16.msra.mxu0 %v3670
    %3899 = vmatprep.subr.bf16.mxu0 %v3679
    %3900 = vmatpush1.bf16.msra.mxu0 %v3678
    %3901 = vmatprep.subr.bf16.mxu0 %v3687
    %3902 = vmatpush1.bf16.msra.mxu0 %v3686
    %3903 = vmatprep.subr.bf16.mxu0 %v3695
    %3904 = vmatpush1.bf16.msra.mxu0 %v3694
    %3905 = vmatprep.subr.bf16.mxu0 %v3703
    %3906 = vmatpush1.bf16.msra.mxu0 %v3702
    %3907 = vmatprep.subr.bf16.mxu0 0
    %3908 = vmatpush1.bf16.msra.mxu0 0
    %3909 = vmatprep.subr.bf16.mxu0 0
    %3910 = vmatpush1.bf16.msra.mxu0 0
    %3911 = vmatprep.subr.bf16.mxu0 0
    %3912 = vmatpush1.bf16.msra.mxu0 0
    %3913 = vmatprep.subr.bf16.mxu0 0
    %3914 = vmatpush1.bf16.msra.mxu0 0
    %3915 = vmatprep.subr.bf16.mxu0 0
    %3916 = vmatpush1.bf16.msra.mxu0 0
    %3917 = vmatprep.subr.bf16.mxu0 0
    %3918 = vmatpush1.bf16.msra.mxu0 0
    %3919 = vmatprep.subr.bf16.mxu0 0
    %3920 = vmatpush1.bf16.msra.mxu0 0
    %3921 = vmatprep.subr.bf16.mxu0 0
    %3922 = vmatpush1.bf16.msra.mxu0 0
    %3923 = vmatprep.mubr.bf16.mxu0 0
    %3924 = vmatmul.mubr.bf16.gmra.mrb[0].mxu0 %v3339
    %v3925 = vpop.f32.mrb[0].mxu0
    %v3926 = vadd.f32 %v3435, %v3925
    %v3927 = vpop.f32.mrb[0].mxu0
    %v3928 = vadd.f32 %v3439, %v3927
    %v3929 = vpop.f32.mrb[0].mxu0
    %v3930 = vpop.f32.mrb[0].mxu0
    %3931 = vdwg.mxu0
    %v3932 = vtanh.pop %v3803
    %v3933 = vtanh.pop %v3805
    %v3934 = vtanh.pop %v3844
    %v3935 = vtanh.pop %v3846
    %v3936 = vmul.f32 %v3932, 1.442695
    %v3937 = vpow.pop %v3936
    %v3938 = vmul.f32 %v3933, 1.442695
    %v3939 = vpow.pop %v3938
    %v3940 = vmul.f32 %v3934, 1.442695
    %v3941 = vpow.pop %v3940
    %v3942 = vmul.f32 %v3935, 1.442695
    %v3943 = vpow.pop %v3942
    %v3944 = vmul.f32 %v2010, %v3937
    %v3945 = vmul.f32 %v2011, %v3939
    %v3946 = vmul.f32 %v2012, %v3941
    %v3947 = vmul.f32 %v2013, %v3943
    %v3948 = vadd.f32 %v3944, %v3885
    %v3949 = vadd.f32 %v3945, %v3887
    %v3950 = vadd.f32 %v3946, %v3926
    %v3951 = vadd.f32 %v3947, %v3928
    %v3952 = vadd.f32 %v3932, %v3933
    %v3953 = vadd.f32 %v3952, %v3934
    %v3954 = vadd.f32 %v3953, %v3935
    %3955 = vadd.xlane.f32.xlu0 %v3954
    %v3956 = vpop.xlane.xlu0 %3955
    %v3957 = vadd.f32 %v2988, %v3956
    %3958 = vst [vmem:[#allocation10] sm:$0xff] %v3948
    %3959 = vst [vmem:[#allocation10 + $0x8] sm:$0xff] %v3949
    %3960 = vst [vmem:[#allocation10 + $0x10] sm:$0xff] %v3950
    %3961 = vst [vmem:[#allocation10 + $0x18] sm:$0xff] %v3951
    %3962 = vst [vmem:[#allocation10 + $0x20] sm:$0xff] %v2979
    %3963 = vst [vmem:[#allocation10 + $0x28] sm:$0xff] %v2980
    %3964 = vst [vmem:[#allocation10 + $0x30] sm:$0xff] %v2981
    %3965 = vst [vmem:[#allocation10 + $0x38] sm:$0xff] %v2982
    %3966 = vst [vmem:[#allocation11] sm:$0xff] %v3957
    // Predicated region
    $region38: #{tpu_custom_call.1} parent=1 // pred_check
      _
    $region39: #{tpu_custom_call.1} parent=1 // pred_check_branch
      %3968 = sbr.rel (0) target = $region41
    $region40: #{tpu_custom_call.1} parent=1 // pred_region
      %s3970 = ssub.s32 1024, 1024
      %3971 = vsyncadd [#allocation4], %s3970
      %s3973 = sshll.u32 [#allocation10], 4
      %s3974 = int_to_ptr.vmem [resolvable:$true] %s3973
      %3976 = dma.vmem_to_hbm [thread:$0]  %s3974, 1024, %s5, [#allocation4]
    $region41: #{tpu_custom_call.1} parent=1 // pred_fallthru
      _
    // Predicated region
    $region42: #{tpu_custom_call.1} parent=1 // pred_check
      _
    $region43: #{tpu_custom_call.1} parent=1 // pred_check_branch
      %3978 = sbr.rel (0) target = $region45
    $region44: #{tpu_custom_call.1} parent=1 // pred_region
      %s3980 = ssub.s32 128, 128
      %3981 = vsyncadd [#allocation12], %s3980
      %s3983 = sshll.u32 [#allocation11], 4
      %s3984 = int_to_ptr.vmem [resolvable:$true] %s3983
      %3986 = dma.vmem_to_hbm [thread:$0]  %s3984, 128, %s6, [#allocation12]
    $region45: #{tpu_custom_call.1} parent=1 // pred_fallthru
      _
    // Predicated region
    $region46: #{tpu_custom_call.1} parent=1 // pred_check
      _
    $region47: #{tpu_custom_call.1} parent=1 // pred_check_branch
      %3988 = sbr.rel (0) target = $region49
    $region48: #{tpu_custom_call.1} parent=1 // pred_region
      %3989 = dma.done [#allocation4], 1024
    $region49: #{tpu_custom_call.1} parent=1 // pred_fallthru
      _
    // Predicated region
    $region50: #{tpu_custom_call.1} parent=1 // pred_check
      _
    $region51: #{tpu_custom_call.1} parent=1 // pred_check_branch
      %3991 = sbr.rel (0) target = $region53
    $region52: #{tpu_custom_call.1} parent=1 // pred_region
      %3992 = dma.done [#allocation12], 128
    $region53: #{tpu_custom_call.1} parent=1 // pred_fallthru
      _
    %3993 = vsyncpa [#allocation3], 1
    %3994 = vsyncpa [#allocation6], 1
    %3995 = vsyncpa [#allocation9], 1
    %3996 = vsyncpa [#allocation4], 1
    %3997 = vsyncpa [#allocation12], 1

</llo_original>
